<compile_context>
chip_gen: v6e
topology: v6e:2x2x1
jax: 0.10.0
libtpu: 0.0.40
codegen_flags: <defaults>
</compile_context>

<pallas_src>
import jax
import jax.numpy as jnp
import numpy as np
from jax import lax
from jax.experimental import pallas as pl
from jax.experimental.pallas import tpu as pltpu

NEG_SLOPE = 0.01                       # nn.LeakyReLU default negative_slope
NUM_NODES = 64
C_IN, H_IN, W_IN = 2, 6, 7
K1, K2 = 4, 2
OH1, OW1 = H_IN - K1 + 1, W_IN - K1 + 1        # 3, 4
OH2, OW2 = OH1 - K2 + 1, OW1 - K2 + 1          # 2, 3
D0 = C_IN * H_IN * W_IN                        # 84   (flattened input)
D1 = OH1 * OW1 * NUM_NODES                     # 768  (conv1 out, (pos, chan))
D2 = OH2 * OW2 * NUM_NODES                     # 384  (conv2 out, (pos, chan))
PRECISION = jax.lax.Precision.HIGHEST


# ----------------------------- Pallas kernel -------------------------------

def _fused_kernel(x_ref, a1_ref, b1_ref, a2_ref, b2_ref,
                  w3_ref, b3_ref, w4_ref, b4_ref, o_ref):
    def lrelu(v):
        return jnp.where(v > 0, v, NEG_SLOPE * v)

    # Conv2d(2,64,4) as one dense GEMM on the flattened sample.
    h = jnp.dot(x_ref[...], a1_ref[...], precision=PRECISION,
                preferred_element_type=jnp.float32) + b1_ref[...]
    h = lrelu(h)                                   # (bm, 768)

    # Conv2d(64,64,2) as one dense GEMM (patch gather folded into A2).
    h = jnp.dot(h, a2_ref[...], precision=PRECISION,
                preferred_element_type=jnp.float32) + b2_ref[...]
    h = lrelu(h)                                   # (bm, 384)

    # Flatten permutation folded into W3r -> plain GEMM.
    h = jnp.dot(h, w3_ref[...], precision=PRECISION,
                preferred_element_type=jnp.float32) + b3_ref[...]
    h = lrelu(h)                                   # (bm, 64)

    # Linear(64,1): VPU multiply + lane reduction (skip 1-column MXU matmul).
    y = jnp.sum(h * w4_ref[...], axis=-1, keepdims=True) + b4_ref[...]
    o_ref[...] = jnp.tanh(y).astype(o_ref.dtype)


# ------------------------- one-time parameter folding ----------------------

def fold_params(params):
    """Fold conv im2col + NCHW-flatten permutations into dense matrices."""
    w1, b1, w2, b2, w3, b3, w4, b4 = params

    # Conv1: A1[f, p*64+o] maps flat input index f = c*42 + h*7 + w to
    # output position p = oh*OW1 + ow, channel o.
    E1 = np.zeros((D0, OH1 * OW1, C_IN * K1 * K1), np.float32)
    for c in range(C_IN):
        for kh in range(K1):
            for kw in range(K1):
                j = (c * K1 + kh) * K1 + kw
                for oh in range(OH1):
                    for ow in range(OW1):
                        f = c * (H_IN * W_IN) + (oh + kh) * W_IN + (ow + kw)
                        E1[f, oh * OW1 + ow, j] = 1.0
    A1 = jnp.einsum('fpj,oj->fpo', E1,
                    w1.reshape(NUM_NODES, -1)).reshape(D0, D1)

    # Conv2: acts on conv1's (pos, chan)-flattened activation (length 768).
    E2 = np.zeros((D1, OH2 * OW2, NUM_NODES * K2 * K2), np.float32)
    for c in range(NUM_NODES):
        for kh in range(K2):
            for kw in range(K2):
                j = (c * K2 + kh) * K2 + kw
                for oh in range(OH2):
                    for ow in range(OW2):
                        q = ((oh + kh) * OW1 + (ow + kw)) * NUM_NODES + c
                        E2[q, oh * OW2 + ow, j] = 1.0
    A2 = jnp.einsum('qpj,oj->qpo', E2,
                    w2.reshape(NUM_NODES, -1)).reshape(D1, D2)

    # Linear(384,64): re-order w3 columns from PyTorch's channel-major
    # flatten (c*6 + s) to our position-major layout (s*64 + c).
    W3r = w3.reshape(NUM_NODES, NUM_NODES, OH2 * OW2)    # [o, c, s]
    W3r = W3r.transpose(2, 1, 0).reshape(D2, NUM_NODES)  # [(s,c), o]

    b1t = jnp.tile(b1, OH1 * OW1).reshape(1, D1)
    b2t = jnp.tile(b2, OH2 * OW2).reshape(1, D2)

    return (A1.astype(jnp.float32), b1t.astype(jnp.float32),
            A2.astype(jnp.float32), b2t.astype(jnp.float32),
            W3r.astype(jnp.float32), b3.reshape(1, NUM_NODES),
            w4.reshape(1, NUM_NODES), b4.reshape(1, 1))


# ------------------------------- forward -----------------------------------

def architecture2_forward(x, folded):
    A1, b1t, A2, b2t, W3r, b3r, w4r, b4r = folded
    N = x.shape[0]
    x_flat = x.reshape(N, D0)                    # metadata-only reshape

    bm = min(N, 128)                             # batch rows per grid block
    grid = (pl.cdiv(N, bm),)

    cost = pl.CostEstimate(
        flops=2 * N * (D0 * D1 + D1 * D2 + D2 * NUM_NODES + NUM_NODES),
        transcendentals=N,
        bytes_accessed=4 * (N * D0 + D0 * D1 + D1 + D1 * D2 + D2
                            + D2 * NUM_NODES + NUM_NODES + NUM_NODES + 1 + N))

    return pl.pallas_call(
        _fused_kernel,
        out_shape=jax.ShapeDtypeStruct((N, 1), jnp.float32),
        grid=grid,
        in_specs=[
            pl.BlockSpec((bm, D0), lambda i: (i, 0)),
            pl.BlockSpec((D0, D1), lambda i: (0, 0)),
            pl.BlockSpec((1, D1), lambda i: (0, 0)),
            pl.BlockSpec((D1, D2), lambda i: (0, 0)),
            pl.BlockSpec((1, D2), lambda i: (0, 0)),
            pl.BlockSpec((D2, NUM_NODES), lambda i: (0, 0)),
            pl.BlockSpec((1, NUM_NODES), lambda i: (0, 0)),
            pl.BlockSpec((1, NUM_NODES), lambda i: (0, 0)),
            pl.BlockSpec((1, 1), lambda i: (0, 0)),
        ],
        out_specs=pl.BlockSpec((bm, 1), lambda i: (i, 0)),
        compiler_params=pltpu.CompilerParams(
            dimension_semantics=("parallel",),
            vmem_limit_bytes=32 * 1024 * 1024),
        cost_estimate=cost,
    )(x_flat, A1, b1t, A2, b2t, W3r, b3r, w4r, b4r)


# ------------------------------ reference -----------------------------------

def reference_forward(x, params):
    """Pure-JAX reference matching the PyTorch module."""
    w1, b1, w2, b2, w3, b3, w4, b4 = params

    def conv(h, w, b):
        y = lax.conv_general_dilated(
            h, w, (1, 1), 'VALID',
            dimension_numbers=('NCHW', 'OIHW', 'NCHW'),
            precision=PRECISION)
        return y + b.reshape(1, -1, 1, 1)

    def lrelu(v):
        return jnp.where(v > 0, v, NEG_SLOPE * v)

    h = lrelu(conv(x, w1, b1))
    h = lrelu(conv(h, w2, b2))
    h = h.reshape(x.shape[0], -1)
    h = lrelu(jnp.dot(h, w3.T, precision=PRECISION) + b3)
    return jnp.tanh(jnp.dot(h, w4.T, precision=PRECISION) + b4)


# -------------------------------- main --------------------------------------

if __name__ == "__main__":
    key = jax.random.PRNGKey(0)
    ks = jax.random.split(key, 9)

    def uinit(k, shape, fan_in):
        bound = 1.0 / np.sqrt(fan_in)
        return jax.random.uniform(k, shape, jnp.float32, -bound, bound)

    # Parameter shapes implied by the module __init__ (NUM_NODES=64)
    w1 = uinit(ks[0], (NUM_NODES, C_IN, K1, K1), C_IN * K1 * K1)
    b1 = uinit(ks[1], (NUM_NODES,), C_IN * K1 * K1)
    w2 = uinit(ks[2], (NUM_NODES, NUM_NODES, K2, K2), NUM_NODES * K2 * K2)
    b2 = uinit(ks[3], (NUM_NODES,), NUM_NODES * K2 * K2)
    w3 = uinit(ks[4], (NUM_NODES, NUM_NODES * OH2 * OW2), NUM_NODES * OH2 * OW2)
    b3 = uinit(ks[5], (NUM_NODES,), NUM_NODES * OH2 * OW2)
    w4 = uinit(ks[6], (1, NUM_NODES), NUM_NODES)
    b4 = uinit(ks[7], (1,), NUM_NODES)
    params = (w1, b1, w2, b2, w3, b3, w4, b4)

    folded = fold_params(params)      # one-time folding, outside the forward

    # Input spatial size must be 6x7 so Flatten produces 64*2*3 features.
    x = jax.random.normal(ks[8], (2, C_IN, H_IN, W_IN), dtype=jnp.float32)

    fwd = jax.jit(architecture2_forward)
    out = jax.block_until_ready(fwd(x, folded))
    assert out.shape == (2, 1)

    ref = reference_forward(x, params)
    np.testing.assert_allclose(np.asarray(out), np.asarray(ref),
                               atol=1e-4, rtol=1e-4)
    print("KERNEL_OK")
</pallas_src>

<mosaic_0001>
module attributes {stable_mosaic.version = 11 : i64} {
  func.func @_fused_kernel(%arg0: i32, %arg1: memref<2x84xf32, #tpu.memory_space<vmem>>, %arg2: memref<84x768xf32, #tpu.memory_space<vmem>>, %arg3: memref<1x768xf32, #tpu.memory_space<vmem>>, %arg4: memref<768x384xf32, #tpu.memory_space<vmem>>, %arg5: memref<1x384xf32, #tpu.memory_space<vmem>>, %arg6: memref<384x64xf32, #tpu.memory_space<vmem>>, %arg7: memref<1x64xf32, #tpu.memory_space<vmem>>, %arg8: memref<1x64xf32, #tpu.memory_space<vmem>>, %arg9: memref<1x1xf32, #tpu.memory_space<vmem>>, %arg10: memref<2x1xf32, #tpu.memory_space<vmem>>) attributes {dimension_semantics = [#tpu.dimension_semantics<parallel>], iteration_bounds = array<i64: 1>, scalar_prefetch = 0 : i64, scratch_operands = 0 : i64, tpu.core_type = #tpu.core_type<tc>, window_params = [{transform_indices = @transform_0, window_bounds = array<i64: 2, 84>}, {pipeline_mode = #tpu.pipeline_mode<synchronous>, transform_indices = @transform_1, window_bounds = array<i64: 84, 768>}, {pipeline_mode = #tpu.pipeline_mode<synchronous>, transform_indices = @transform_2, window_bounds = array<i64: 1, 768>}, {pipeline_mode = #tpu.pipeline_mode<synchronous>, transform_indices = @transform_3, window_bounds = array<i64: 768, 384>}, {pipeline_mode = #tpu.pipeline_mode<synchronous>, transform_indices = @transform_4, window_bounds = array<i64: 1, 384>}, {pipeline_mode = #tpu.pipeline_mode<synchronous>, transform_indices = @transform_5, window_bounds = array<i64: 384, 64>}, {pipeline_mode = #tpu.pipeline_mode<synchronous>, transform_indices = @transform_6, window_bounds = array<i64: 1, 64>}, {pipeline_mode = #tpu.pipeline_mode<synchronous>, transform_indices = @transform_7, window_bounds = array<i64: 1, 64>}, {pipeline_mode = #tpu.pipeline_mode<synchronous>, transform_indices = @transform_8, window_bounds = array<i64: 1, 1>}, {transform_indices = @transform_9, window_bounds = array<i64: 2, 1>}]} {
    %c0 = arith.constant 0 : index
    %c0_0 = arith.constant 0 : index
    %0 = vector.load %arg1[%c0, %c0_0] : memref<2x84xf32, #tpu.memory_space<vmem>>, vector<2x84xf32>
    %c0_1 = arith.constant 0 : index
    %c0_2 = arith.constant 0 : index
    %1 = vector.load %arg2[%c0_1, %c0_2] : memref<84x768xf32, #tpu.memory_space<vmem>>, vector<84x768xf32>
    %cst = arith.constant dense<0.000000e+00> : vector<2x768xf32>
    %2 = tpu.matmul %0, %1, %cst {dimension_numbers = #tpu.dot_dimension_numbers<[1], [0], [0], [1], [0, 0, 1, 1], [], []>, precision = #tpu.contract_precision<fp32>} : vector<2x84xf32>, vector<84x768xf32>, vector<2x768xf32> -> vector<2x768xf32>
    %c0_3 = arith.constant 0 : index
    %c0_4 = arith.constant 0 : index
    %3 = vector.load %arg3[%c0_3, %c0_4] : memref<1x768xf32, #tpu.memory_space<vmem>>, vector<1x768xf32>
    %4 = vector.broadcast %3 : vector<1x768xf32> to vector<2x768xf32>
    %5 = arith.addf %2, %4 : vector<2x768xf32>
    %cst_5 = arith.constant 0.000000e+00 : f32
    %6 = vector.broadcast %cst_5 : f32 to vector<2x768xf32>
    %7 = arith.cmpf ogt, %5, %6 : vector<2x768xf32>
    %cst_6 = arith.constant 0.00999999977 : f32
    %8 = vector.broadcast %cst_6 : f32 to vector<2x768xf32>
    %9 = arith.mulf %8, %5 : vector<2x768xf32>
    %10 = arith.select %7, %5, %9 : vector<2x768xi1>, vector<2x768xf32>
    %c0_7 = arith.constant 0 : index
    %c0_8 = arith.constant 0 : index
    %11 = vector.load %arg4[%c0_7, %c0_8] : memref<768x384xf32, #tpu.memory_space<vmem>>, vector<768x384xf32>
    %cst_9 = arith.constant dense<0.000000e+00> : vector<2x384xf32>
    %12 = tpu.matmul %10, %11, %cst_9 {dimension_numbers = #tpu.dot_dimension_numbers<[1], [0], [0], [1], [0, 0, 1, 1], [], []>, precision = #tpu.contract_precision<fp32>} : vector<2x768xf32>, vector<768x384xf32>, vector<2x384xf32> -> vector<2x384xf32>
    %c0_10 = arith.constant 0 : index
    %c0_11 = arith.constant 0 : index
    %13 = vector.load %arg5[%c0_10, %c0_11] : memref<1x384xf32, #tpu.memory_space<vmem>>, vector<1x384xf32>
    %14 = vector.broadcast %13 : vector<1x384xf32> to vector<2x384xf32>
    %15 = arith.addf %12, %14 : vector<2x384xf32>
    %cst_12 = arith.constant 0.000000e+00 : f32
    %16 = vector.broadcast %cst_12 : f32 to vector<2x384xf32>
    %17 = arith.cmpf ogt, %15, %16 : vector<2x384xf32>
    %cst_13 = arith.constant 0.00999999977 : f32
    %18 = vector.broadcast %cst_13 : f32 to vector<2x384xf32>
    %19 = arith.mulf %18, %15 : vector<2x384xf32>
    %20 = arith.select %17, %15, %19 : vector<2x384xi1>, vector<2x384xf32>
    %c0_14 = arith.constant 0 : index
    %c0_15 = arith.constant 0 : index
    %21 = vector.load %arg6[%c0_14, %c0_15] : memref<384x64xf32, #tpu.memory_space<vmem>>, vector<384x64xf32>
    %cst_16 = arith.constant dense<0.000000e+00> : vector<2x64xf32>
    %22 = tpu.matmul %20, %21, %cst_16 {dimension_numbers = #tpu.dot_dimension_numbers<[1], [0], [0], [1], [0, 0, 1, 1], [], []>, precision = #tpu.contract_precision<fp32>} : vector<2x384xf32>, vector<384x64xf32>, vector<2x64xf32> -> vector<2x64xf32>
    %c0_17 = arith.constant 0 : index
    %c0_18 = arith.constant 0 : index
    %23 = vector.load %arg7[%c0_17, %c0_18] : memref<1x64xf32, #tpu.memory_space<vmem>>, vector<1x64xf32>
    %24 = vector.broadcast %23 : vector<1x64xf32> to vector<2x64xf32>
    %25 = arith.addf %22, %24 : vector<2x64xf32>
    %cst_19 = arith.constant 0.000000e+00 : f32
    %26 = vector.broadcast %cst_19 : f32 to vector<2x64xf32>
    %27 = arith.cmpf ogt, %25, %26 : vector<2x64xf32>
    %cst_20 = arith.constant 0.00999999977 : f32
    %28 = vector.broadcast %cst_20 : f32 to vector<2x64xf32>
    %29 = arith.mulf %28, %25 : vector<2x64xf32>
    %30 = arith.select %27, %25, %29 : vector<2x64xi1>, vector<2x64xf32>
    %c0_21 = arith.constant 0 : index
    %c0_22 = arith.constant 0 : index
    %31 = vector.load %arg8[%c0_21, %c0_22] : memref<1x64xf32, #tpu.memory_space<vmem>>, vector<1x64xf32>
    %32 = vector.broadcast %31 : vector<1x64xf32> to vector<2x64xf32>
    %33 = arith.mulf %30, %32 : vector<2x64xf32>
    %cst_23 = arith.constant dense<0.000000e+00> : vector<2xf32>
    %34 = vector.multi_reduction <add>, %33, %cst_23 [1] : vector<2x64xf32> to vector<2xf32>
    %35 = vector.shape_cast %34 : vector<2xf32> to vector<2x1xf32>
    %c0_24 = arith.constant 0 : index
    %c0_25 = arith.constant 0 : index
    %36 = vector.load %arg9[%c0_24, %c0_25] : memref<1x1xf32, #tpu.memory_space<vmem>>, vector<1x1xf32>
    %37 = vector.broadcast %36 : vector<1x1xf32> to vector<2x1xf32>
    %38 = arith.addf %35, %37 : vector<2x1xf32>
    %39 = math.tanh %38 : vector<2x1xf32>
    %c0_26 = arith.constant 0 : index
    %c0_27 = arith.constant 0 : index
    %40 = vector.load %arg10[%c0_26, %c0_27] : memref<2x1xf32, #tpu.memory_space<vmem>>, vector<2x1xf32>
    tpu.vector_store %arg10[%c0_26, %c0_27], %39 {strides = array<i32>} : memref<2x1xf32, #tpu.memory_space<vmem>>, vector<2x1xf32>,
    return
  }
  func.func @transform_0(%arg0: i32) -> (i32, i32) {
    %c0_i32 = arith.constant 0 : i32
    %c0_i32_0 = arith.constant 0 : i32
    return %arg0, %c0_i32 : i32, i32
  }
  func.func @transform_1(%arg0: i32) -> (i32, i32) {
    %c0_i32 = arith.constant 0 : i32
    %c0_i32_0 = arith.constant 0 : i32
    %c0_i32_1 = arith.constant 0 : i32
    return %c0_i32, %c0_i32_0 : i32, i32
  }
  func.func @transform_2(%arg0: i32) -> (i32, i32) {
    %c0_i32 = arith.constant 0 : i32
    %c0_i32_0 = arith.constant 0 : i32
    %c0_i32_1 = arith.constant 0 : i32
    return %c0_i32, %c0_i32_0 : i32, i32
  }
  func.func @transform_3(%arg0: i32) -> (i32, i32) {
    %c0_i32 = arith.constant 0 : i32
    %c0_i32_0 = arith.constant 0 : i32
    %c0_i32_1 = arith.constant 0 : i32
    return %c0_i32, %c0_i32_0 : i32, i32
  }
  func.func @transform_4(%arg0: i32) -> (i32, i32) {
    %c0_i32 = arith.constant 0 : i32
    %c0_i32_0 = arith.constant 0 : i32
    %c0_i32_1 = arith.constant 0 : i32
    return %c0_i32, %c0_i32_0 : i32, i32
  }
  func.func @transform_5(%arg0: i32) -> (i32, i32) {
    %c0_i32 = arith.constant 0 : i32
    %c0_i32_0 = arith.constant 0 : i32
    %c0_i32_1 = arith.constant 0 : i32
    return %c0_i32, %c0_i32_0 : i32, i32
  }
  func.func @transform_6(%arg0: i32) -> (i32, i32) {
    %c0_i32 = arith.constant 0 : i32
    %c0_i32_0 = arith.constant 0 : i32
    %c0_i32_1 = arith.constant 0 : i32
    return %c0_i32, %c0_i32_0 : i32, i32
  }
  func.func @transform_7(%arg0: i32) -> (i32, i32) {
    %c0_i32 = arith.constant 0 : i32
    %c0_i32_0 = arith.constant 0 : i32
    %c0_i32_1 = arith.constant 0 : i32
    return %c0_i32, %c0_i32_0 : i32, i32
  }
  func.func @transform_8(%arg0: i32) -> (i32, i32) {
    %c0_i32 = arith.constant 0 : i32
    %c0_i32_0 = arith.constant 0 : i32
    %c0_i32_1 = arith.constant 0 : i32
    return %c0_i32, %c0_i32_0 : i32, i32
  }
  func.func @transform_9(%arg0: i32) -> (i32, i32) {
    %c0_i32 = arith.constant 0 : i32
    %c0_i32_0 = arith.constant 0 : i32
    return %arg0, %c0_i32 : i32, i32
  }
}

</mosaic_0001>

<llo_original>
// kernel: architecture2_forward.1
$region0: #{architecture2_forward.1}
  #allocation0 [shape = 'u32[]', space=smem, size = 0x4, offset = 0x4, fixed_abs, tag = 'smem constant byte address 0x4 - core index']
  #allocation1 [shape = 'u32[144,128]{1,0:T(1,128)}', space=vmem, size = 0x12000, scoped, tag = 'internal scratch']
  #allocation2 [shape = 'f32[1,1]{1,0:T(1,128)S(1)}', space=vmem, size = 0x200, scoped, tag = 'scoped memory for architecture2_forward.1']
  %s0 = inlined_call_operand.vmem [shape: f32[2,84], index: 0, kind: input, shape index: {}]
  %s1 = inlined_call_operand.hbm [shape: f32[84,768], index: 1, kind: input, shape index: {}]
  %s2 = inlined_call_operand.hbm [shape: f32[1,768], index: 2, kind: input, shape index: {}]
  %s3 = inlined_call_operand.hbm [shape: f32[768,384], index: 3, kind: input, shape index: {}]
  %s4 = inlined_call_operand.hbm [shape: f32[1,384], index: 4, kind: input, shape index: {}]
  %s5 = inlined_call_operand.vmem [shape: f32[384,64], index: 5, kind: input, shape index: {}]
  %s6 = inlined_call_operand.hbm [shape: f32[1,64], index: 6, kind: input, shape index: {}]
  %s7 = inlined_call_operand.hbm [shape: f32[1,64], index: 7, kind: input, shape index: {}]
  %s8 = inlined_call_operand.<no memory space> [shape: f32[1,1], index: 8, kind: input, shape index: {}]
  %s9 = inlined_call_operand.vmem [shape: f32[2,1], index: 9, kind: output, shape index: {}]
  %s10 = sld [smem:[#allocation0]]
  $region70: #{architecture2_forward.1} parent=0
    _
  %s12 = ssub.s32 1, %s10
  %s13 = scalar_select 0, %s12, %s10
  %v14 = vstv %s8
  %15 = vst [vmem:[#allocation2] sm:$0x1] %v14
  $region1: #{architecture2_forward.1} parent=0
    #allocation3 [shape = 'u8[270336]{0}', space=vmem, size = 0x42000, scoped, tag = 'input window, operand 1, single buffered']
    #allocation4 [shape = 's32[1]{0}', space=sflag, size = 0x4, scoped, tag = 'scoped memory for architecture2_forward.1']
    #allocation5 [shape = 'u8[3072]{0}', space=vmem, size = 0xc00, scoped, tag = 'input window, operand 2, single buffered']
    #allocation6 [shape = 's32[1]{0}', space=sflag, size = 0x4, scoped, tag = 'scoped memory for architecture2_forward.1']
    #allocation7 [shape = 'u8[1179648]{0}', space=vmem, size = 0x120000, scoped, tag = 'input window, operand 3, single buffered']
    #allocation8 [shape = 'u8[1536]{0}', space=vmem, size = 0x800, scoped, tag = 'input window, operand 4, single buffered']
    #allocation9 [shape = 's32[1]{0}', space=sflag, size = 0x4, scoped, tag = 'scoped memory for architecture2_forward.1']
    #allocation10 [shape = 'u8[512]{0}', space=vmem, size = 0x400, scoped, tag = 'input window, operand 6, single buffered']
    #allocation11 [shape = 'u8[512]{0}', space=vmem, size = 0x400, scoped, tag = 'input window, operand 7, single buffered']
    #allocation12 [shape = 's32[1]{0}', space=sflag, size = 0x4, scoped, tag = 'scoped memory for architecture2_forward.1']
    %16 = vsyncpa [#allocation4], 0
    %17 = vsyncpa [#allocation6], 0
    %18 = vsyncpa [#allocation9], 0
    %19 = vsyncpa [#allocation12], 0
    // Predicated region
    $region2: #{architecture2_forward.1} parent=1 // pred_check
      _
    $region3: #{architecture2_forward.1} parent=1 // pred_check_branch
      %21 = sbr.rel (0) target = $region5
    $region4: #{architecture2_forward.1} parent=1 // pred_region
      _
    $region5: #{architecture2_forward.1} parent=1 // pred_fallthru
      _
    // Predicated region
    $region6: #{architecture2_forward.1} parent=1 // pred_check
      _
    $region7: #{architecture2_forward.1} parent=1 // pred_check_branch
      %23 = sbr.rel (0) target = $region9
    $region8: #{architecture2_forward.1} parent=1 // pred_region
      %s25 = ssub.s32 8448, 8448
      %26 = vsyncadd [#allocation4], %s25
      %s27 = sshll.u32 [#allocation3], 4
      %s28 = int_to_ptr.vmem [resolvable:$true] %s27
      %33 = dma.hbm_to_vmem [thread:$0]  %s1, 8448, %s28, [#allocation4], 768, 768, 48
    $region9: #{architecture2_forward.1} parent=1 // pred_fallthru
      _
    // Predicated region
    $region10: #{architecture2_forward.1} parent=1 // pred_check
      _
    $region11: #{architecture2_forward.1} parent=1 // pred_check_branch
      %35 = sbr.rel (0) target = $region13
    $region12: #{architecture2_forward.1} parent=1 // pred_region
      %s37 = ssub.s32 96, 96
      %38 = vsyncadd [#allocation6], %s37
      %s40 = sshll.u32 [#allocation5], 4
      %s41 = int_to_ptr.vmem [resolvable:$true] %s40
      %43 = dma.hbm_to_vmem [thread:$0]  %s2, 96, %s41, [#allocation6]
    $region13: #{architecture2_forward.1} parent=1 // pred_fallthru
      _
    // Predicated region
    $region14: #{architecture2_forward.1} parent=1 // pred_check
      _
    $region15: #{architecture2_forward.1} parent=1 // pred_check_branch
      %45 = sbr.rel (0) target = $region17
    $region16: #{architecture2_forward.1} parent=1 // pred_region
      %s47 = ssub.s32 36864, 36864
      %48 = vsyncadd [#allocation6], %s47
      %s49 = sshll.u32 [#allocation7], 4
      %s50 = int_to_ptr.vmem [resolvable:$true] %s49
      %55 = dma.hbm_to_vmem [thread:$0]  %s3, 36864, %s50, [#allocation6], 384, 384, 24
    $region17: #{architecture2_forward.1} parent=1 // pred_fallthru
      _
    // Predicated region
    $region18: #{architecture2_forward.1} parent=1 // pred_check
      _
    $region19: #{architecture2_forward.1} parent=1 // pred_check_branch
      %57 = sbr.rel (0) target = $region21
    $region20: #{architecture2_forward.1} parent=1 // pred_region
      %s59 = ssub.s32 48, 48
      %60 = vsyncadd [#allocation9], %s59
      %s62 = sshll.u32 [#allocation8], 4
      %s63 = int_to_ptr.vmem [resolvable:$true] %s62
      %65 = dma.hbm_to_vmem [thread:$0]  %s4, 48, %s63, [#allocation9]
    $region21: #{architecture2_forward.1} parent=1 // pred_fallthru
      _
    // Predicated region
    $region22: #{architecture2_forward.1} parent=1 // pred_check
      _
    $region23: #{architecture2_forward.1} parent=1 // pred_check_branch
      %67 = sbr.rel (0) target = $region25
    $region24: #{architecture2_forward.1} parent=1 // pred_region
      _
    $region25: #{architecture2_forward.1} parent=1 // pred_fallthru
      _
    // Predicated region
    $region26: #{architecture2_forward.1} parent=1 // pred_check
      _
    $region27: #{architecture2_forward.1} parent=1 // pred_check_branch
      %69 = sbr.rel (0) target = $region29
    $region28: #{architecture2_forward.1} parent=1 // pred_region
      %s71 = ssub.s32 16, 16
      %72 = vsyncadd [#allocation9], %s71
      %s74 = sshll.u32 [#allocation10], 4
      %s75 = int_to_ptr.vmem [resolvable:$true] %s74
      %77 = dma.hbm_to_vmem [thread:$0]  %s6, 16, %s75, [#allocation9]
    $region29: #{architecture2_forward.1} parent=1 // pred_fallthru
      _
    // Predicated region
    $region30: #{architecture2_forward.1} parent=1 // pred_check
      _
    $region31: #{architecture2_forward.1} parent=1 // pred_check_branch
      %79 = sbr.rel (0) target = $region33
    $region32: #{architecture2_forward.1} parent=1 // pred_region
      %s81 = ssub.s32 16, 16
      %82 = vsyncadd [#allocation12], %s81
      %s84 = sshll.u32 [#allocation11], 4
      %s85 = int_to_ptr.vmem [resolvable:$true] %s84
      %87 = dma.hbm_to_vmem [thread:$0]  %s7, 16, %s85, [#allocation12]
    $region33: #{architecture2_forward.1} parent=1 // pred_fallthru
      _
    // Predicated region
    $region34: #{architecture2_forward.1} parent=1 // pred_check
      _
    $region35: #{architecture2_forward.1} parent=1 // pred_check_branch
      %89 = sbr.rel (0) target = $region37
    $region36: #{architecture2_forward.1} parent=1 // pred_region
      _
    $region37: #{architecture2_forward.1} parent=1 // pred_fallthru
      _
    // Predicated region
    $region38: #{architecture2_forward.1} parent=1 // pred_check
      _
    $region39: #{architecture2_forward.1} parent=1 // pred_check_branch
      %91 = sbr.rel (0) target = $region41
    $region40: #{architecture2_forward.1} parent=1 // pred_region
      %92 = dma.done [#allocation4], 8448
    $region41: #{architecture2_forward.1} parent=1 // pred_fallthru
      _
    // Predicated region
    $region42: #{architecture2_forward.1} parent=1 // pred_check
      _
    $region43: #{architecture2_forward.1} parent=1 // pred_check_branch
      %94 = sbr.rel (0) target = $region45
    $region44: #{architecture2_forward.1} parent=1 // pred_region
      %95 = dma.done [#allocation6], 96
    $region45: #{architecture2_forward.1} parent=1 // pred_fallthru
      _
    // Predicated region
    $region46: #{architecture2_forward.1} parent=1 // pred_check
      _
    $region47: #{architecture2_forward.1} parent=1 // pred_check_branch
      %97 = sbr.rel (0) target = $region49
    $region48: #{architecture2_forward.1} parent=1 // pred_region
      %98 = dma.done [#allocation6], 36864
    $region49: #{architecture2_forward.1} parent=1 // pred_fallthru
      _
    // Predicated region
    $region50: #{architecture2_forward.1} parent=1 // pred_check
      _
    $region51: #{architecture2_forward.1} parent=1 // pred_check_branch
      %100 = sbr.rel (0) target = $region53
    $region52: #{architecture2_forward.1} parent=1 // pred_region
      %101 = dma.done [#allocation9], 48
    $region53: #{architecture2_forward.1} parent=1 // pred_fallthru
      _
    // Predicated region
    $region54: #{architecture2_forward.1} parent=1 // pred_check
      _
    $region55: #{architecture2_forward.1} parent=1 // pred_check_branch
      %103 = sbr.rel (0) target = $region57
    $region56: #{architecture2_forward.1} parent=1 // pred_region
      %104 = dma.done [#allocation9], 16
    $region57: #{architecture2_forward.1} parent=1 // pred_fallthru
      _
    // Predicated region
    $region58: #{architecture2_forward.1} parent=1 // pred_check
      _
    $region59: #{architecture2_forward.1} parent=1 // pred_check_branch
      %106 = sbr.rel (0) target = $region61
    $region60: #{architecture2_forward.1} parent=1 // pred_region
      %107 = dma.done [#allocation12], 16
    $region61: #{architecture2_forward.1} parent=1 // pred_fallthru
      _
    %v108 = vld [vmem:[%s0] sm:$0x3]
    %v109 = vld [vmem:[#allocation3] sm:$0xff]
    %v110 = vld [vmem:[#allocation3 + $0x8] sm:$0xff]
    %v111 = vld [vmem:[#allocation3 + $0x10] sm:$0xff]
    %v112 = vld [vmem:[#allocation3 + $0x18] sm:$0xff]
    %v113 = vld [vmem:[#allocation3 + $0x20] sm:$0xff]
    %v114 = vld [vmem:[#allocation3 + $0x28] sm:$0xff]
    %v115 = vld [vmem:[#allocation3 + $0x30] sm:$0xff]
    %v116 = vld [vmem:[#allocation3 + $0x38] sm:$0xff]
    %v117 = vld [vmem:[#allocation3 + $0x40] sm:$0xff]
    %v118 = vld [vmem:[#allocation3 + $0x48] sm:$0xff]
    %v119 = vld [vmem:[#allocation3 + $0x50] sm:$0xff]
    %v120 = vld [vmem:[#allocation3 + $0x58] sm:$0xff]
    %v121 = vld [vmem:[#allocation3 + $0x60] sm:$0xff]
    %v122 = vld [vmem:[#allocation3 + $0x68] sm:$0xff]
    %v123 = vld [vmem:[#allocation3 + $0x70] sm:$0xff]
    %v124 = vld [vmem:[#allocation3 + $0x78] sm:$0xff]
    %v125 = vld [vmem:[#allocation3 + $0x80] sm:$0xff]
    %v126 = vld [vmem:[#allocation3 + $0x88] sm:$0xff]
    %v127 = vld [vmem:[#allocation3 + $0x90] sm:$0xff]
    %v128 = vld [vmem:[#allocation3 + $0x98] sm:$0xff]
    %v129 = vld [vmem:[#allocation3 + $0xa0] sm:$0xff]
    %v130 = vld [vmem:[#allocation3 + $0xa8] sm:$0xff]
    %v131 = vld [vmem:[#allocation3 + $0xb0] sm:$0xff]
    %v132 = vld [vmem:[#allocation3 + $0xb8] sm:$0xff]
    %v133 = vld [vmem:[#allocation3 + $0xc0] sm:$0xff]
    %v134 = vld [vmem:[#allocation3 + $0xc8] sm:$0xff]
    %v135 = vld [vmem:[#allocation3 + $0xd0] sm:$0xff]
    %v136 = vld [vmem:[#allocation3 + $0xd8] sm:$0xff]
    %v137 = vld [vmem:[#allocation3 + $0xe0] sm:$0xff]
    %v138 = vld [vmem:[#allocation3 + $0xe8] sm:$0xff]
    %v139 = vld [vmem:[#allocation3 + $0xf0] sm:$0xff]
    %v140 = vld [vmem:[#allocation3 + $0xf8] sm:$0xff]
    %v141 = vld [vmem:[#allocation3 + $0x100] sm:$0xff]
    %v142 = vld [vmem:[#allocation3 + $0x108] sm:$0xff]
    %v143 = vld [vmem:[#allocation3 + $0x110] sm:$0xff]
    %v144 = vld [vmem:[#allocation3 + $0x118] sm:$0xff]
    %v145 = vld [vmem:[#allocation3 + $0x120] sm:$0xff]
    %v146 = vld [vmem:[#allocation3 + $0x128] sm:$0xff]
    %v147 = vld [vmem:[#allocation3 + $0x130] sm:$0xff]
    %v148 = vld [vmem:[#allocation3 + $0x138] sm:$0xff]
    %v149 = vld [vmem:[#allocation3 + $0x140] sm:$0xff]
    %v150 = vld [vmem:[#allocation3 + $0x148] sm:$0xff]
    %v151 = vld [vmem:[#allocation3 + $0x150] sm:$0xff]
    %v152 = vld [vmem:[#allocation3 + $0x158] sm:$0xff]
    %v153 = vld [vmem:[#allocation3 + $0x160] sm:$0xff]
    %v154 = vld [vmem:[#allocation3 + $0x168] sm:$0xff]
    %v155 = vld [vmem:[#allocation3 + $0x170] sm:$0xff]
    %v156 = vld [vmem:[#allocation3 + $0x178] sm:$0xff]
    %v157 = vld [vmem:[#allocation3 + $0x180] sm:$0xff]
    %v158 = vld [vmem:[#allocation3 + $0x188] sm:$0xff]
    %v159 = vld [vmem:[#allocation3 + $0x190] sm:$0xff]
    %v160 = vld [vmem:[#allocation3 + $0x198] sm:$0xff]
    %v161 = vld [vmem:[#allocation3 + $0x1a0] sm:$0xff]
    %v162 = vld [vmem:[#allocation3 + $0x1a8] sm:$0xff]
    %v163 = vld [vmem:[#allocation3 + $0x1b0] sm:$0xff]
    %v164 = vld [vmem:[#allocation3 + $0x1b8] sm:$0xff]
    %v165 = vld [vmem:[#allocation3 + $0x1c0] sm:$0xff]
    %v166 = vld [vmem:[#allocation3 + $0x1c8] sm:$0xff]
    %v167 = vld [vmem:[#allocation3 + $0x1d0] sm:$0xff]
    %v168 = vld [vmem:[#allocation3 + $0x1d8] sm:$0xff]
    %v169 = vld [vmem:[#allocation3 + $0x1e0] sm:$0xf]
    %v170 = vld [vmem:[#allocation3 + $0x1e8] sm:$0xf]
    %v171 = vld [vmem:[#allocation3 + $0x1f0] sm:$0xf]
    %v172 = vld [vmem:[#allocation3 + $0x1f8] sm:$0xf]
    %v173 = vld [vmem:[#allocation3 + $0x200] sm:$0xf]
    %v174 = vld [vmem:[#allocation3 + $0x208] sm:$0xf]
    %v175 = vld [vmem:[#allocation5] sm:$0x3f]
    %v177 = vlaneseq
    %v178 = vshrl.u32 %v177, 7
    %v179 = vsub.s32 0, %v178
    %v180 = vrot.slane %v175, %v179
    %v181 = vlaneseq
    %v182 = vshrl.u32 %v181, 7
    %v183 = vsub.s32 1, %v182
    %v184 = vrot.slane %v175, %v183
    %v185 = vlaneseq
    %v186 = vshrl.u32 %v185, 7
    %v187 = vsub.s32 2, %v186
    %v188 = vrot.slane %v175, %v187
    %v189 = vlaneseq
    %v190 = vshrl.u32 %v189, 7
    %v191 = vsub.s32 3, %v190
    %v192 = vrot.slane %v175, %v191
    %v193 = vlaneseq
    %v194 = vshrl.u32 %v193, 7
    %v195 = vsub.s32 4, %v194
    %v196 = vrot.slane %v175, %v195
    %v197 = vlaneseq
    %v198 = vshrl.u32 %v197, 7
    %v199 = vsub.s32 5, %v198
    %v200 = vrot.slane %v175, %v199
    %vm207 = vcmask 687104
    %v209 = vsel %vm207, %v108, 0
    %vm211 = vcmask 1043456
    %v213 = vsel %vm211, %v169, 0
    %v216 = vsel %vm211, %v170, 0
    %v219 = vsel %vm211, %v171, 0
    %v222 = vsel %vm211, %v172, 0
    %v225 = vsel %vm211, %v173, 0
    %v228 = vsel %vm211, %v174, 0
    %230 = vmatprep.subr.mxu0 0.0
    %231 = vmatpush1.msra.mxu0 0.0
    %232 = vmatprep.subr.mxu0 0.0
    %233 = vmatpush1.msra.mxu0 0.0
    %234 = vmatprep.subr.mxu0 0.0
    %235 = vmatpush1.msra.mxu0 0.0
    %236 = vmatprep.subr.mxu0 0.0
    %237 = vmatpush1.msra.mxu0 0.0
    %238 = vmatprep.subr.mxu0 0.0
    %239 = vmatpush1.msra.mxu0 0.0
    %v240 = vand.u32 %v216, 4294901760
    %241 = vmatprep.subr.mxu0 %v240
    %v242 = vand.u32 %v213, 4294901760
    %243 = vmatpush1.msra.mxu0 %v242
    %v244 = vand.u32 %v164, 4294901760
    %245 = vmatprep.subr.mxu0 %v244
    %v246 = vand.u32 %v163, 4294901760
    %247 = vmatpush1.msra.mxu0 %v246
    %v248 = vand.u32 %v158, 4294901760
    %249 = vmatprep.subr.mxu0 %v248
    %v250 = vand.u32 %v157, 4294901760
    %251 = vmatpush1.msra.mxu0 %v250
    %v252 = vand.u32 %v152, 4294901760
    %253 = vmatprep.subr.mxu0 %v252
    %v254 = vand.u32 %v151, 4294901760
    %255 = vmatpush1.msra.mxu0 %v254
    %v256 = vand.u32 %v146, 4294901760
    %257 = vmatprep.subr.mxu0 %v256
    %v258 = vand.u32 %v145, 4294901760
    %259 = vmatpush1.msra.mxu0 %v258
    %v260 = vand.u32 %v140, 4294901760
    %261 = vmatprep.subr.mxu0 %v260
    %v262 = vand.u32 %v139, 4294901760
    %263 = vmatpush1.msra.mxu0 %v262
    %v264 = vand.u32 %v134, 4294901760
    %265 = vmatprep.subr.mxu0 %v264
    %v266 = vand.u32 %v133, 4294901760
    %267 = vmatpush1.msra.mxu0 %v266
    %v268 = vand.u32 %v128, 4294901760
    %269 = vmatprep.subr.mxu0 %v268
    %v270 = vand.u32 %v127, 4294901760
    %271 = vmatpush1.msra.mxu0 %v270
    %v272 = vand.u32 %v122, 4294901760
    %273 = vmatprep.subr.mxu0 %v272
    %v274 = vand.u32 %v121, 4294901760
    %275 = vmatpush1.msra.mxu0 %v274
    %v276 = vand.u32 %v116, 4294901760
    %277 = vmatprep.subr.mxu0 %v276
    %v278 = vand.u32 %v115, 4294901760
    %279 = vmatpush1.msra.mxu0 %v278
    %v280 = vand.u32 %v110, 4294901760
    %281 = vmatprep.subr.mxu0 %v280
    %v282 = vand.u32 %v109, 4294901760
    %283 = vmatpush1.msra.mxu0 %v282
    %284 = vmatprep.subr.mxu0 0.0
    %285 = vmatpush2.msra.mxu0 0.0
    %286 = vmatprep.subr.mxu0 0.0
    %287 = vmatpush2.msra.mxu0 0.0
    %288 = vmatprep.subr.mxu0 0.0
    %289 = vmatpush2.msra.mxu0 0.0
    %290 = vmatprep.subr.mxu0 0.0
    %291 = vmatpush2.msra.mxu0 0.0
    %292 = vmatprep.subr.mxu0 0.0
    %293 = vmatpush2.msra.mxu0 0.0
    %294 = vmatprep.subr.mxu0 0.0
    %295 = vmatpush2.msra.mxu0 0.0
    %296 = vmatprep.subr.mxu0 0.0
    %297 = vmatpush2.msra.mxu0 0.0
    %298 = vmatprep.subr.mxu0 0.0
    %299 = vmatpush2.msra.mxu0 0.0
    %300 = vmatprep.subr.mxu0 0.0
    %301 = vmatpush2.msra.mxu0 0.0
    %302 = vmatprep.subr.mxu0 0.0
    %303 = vmatpush2.msra.mxu0 0.0
    %304 = vmatprep.subr.mxu0 0.0
    %305 = vmatpush2.msra.mxu0 0.0
    %306 = vmatprep.subr.mxu0 0.0
    %307 = vmatpush2.msra.mxu0 0.0
    %308 = vmatprep.subr.mxu0 0.0
    %309 = vmatpush2.msra.mxu0 0.0
    %310 = vmatprep.subr.mxu0 0.0
    %311 = vmatpush2.msra.mxu0 0.0
    %312 = vmatprep.subr.mxu0 0.0
    %313 = vmatpush2.msra.mxu0 0.0
    %314 = vmatprep.subr.mxu0 0.0
    %315 = vmatpush2.msra.mxu0 0.0
    %316 = vmatprep.mubr.f32.mxu0 0.0
    %v317 = vand.u32 %v209, 4294901760
    %v318 = vsub.f32 %v209, %v317
    %v319 = vand.u32 %v318, 4294901760
    %v320 = vsub.f32 %v318, %v319
    %v321 = vand.u32 %v320, 4294901760
    %322 = vmatmul.mubr.f32.gmra.mxu0 %v321
    %v323 = vpop.f32.mrf.mxu0
    %v324 = vadd.f32 %v180, %v323
    %v325 = vpop.f32.mrf.mxu0
    %v326 = vadd.f32 %v184, %v325
    %327 = vdwg.mxu0
    %328 = vmatprep.subr.mxu0 0.0
    %329 = vmatpush1.msra.mxu0 0.0
    %330 = vmatprep.subr.mxu0 0.0
    %331 = vmatpush1.msra.mxu0 0.0
    %332 = vmatprep.subr.mxu0 0.0
    %333 = vmatpush1.msra.mxu0 0.0
    %334 = vmatprep.subr.mxu0 0.0
    %335 = vmatpush1.msra.mxu0 0.0
    %336 = vmatprep.subr.mxu0 0.0
    %337 = vmatpush1.msra.mxu0 0.0
    %v338 = vand.u32 %v216, 4294901760
    %v339 = vsub.f32 %v216, %v338
    %v340 = vand.u32 %v339, 4294901760
    %v341 = vsub.f32 %v339, %v340
    %v342 = vand.u32 %v341, 4294901760
    %343 = vmatprep.subr.mxu0 %v342
    %v344 = vand.u32 %v213, 4294901760
    %v345 = vsub.f32 %v213, %v344
    %v346 = vand.u32 %v345, 4294901760
    %v347 = vsub.f32 %v345, %v346
    %v348 = vand.u32 %v347, 4294901760
    %349 = vmatpush1.msra.mxu0 %v348
    %v350 = vand.u32 %v164, 4294901760
    %v351 = vsub.f32 %v164, %v350
    %v352 = vand.u32 %v351, 4294901760
    %v353 = vsub.f32 %v351, %v352
    %v354 = vand.u32 %v353, 4294901760
    %355 = vmatprep.subr.mxu0 %v354
    %v356 = vand.u32 %v163, 4294901760
    %v357 = vsub.f32 %v163, %v356
    %v358 = vand.u32 %v357, 4294901760
    %v359 = vsub.f32 %v357, %v358
    %v360 = vand.u32 %v359, 4294901760
    %361 = vmatpush1.msra.mxu0 %v360
    %v362 = vand.u32 %v158, 4294901760
    %v363 = vsub.f32 %v158, %v362
    %v364 = vand.u32 %v363, 4294901760
    %v365 = vsub.f32 %v363, %v364
    %v366 = vand.u32 %v365, 4294901760
    %367 = vmatprep.subr.mxu0 %v366
    %v368 = vand.u32 %v157, 4294901760
    %v369 = vsub.f32 %v157, %v368
    %v370 = vand.u32 %v369, 4294901760
    %v371 = vsub.f32 %v369, %v370
    %v372 = vand.u32 %v371, 4294901760
    %373 = vmatpush1.msra.mxu0 %v372
    %v374 = vand.u32 %v152, 4294901760
    %v375 = vsub.f32 %v152, %v374
    %v376 = vand.u32 %v375, 4294901760
    %v377 = vsub.f32 %v375, %v376
    %v378 = vand.u32 %v377, 4294901760
    %379 = vmatprep.subr.mxu0 %v378
    %v380 = vand.u32 %v151, 4294901760
    %v381 = vsub.f32 %v151, %v380
    %v382 = vand.u32 %v381, 4294901760
    %v383 = vsub.f32 %v381, %v382
    %v384 = vand.u32 %v383, 4294901760
    %385 = vmatpush1.msra.mxu0 %v384
    %v386 = vand.u32 %v146, 4294901760
    %v387 = vsub.f32 %v146, %v386
    %v388 = vand.u32 %v387, 4294901760
    %v389 = vsub.f32 %v387, %v388
    %v390 = vand.u32 %v389, 4294901760
    %391 = vmatprep.subr.mxu0 %v390
    %v392 = vand.u32 %v145, 4294901760
    %v393 = vsub.f32 %v145, %v392
    %v394 = vand.u32 %v393, 4294901760
    %v395 = vsub.f32 %v393, %v394
    %v396 = vand.u32 %v395, 4294901760
    %397 = vmatpush1.msra.mxu0 %v396
    %v398 = vand.u32 %v140, 4294901760
    %v399 = vsub.f32 %v140, %v398
    %v400 = vand.u32 %v399, 4294901760
    %v401 = vsub.f32 %v399, %v400
    %v402 = vand.u32 %v401, 4294901760
    %403 = vmatprep.subr.mxu0 %v402
    %v404 = vand.u32 %v139, 4294901760
    %v405 = vsub.f32 %v139, %v404
    %v406 = vand.u32 %v405, 4294901760
    %v407 = vsub.f32 %v405, %v406
    %v408 = vand.u32 %v407, 4294901760
    %409 = vmatpush1.msra.mxu0 %v408
    %v410 = vand.u32 %v134, 4294901760
    %v411 = vsub.f32 %v134, %v410
    %v412 = vand.u32 %v411, 4294901760
    %v413 = vsub.f32 %v411, %v412
    %v414 = vand.u32 %v413, 4294901760
    %415 = vmatprep.subr.mxu0 %v414
    %v416 = vand.u32 %v133, 4294901760
    %v417 = vsub.f32 %v133, %v416
    %v418 = vand.u32 %v417, 4294901760
    %v419 = vsub.f32 %v417, %v418
    %v420 = vand.u32 %v419, 4294901760
    %421 = vmatpush1.msra.mxu0 %v420
    %v422 = vand.u32 %v128, 4294901760
    %v423 = vsub.f32 %v128, %v422
    %v424 = vand.u32 %v423, 4294901760
    %v425 = vsub.f32 %v423, %v424
    %v426 = vand.u32 %v425, 4294901760
    %427 = vmatprep.subr.mxu0 %v426
    %v428 = vand.u32 %v127, 4294901760
    %v429 = vsub.f32 %v127, %v428
    %v430 = vand.u32 %v429, 4294901760
    %v431 = vsub.f32 %v429, %v430
    %v432 = vand.u32 %v431, 4294901760
    %433 = vmatpush1.msra.mxu0 %v432
    %v434 = vand.u32 %v122, 4294901760
    %v435 = vsub.f32 %v122, %v434
    %v436 = vand.u32 %v435, 4294901760
    %v437 = vsub.f32 %v435, %v436
    %v438 = vand.u32 %v437, 4294901760
    %439 = vmatprep.subr.mxu0 %v438
    %v440 = vand.u32 %v121, 4294901760
    %v441 = vsub.f32 %v121, %v440
    %v442 = vand.u32 %v441, 4294901760
    %v443 = vsub.f32 %v441, %v442
    %v444 = vand.u32 %v443, 4294901760
    %445 = vmatpush1.msra.mxu0 %v444
    %v446 = vand.u32 %v116, 4294901760
    %v447 = vsub.f32 %v116, %v446
    %v448 = vand.u32 %v447, 4294901760
    %v449 = vsub.f32 %v447, %v448
    %v450 = vand.u32 %v449, 4294901760
    %451 = vmatprep.subr.mxu0 %v450
    %v452 = vand.u32 %v115, 4294901760
    %v453 = vsub.f32 %v115, %v452
    %v454 = vand.u32 %v453, 4294901760
    %v455 = vsub.f32 %v453, %v454
    %v456 = vand.u32 %v455, 4294901760
    %457 = vmatpush1.msra.mxu0 %v456
    %v458 = vand.u32 %v110, 4294901760
    %v459 = vsub.f32 %v110, %v458
    %v460 = vand.u32 %v459, 4294901760
    %v461 = vsub.f32 %v459, %v460
    %v462 = vand.u32 %v461, 4294901760
    %463 = vmatprep.subr.mxu0 %v462
    %v464 = vand.u32 %v109, 4294901760
    %v465 = vsub.f32 %v109, %v464
    %v466 = vand.u32 %v465, 4294901760
    %v467 = vsub.f32 %v465, %v466
    %v468 = vand.u32 %v467, 4294901760
    %469 = vmatpush1.msra.mxu0 %v468
    %470 = vmatprep.subr.mxu0 0.0
    %471 = vmatpush2.msra.mxu0 0.0
    %472 = vmatprep.subr.mxu0 0.0
    %473 = vmatpush2.msra.mxu0 0.0
    %474 = vmatprep.subr.mxu0 0.0
    %475 = vmatpush2.msra.mxu0 0.0
    %476 = vmatprep.subr.mxu0 0.0
    %477 = vmatpush2.msra.mxu0 0.0
    %478 = vmatprep.subr.mxu0 0.0
    %479 = vmatpush2.msra.mxu0 0.0
    %480 = vmatprep.subr.mxu0 0.0
    %481 = vmatpush2.msra.mxu0 0.0
    %482 = vmatprep.subr.mxu0 0.0
    %483 = vmatpush2.msra.mxu0 0.0
    %484 = vmatprep.subr.mxu0 0.0
    %485 = vmatpush2.msra.mxu0 0.0
    %486 = vmatprep.subr.mxu0 0.0
    %487 = vmatpush2.msra.mxu0 0.0
    %488 = vmatprep.subr.mxu0 0.0
    %489 = vmatpush2.msra.mxu0 0.0
    %490 = vmatprep.subr.mxu0 0.0
    %491 = vmatpush2.msra.mxu0 0.0
    %492 = vmatprep.subr.mxu0 0.0
    %493 = vmatpush2.msra.mxu0 0.0
    %494 = vmatprep.subr.mxu0 0.0
    %495 = vmatpush2.msra.mxu0 0.0
    %496 = vmatprep.subr.mxu0 0.0
    %497 = vmatpush2.msra.mxu0 0.0
    %498 = vmatprep.subr.mxu0 0.0
    %499 = vmatpush2.msra.mxu0 0.0
    %500 = vmatprep.subr.mxu0 0.0
    %501 = vmatpush2.msra.mxu0 0.0
    %502 = vmatprep.mubr.f32.mxu0 0.0
    %v503 = vand.u32 %v209, 4294901760
    %504 = vmatmul.mubr.f32.gmra.mxu0 %v503
    %v505 = vpop.f32.mrf.mxu0
    %v506 = vadd.f32 %v324, %v505
    %v507 = vpop.f32.mrf.mxu0
    %v508 = vadd.f32 %v326, %v507
    %509 = vdwg.mxu0
    %510 = vmatprep.subr.mxu0 0.0
    %511 = vmatpush1.msra.mxu0 0.0
    %512 = vmatprep.subr.mxu0 0.0
    %513 = vmatpush1.msra.mxu0 0.0
    %514 = vmatprep.subr.mxu0 0.0
    %515 = vmatpush1.msra.mxu0 0.0
    %516 = vmatprep.subr.mxu0 0.0
    %517 = vmatpush1.msra.mxu0 0.0
    %518 = vmatprep.subr.mxu0 0.0
    %519 = vmatpush1.msra.mxu0 0.0
    %v520 = vand.u32 %v216, 4294901760
    %v521 = vsub.f32 %v216, %v520
    %522 = vmatprep.subr.mxu0 %v521
    %v523 = vand.u32 %v213, 4294901760
    %v524 = vsub.f32 %v213, %v523
    %525 = vmatpush1.msra.mxu0 %v524
    %v526 = vand.u32 %v164, 4294901760
    %v527 = vsub.f32 %v164, %v526
    %528 = vmatprep.subr.mxu0 %v527
    %v529 = vand.u32 %v163, 4294901760
    %v530 = vsub.f32 %v163, %v529
    %531 = vmatpush1.msra.mxu0 %v530
    %v532 = vand.u32 %v158, 4294901760
    %v533 = vsub.f32 %v158, %v532
    %534 = vmatprep.subr.mxu0 %v533
    %v535 = vand.u32 %v157, 4294901760
    %v536 = vsub.f32 %v157, %v535
    %537 = vmatpush1.msra.mxu0 %v536
    %v538 = vand.u32 %v152, 4294901760
    %v539 = vsub.f32 %v152, %v538
    %540 = vmatprep.subr.mxu0 %v539
    %v541 = vand.u32 %v151, 4294901760
    %v542 = vsub.f32 %v151, %v541
    %543 = vmatpush1.msra.mxu0 %v542
    %v544 = vand.u32 %v146, 4294901760
    %v545 = vsub.f32 %v146, %v544
    %546 = vmatprep.subr.mxu0 %v545
    %v547 = vand.u32 %v145, 4294901760
    %v548 = vsub.f32 %v145, %v547
    %549 = vmatpush1.msra.mxu0 %v548
    %v550 = vand.u32 %v140, 4294901760
    %v551 = vsub.f32 %v140, %v550
    %552 = vmatprep.subr.mxu0 %v551
    %v553 = vand.u32 %v139, 4294901760
    %v554 = vsub.f32 %v139, %v553
    %555 = vmatpush1.msra.mxu0 %v554
    %v556 = vand.u32 %v134, 4294901760
    %v557 = vsub.f32 %v134, %v556
    %558 = vmatprep.subr.mxu0 %v557
    %v559 = vand.u32 %v133, 4294901760
    %v560 = vsub.f32 %v133, %v559
    %561 = vmatpush1.msra.mxu0 %v560
    %v562 = vand.u32 %v128, 4294901760
    %v563 = vsub.f32 %v128, %v562
    %564 = vmatprep.subr.mxu0 %v563
    %v565 = vand.u32 %v127, 4294901760
    %v566 = vsub.f32 %v127, %v565
    %567 = vmatpush1.msra.mxu0 %v566
    %v568 = vand.u32 %v122, 4294901760
    %v569 = vsub.f32 %v122, %v568
    %570 = vmatprep.subr.mxu0 %v569
    %v571 = vand.u32 %v121, 4294901760
    %v572 = vsub.f32 %v121, %v571
    %573 = vmatpush1.msra.mxu0 %v572
    %v574 = vand.u32 %v116, 4294901760
    %v575 = vsub.f32 %v116, %v574
    %576 = vmatprep.subr.mxu0 %v575
    %v577 = vand.u32 %v115, 4294901760
    %v578 = vsub.f32 %v115, %v577
    %579 = vmatpush1.msra.mxu0 %v578
    %v580 = vand.u32 %v110, 4294901760
    %v581 = vsub.f32 %v110, %v580
    %582 = vmatprep.subr.mxu0 %v581
    %v583 = vand.u32 %v109, 4294901760
    %v584 = vsub.f32 %v109, %v583
    %585 = vmatpush1.msra.mxu0 %v584
    %586 = vmatprep.subr.mxu0 0.0
    %587 = vmatpush2.msra.mxu0 0.0
    %588 = vmatprep.subr.mxu0 0.0
    %589 = vmatpush2.msra.mxu0 0.0
    %590 = vmatprep.subr.mxu0 0.0
    %591 = vmatpush2.msra.mxu0 0.0
    %592 = vmatprep.subr.mxu0 0.0
    %593 = vmatpush2.msra.mxu0 0.0
    %594 = vmatprep.subr.mxu0 0.0
    %595 = vmatpush2.msra.mxu0 0.0
    %596 = vmatprep.subr.mxu0 0.0
    %597 = vmatpush2.msra.mxu0 0.0
    %598 = vmatprep.subr.mxu0 0.0
    %599 = vmatpush2.msra.mxu0 0.0
    %600 = vmatprep.subr.mxu0 0.0
    %601 = vmatpush2.msra.mxu0 0.0
    %602 = vmatprep.subr.mxu0 0.0
    %603 = vmatpush2.msra.mxu0 0.0
    %604 = vmatprep.subr.mxu0 0.0
    %605 = vmatpush2.msra.mxu0 0.0
    %606 = vmatprep.subr.mxu0 0.0
    %607 = vmatpush2.msra.mxu0 0.0
    %608 = vmatprep.subr.mxu0 0.0
    %609 = vmatpush2.msra.mxu0 0.0
    %610 = vmatprep.subr.mxu0 0.0
    %611 = vmatpush2.msra.mxu0 0.0
    %612 = vmatprep.subr.mxu0 0.0
    %613 = vmatpush2.msra.mxu0 0.0
    %614 = vmatprep.subr.mxu0 0.0
    %615 = vmatpush2.msra.mxu0 0.0
    %616 = vmatprep.subr.mxu0 0.0
    %617 = vmatpush2.msra.mxu0 0.0
    %618 = vmatprep.mubr.f32.mxu0 0.0
    %v619 = vand.u32 %v209, 4294901760
    %v620 = vsub.f32 %v209, %v619
    %621 = vmatmul.mubr.f32.gmra.mxu0 %v620
    %v622 = vpop.f32.mrf.mxu0
    %v623 = vadd.f32 %v506, %v622
    %v624 = vpop.f32.mrf.mxu0
    %v625 = vadd.f32 %v508, %v624
    %626 = vdwg.mxu0
    %627 = vmatprep.subr.mxu0 0.0
    %628 = vmatpush1.msra.mxu0 0.0
    %629 = vmatprep.subr.mxu0 0.0
    %630 = vmatpush1.msra.mxu0 0.0
    %631 = vmatprep.subr.mxu0 0.0
    %632 = vmatpush1.msra.mxu0 0.0
    %633 = vmatprep.subr.mxu0 0.0
    %634 = vmatpush1.msra.mxu0 0.0
    %635 = vmatprep.subr.mxu0 0.0
    %636 = vmatpush1.msra.mxu0 0.0
    %v637 = vand.u32 %v216, 4294901760
    %638 = vmatprep.subr.mxu0 %v637
    %v639 = vand.u32 %v213, 4294901760
    %640 = vmatpush1.msra.mxu0 %v639
    %v641 = vand.u32 %v164, 4294901760
    %642 = vmatprep.subr.mxu0 %v641
    %v643 = vand.u32 %v163, 4294901760
    %644 = vmatpush1.msra.mxu0 %v643
    %v645 = vand.u32 %v158, 4294901760
    %646 = vmatprep.subr.mxu0 %v645
    %v647 = vand.u32 %v157, 4294901760
    %648 = vmatpush1.msra.mxu0 %v647
    %v649 = vand.u32 %v152, 4294901760
    %650 = vmatprep.subr.mxu0 %v649
    %v651 = vand.u32 %v151, 4294901760
    %652 = vmatpush1.msra.mxu0 %v651
    %v653 = vand.u32 %v146, 4294901760
    %654 = vmatprep.subr.mxu0 %v653
    %v655 = vand.u32 %v145, 4294901760
    %656 = vmatpush1.msra.mxu0 %v655
    %v657 = vand.u32 %v140, 4294901760
    %658 = vmatprep.subr.mxu0 %v657
    %v659 = vand.u32 %v139, 4294901760
    %660 = vmatpush1.msra.mxu0 %v659
    %v661 = vand.u32 %v134, 4294901760
    %662 = vmatprep.subr.mxu0 %v661
    %v663 = vand.u32 %v133, 4294901760
    %664 = vmatpush1.msra.mxu0 %v663
    %v665 = vand.u32 %v128, 4294901760
    %666 = vmatprep.subr.mxu0 %v665
    %v667 = vand.u32 %v127, 4294901760
    %668 = vmatpush1.msra.mxu0 %v667
    %v669 = vand.u32 %v122, 4294901760
    %670 = vmatprep.subr.mxu0 %v669
    %v671 = vand.u32 %v121, 4294901760
    %672 = vmatpush1.msra.mxu0 %v671
    %v673 = vand.u32 %v116, 4294901760
    %674 = vmatprep.subr.mxu0 %v673
    %v675 = vand.u32 %v115, 4294901760
    %676 = vmatpush1.msra.mxu0 %v675
    %v677 = vand.u32 %v110, 4294901760
    %678 = vmatprep.subr.mxu0 %v677
    %v679 = vand.u32 %v109, 4294901760
    %680 = vmatpush1.msra.mxu0 %v679
    %681 = vmatprep.subr.mxu0 0.0
    %682 = vmatpush2.msra.mxu0 0.0
    %683 = vmatprep.subr.mxu0 0.0
    %684 = vmatpush2.msra.mxu0 0.0
    %685 = vmatprep.subr.mxu0 0.0
    %686 = vmatpush2.msra.mxu0 0.0
    %687 = vmatprep.subr.mxu0 0.0
    %688 = vmatpush2.msra.mxu0 0.0
    %689 = vmatprep.subr.mxu0 0.0
    %690 = vmatpush2.msra.mxu0 0.0
    %691 = vmatprep.subr.mxu0 0.0
    %692 = vmatpush2.msra.mxu0 0.0
    %693 = vmatprep.subr.mxu0 0.0
    %694 = vmatpush2.msra.mxu0 0.0
    %695 = vmatprep.subr.mxu0 0.0
    %696 = vmatpush2.msra.mxu0 0.0
    %697 = vmatprep.subr.mxu0 0.0
    %698 = vmatpush2.msra.mxu0 0.0
    %699 = vmatprep.subr.mxu0 0.0
    %700 = vmatpush2.msra.mxu0 0.0
    %701 = vmatprep.subr.mxu0 0.0
    %702 = vmatpush2.msra.mxu0 0.0
    %703 = vmatprep.subr.mxu0 0.0
    %704 = vmatpush2.msra.mxu0 0.0
    %705 = vmatprep.subr.mxu0 0.0
    %706 = vmatpush2.msra.mxu0 0.0
    %707 = vmatprep.subr.mxu0 0.0
    %708 = vmatpush2.msra.mxu0 0.0
    %709 = vmatprep.subr.mxu0 0.0
    %710 = vmatpush2.msra.mxu0 0.0
    %711 = vmatprep.subr.mxu0 0.0
    %712 = vmatpush2.msra.mxu0 0.0
    %713 = vmatprep.mubr.f32.mxu0 0.0
    %v714 = vand.u32 %v209, 4294901760
    %v715 = vsub.f32 %v209, %v714
    %v716 = vand.u32 %v715, 4294901760
    %717 = vmatmul.mubr.f32.gmra.mxu0 %v716
    %v718 = vpop.f32.mrf.mxu0
    %v719 = vadd.f32 %v623, %v718
    %v720 = vpop.f32.mrf.mxu0
    %v721 = vadd.f32 %v625, %v720
    %722 = vdwg.mxu0
    %723 = vmatprep.subr.mxu0 0.0
    %724 = vmatpush1.msra.mxu0 0.0
    %725 = vmatprep.subr.mxu0 0.0
    %726 = vmatpush1.msra.mxu0 0.0
    %727 = vmatprep.subr.mxu0 0.0
    %728 = vmatpush1.msra.mxu0 0.0
    %729 = vmatprep.subr.mxu0 0.0
    %730 = vmatpush1.msra.mxu0 0.0
    %731 = vmatprep.subr.mxu0 0.0
    %732 = vmatpush1.msra.mxu0 0.0
    %v733 = vand.u32 %v216, 4294901760
    %v734 = vsub.f32 %v216, %v733
    %v735 = vand.u32 %v734, 4294901760
    %736 = vmatprep.subr.mxu0 %v735
    %v737 = vand.u32 %v213, 4294901760
    %v738 = vsub.f32 %v213, %v737
    %v739 = vand.u32 %v738, 4294901760
    %740 = vmatpush1.msra.mxu0 %v739
    %v741 = vand.u32 %v164, 4294901760
    %v742 = vsub.f32 %v164, %v741
    %v743 = vand.u32 %v742, 4294901760
    %744 = vmatprep.subr.mxu0 %v743
    %v745 = vand.u32 %v163, 4294901760
    %v746 = vsub.f32 %v163, %v745
    %v747 = vand.u32 %v746, 4294901760
    %748 = vmatpush1.msra.mxu0 %v747
    %v749 = vand.u32 %v158, 4294901760
    %v750 = vsub.f32 %v158, %v749
    %v751 = vand.u32 %v750, 4294901760
    %752 = vmatprep.subr.mxu0 %v751
    %v753 = vand.u32 %v157, 4294901760
    %v754 = vsub.f32 %v157, %v753
    %v755 = vand.u32 %v754, 4294901760
    %756 = vmatpush1.msra.mxu0 %v755
    %v757 = vand.u32 %v152, 4294901760
    %v758 = vsub.f32 %v152, %v757
    %v759 = vand.u32 %v758, 4294901760
    %760 = vmatprep.subr.mxu0 %v759
    %v761 = vand.u32 %v151, 4294901760
    %v762 = vsub.f32 %v151, %v761
    %v763 = vand.u32 %v762, 4294901760
    %764 = vmatpush1.msra.mxu0 %v763
    %v765 = vand.u32 %v146, 4294901760
    %v766 = vsub.f32 %v146, %v765
    %v767 = vand.u32 %v766, 4294901760
    %768 = vmatprep.subr.mxu0 %v767
    %v769 = vand.u32 %v145, 4294901760
    %v770 = vsub.f32 %v145, %v769
    %v771 = vand.u32 %v770, 4294901760
    %772 = vmatpush1.msra.mxu0 %v771
    %v773 = vand.u32 %v140, 4294901760
    %v774 = vsub.f32 %v140, %v773
    %v775 = vand.u32 %v774, 4294901760
    %776 = vmatprep.subr.mxu0 %v775
    %v777 = vand.u32 %v139, 4294901760
    %v778 = vsub.f32 %v139, %v777
    %v779 = vand.u32 %v778, 4294901760
    %780 = vmatpush1.msra.mxu0 %v779
    %v781 = vand.u32 %v134, 4294901760
    %v782 = vsub.f32 %v134, %v781
    %v783 = vand.u32 %v782, 4294901760
    %784 = vmatprep.subr.mxu0 %v783
    %v785 = vand.u32 %v133, 4294901760
    %v786 = vsub.f32 %v133, %v785
    %v787 = vand.u32 %v786, 4294901760
    %788 = vmatpush1.msra.mxu0 %v787
    %v789 = vand.u32 %v128, 4294901760
    %v790 = vsub.f32 %v128, %v789
    %v791 = vand.u32 %v790, 4294901760
    %792 = vmatprep.subr.mxu0 %v791
    %v793 = vand.u32 %v127, 4294901760
    %v794 = vsub.f32 %v127, %v793
    %v795 = vand.u32 %v794, 4294901760
    %796 = vmatpush1.msra.mxu0 %v795
    %v797 = vand.u32 %v122, 4294901760
    %v798 = vsub.f32 %v122, %v797
    %v799 = vand.u32 %v798, 4294901760
    %800 = vmatprep.subr.mxu0 %v799
    %v801 = vand.u32 %v121, 4294901760
    %v802 = vsub.f32 %v121, %v801
    %v803 = vand.u32 %v802, 4294901760
    %804 = vmatpush1.msra.mxu0 %v803
    %v805 = vand.u32 %v116, 4294901760
    %v806 = vsub.f32 %v116, %v805
    %v807 = vand.u32 %v806, 4294901760
    %808 = vmatprep.subr.mxu0 %v807
    %v809 = vand.u32 %v115, 4294901760
    %v810 = vsub.f32 %v115, %v809
    %v811 = vand.u32 %v810, 4294901760
    %812 = vmatpush1.msra.mxu0 %v811
    %v813 = vand.u32 %v110, 4294901760
    %v814 = vsub.f32 %v110, %v813
    %v815 = vand.u32 %v814, 4294901760
    %816 = vmatprep.subr.mxu0 %v815
    %v817 = vand.u32 %v109, 4294901760
    %v818 = vsub.f32 %v109, %v817
    %v819 = vand.u32 %v818, 4294901760
    %820 = vmatpush1.msra.mxu0 %v819
    %821 = vmatprep.subr.mxu0 0.0
    %822 = vmatpush2.msra.mxu0 0.0
    %823 = vmatprep.subr.mxu0 0.0
    %824 = vmatpush2.msra.mxu0 0.0
    %825 = vmatprep.subr.mxu0 0.0
    %826 = vmatpush2.msra.mxu0 0.0
    %827 = vmatprep.subr.mxu0 0.0
    %828 = vmatpush2.msra.mxu0 0.0
    %829 = vmatprep.subr.mxu0 0.0
    %830 = vmatpush2.msra.mxu0 0.0
    %831 = vmatprep.subr.mxu0 0.0
    %832 = vmatpush2.msra.mxu0 0.0
    %833 = vmatprep.subr.mxu0 0.0
    %834 = vmatpush2.msra.mxu0 0.0
    %835 = vmatprep.subr.mxu0 0.0
    %836 = vmatpush2.msra.mxu0 0.0
    %837 = vmatprep.subr.mxu0 0.0
    %838 = vmatpush2.msra.mxu0 0.0
    %839 = vmatprep.subr.mxu0 0.0
    %840 = vmatpush2.msra.mxu0 0.0
    %841 = vmatprep.subr.mxu0 0.0
    %842 = vmatpush2.msra.mxu0 0.0
    %843 = vmatprep.subr.mxu0 0.0
    %844 = vmatpush2.msra.mxu0 0.0
    %845 = vmatprep.subr.mxu0 0.0
    %846 = vmatpush2.msra.mxu0 0.0
    %847 = vmatprep.subr.mxu0 0.0
    %848 = vmatpush2.msra.mxu0 0.0
    %849 = vmatprep.subr.mxu0 0.0
    %850 = vmatpush2.msra.mxu0 0.0
    %851 = vmatprep.subr.mxu0 0.0
    %852 = vmatpush2.msra.mxu0 0.0
    %853 = vmatprep.mubr.f32.mxu0 0.0
    %v854 = vand.u32 %v209, 4294901760
    %855 = vmatmul.mubr.f32.gmra.mxu0 %v854
    %v856 = vpop.f32.mrf.mxu0
    %v857 = vadd.f32 %v719, %v856
    %v858 = vpop.f32.mrf.mxu0
    %v859 = vadd.f32 %v721, %v858
    %860 = vdwg.mxu0
    %861 = vmatprep.subr.mxu0 0.0
    %862 = vmatpush1.msra.mxu0 0.0
    %863 = vmatprep.subr.mxu0 0.0
    %864 = vmatpush1.msra.mxu0 0.0
    %865 = vmatprep.subr.mxu0 0.0
    %866 = vmatpush1.msra.mxu0 0.0
    %867 = vmatprep.subr.mxu0 0.0
    %868 = vmatpush1.msra.mxu0 0.0
    %869 = vmatprep.subr.mxu0 0.0
    %870 = vmatpush1.msra.mxu0 0.0
    %v871 = vand.u32 %v216, 4294901760
    %872 = vmatprep.subr.mxu0 %v871
    %v873 = vand.u32 %v213, 4294901760
    %874 = vmatpush1.msra.mxu0 %v873
    %v875 = vand.u32 %v164, 4294901760
    %876 = vmatprep.subr.mxu0 %v875
    %v877 = vand.u32 %v163, 4294901760
    %878 = vmatpush1.msra.mxu0 %v877
    %v879 = vand.u32 %v158, 4294901760
    %880 = vmatprep.subr.mxu0 %v879
    %v881 = vand.u32 %v157, 4294901760
    %882 = vmatpush1.msra.mxu0 %v881
    %v883 = vand.u32 %v152, 4294901760
    %884 = vmatprep.subr.mxu0 %v883
    %v885 = vand.u32 %v151, 4294901760
    %886 = vmatpush1.msra.mxu0 %v885
    %v887 = vand.u32 %v146, 4294901760
    %888 = vmatprep.subr.mxu0 %v887
    %v889 = vand.u32 %v145, 4294901760
    %890 = vmatpush1.msra.mxu0 %v889
    %v891 = vand.u32 %v140, 4294901760
    %892 = vmatprep.subr.mxu0 %v891
    %v893 = vand.u32 %v139, 4294901760
    %894 = vmatpush1.msra.mxu0 %v893
    %v895 = vand.u32 %v134, 4294901760
    %896 = vmatprep.subr.mxu0 %v895
    %v897 = vand.u32 %v133, 4294901760
    %898 = vmatpush1.msra.mxu0 %v897
    %v899 = vand.u32 %v128, 4294901760
    %900 = vmatprep.subr.mxu0 %v899
    %v901 = vand.u32 %v127, 4294901760
    %902 = vmatpush1.msra.mxu0 %v901
    %v903 = vand.u32 %v122, 4294901760
    %904 = vmatprep.subr.mxu0 %v903
    %v905 = vand.u32 %v121, 4294901760
    %906 = vmatpush1.msra.mxu0 %v905
    %v907 = vand.u32 %v116, 4294901760
    %908 = vmatprep.subr.mxu0 %v907
    %v909 = vand.u32 %v115, 4294901760
    %910 = vmatpush1.msra.mxu0 %v909
    %v911 = vand.u32 %v110, 4294901760
    %912 = vmatprep.subr.mxu0 %v911
    %v913 = vand.u32 %v109, 4294901760
    %914 = vmatpush1.msra.mxu0 %v913
    %915 = vmatprep.subr.mxu0 0.0
    %916 = vmatpush2.msra.mxu0 0.0
    %917 = vmatprep.subr.mxu0 0.0
    %918 = vmatpush2.msra.mxu0 0.0
    %919 = vmatprep.subr.mxu0 0.0
    %920 = vmatpush2.msra.mxu0 0.0
    %921 = vmatprep.subr.mxu0 0.0
    %922 = vmatpush2.msra.mxu0 0.0
    %923 = vmatprep.subr.mxu0 0.0
    %924 = vmatpush2.msra.mxu0 0.0
    %925 = vmatprep.subr.mxu0 0.0
    %926 = vmatpush2.msra.mxu0 0.0
    %927 = vmatprep.subr.mxu0 0.0
    %928 = vmatpush2.msra.mxu0 0.0
    %929 = vmatprep.subr.mxu0 0.0
    %930 = vmatpush2.msra.mxu0 0.0
    %931 = vmatprep.subr.mxu0 0.0
    %932 = vmatpush2.msra.mxu0 0.0
    %933 = vmatprep.subr.mxu0 0.0
    %934 = vmatpush2.msra.mxu0 0.0
    %935 = vmatprep.subr.mxu0 0.0
    %936 = vmatpush2.msra.mxu0 0.0
    %937 = vmatprep.subr.mxu0 0.0
    %938 = vmatpush2.msra.mxu0 0.0
    %939 = vmatprep.subr.mxu0 0.0
    %940 = vmatpush2.msra.mxu0 0.0
    %941 = vmatprep.subr.mxu0 0.0
    %942 = vmatpush2.msra.mxu0 0.0
    %943 = vmatprep.subr.mxu0 0.0
    %944 = vmatpush2.msra.mxu0 0.0
    %945 = vmatprep.subr.mxu0 0.0
    %946 = vmatpush2.msra.mxu0 0.0
    %947 = vmatprep.mubr.f32.mxu0 0.0
    %v948 = vand.u32 %v209, 4294901760
    %949 = vmatmul.mubr.f32.gmra.mxu0 %v948
    %v950 = vpop.f32.mrf.mxu0
    %v951 = vadd.f32 %v857, %v950
    %v952 = vpop.f32.mrf.mxu0
    %v953 = vadd.f32 %v859, %v952
    %954 = vdwg.mxu0
    %955 = vmatprep.subr.mxu0 0.0
    %956 = vmatpush1.msra.mxu0 0.0
    %957 = vmatprep.subr.mxu0 0.0
    %958 = vmatpush1.msra.mxu0 0.0
    %959 = vmatprep.subr.mxu0 0.0
    %960 = vmatpush1.msra.mxu0 0.0
    %961 = vmatprep.subr.mxu0 0.0
    %962 = vmatpush1.msra.mxu0 0.0
    %963 = vmatprep.subr.mxu0 0.0
    %964 = vmatpush1.msra.mxu0 0.0
    %v965 = vand.u32 %v222, 4294901760
    %966 = vmatprep.subr.mxu0 %v965
    %v967 = vand.u32 %v219, 4294901760
    %968 = vmatpush1.msra.mxu0 %v967
    %v969 = vand.u32 %v166, 4294901760
    %970 = vmatprep.subr.mxu0 %v969
    %v971 = vand.u32 %v165, 4294901760
    %972 = vmatpush1.msra.mxu0 %v971
    %v973 = vand.u32 %v160, 4294901760
    %974 = vmatprep.subr.mxu0 %v973
    %v975 = vand.u32 %v159, 4294901760
    %976 = vmatpush1.msra.mxu0 %v975
    %v977 = vand.u32 %v154, 4294901760
    %978 = vmatprep.subr.mxu0 %v977
    %v979 = vand.u32 %v153, 4294901760
    %980 = vmatpush1.msra.mxu0 %v979
    %v981 = vand.u32 %v148, 4294901760
    %982 = vmatprep.subr.mxu0 %v981
    %v983 = vand.u32 %v147, 4294901760
    %984 = vmatpush1.msra.mxu0 %v983
    %v985 = vand.u32 %v142, 4294901760
    %986 = vmatprep.subr.mxu0 %v985
    %v987 = vand.u32 %v141, 4294901760
    %988 = vmatpush1.msra.mxu0 %v987
    %v989 = vand.u32 %v136, 4294901760
    %990 = vmatprep.subr.mxu0 %v989
    %v991 = vand.u32 %v135, 4294901760
    %992 = vmatpush1.msra.mxu0 %v991
    %v993 = vand.u32 %v130, 4294901760
    %994 = vmatprep.subr.mxu0 %v993
    %v995 = vand.u32 %v129, 4294901760
    %996 = vmatpush1.msra.mxu0 %v995
    %v997 = vand.u32 %v124, 4294901760
    %998 = vmatprep.subr.mxu0 %v997
    %v999 = vand.u32 %v123, 4294901760
    %1000 = vmatpush1.msra.mxu0 %v999
    %v1001 = vand.u32 %v118, 4294901760
    %1002 = vmatprep.subr.mxu0 %v1001
    %v1003 = vand.u32 %v117, 4294901760
    %1004 = vmatpush1.msra.mxu0 %v1003
    %v1005 = vand.u32 %v112, 4294901760
    %1006 = vmatprep.subr.mxu0 %v1005
    %v1007 = vand.u32 %v111, 4294901760
    %1008 = vmatpush1.msra.mxu0 %v1007
    %1009 = vmatprep.subr.mxu0 0.0
    %1010 = vmatpush2.msra.mxu0 0.0
    %1011 = vmatprep.subr.mxu0 0.0
    %1012 = vmatpush2.msra.mxu0 0.0
    %1013 = vmatprep.subr.mxu0 0.0
    %1014 = vmatpush2.msra.mxu0 0.0
    %1015 = vmatprep.subr.mxu0 0.0
    %1016 = vmatpush2.msra.mxu0 0.0
    %1017 = vmatprep.subr.mxu0 0.0
    %1018 = vmatpush2.msra.mxu0 0.0
    %1019 = vmatprep.subr.mxu0 0.0
    %1020 = vmatpush2.msra.mxu0 0.0
    %1021 = vmatprep.subr.mxu0 0.0
    %1022 = vmatpush2.msra.mxu0 0.0
    %1023 = vmatprep.subr.mxu0 0.0
    %1024 = vmatpush2.msra.mxu0 0.0
    %1025 = vmatprep.subr.mxu0 0.0
    %1026 = vmatpush2.msra.mxu0 0.0
    %1027 = vmatprep.subr.mxu0 0.0
    %1028 = vmatpush2.msra.mxu0 0.0
    %1029 = vmatprep.subr.mxu0 0.0
    %1030 = vmatpush2.msra.mxu0 0.0
    %1031 = vmatprep.subr.mxu0 0.0
    %1032 = vmatpush2.msra.mxu0 0.0
    %1033 = vmatprep.subr.mxu0 0.0
    %1034 = vmatpush2.msra.mxu0 0.0
    %1035 = vmatprep.subr.mxu0 0.0
    %1036 = vmatpush2.msra.mxu0 0.0
    %1037 = vmatprep.subr.mxu0 0.0
    %1038 = vmatpush2.msra.mxu0 0.0
    %1039 = vmatprep.subr.mxu0 0.0
    %1040 = vmatpush2.msra.mxu0 0.0
    %1041 = vmatprep.mubr.f32.mxu0 0.0
    %v1042 = vand.u32 %v209, 4294901760
    %v1043 = vsub.f32 %v209, %v1042
    %v1044 = vand.u32 %v1043, 4294901760
    %v1045 = vsub.f32 %v1043, %v1044
    %v1046 = vand.u32 %v1045, 4294901760
    %1047 = vmatmul.mubr.f32.gmra.mxu0 %v1046
    %v1048 = vpop.f32.mrf.mxu0
    %v1049 = vadd.f32 %v188, %v1048
    %v1050 = vpop.f32.mrf.mxu0
    %v1051 = vadd.f32 %v192, %v1050
    %1052 = vdwg.mxu0
    %1053 = vmatprep.subr.mxu0 0.0
    %1054 = vmatpush1.msra.mxu0 0.0
    %1055 = vmatprep.subr.mxu0 0.0
    %1056 = vmatpush1.msra.mxu0 0.0
    %1057 = vmatprep.subr.mxu0 0.0
    %1058 = vmatpush1.msra.mxu0 0.0
    %1059 = vmatprep.subr.mxu0 0.0
    %1060 = vmatpush1.msra.mxu0 0.0
    %1061 = vmatprep.subr.mxu0 0.0
    %1062 = vmatpush1.msra.mxu0 0.0
    %v1063 = vand.u32 %v222, 4294901760
    %v1064 = vsub.f32 %v222, %v1063
    %v1065 = vand.u32 %v1064, 4294901760
    %v1066 = vsub.f32 %v1064, %v1065
    %v1067 = vand.u32 %v1066, 4294901760
    %1068 = vmatprep.subr.mxu0 %v1067
    %v1069 = vand.u32 %v219, 4294901760
    %v1070 = vsub.f32 %v219, %v1069
    %v1071 = vand.u32 %v1070, 4294901760
    %v1072 = vsub.f32 %v1070, %v1071
    %v1073 = vand.u32 %v1072, 4294901760
    %1074 = vmatpush1.msra.mxu0 %v1073
    %v1075 = vand.u32 %v166, 4294901760
    %v1076 = vsub.f32 %v166, %v1075
    %v1077 = vand.u32 %v1076, 4294901760
    %v1078 = vsub.f32 %v1076, %v1077
    %v1079 = vand.u32 %v1078, 4294901760
    %1080 = vmatprep.subr.mxu0 %v1079
    %v1081 = vand.u32 %v165, 4294901760
    %v1082 = vsub.f32 %v165, %v1081
    %v1083 = vand.u32 %v1082, 4294901760
    %v1084 = vsub.f32 %v1082, %v1083
    %v1085 = vand.u32 %v1084, 4294901760
    %1086 = vmatpush1.msra.mxu0 %v1085
    %v1087 = vand.u32 %v160, 4294901760
    %v1088 = vsub.f32 %v160, %v1087
    %v1089 = vand.u32 %v1088, 4294901760
    %v1090 = vsub.f32 %v1088, %v1089
    %v1091 = vand.u32 %v1090, 4294901760
    %1092 = vmatprep.subr.mxu0 %v1091
    %v1093 = vand.u32 %v159, 4294901760
    %v1094 = vsub.f32 %v159, %v1093
    %v1095 = vand.u32 %v1094, 4294901760
    %v1096 = vsub.f32 %v1094, %v1095
    %v1097 = vand.u32 %v1096, 4294901760
    %1098 = vmatpush1.msra.mxu0 %v1097
    %v1099 = vand.u32 %v154, 4294901760
    %v1100 = vsub.f32 %v154, %v1099
    %v1101 = vand.u32 %v1100, 4294901760
    %v1102 = vsub.f32 %v1100, %v1101
    %v1103 = vand.u32 %v1102, 4294901760
    %1104 = vmatprep.subr.mxu0 %v1103
    %v1105 = vand.u32 %v153, 4294901760
    %v1106 = vsub.f32 %v153, %v1105
    %v1107 = vand.u32 %v1106, 4294901760
    %v1108 = vsub.f32 %v1106, %v1107
    %v1109 = vand.u32 %v1108, 4294901760
    %1110 = vmatpush1.msra.mxu0 %v1109
    %v1111 = vand.u32 %v148, 4294901760
    %v1112 = vsub.f32 %v148, %v1111
    %v1113 = vand.u32 %v1112, 4294901760
    %v1114 = vsub.f32 %v1112, %v1113
    %v1115 = vand.u32 %v1114, 4294901760
    %1116 = vmatprep.subr.mxu0 %v1115
    %v1117 = vand.u32 %v147, 4294901760
    %v1118 = vsub.f32 %v147, %v1117
    %v1119 = vand.u32 %v1118, 4294901760
    %v1120 = vsub.f32 %v1118, %v1119
    %v1121 = vand.u32 %v1120, 4294901760
    %1122 = vmatpush1.msra.mxu0 %v1121
    %v1123 = vand.u32 %v142, 4294901760
    %v1124 = vsub.f32 %v142, %v1123
    %v1125 = vand.u32 %v1124, 4294901760
    %v1126 = vsub.f32 %v1124, %v1125
    %v1127 = vand.u32 %v1126, 4294901760
    %1128 = vmatprep.subr.mxu0 %v1127
    %v1129 = vand.u32 %v141, 4294901760
    %v1130 = vsub.f32 %v141, %v1129
    %v1131 = vand.u32 %v1130, 4294901760
    %v1132 = vsub.f32 %v1130, %v1131
    %v1133 = vand.u32 %v1132, 4294901760
    %1134 = vmatpush1.msra.mxu0 %v1133
    %v1135 = vand.u32 %v136, 4294901760
    %v1136 = vsub.f32 %v136, %v1135
    %v1137 = vand.u32 %v1136, 4294901760
    %v1138 = vsub.f32 %v1136, %v1137
    %v1139 = vand.u32 %v1138, 4294901760
    %1140 = vmatprep.subr.mxu0 %v1139
    %v1141 = vand.u32 %v135, 4294901760
    %v1142 = vsub.f32 %v135, %v1141
    %v1143 = vand.u32 %v1142, 4294901760
    %v1144 = vsub.f32 %v1142, %v1143
    %v1145 = vand.u32 %v1144, 4294901760
    %1146 = vmatpush1.msra.mxu0 %v1145
    %v1147 = vand.u32 %v130, 4294901760
    %v1148 = vsub.f32 %v130, %v1147
    %v1149 = vand.u32 %v1148, 4294901760
    %v1150 = vsub.f32 %v1148, %v1149
    %v1151 = vand.u32 %v1150, 4294901760
    %1152 = vmatprep.subr.mxu0 %v1151
    %v1153 = vand.u32 %v129, 4294901760
    %v1154 = vsub.f32 %v129, %v1153
    %v1155 = vand.u32 %v1154, 4294901760
    %v1156 = vsub.f32 %v1154, %v1155
    %v1157 = vand.u32 %v1156, 4294901760
    %1158 = vmatpush1.msra.mxu0 %v1157
    %v1159 = vand.u32 %v124, 4294901760
    %v1160 = vsub.f32 %v124, %v1159
    %v1161 = vand.u32 %v1160, 4294901760
    %v1162 = vsub.f32 %v1160, %v1161
    %v1163 = vand.u32 %v1162, 4294901760
    %1164 = vmatprep.subr.mxu0 %v1163
    %v1165 = vand.u32 %v123, 4294901760
    %v1166 = vsub.f32 %v123, %v1165
    %v1167 = vand.u32 %v1166, 4294901760
    %v1168 = vsub.f32 %v1166, %v1167
    %v1169 = vand.u32 %v1168, 4294901760
    %1170 = vmatpush1.msra.mxu0 %v1169
    %v1171 = vand.u32 %v118, 4294901760
    %v1172 = vsub.f32 %v118, %v1171
    %v1173 = vand.u32 %v1172, 4294901760
    %v1174 = vsub.f32 %v1172, %v1173
    %v1175 = vand.u32 %v1174, 4294901760
    %1176 = vmatprep.subr.mxu0 %v1175
    %v1177 = vand.u32 %v117, 4294901760
    %v1178 = vsub.f32 %v117, %v1177
    %v1179 = vand.u32 %v1178, 4294901760
    %v1180 = vsub.f32 %v1178, %v1179
    %v1181 = vand.u32 %v1180, 4294901760
    %1182 = vmatpush1.msra.mxu0 %v1181
    %v1183 = vand.u32 %v112, 4294901760
    %v1184 = vsub.f32 %v112, %v1183
    %v1185 = vand.u32 %v1184, 4294901760
    %v1186 = vsub.f32 %v1184, %v1185
    %v1187 = vand.u32 %v1186, 4294901760
    %1188 = vmatprep.subr.mxu0 %v1187
    %v1189 = vand.u32 %v111, 4294901760
    %v1190 = vsub.f32 %v111, %v1189
    %v1191 = vand.u32 %v1190, 4294901760
    %v1192 = vsub.f32 %v1190, %v1191
    %v1193 = vand.u32 %v1192, 4294901760
    %1194 = vmatpush1.msra.mxu0 %v1193
    %1195 = vmatprep.subr.mxu0 0.0
    %1196 = vmatpush2.msra.mxu0 0.0
    %1197 = vmatprep.subr.mxu0 0.0
    %1198 = vmatpush2.msra.mxu0 0.0
    %1199 = vmatprep.subr.mxu0 0.0
    %1200 = vmatpush2.msra.mxu0 0.0
    %1201 = vmatprep.subr.mxu0 0.0
    %1202 = vmatpush2.msra.mxu0 0.0
    %1203 = vmatprep.subr.mxu0 0.0
    %1204 = vmatpush2.msra.mxu0 0.0
    %1205 = vmatprep.subr.mxu0 0.0
    %1206 = vmatpush2.msra.mxu0 0.0
    %1207 = vmatprep.subr.mxu0 0.0
    %1208 = vmatpush2.msra.mxu0 0.0
    %1209 = vmatprep.subr.mxu0 0.0
    %1210 = vmatpush2.msra.mxu0 0.0
    %1211 = vmatprep.subr.mxu0 0.0
    %1212 = vmatpush2.msra.mxu0 0.0
    %1213 = vmatprep.subr.mxu0 0.0
    %1214 = vmatpush2.msra.mxu0 0.0
    %1215 = vmatprep.subr.mxu0 0.0
    %1216 = vmatpush2.msra.mxu0 0.0
    %1217 = vmatprep.subr.mxu0 0.0
    %1218 = vmatpush2.msra.mxu0 0.0
    %1219 = vmatprep.subr.mxu0 0.0
    %1220 = vmatpush2.msra.mxu0 0.0
    %1221 = vmatprep.subr.mxu0 0.0
    %1222 = vmatpush2.msra.mxu0 0.0
    %1223 = vmatprep.subr.mxu0 0.0
    %1224 = vmatpush2.msra.mxu0 0.0
    %1225 = vmatprep.subr.mxu0 0.0
    %1226 = vmatpush2.msra.mxu0 0.0
    %1227 = vmatprep.mubr.f32.mxu0 0.0
    %v1228 = vand.u32 %v209, 4294901760
    %1229 = vmatmul.mubr.f32.gmra.mxu0 %v1228
    %v1230 = vpop.f32.mrf.mxu0
    %v1231 = vadd.f32 %v1049, %v1230
    %v1232 = vpop.f32.mrf.mxu0
    %v1233 = vadd.f32 %v1051, %v1232
    %1234 = vdwg.mxu0
    %1235 = vmatprep.subr.mxu0 0.0
    %1236 = vmatpush1.msra.mxu0 0.0
    %1237 = vmatprep.subr.mxu0 0.0
    %1238 = vmatpush1.msra.mxu0 0.0
    %1239 = vmatprep.subr.mxu0 0.0
    %1240 = vmatpush1.msra.mxu0 0.0
    %1241 = vmatprep.subr.mxu0 0.0
    %1242 = vmatpush1.msra.mxu0 0.0
    %1243 = vmatprep.subr.mxu0 0.0
    %1244 = vmatpush1.msra.mxu0 0.0
    %v1245 = vand.u32 %v222, 4294901760
    %v1246 = vsub.f32 %v222, %v1245
    %1247 = vmatprep.subr.mxu0 %v1246
    %v1248 = vand.u32 %v219, 4294901760
    %v1249 = vsub.f32 %v219, %v1248
    %1250 = vmatpush1.msra.mxu0 %v1249
    %v1251 = vand.u32 %v166, 4294901760
    %v1252 = vsub.f32 %v166, %v1251
    %1253 = vmatprep.subr.mxu0 %v1252
    %v1254 = vand.u32 %v165, 4294901760
    %v1255 = vsub.f32 %v165, %v1254
    %1256 = vmatpush1.msra.mxu0 %v1255
    %v1257 = vand.u32 %v160, 4294901760
    %v1258 = vsub.f32 %v160, %v1257
    %1259 = vmatprep.subr.mxu0 %v1258
    %v1260 = vand.u32 %v159, 4294901760
    %v1261 = vsub.f32 %v159, %v1260
    %1262 = vmatpush1.msra.mxu0 %v1261
    %v1263 = vand.u32 %v154, 4294901760
    %v1264 = vsub.f32 %v154, %v1263
    %1265 = vmatprep.subr.mxu0 %v1264
    %v1266 = vand.u32 %v153, 4294901760
    %v1267 = vsub.f32 %v153, %v1266
    %1268 = vmatpush1.msra.mxu0 %v1267
    %v1269 = vand.u32 %v148, 4294901760
    %v1270 = vsub.f32 %v148, %v1269
    %1271 = vmatprep.subr.mxu0 %v1270
    %v1272 = vand.u32 %v147, 4294901760
    %v1273 = vsub.f32 %v147, %v1272
    %1274 = vmatpush1.msra.mxu0 %v1273
    %v1275 = vand.u32 %v142, 4294901760
    %v1276 = vsub.f32 %v142, %v1275
    %1277 = vmatprep.subr.mxu0 %v1276
    %v1278 = vand.u32 %v141, 4294901760
    %v1279 = vsub.f32 %v141, %v1278
    %1280 = vmatpush1.msra.mxu0 %v1279
    %v1281 = vand.u32 %v136, 4294901760
    %v1282 = vsub.f32 %v136, %v1281
    %1283 = vmatprep.subr.mxu0 %v1282
    %v1284 = vand.u32 %v135, 4294901760
    %v1285 = vsub.f32 %v135, %v1284
    %1286 = vmatpush1.msra.mxu0 %v1285
    %v1287 = vand.u32 %v130, 4294901760
    %v1288 = vsub.f32 %v130, %v1287
    %1289 = vmatprep.subr.mxu0 %v1288
    %v1290 = vand.u32 %v129, 4294901760
    %v1291 = vsub.f32 %v129, %v1290
    %1292 = vmatpush1.msra.mxu0 %v1291
    %v1293 = vand.u32 %v124, 4294901760
    %v1294 = vsub.f32 %v124, %v1293
    %1295 = vmatprep.subr.mxu0 %v1294
    %v1296 = vand.u32 %v123, 4294901760
    %v1297 = vsub.f32 %v123, %v1296
    %1298 = vmatpush1.msra.mxu0 %v1297
    %v1299 = vand.u32 %v118, 4294901760
    %v1300 = vsub.f32 %v118, %v1299
    %1301 = vmatprep.subr.mxu0 %v1300
    %v1302 = vand.u32 %v117, 4294901760
    %v1303 = vsub.f32 %v117, %v1302
    %1304 = vmatpush1.msra.mxu0 %v1303
    %v1305 = vand.u32 %v112, 4294901760
    %v1306 = vsub.f32 %v112, %v1305
    %1307 = vmatprep.subr.mxu0 %v1306
    %v1308 = vand.u32 %v111, 4294901760
    %v1309 = vsub.f32 %v111, %v1308
    %1310 = vmatpush1.msra.mxu0 %v1309
    %1311 = vmatprep.subr.mxu0 0.0
    %1312 = vmatpush2.msra.mxu0 0.0
    %1313 = vmatprep.subr.mxu0 0.0
    %1314 = vmatpush2.msra.mxu0 0.0
    %1315 = vmatprep.subr.mxu0 0.0
    %1316 = vmatpush2.msra.mxu0 0.0
    %1317 = vmatprep.subr.mxu0 0.0
    %1318 = vmatpush2.msra.mxu0 0.0
    %1319 = vmatprep.subr.mxu0 0.0
    %1320 = vmatpush2.msra.mxu0 0.0
    %1321 = vmatprep.subr.mxu0 0.0
    %1322 = vmatpush2.msra.mxu0 0.0
    %1323 = vmatprep.subr.mxu0 0.0
    %1324 = vmatpush2.msra.mxu0 0.0
    %1325 = vmatprep.subr.mxu0 0.0
    %1326 = vmatpush2.msra.mxu0 0.0
    %1327 = vmatprep.subr.mxu0 0.0
    %1328 = vmatpush2.msra.mxu0 0.0
    %1329 = vmatprep.subr.mxu0 0.0
    %1330 = vmatpush2.msra.mxu0 0.0
    %1331 = vmatprep.subr.mxu0 0.0
    %1332 = vmatpush2.msra.mxu0 0.0
    %1333 = vmatprep.subr.mxu0 0.0
    %1334 = vmatpush2.msra.mxu0 0.0
    %1335 = vmatprep.subr.mxu0 0.0
    %1336 = vmatpush2.msra.mxu0 0.0
    %1337 = vmatprep.subr.mxu0 0.0
    %1338 = vmatpush2.msra.mxu0 0.0
    %1339 = vmatprep.subr.mxu0 0.0
    %1340 = vmatpush2.msra.mxu0 0.0
    %1341 = vmatprep.subr.mxu0 0.0
    %1342 = vmatpush2.msra.mxu0 0.0
    %1343 = vmatprep.mubr.f32.mxu0 0.0
    %v1344 = vand.u32 %v209, 4294901760
    %v1345 = vsub.f32 %v209, %v1344
    %1346 = vmatmul.mubr.f32.gmra.mxu0 %v1345
    %v1347 = vpop.f32.mrf.mxu0
    %v1348 = vadd.f32 %v1231, %v1347
    %v1349 = vpop.f32.mrf.mxu0
    %v1350 = vadd.f32 %v1233, %v1349
    %1351 = vdwg.mxu0
    %1352 = vmatprep.subr.mxu0 0.0
    %1353 = vmatpush1.msra.mxu0 0.0
    %1354 = vmatprep.subr.mxu0 0.0
    %1355 = vmatpush1.msra.mxu0 0.0
    %1356 = vmatprep.subr.mxu0 0.0
    %1357 = vmatpush1.msra.mxu0 0.0
    %1358 = vmatprep.subr.mxu0 0.0
    %1359 = vmatpush1.msra.mxu0 0.0
    %1360 = vmatprep.subr.mxu0 0.0
    %1361 = vmatpush1.msra.mxu0 0.0
    %v1362 = vand.u32 %v222, 4294901760
    %1363 = vmatprep.subr.mxu0 %v1362
    %v1364 = vand.u32 %v219, 4294901760
    %1365 = vmatpush1.msra.mxu0 %v1364
    %v1366 = vand.u32 %v166, 4294901760
    %1367 = vmatprep.subr.mxu0 %v1366
    %v1368 = vand.u32 %v165, 4294901760
    %1369 = vmatpush1.msra.mxu0 %v1368
    %v1370 = vand.u32 %v160, 4294901760
    %1371 = vmatprep.subr.mxu0 %v1370
    %v1372 = vand.u32 %v159, 4294901760
    %1373 = vmatpush1.msra.mxu0 %v1372
    %v1374 = vand.u32 %v154, 4294901760
    %1375 = vmatprep.subr.mxu0 %v1374
    %v1376 = vand.u32 %v153, 4294901760
    %1377 = vmatpush1.msra.mxu0 %v1376
    %v1378 = vand.u32 %v148, 4294901760
    %1379 = vmatprep.subr.mxu0 %v1378
    %v1380 = vand.u32 %v147, 4294901760
    %1381 = vmatpush1.msra.mxu0 %v1380
    %v1382 = vand.u32 %v142, 4294901760
    %1383 = vmatprep.subr.mxu0 %v1382
    %v1384 = vand.u32 %v141, 4294901760
    %1385 = vmatpush1.msra.mxu0 %v1384
    %v1386 = vand.u32 %v136, 4294901760
    %1387 = vmatprep.subr.mxu0 %v1386
    %v1388 = vand.u32 %v135, 4294901760
    %1389 = vmatpush1.msra.mxu0 %v1388
    %v1390 = vand.u32 %v130, 4294901760
    %1391 = vmatprep.subr.mxu0 %v1390
    %v1392 = vand.u32 %v129, 4294901760
    %1393 = vmatpush1.msra.mxu0 %v1392
    %v1394 = vand.u32 %v124, 4294901760
    %1395 = vmatprep.subr.mxu0 %v1394
    %v1396 = vand.u32 %v123, 4294901760
    %1397 = vmatpush1.msra.mxu0 %v1396
    %v1398 = vand.u32 %v118, 4294901760
    %1399 = vmatprep.subr.mxu0 %v1398
    %v1400 = vand.u32 %v117, 4294901760
    %1401 = vmatpush1.msra.mxu0 %v1400
    %v1402 = vand.u32 %v112, 4294901760
    %1403 = vmatprep.subr.mxu0 %v1402
    %v1404 = vand.u32 %v111, 4294901760
    %1405 = vmatpush1.msra.mxu0 %v1404
    %1406 = vmatprep.subr.mxu0 0.0
    %1407 = vmatpush2.msra.mxu0 0.0
    %1408 = vmatprep.subr.mxu0 0.0
    %1409 = vmatpush2.msra.mxu0 0.0
    %1410 = vmatprep.subr.mxu0 0.0
    %1411 = vmatpush2.msra.mxu0 0.0
    %1412 = vmatprep.subr.mxu0 0.0
    %1413 = vmatpush2.msra.mxu0 0.0
    %1414 = vmatprep.subr.mxu0 0.0
    %1415 = vmatpush2.msra.mxu0 0.0
    %1416 = vmatprep.subr.mxu0 0.0
    %1417 = vmatpush2.msra.mxu0 0.0
    %1418 = vmatprep.subr.mxu0 0.0
    %1419 = vmatpush2.msra.mxu0 0.0
    %1420 = vmatprep.subr.mxu0 0.0
    %1421 = vmatpush2.msra.mxu0 0.0
    %1422 = vmatprep.subr.mxu0 0.0
    %1423 = vmatpush2.msra.mxu0 0.0
    %1424 = vmatprep.subr.mxu0 0.0
    %1425 = vmatpush2.msra.mxu0 0.0
    %1426 = vmatprep.subr.mxu0 0.0
    %1427 = vmatpush2.msra.mxu0 0.0
    %1428 = vmatprep.subr.mxu0 0.0
    %1429 = vmatpush2.msra.mxu0 0.0
    %1430 = vmatprep.subr.mxu0 0.0
    %1431 = vmatpush2.msra.mxu0 0.0
    %1432 = vmatprep.subr.mxu0 0.0
    %1433 = vmatpush2.msra.mxu0 0.0
    %1434 = vmatprep.subr.mxu0 0.0
    %1435 = vmatpush2.msra.mxu0 0.0
    %1436 = vmatprep.subr.mxu0 0.0
    %1437 = vmatpush2.msra.mxu0 0.0
    %1438 = vmatprep.mubr.f32.mxu0 0.0
    %v1439 = vand.u32 %v209, 4294901760
    %v1440 = vsub.f32 %v209, %v1439
    %v1441 = vand.u32 %v1440, 4294901760
    %1442 = vmatmul.mubr.f32.gmra.mxu0 %v1441
    %v1443 = vpop.f32.mrf.mxu0
    %v1444 = vadd.f32 %v1348, %v1443
    %v1445 = vpop.f32.mrf.mxu0
    %v1446 = vadd.f32 %v1350, %v1445
    %1447 = vdwg.mxu0
    %1448 = vmatprep.subr.mxu0 0.0
    %1449 = vmatpush1.msra.mxu0 0.0
    %1450 = vmatprep.subr.mxu0 0.0
    %1451 = vmatpush1.msra.mxu0 0.0
    %1452 = vmatprep.subr.mxu0 0.0
    %1453 = vmatpush1.msra.mxu0 0.0
    %1454 = vmatprep.subr.mxu0 0.0
    %1455 = vmatpush1.msra.mxu0 0.0
    %1456 = vmatprep.subr.mxu0 0.0
    %1457 = vmatpush1.msra.mxu0 0.0
    %v1458 = vand.u32 %v222, 4294901760
    %v1459 = vsub.f32 %v222, %v1458
    %v1460 = vand.u32 %v1459, 4294901760
    %1461 = vmatprep.subr.mxu0 %v1460
    %v1462 = vand.u32 %v219, 4294901760
    %v1463 = vsub.f32 %v219, %v1462
    %v1464 = vand.u32 %v1463, 4294901760
    %1465 = vmatpush1.msra.mxu0 %v1464
    %v1466 = vand.u32 %v166, 4294901760
    %v1467 = vsub.f32 %v166, %v1466
    %v1468 = vand.u32 %v1467, 4294901760
    %1469 = vmatprep.subr.mxu0 %v1468
    %v1470 = vand.u32 %v165, 4294901760
    %v1471 = vsub.f32 %v165, %v1470
    %v1472 = vand.u32 %v1471, 4294901760
    %1473 = vmatpush1.msra.mxu0 %v1472
    %v1474 = vand.u32 %v160, 4294901760
    %v1475 = vsub.f32 %v160, %v1474
    %v1476 = vand.u32 %v1475, 4294901760
    %1477 = vmatprep.subr.mxu0 %v1476
    %v1478 = vand.u32 %v159, 4294901760
    %v1479 = vsub.f32 %v159, %v1478
    %v1480 = vand.u32 %v1479, 4294901760
    %1481 = vmatpush1.msra.mxu0 %v1480
    %v1482 = vand.u32 %v154, 4294901760
    %v1483 = vsub.f32 %v154, %v1482
    %v1484 = vand.u32 %v1483, 4294901760
    %1485 = vmatprep.subr.mxu0 %v1484
    %v1486 = vand.u32 %v153, 4294901760
    %v1487 = vsub.f32 %v153, %v1486
    %v1488 = vand.u32 %v1487, 4294901760
    %1489 = vmatpush1.msra.mxu0 %v1488
    %v1490 = vand.u32 %v148, 4294901760
    %v1491 = vsub.f32 %v148, %v1490
    %v1492 = vand.u32 %v1491, 4294901760
    %1493 = vmatprep.subr.mxu0 %v1492
    %v1494 = vand.u32 %v147, 4294901760
    %v1495 = vsub.f32 %v147, %v1494
    %v1496 = vand.u32 %v1495, 4294901760
    %1497 = vmatpush1.msra.mxu0 %v1496
    %v1498 = vand.u32 %v142, 4294901760
    %v1499 = vsub.f32 %v142, %v1498
    %v1500 = vand.u32 %v1499, 4294901760
    %1501 = vmatprep.subr.mxu0 %v1500
    %v1502 = vand.u32 %v141, 4294901760
    %v1503 = vsub.f32 %v141, %v1502
    %v1504 = vand.u32 %v1503, 4294901760
    %1505 = vmatpush1.msra.mxu0 %v1504
    %v1506 = vand.u32 %v136, 4294901760
    %v1507 = vsub.f32 %v136, %v1506
    %v1508 = vand.u32 %v1507, 4294901760
    %1509 = vmatprep.subr.mxu0 %v1508
    %v1510 = vand.u32 %v135, 4294901760
    %v1511 = vsub.f32 %v135, %v1510
    %v1512 = vand.u32 %v1511, 4294901760
    %1513 = vmatpush1.msra.mxu0 %v1512
    %v1514 = vand.u32 %v130, 4294901760
    %v1515 = vsub.f32 %v130, %v1514
    %v1516 = vand.u32 %v1515, 4294901760
    %1517 = vmatprep.subr.mxu0 %v1516
    %v1518 = vand.u32 %v129, 4294901760
    %v1519 = vsub.f32 %v129, %v1518
    %v1520 = vand.u32 %v1519, 4294901760
    %1521 = vmatpush1.msra.mxu0 %v1520
    %v1522 = vand.u32 %v124, 4294901760
    %v1523 = vsub.f32 %v124, %v1522
    %v1524 = vand.u32 %v1523, 4294901760
    %1525 = vmatprep.subr.mxu0 %v1524
    %v1526 = vand.u32 %v123, 4294901760
    %v1527 = vsub.f32 %v123, %v1526
    %v1528 = vand.u32 %v1527, 4294901760
    %1529 = vmatpush1.msra.mxu0 %v1528
    %v1530 = vand.u32 %v118, 4294901760
    %v1531 = vsub.f32 %v118, %v1530
    %v1532 = vand.u32 %v1531, 4294901760
    %1533 = vmatprep.subr.mxu0 %v1532
    %v1534 = vand.u32 %v117, 4294901760
    %v1535 = vsub.f32 %v117, %v1534
    %v1536 = vand.u32 %v1535, 4294901760
    %1537 = vmatpush1.msra.mxu0 %v1536
    %v1538 = vand.u32 %v112, 4294901760
    %v1539 = vsub.f32 %v112, %v1538
    %v1540 = vand.u32 %v1539, 4294901760
    %1541 = vmatprep.subr.mxu0 %v1540
    %v1542 = vand.u32 %v111, 4294901760
    %v1543 = vsub.f32 %v111, %v1542
    %v1544 = vand.u32 %v1543, 4294901760
    %1545 = vmatpush1.msra.mxu0 %v1544
    %1546 = vmatprep.subr.mxu0 0.0
    %1547 = vmatpush2.msra.mxu0 0.0
    %1548 = vmatprep.subr.mxu0 0.0
    %1549 = vmatpush2.msra.mxu0 0.0
    %1550 = vmatprep.subr.mxu0 0.0
    %1551 = vmatpush2.msra.mxu0 0.0
    %1552 = vmatprep.subr.mxu0 0.0
    %1553 = vmatpush2.msra.mxu0 0.0
    %1554 = vmatprep.subr.mxu0 0.0
    %1555 = vmatpush2.msra.mxu0 0.0
    %1556 = vmatprep.subr.mxu0 0.0
    %1557 = vmatpush2.msra.mxu0 0.0
    %1558 = vmatprep.subr.mxu0 0.0
    %1559 = vmatpush2.msra.mxu0 0.0
    %1560 = vmatprep.subr.mxu0 0.0
    %1561 = vmatpush2.msra.mxu0 0.0
    %1562 = vmatprep.subr.mxu0 0.0
    %1563 = vmatpush2.msra.mxu0 0.0
    %1564 = vmatprep.subr.mxu0 0.0
    %1565 = vmatpush2.msra.mxu0 0.0
    %1566 = vmatprep.subr.mxu0 0.0
    %1567 = vmatpush2.msra.mxu0 0.0
    %1568 = vmatprep.subr.mxu0 0.0
    %1569 = vmatpush2.msra.mxu0 0.0
    %1570 = vmatprep.subr.mxu0 0.0
    %1571 = vmatpush2.msra.mxu0 0.0
    %1572 = vmatprep.subr.mxu0 0.0
    %1573 = vmatpush2.msra.mxu0 0.0
    %1574 = vmatprep.subr.mxu0 0.0
    %1575 = vmatpush2.msra.mxu0 0.0
    %1576 = vmatprep.subr.mxu0 0.0
    %1577 = vmatpush2.msra.mxu0 0.0
    %1578 = vmatprep.mubr.f32.mxu0 0.0
    %v1579 = vand.u32 %v209, 4294901760
    %1580 = vmatmul.mubr.f32.gmra.mxu0 %v1579
    %v1581 = vpop.f32.mrf.mxu0
    %v1582 = vadd.f32 %v1444, %v1581
    %v1583 = vpop.f32.mrf.mxu0
    %v1584 = vadd.f32 %v1446, %v1583
    %1585 = vdwg.mxu0
    %1586 = vmatprep.subr.mxu0 0.0
    %1587 = vmatpush1.msra.mxu0 0.0
    %1588 = vmatprep.subr.mxu0 0.0
    %1589 = vmatpush1.msra.mxu0 0.0
    %1590 = vmatprep.subr.mxu0 0.0
    %1591 = vmatpush1.msra.mxu0 0.0
    %1592 = vmatprep.subr.mxu0 0.0
    %1593 = vmatpush1.msra.mxu0 0.0
    %1594 = vmatprep.subr.mxu0 0.0
    %1595 = vmatpush1.msra.mxu0 0.0
    %v1596 = vand.u32 %v222, 4294901760
    %1597 = vmatprep.subr.mxu0 %v1596
    %v1598 = vand.u32 %v219, 4294901760
    %1599 = vmatpush1.msra.mxu0 %v1598
    %v1600 = vand.u32 %v166, 4294901760
    %1601 = vmatprep.subr.mxu0 %v1600
    %v1602 = vand.u32 %v165, 4294901760
    %1603 = vmatpush1.msra.mxu0 %v1602
    %v1604 = vand.u32 %v160, 4294901760
    %1605 = vmatprep.subr.mxu0 %v1604
    %v1606 = vand.u32 %v159, 4294901760
    %1607 = vmatpush1.msra.mxu0 %v1606
    %v1608 = vand.u32 %v154, 4294901760
    %1609 = vmatprep.subr.mxu0 %v1608
    %v1610 = vand.u32 %v153, 4294901760
    %1611 = vmatpush1.msra.mxu0 %v1610
    %v1612 = vand.u32 %v148, 4294901760
    %1613 = vmatprep.subr.mxu0 %v1612
    %v1614 = vand.u32 %v147, 4294901760
    %1615 = vmatpush1.msra.mxu0 %v1614
    %v1616 = vand.u32 %v142, 4294901760
    %1617 = vmatprep.subr.mxu0 %v1616
    %v1618 = vand.u32 %v141, 4294901760
    %1619 = vmatpush1.msra.mxu0 %v1618
    %v1620 = vand.u32 %v136, 4294901760
    %1621 = vmatprep.subr.mxu0 %v1620
    %v1622 = vand.u32 %v135, 4294901760
    %1623 = vmatpush1.msra.mxu0 %v1622
    %v1624 = vand.u32 %v130, 4294901760
    %1625 = vmatprep.subr.mxu0 %v1624
    %v1626 = vand.u32 %v129, 4294901760
    %1627 = vmatpush1.msra.mxu0 %v1626
    %v1628 = vand.u32 %v124, 4294901760
    %1629 = vmatprep.subr.mxu0 %v1628
    %v1630 = vand.u32 %v123, 4294901760
    %1631 = vmatpush1.msra.mxu0 %v1630
    %v1632 = vand.u32 %v118, 4294901760
    %1633 = vmatprep.subr.mxu0 %v1632
    %v1634 = vand.u32 %v117, 4294901760
    %1635 = vmatpush1.msra.mxu0 %v1634
    %v1636 = vand.u32 %v112, 4294901760
    %1637 = vmatprep.subr.mxu0 %v1636
    %v1638 = vand.u32 %v111, 4294901760
    %1639 = vmatpush1.msra.mxu0 %v1638
    %1640 = vmatprep.subr.mxu0 0.0
    %1641 = vmatpush2.msra.mxu0 0.0
    %1642 = vmatprep.subr.mxu0 0.0
    %1643 = vmatpush2.msra.mxu0 0.0
    %1644 = vmatprep.subr.mxu0 0.0
    %1645 = vmatpush2.msra.mxu0 0.0
    %1646 = vmatprep.subr.mxu0 0.0
    %1647 = vmatpush2.msra.mxu0 0.0
    %1648 = vmatprep.subr.mxu0 0.0
    %1649 = vmatpush2.msra.mxu0 0.0
    %1650 = vmatprep.subr.mxu0 0.0
    %1651 = vmatpush2.msra.mxu0 0.0
    %1652 = vmatprep.subr.mxu0 0.0
    %1653 = vmatpush2.msra.mxu0 0.0
    %1654 = vmatprep.subr.mxu0 0.0
    %1655 = vmatpush2.msra.mxu0 0.0
    %1656 = vmatprep.subr.mxu0 0.0
    %1657 = vmatpush2.msra.mxu0 0.0
    %1658 = vmatprep.subr.mxu0 0.0
    %1659 = vmatpush2.msra.mxu0 0.0
    %1660 = vmatprep.subr.mxu0 0.0
    %1661 = vmatpush2.msra.mxu0 0.0
    %1662 = vmatprep.subr.mxu0 0.0
    %1663 = vmatpush2.msra.mxu0 0.0
    %1664 = vmatprep.subr.mxu0 0.0
    %1665 = vmatpush2.msra.mxu0 0.0
    %1666 = vmatprep.subr.mxu0 0.0
    %1667 = vmatpush2.msra.mxu0 0.0
    %1668 = vmatprep.subr.mxu0 0.0
    %1669 = vmatpush2.msra.mxu0 0.0
    %1670 = vmatprep.subr.mxu0 0.0
    %1671 = vmatpush2.msra.mxu0 0.0
    %1672 = vmatprep.mubr.f32.mxu0 0.0
    %v1673 = vand.u32 %v209, 4294901760
    %1674 = vmatmul.mubr.f32.gmra.mxu0 %v1673
    %v1675 = vpop.f32.mrf.mxu0
    %v1676 = vadd.f32 %v1582, %v1675
    %v1677 = vpop.f32.mrf.mxu0
    %v1678 = vadd.f32 %v1584, %v1677
    %1679 = vdwg.mxu0
    %1680 = vmatprep.subr.mxu0 0.0
    %1681 = vmatpush1.msra.mxu0 0.0
    %1682 = vmatprep.subr.mxu0 0.0
    %1683 = vmatpush1.msra.mxu0 0.0
    %1684 = vmatprep.subr.mxu0 0.0
    %1685 = vmatpush1.msra.mxu0 0.0
    %1686 = vmatprep.subr.mxu0 0.0
    %1687 = vmatpush1.msra.mxu0 0.0
    %1688 = vmatprep.subr.mxu0 0.0
    %1689 = vmatpush1.msra.mxu0 0.0
    %v1690 = vand.u32 %v228, 4294901760
    %1691 = vmatprep.subr.mxu0 %v1690
    %v1692 = vand.u32 %v225, 4294901760
    %1693 = vmatpush1.msra.mxu0 %v1692
    %v1694 = vand.u32 %v168, 4294901760
    %1695 = vmatprep.subr.mxu0 %v1694
    %v1696 = vand.u32 %v167, 4294901760
    %1697 = vmatpush1.msra.mxu0 %v1696
    %v1698 = vand.u32 %v162, 4294901760
    %1699 = vmatprep.subr.mxu0 %v1698
    %v1700 = vand.u32 %v161, 4294901760
    %1701 = vmatpush1.msra.mxu0 %v1700
    %v1702 = vand.u32 %v156, 4294901760
    %1703 = vmatprep.subr.mxu0 %v1702
    %v1704 = vand.u32 %v155, 4294901760
    %1705 = vmatpush1.msra.mxu0 %v1704
    %v1706 = vand.u32 %v150, 4294901760
    %1707 = vmatprep.subr.mxu0 %v1706
    %v1708 = vand.u32 %v149, 4294901760
    %1709 = vmatpush1.msra.mxu0 %v1708
    %v1710 = vand.u32 %v144, 4294901760
    %1711 = vmatprep.subr.mxu0 %v1710
    %v1712 = vand.u32 %v143, 4294901760
    %1713 = vmatpush1.msra.mxu0 %v1712
    %v1714 = vand.u32 %v138, 4294901760
    %1715 = vmatprep.subr.mxu0 %v1714
    %v1716 = vand.u32 %v137, 4294901760
    %1717 = vmatpush1.msra.mxu0 %v1716
    %v1718 = vand.u32 %v132, 4294901760
    %1719 = vmatprep.subr.mxu0 %v1718
    %v1720 = vand.u32 %v131, 4294901760
    %1721 = vmatpush1.msra.mxu0 %v1720
    %v1722 = vand.u32 %v126, 4294901760
    %1723 = vmatprep.subr.mxu0 %v1722
    %v1724 = vand.u32 %v125, 4294901760
    %1725 = vmatpush1.msra.mxu0 %v1724
    %v1726 = vand.u32 %v120, 4294901760
    %1727 = vmatprep.subr.mxu0 %v1726
    %v1728 = vand.u32 %v119, 4294901760
    %1729 = vmatpush1.msra.mxu0 %v1728
    %v1730 = vand.u32 %v114, 4294901760
    %1731 = vmatprep.subr.mxu0 %v1730
    %v1732 = vand.u32 %v113, 4294901760
    %1733 = vmatpush1.msra.mxu0 %v1732
    %1734 = vmatprep.subr.mxu0 0.0
    %1735 = vmatpush2.msra.mxu0 0.0
    %1736 = vmatprep.subr.mxu0 0.0
    %1737 = vmatpush2.msra.mxu0 0.0
    %1738 = vmatprep.subr.mxu0 0.0
    %1739 = vmatpush2.msra.mxu0 0.0
    %1740 = vmatprep.subr.mxu0 0.0
    %1741 = vmatpush2.msra.mxu0 0.0
    %1742 = vmatprep.subr.mxu0 0.0
    %1743 = vmatpush2.msra.mxu0 0.0
    %1744 = vmatprep.subr.mxu0 0.0
    %1745 = vmatpush2.msra.mxu0 0.0
    %1746 = vmatprep.subr.mxu0 0.0
    %1747 = vmatpush2.msra.mxu0 0.0
    %1748 = vmatprep.subr.mxu0 0.0
    %1749 = vmatpush2.msra.mxu0 0.0
    %1750 = vmatprep.subr.mxu0 0.0
    %1751 = vmatpush2.msra.mxu0 0.0
    %1752 = vmatprep.subr.mxu0 0.0
    %1753 = vmatpush2.msra.mxu0 0.0
    %1754 = vmatprep.subr.mxu0 0.0
    %1755 = vmatpush2.msra.mxu0 0.0
    %1756 = vmatprep.subr.mxu0 0.0
    %1757 = vmatpush2.msra.mxu0 0.0
    %1758 = vmatprep.subr.mxu0 0.0
    %1759 = vmatpush2.msra.mxu0 0.0
    %1760 = vmatprep.subr.mxu0 0.0
    %1761 = vmatpush2.msra.mxu0 0.0
    %1762 = vmatprep.subr.mxu0 0.0
    %1763 = vmatpush2.msra.mxu0 0.0
    %1764 = vmatprep.subr.mxu0 0.0
    %1765 = vmatpush2.msra.mxu0 0.0
    %1766 = vmatprep.mubr.f32.mxu0 0.0
    %v1767 = vand.u32 %v209, 4294901760
    %v1768 = vsub.f32 %v209, %v1767
    %v1769 = vand.u32 %v1768, 4294901760
    %v1770 = vsub.f32 %v1768, %v1769
    %v1771 = vand.u32 %v1770, 4294901760
    %1772 = vmatmul.mubr.f32.gmra.mxu0 %v1771
    %v1773 = vpop.f32.mrf.mxu0
    %v1774 = vadd.f32 %v196, %v1773
    %v1775 = vpop.f32.mrf.mxu0
    %v1776 = vadd.f32 %v200, %v1775
    %1777 = vdwg.mxu0
    %1778 = vmatprep.subr.mxu0 0.0
    %1779 = vmatpush1.msra.mxu0 0.0
    %1780 = vmatprep.subr.mxu0 0.0
    %1781 = vmatpush1.msra.mxu0 0.0
    %1782 = vmatprep.subr.mxu0 0.0
    %1783 = vmatpush1.msra.mxu0 0.0
    %1784 = vmatprep.subr.mxu0 0.0
    %1785 = vmatpush1.msra.mxu0 0.0
    %1786 = vmatprep.subr.mxu0 0.0
    %1787 = vmatpush1.msra.mxu0 0.0
    %v1788 = vand.u32 %v228, 4294901760
    %v1789 = vsub.f32 %v228, %v1788
    %v1790 = vand.u32 %v1789, 4294901760
    %v1791 = vsub.f32 %v1789, %v1790
    %v1792 = vand.u32 %v1791, 4294901760
    %1793 = vmatprep.subr.mxu0 %v1792
    %v1794 = vand.u32 %v225, 4294901760
    %v1795 = vsub.f32 %v225, %v1794
    %v1796 = vand.u32 %v1795, 4294901760
    %v1797 = vsub.f32 %v1795, %v1796
    %v1798 = vand.u32 %v1797, 4294901760
    %1799 = vmatpush1.msra.mxu0 %v1798
    %v1800 = vand.u32 %v168, 4294901760
    %v1801 = vsub.f32 %v168, %v1800
    %v1802 = vand.u32 %v1801, 4294901760
    %v1803 = vsub.f32 %v1801, %v1802
    %v1804 = vand.u32 %v1803, 4294901760
    %1805 = vmatprep.subr.mxu0 %v1804
    %v1806 = vand.u32 %v167, 4294901760
    %v1807 = vsub.f32 %v167, %v1806
    %v1808 = vand.u32 %v1807, 4294901760
    %v1809 = vsub.f32 %v1807, %v1808
    %v1810 = vand.u32 %v1809, 4294901760
    %1811 = vmatpush1.msra.mxu0 %v1810
    %v1812 = vand.u32 %v162, 4294901760
    %v1813 = vsub.f32 %v162, %v1812
    %v1814 = vand.u32 %v1813, 4294901760
    %v1815 = vsub.f32 %v1813, %v1814
    %v1816 = vand.u32 %v1815, 4294901760
    %1817 = vmatprep.subr.mxu0 %v1816
    %v1818 = vand.u32 %v161, 4294901760
    %v1819 = vsub.f32 %v161, %v1818
    %v1820 = vand.u32 %v1819, 4294901760
    %v1821 = vsub.f32 %v1819, %v1820
    %v1822 = vand.u32 %v1821, 4294901760
    %1823 = vmatpush1.msra.mxu0 %v1822
    %v1824 = vand.u32 %v156, 4294901760
    %v1825 = vsub.f32 %v156, %v1824
    %v1826 = vand.u32 %v1825, 4294901760
    %v1827 = vsub.f32 %v1825, %v1826
    %v1828 = vand.u32 %v1827, 4294901760
    %1829 = vmatprep.subr.mxu0 %v1828
    %v1830 = vand.u32 %v155, 4294901760
    %v1831 = vsub.f32 %v155, %v1830
    %v1832 = vand.u32 %v1831, 4294901760
    %v1833 = vsub.f32 %v1831, %v1832
    %v1834 = vand.u32 %v1833, 4294901760
    %1835 = vmatpush1.msra.mxu0 %v1834
    %v1836 = vand.u32 %v150, 4294901760
    %v1837 = vsub.f32 %v150, %v1836
    %v1838 = vand.u32 %v1837, 4294901760
    %v1839 = vsub.f32 %v1837, %v1838
    %v1840 = vand.u32 %v1839, 4294901760
    %1841 = vmatprep.subr.mxu0 %v1840
    %v1842 = vand.u32 %v149, 4294901760
    %v1843 = vsub.f32 %v149, %v1842
    %v1844 = vand.u32 %v1843, 4294901760
    %v1845 = vsub.f32 %v1843, %v1844
    %v1846 = vand.u32 %v1845, 4294901760
    %1847 = vmatpush1.msra.mxu0 %v1846
    %v1848 = vand.u32 %v144, 4294901760
    %v1849 = vsub.f32 %v144, %v1848
    %v1850 = vand.u32 %v1849, 4294901760
    %v1851 = vsub.f32 %v1849, %v1850
    %v1852 = vand.u32 %v1851, 4294901760
    %1853 = vmatprep.subr.mxu0 %v1852
    %v1854 = vand.u32 %v143, 4294901760
    %v1855 = vsub.f32 %v143, %v1854
    %v1856 = vand.u32 %v1855, 4294901760
    %v1857 = vsub.f32 %v1855, %v1856
    %v1858 = vand.u32 %v1857, 4294901760
    %1859 = vmatpush1.msra.mxu0 %v1858
    %v1860 = vand.u32 %v138, 4294901760
    %v1861 = vsub.f32 %v138, %v1860
    %v1862 = vand.u32 %v1861, 4294901760
    %v1863 = vsub.f32 %v1861, %v1862
    %v1864 = vand.u32 %v1863, 4294901760
    %1865 = vmatprep.subr.mxu0 %v1864
    %v1866 = vand.u32 %v137, 4294901760
    %v1867 = vsub.f32 %v137, %v1866
    %v1868 = vand.u32 %v1867, 4294901760
    %v1869 = vsub.f32 %v1867, %v1868
    %v1870 = vand.u32 %v1869, 4294901760
    %1871 = vmatpush1.msra.mxu0 %v1870
    %v1872 = vand.u32 %v132, 4294901760
    %v1873 = vsub.f32 %v132, %v1872
    %v1874 = vand.u32 %v1873, 4294901760
    %v1875 = vsub.f32 %v1873, %v1874
    %v1876 = vand.u32 %v1875, 4294901760
    %1877 = vmatprep.subr.mxu0 %v1876
    %v1878 = vand.u32 %v131, 4294901760
    %v1879 = vsub.f32 %v131, %v1878
    %v1880 = vand.u32 %v1879, 4294901760
    %v1881 = vsub.f32 %v1879, %v1880
    %v1882 = vand.u32 %v1881, 4294901760
    %1883 = vmatpush1.msra.mxu0 %v1882
    %v1884 = vand.u32 %v126, 4294901760
    %v1885 = vsub.f32 %v126, %v1884
    %v1886 = vand.u32 %v1885, 4294901760
    %v1887 = vsub.f32 %v1885, %v1886
    %v1888 = vand.u32 %v1887, 4294901760
    %1889 = vmatprep.subr.mxu0 %v1888
    %v1890 = vand.u32 %v125, 4294901760
    %v1891 = vsub.f32 %v125, %v1890
    %v1892 = vand.u32 %v1891, 4294901760
    %v1893 = vsub.f32 %v1891, %v1892
    %v1894 = vand.u32 %v1893, 4294901760
    %1895 = vmatpush1.msra.mxu0 %v1894
    %v1896 = vand.u32 %v120, 4294901760
    %v1897 = vsub.f32 %v120, %v1896
    %v1898 = vand.u32 %v1897, 4294901760
    %v1899 = vsub.f32 %v1897, %v1898
    %v1900 = vand.u32 %v1899, 4294901760
    %1901 = vmatprep.subr.mxu0 %v1900
    %v1902 = vand.u32 %v119, 4294901760
    %v1903 = vsub.f32 %v119, %v1902
    %v1904 = vand.u32 %v1903, 4294901760
    %v1905 = vsub.f32 %v1903, %v1904
    %v1906 = vand.u32 %v1905, 4294901760
    %1907 = vmatpush1.msra.mxu0 %v1906
    %v1908 = vand.u32 %v114, 4294901760
    %v1909 = vsub.f32 %v114, %v1908
    %v1910 = vand.u32 %v1909, 4294901760
    %v1911 = vsub.f32 %v1909, %v1910
    %v1912 = vand.u32 %v1911, 4294901760
    %1913 = vmatprep.subr.mxu0 %v1912
    %v1914 = vand.u32 %v113, 4294901760
    %v1915 = vsub.f32 %v113, %v1914
    %v1916 = vand.u32 %v1915, 4294901760
    %v1917 = vsub.f32 %v1915, %v1916
    %v1918 = vand.u32 %v1917, 4294901760
    %1919 = vmatpush1.msra.mxu0 %v1918
    %1920 = vmatprep.subr.mxu0 0.0
    %1921 = vmatpush2.msra.mxu0 0.0
    %1922 = vmatprep.subr.mxu0 0.0
    %1923 = vmatpush2.msra.mxu0 0.0
    %1924 = vmatprep.subr.mxu0 0.0
    %1925 = vmatpush2.msra.mxu0 0.0
    %1926 = vmatprep.subr.mxu0 0.0
    %1927 = vmatpush2.msra.mxu0 0.0
    %1928 = vmatprep.subr.mxu0 0.0
    %1929 = vmatpush2.msra.mxu0 0.0
    %1930 = vmatprep.subr.mxu0 0.0
    %1931 = vmatpush2.msra.mxu0 0.0
    %1932 = vmatprep.subr.mxu0 0.0
    %1933 = vmatpush2.msra.mxu0 0.0
    %1934 = vmatprep.subr.mxu0 0.0
    %1935 = vmatpush2.msra.mxu0 0.0
    %1936 = vmatprep.subr.mxu0 0.0
    %1937 = vmatpush2.msra.mxu0 0.0
    %1938 = vmatprep.subr.mxu0 0.0
    %1939 = vmatpush2.msra.mxu0 0.0
    %1940 = vmatprep.subr.mxu0 0.0
    %1941 = vmatpush2.msra.mxu0 0.0
    %1942 = vmatprep.subr.mxu0 0.0
    %1943 = vmatpush2.msra.mxu0 0.0
    %1944 = vmatprep.subr.mxu0 0.0
    %1945 = vmatpush2.msra.mxu0 0.0
    %1946 = vmatprep.subr.mxu0 0.0
    %1947 = vmatpush2.msra.mxu0 0.0
    %1948 = vmatprep.subr.mxu0 0.0
    %1949 = vmatpush2.msra.mxu0 0.0
    %1950 = vmatprep.subr.mxu0 0.0
    %1951 = vmatpush2.msra.mxu0 0.0
    %1952 = vmatprep.mubr.f32.mxu0 0.0
    %v1953 = vand.u32 %v209, 4294901760
    %1954 = vmatmul.mubr.f32.gmra.mxu0 %v1953
    %v1955 = vpop.f32.mrf.mxu0
    %v1956 = vadd.f32 %v1774, %v1955
    %v1957 = vpop.f32.mrf.mxu0
    %v1958 = vadd.f32 %v1776, %v1957
    %1959 = vdwg.mxu0
    %1960 = vmatprep.subr.mxu0 0.0
    %1961 = vmatpush1.msra.mxu0 0.0
    %1962 = vmatprep.subr.mxu0 0.0
    %1963 = vmatpush1.msra.mxu0 0.0
    %1964 = vmatprep.subr.mxu0 0.0
    %1965 = vmatpush1.msra.mxu0 0.0
    %1966 = vmatprep.subr.mxu0 0.0
    %1967 = vmatpush1.msra.mxu0 0.0
    %1968 = vmatprep.subr.mxu0 0.0
    %1969 = vmatpush1.msra.mxu0 0.0
    %v1970 = vand.u32 %v228, 4294901760
    %v1971 = vsub.f32 %v228, %v1970
    %1972 = vmatprep.subr.mxu0 %v1971
    %v1973 = vand.u32 %v225, 4294901760
    %v1974 = vsub.f32 %v225, %v1973
    %1975 = vmatpush1.msra.mxu0 %v1974
    %v1976 = vand.u32 %v168, 4294901760
    %v1977 = vsub.f32 %v168, %v1976
    %1978 = vmatprep.subr.mxu0 %v1977
    %v1979 = vand.u32 %v167, 4294901760
    %v1980 = vsub.f32 %v167, %v1979
    %1981 = vmatpush1.msra.mxu0 %v1980
    %v1982 = vand.u32 %v162, 4294901760
    %v1983 = vsub.f32 %v162, %v1982
    %1984 = vmatprep.subr.mxu0 %v1983
    %v1985 = vand.u32 %v161, 4294901760
    %v1986 = vsub.f32 %v161, %v1985
    %1987 = vmatpush1.msra.mxu0 %v1986
    %v1988 = vand.u32 %v156, 4294901760
    %v1989 = vsub.f32 %v156, %v1988
    %1990 = vmatprep.subr.mxu0 %v1989
    %v1991 = vand.u32 %v155, 4294901760
    %v1992 = vsub.f32 %v155, %v1991
    %1993 = vmatpush1.msra.mxu0 %v1992
    %v1994 = vand.u32 %v150, 4294901760
    %v1995 = vsub.f32 %v150, %v1994
    %1996 = vmatprep.subr.mxu0 %v1995
    %v1997 = vand.u32 %v149, 4294901760
    %v1998 = vsub.f32 %v149, %v1997
    %1999 = vmatpush1.msra.mxu0 %v1998
    %v2000 = vand.u32 %v144, 4294901760
    %v2001 = vsub.f32 %v144, %v2000
    %2002 = vmatprep.subr.mxu0 %v2001
    %v2003 = vand.u32 %v143, 4294901760
    %v2004 = vsub.f32 %v143, %v2003
    %2005 = vmatpush1.msra.mxu0 %v2004
    %v2006 = vand.u32 %v138, 4294901760
    %v2007 = vsub.f32 %v138, %v2006
    %2008 = vmatprep.subr.mxu0 %v2007
    %v2009 = vand.u32 %v137, 4294901760
    %v2010 = vsub.f32 %v137, %v2009
    %2011 = vmatpush1.msra.mxu0 %v2010
    %v2012 = vand.u32 %v132, 4294901760
    %v2013 = vsub.f32 %v132, %v2012
    %2014 = vmatprep.subr.mxu0 %v2013
    %v2015 = vand.u32 %v131, 4294901760
    %v2016 = vsub.f32 %v131, %v2015
    %2017 = vmatpush1.msra.mxu0 %v2016
    %v2018 = vand.u32 %v126, 4294901760
    %v2019 = vsub.f32 %v126, %v2018
    %2020 = vmatprep.subr.mxu0 %v2019
    %v2021 = vand.u32 %v125, 4294901760
    %v2022 = vsub.f32 %v125, %v2021
    %2023 = vmatpush1.msra.mxu0 %v2022
    %v2024 = vand.u32 %v120, 4294901760
    %v2025 = vsub.f32 %v120, %v2024
    %2026 = vmatprep.subr.mxu0 %v2025
    %v2027 = vand.u32 %v119, 4294901760
    %v2028 = vsub.f32 %v119, %v2027
    %2029 = vmatpush1.msra.mxu0 %v2028
    %v2030 = vand.u32 %v114, 4294901760
    %v2031 = vsub.f32 %v114, %v2030
    %2032 = vmatprep.subr.mxu0 %v2031
    %v2033 = vand.u32 %v113, 4294901760
    %v2034 = vsub.f32 %v113, %v2033
    %2035 = vmatpush1.msra.mxu0 %v2034
    %2036 = vmatprep.subr.mxu0 0.0
    %2037 = vmatpush2.msra.mxu0 0.0
    %2038 = vmatprep.subr.mxu0 0.0
    %2039 = vmatpush2.msra.mxu0 0.0
    %2040 = vmatprep.subr.mxu0 0.0
    %2041 = vmatpush2.msra.mxu0 0.0
    %2042 = vmatprep.subr.mxu0 0.0
    %2043 = vmatpush2.msra.mxu0 0.0
    %2044 = vmatprep.subr.mxu0 0.0
    %2045 = vmatpush2.msra.mxu0 0.0
    %2046 = vmatprep.subr.mxu0 0.0
    %2047 = vmatpush2.msra.mxu0 0.0
    %2048 = vmatprep.subr.mxu0 0.0
    %2049 = vmatpush2.msra.mxu0 0.0
    %2050 = vmatprep.subr.mxu0 0.0
    %2051 = vmatpush2.msra.mxu0 0.0
    %2052 = vmatprep.subr.mxu0 0.0
    %2053 = vmatpush2.msra.mxu0 0.0
    %2054 = vmatprep.subr.mxu0 0.0
    %2055 = vmatpush2.msra.mxu0 0.0
    %2056 = vmatprep.subr.mxu0 0.0
    %2057 = vmatpush2.msra.mxu0 0.0
    %2058 = vmatprep.subr.mxu0 0.0
    %2059 = vmatpush2.msra.mxu0 0.0
    %2060 = vmatprep.subr.mxu0 0.0
    %2061 = vmatpush2.msra.mxu0 0.0
    %2062 = vmatprep.subr.mxu0 0.0
    %2063 = vmatpush2.msra.mxu0 0.0
    %2064 = vmatprep.subr.mxu0 0.0
    %2065 = vmatpush2.msra.mxu0 0.0
    %2066 = vmatprep.subr.mxu0 0.0
    %2067 = vmatpush2.msra.mxu0 0.0
    %2068 = vmatprep.mubr.f32.mxu0 0.0
    %v2069 = vand.u32 %v209, 4294901760
    %v2070 = vsub.f32 %v209, %v2069
    %2071 = vmatmul.mubr.f32.gmra.mxu0 %v2070
    %v2072 = vpop.f32.mrf.mxu0
    %v2073 = vadd.f32 %v1956, %v2072
    %v2074 = vpop.f32.mrf.mxu0
    %v2075 = vadd.f32 %v1958, %v2074
    %2076 = vdwg.mxu0
    %2077 = vmatprep.subr.mxu0 0.0
    %2078 = vmatpush1.msra.mxu0 0.0
    %2079 = vmatprep.subr.mxu0 0.0
    %2080 = vmatpush1.msra.mxu0 0.0
    %2081 = vmatprep.subr.mxu0 0.0
    %2082 = vmatpush1.msra.mxu0 0.0
    %2083 = vmatprep.subr.mxu0 0.0
    %2084 = vmatpush1.msra.mxu0 0.0
    %2085 = vmatprep.subr.mxu0 0.0
    %2086 = vmatpush1.msra.mxu0 0.0
    %v2087 = vand.u32 %v228, 4294901760
    %2088 = vmatprep.subr.mxu0 %v2087
    %v2089 = vand.u32 %v225, 4294901760
    %2090 = vmatpush1.msra.mxu0 %v2089
    %v2091 = vand.u32 %v168, 4294901760
    %2092 = vmatprep.subr.mxu0 %v2091
    %v2093 = vand.u32 %v167, 4294901760
    %2094 = vmatpush1.msra.mxu0 %v2093
    %v2095 = vand.u32 %v162, 4294901760
    %2096 = vmatprep.subr.mxu0 %v2095
    %v2097 = vand.u32 %v161, 4294901760
    %2098 = vmatpush1.msra.mxu0 %v2097
    %v2099 = vand.u32 %v156, 4294901760
    %2100 = vmatprep.subr.mxu0 %v2099
    %v2101 = vand.u32 %v155, 4294901760
    %2102 = vmatpush1.msra.mxu0 %v2101
    %v2103 = vand.u32 %v150, 4294901760
    %2104 = vmatprep.subr.mxu0 %v2103
    %v2105 = vand.u32 %v149, 4294901760
    %2106 = vmatpush1.msra.mxu0 %v2105
    %v2107 = vand.u32 %v144, 4294901760
    %2108 = vmatprep.subr.mxu0 %v2107
    %v2109 = vand.u32 %v143, 4294901760
    %2110 = vmatpush1.msra.mxu0 %v2109
    %v2111 = vand.u32 %v138, 4294901760
    %2112 = vmatprep.subr.mxu0 %v2111
    %v2113 = vand.u32 %v137, 4294901760
    %2114 = vmatpush1.msra.mxu0 %v2113
    %v2115 = vand.u32 %v132, 4294901760
    %2116 = vmatprep.subr.mxu0 %v2115
    %v2117 = vand.u32 %v131, 4294901760
    %2118 = vmatpush1.msra.mxu0 %v2117
    %v2119 = vand.u32 %v126, 4294901760
    %2120 = vmatprep.subr.mxu0 %v2119
    %v2121 = vand.u32 %v125, 4294901760
    %2122 = vmatpush1.msra.mxu0 %v2121
    %v2123 = vand.u32 %v120, 4294901760
    %2124 = vmatprep.subr.mxu0 %v2123
    %v2125 = vand.u32 %v119, 4294901760
    %2126 = vmatpush1.msra.mxu0 %v2125
    %v2127 = vand.u32 %v114, 4294901760
    %2128 = vmatprep.subr.mxu0 %v2127
    %v2129 = vand.u32 %v113, 4294901760
    %2130 = vmatpush1.msra.mxu0 %v2129
    %2131 = vmatprep.subr.mxu0 0.0
    %2132 = vmatpush2.msra.mxu0 0.0
    %2133 = vmatprep.subr.mxu0 0.0
    %2134 = vmatpush2.msra.mxu0 0.0
    %2135 = vmatprep.subr.mxu0 0.0
    %2136 = vmatpush2.msra.mxu0 0.0
    %2137 = vmatprep.subr.mxu0 0.0
    %2138 = vmatpush2.msra.mxu0 0.0
    %2139 = vmatprep.subr.mxu0 0.0
    %2140 = vmatpush2.msra.mxu0 0.0
    %2141 = vmatprep.subr.mxu0 0.0
    %2142 = vmatpush2.msra.mxu0 0.0
    %2143 = vmatprep.subr.mxu0 0.0
    %2144 = vmatpush2.msra.mxu0 0.0
    %2145 = vmatprep.subr.mxu0 0.0
    %2146 = vmatpush2.msra.mxu0 0.0
    %2147 = vmatprep.subr.mxu0 0.0
    %2148 = vmatpush2.msra.mxu0 0.0
    %2149 = vmatprep.subr.mxu0 0.0
    %2150 = vmatpush2.msra.mxu0 0.0
    %2151 = vmatprep.subr.mxu0 0.0
    %2152 = vmatpush2.msra.mxu0 0.0
    %2153 = vmatprep.subr.mxu0 0.0
    %2154 = vmatpush2.msra.mxu0 0.0
    %2155 = vmatprep.subr.mxu0 0.0
    %2156 = vmatpush2.msra.mxu0 0.0
    %2157 = vmatprep.subr.mxu0 0.0
    %2158 = vmatpush2.msra.mxu0 0.0
    %2159 = vmatprep.subr.mxu0 0.0
    %2160 = vmatpush2.msra.mxu0 0.0
    %2161 = vmatprep.subr.mxu0 0.0
    %2162 = vmatpush2.msra.mxu0 0.0
    %2163 = vmatprep.mubr.f32.mxu0 0.0
    %v2164 = vand.u32 %v209, 4294901760
    %v2165 = vsub.f32 %v209, %v2164
    %v2166 = vand.u32 %v2165, 4294901760
    %2167 = vmatmul.mubr.f32.gmra.mxu0 %v2166
    %v2168 = vpop.f32.mrf.mxu0
    %v2169 = vadd.f32 %v2073, %v2168
    %v2170 = vpop.f32.mrf.mxu0
    %v2171 = vadd.f32 %v2075, %v2170
    %2172 = vdwg.mxu0
    %2173 = vmatprep.subr.mxu0 0.0
    %2174 = vmatpush1.msra.mxu0 0.0
    %2175 = vmatprep.subr.mxu0 0.0
    %2176 = vmatpush1.msra.mxu0 0.0
    %2177 = vmatprep.subr.mxu0 0.0
    %2178 = vmatpush1.msra.mxu0 0.0
    %2179 = vmatprep.subr.mxu0 0.0
    %2180 = vmatpush1.msra.mxu0 0.0
    %2181 = vmatprep.subr.mxu0 0.0
    %2182 = vmatpush1.msra.mxu0 0.0
    %v2183 = vand.u32 %v228, 4294901760
    %v2184 = vsub.f32 %v228, %v2183
    %v2185 = vand.u32 %v2184, 4294901760
    %2186 = vmatprep.subr.mxu0 %v2185
    %v2187 = vand.u32 %v225, 4294901760
    %v2188 = vsub.f32 %v225, %v2187
    %v2189 = vand.u32 %v2188, 4294901760
    %2190 = vmatpush1.msra.mxu0 %v2189
    %v2191 = vand.u32 %v168, 4294901760
    %v2192 = vsub.f32 %v168, %v2191
    %v2193 = vand.u32 %v2192, 4294901760
    %2194 = vmatprep.subr.mxu0 %v2193
    %v2195 = vand.u32 %v167, 4294901760
    %v2196 = vsub.f32 %v167, %v2195
    %v2197 = vand.u32 %v2196, 4294901760
    %2198 = vmatpush1.msra.mxu0 %v2197
    %v2199 = vand.u32 %v162, 4294901760
    %v2200 = vsub.f32 %v162, %v2199
    %v2201 = vand.u32 %v2200, 4294901760
    %2202 = vmatprep.subr.mxu0 %v2201
    %v2203 = vand.u32 %v161, 4294901760
    %v2204 = vsub.f32 %v161, %v2203
    %v2205 = vand.u32 %v2204, 4294901760
    %2206 = vmatpush1.msra.mxu0 %v2205
    %v2207 = vand.u32 %v156, 4294901760
    %v2208 = vsub.f32 %v156, %v2207
    %v2209 = vand.u32 %v2208, 4294901760
    %2210 = vmatprep.subr.mxu0 %v2209
    %v2211 = vand.u32 %v155, 4294901760
    %v2212 = vsub.f32 %v155, %v2211
    %v2213 = vand.u32 %v2212, 4294901760
    %2214 = vmatpush1.msra.mxu0 %v2213
    %v2215 = vand.u32 %v150, 4294901760
    %v2216 = vsub.f32 %v150, %v2215
    %v2217 = vand.u32 %v2216, 4294901760
    %2218 = vmatprep.subr.mxu0 %v2217
    %v2219 = vand.u32 %v149, 4294901760
    %v2220 = vsub.f32 %v149, %v2219
    %v2221 = vand.u32 %v2220, 4294901760
    %2222 = vmatpush1.msra.mxu0 %v2221
    %v2223 = vand.u32 %v144, 4294901760
    %v2224 = vsub.f32 %v144, %v2223
    %v2225 = vand.u32 %v2224, 4294901760
    %2226 = vmatprep.subr.mxu0 %v2225
    %v2227 = vand.u32 %v143, 4294901760
    %v2228 = vsub.f32 %v143, %v2227
    %v2229 = vand.u32 %v2228, 4294901760
    %2230 = vmatpush1.msra.mxu0 %v2229
    %v2231 = vand.u32 %v138, 4294901760
    %v2232 = vsub.f32 %v138, %v2231
    %v2233 = vand.u32 %v2232, 4294901760
    %2234 = vmatprep.subr.mxu0 %v2233
    %v2235 = vand.u32 %v137, 4294901760
    %v2236 = vsub.f32 %v137, %v2235
    %v2237 = vand.u32 %v2236, 4294901760
    %2238 = vmatpush1.msra.mxu0 %v2237
    %v2239 = vand.u32 %v132, 4294901760
    %v2240 = vsub.f32 %v132, %v2239
    %v2241 = vand.u32 %v2240, 4294901760
    %2242 = vmatprep.subr.mxu0 %v2241
    %v2243 = vand.u32 %v131, 4294901760
    %v2244 = vsub.f32 %v131, %v2243
    %v2245 = vand.u32 %v2244, 4294901760
    %2246 = vmatpush1.msra.mxu0 %v2245
    %v2247 = vand.u32 %v126, 4294901760
    %v2248 = vsub.f32 %v126, %v2247
    %v2249 = vand.u32 %v2248, 4294901760
    %2250 = vmatprep.subr.mxu0 %v2249
    %v2251 = vand.u32 %v125, 4294901760
    %v2252 = vsub.f32 %v125, %v2251
    %v2253 = vand.u32 %v2252, 4294901760
    %2254 = vmatpush1.msra.mxu0 %v2253
    %v2255 = vand.u32 %v120, 4294901760
    %v2256 = vsub.f32 %v120, %v2255
    %v2257 = vand.u32 %v2256, 4294901760
    %2258 = vmatprep.subr.mxu0 %v2257
    %v2259 = vand.u32 %v119, 4294901760
    %v2260 = vsub.f32 %v119, %v2259
    %v2261 = vand.u32 %v2260, 4294901760
    %2262 = vmatpush1.msra.mxu0 %v2261
    %v2263 = vand.u32 %v114, 4294901760
    %v2264 = vsub.f32 %v114, %v2263
    %v2265 = vand.u32 %v2264, 4294901760
    %2266 = vmatprep.subr.mxu0 %v2265
    %v2267 = vand.u32 %v113, 4294901760
    %v2268 = vsub.f32 %v113, %v2267
    %v2269 = vand.u32 %v2268, 4294901760
    %2270 = vmatpush1.msra.mxu0 %v2269
    %2271 = vmatprep.subr.mxu0 0.0
    %2272 = vmatpush2.msra.mxu0 0.0
    %2273 = vmatprep.subr.mxu0 0.0
    %2274 = vmatpush2.msra.mxu0 0.0
    %2275 = vmatprep.subr.mxu0 0.0
    %2276 = vmatpush2.msra.mxu0 0.0
    %2277 = vmatprep.subr.mxu0 0.0
    %2278 = vmatpush2.msra.mxu0 0.0
    %2279 = vmatprep.subr.mxu0 0.0
    %2280 = vmatpush2.msra.mxu0 0.0
    %2281 = vmatprep.subr.mxu0 0.0
    %2282 = vmatpush2.msra.mxu0 0.0
    %2283 = vmatprep.subr.mxu0 0.0
    %2284 = vmatpush2.msra.mxu0 0.0
    %2285 = vmatprep.subr.mxu0 0.0
    %2286 = vmatpush2.msra.mxu0 0.0
    %2287 = vmatprep.subr.mxu0 0.0
    %2288 = vmatpush2.msra.mxu0 0.0
    %2289 = vmatprep.subr.mxu0 0.0
    %2290 = vmatpush2.msra.mxu0 0.0
    %2291 = vmatprep.subr.mxu0 0.0
    %2292 = vmatpush2.msra.mxu0 0.0
    %2293 = vmatprep.subr.mxu0 0.0
    %2294 = vmatpush2.msra.mxu0 0.0
    %2295 = vmatprep.subr.mxu0 0.0
    %2296 = vmatpush2.msra.mxu0 0.0
    %2297 = vmatprep.subr.mxu0 0.0
    %2298 = vmatpush2.msra.mxu0 0.0
    %2299 = vmatprep.subr.mxu0 0.0
    %2300 = vmatpush2.msra.mxu0 0.0
    %2301 = vmatprep.subr.mxu0 0.0
    %2302 = vmatpush2.msra.mxu0 0.0
    %2303 = vmatprep.mubr.f32.mxu0 0.0
    %v2304 = vand.u32 %v209, 4294901760
    %2305 = vmatmul.mubr.f32.gmra.mxu0 %v2304
    %v2306 = vpop.f32.mrf.mxu0
    %v2307 = vadd.f32 %v2169, %v2306
    %v2308 = vpop.f32.mrf.mxu0
    %v2309 = vadd.f32 %v2171, %v2308
    %2310 = vdwg.mxu0
    %2311 = vmatprep.subr.mxu0 0.0
    %2312 = vmatpush1.msra.mxu0 0.0
    %2313 = vmatprep.subr.mxu0 0.0
    %2314 = vmatpush1.msra.mxu0 0.0
    %2315 = vmatprep.subr.mxu0 0.0
    %2316 = vmatpush1.msra.mxu0 0.0
    %2317 = vmatprep.subr.mxu0 0.0
    %2318 = vmatpush1.msra.mxu0 0.0
    %2319 = vmatprep.subr.mxu0 0.0
    %2320 = vmatpush1.msra.mxu0 0.0
    %v2321 = vand.u32 %v228, 4294901760
    %2322 = vmatprep.subr.mxu0 %v2321
    %v2323 = vand.u32 %v225, 4294901760
    %2324 = vmatpush1.msra.mxu0 %v2323
    %v2325 = vand.u32 %v168, 4294901760
    %2326 = vmatprep.subr.mxu0 %v2325
    %v2327 = vand.u32 %v167, 4294901760
    %2328 = vmatpush1.msra.mxu0 %v2327
    %v2329 = vand.u32 %v162, 4294901760
    %2330 = vmatprep.subr.mxu0 %v2329
    %v2331 = vand.u32 %v161, 4294901760
    %2332 = vmatpush1.msra.mxu0 %v2331
    %v2333 = vand.u32 %v156, 4294901760
    %2334 = vmatprep.subr.mxu0 %v2333
    %v2335 = vand.u32 %v155, 4294901760
    %2336 = vmatpush1.msra.mxu0 %v2335
    %v2337 = vand.u32 %v150, 4294901760
    %2338 = vmatprep.subr.mxu0 %v2337
    %v2339 = vand.u32 %v149, 4294901760
    %2340 = vmatpush1.msra.mxu0 %v2339
    %v2341 = vand.u32 %v144, 4294901760
    %2342 = vmatprep.subr.mxu0 %v2341
    %v2343 = vand.u32 %v143, 4294901760
    %2344 = vmatpush1.msra.mxu0 %v2343
    %v2345 = vand.u32 %v138, 4294901760
    %2346 = vmatprep.subr.mxu0 %v2345
    %v2347 = vand.u32 %v137, 4294901760
    %2348 = vmatpush1.msra.mxu0 %v2347
    %v2349 = vand.u32 %v132, 4294901760
    %2350 = vmatprep.subr.mxu0 %v2349
    %v2351 = vand.u32 %v131, 4294901760
    %2352 = vmatpush1.msra.mxu0 %v2351
    %v2353 = vand.u32 %v126, 4294901760
    %2354 = vmatprep.subr.mxu0 %v2353
    %v2355 = vand.u32 %v125, 4294901760
    %2356 = vmatpush1.msra.mxu0 %v2355
    %v2357 = vand.u32 %v120, 4294901760
    %2358 = vmatprep.subr.mxu0 %v2357
    %v2359 = vand.u32 %v119, 4294901760
    %2360 = vmatpush1.msra.mxu0 %v2359
    %v2361 = vand.u32 %v114, 4294901760
    %2362 = vmatprep.subr.mxu0 %v2361
    %v2363 = vand.u32 %v113, 4294901760
    %2364 = vmatpush1.msra.mxu0 %v2363
    %2365 = vmatprep.subr.mxu0 0.0
    %2366 = vmatpush2.msra.mxu0 0.0
    %2367 = vmatprep.subr.mxu0 0.0
    %2368 = vmatpush2.msra.mxu0 0.0
    %2369 = vmatprep.subr.mxu0 0.0
    %2370 = vmatpush2.msra.mxu0 0.0
    %2371 = vmatprep.subr.mxu0 0.0
    %2372 = vmatpush2.msra.mxu0 0.0
    %2373 = vmatprep.subr.mxu0 0.0
    %2374 = vmatpush2.msra.mxu0 0.0
    %2375 = vmatprep.subr.mxu0 0.0
    %2376 = vmatpush2.msra.mxu0 0.0
    %2377 = vmatprep.subr.mxu0 0.0
    %2378 = vmatpush2.msra.mxu0 0.0
    %2379 = vmatprep.subr.mxu0 0.0
    %2380 = vmatpush2.msra.mxu0 0.0
    %2381 = vmatprep.subr.mxu0 0.0
    %2382 = vmatpush2.msra.mxu0 0.0
    %2383 = vmatprep.subr.mxu0 0.0
    %2384 = vmatpush2.msra.mxu0 0.0
    %2385 = vmatprep.subr.mxu0 0.0
    %2386 = vmatpush2.msra.mxu0 0.0
    %2387 = vmatprep.subr.mxu0 0.0
    %2388 = vmatpush2.msra.mxu0 0.0
    %2389 = vmatprep.subr.mxu0 0.0
    %2390 = vmatpush2.msra.mxu0 0.0
    %2391 = vmatprep.subr.mxu0 0.0
    %2392 = vmatpush2.msra.mxu0 0.0
    %2393 = vmatprep.subr.mxu0 0.0
    %2394 = vmatpush2.msra.mxu0 0.0
    %2395 = vmatprep.subr.mxu0 0.0
    %2396 = vmatpush2.msra.mxu0 0.0
    %2397 = vmatprep.mubr.f32.mxu0 0.0
    %v2398 = vand.u32 %v209, 4294901760
    %2399 = vmatmul.mubr.f32.gmra.mxu0 %v2398
    %v2400 = vpop.f32.mrf.mxu0
    %v2401 = vadd.f32 %v2307, %v2400
    %v2402 = vpop.f32.mrf.mxu0
    %v2403 = vadd.f32 %v2309, %v2402
    %2404 = vdwg.mxu0
    %vm2405 = vcmp.gt.f32.partialorder %v951, 0.0
    %vm2406 = vcmp.gt.f32.partialorder %v953, 0.0
    %vm2407 = vcmp.gt.f32.partialorder %v1676, 0.0
    %vm2408 = vcmp.gt.f32.partialorder %v1678, 0.0
    %vm2409 = vcmp.gt.f32.partialorder %v2401, 0.0
    %vm2410 = vcmp.gt.f32.partialorder %v2403, 0.0
    %v2411 = vmul.f32 %v951, 0.01
    %v2412 = vmul.f32 %v953, 0.01
    %v2413 = vmul.f32 %v1676, 0.01
    %v2414 = vmul.f32 %v1678, 0.01
    %v2415 = vmul.f32 %v2401, 0.01
    %v2416 = vmul.f32 %v2403, 0.01
    %v2417 = vsel %vm2405, %v951, %v2411
    %v2418 = vsel %vm2406, %v953, %v2412
    %v2419 = vsel %vm2407, %v1676, %v2413
    %v2420 = vsel %vm2408, %v1678, %v2414
    %v2421 = vsel %vm2409, %v2401, %v2415
    %v2422 = vsel %vm2410, %v2403, %v2416
    %v2423 = vld [vmem:[#allocation7] sm:$0xff]
    %v2424 = vld [vmem:[#allocation7 + $0x8] sm:$0xff]
    %v2425 = vld [vmem:[#allocation7 + $0x10] sm:$0xff]
    %v2426 = vld [vmem:[#allocation7 + $0x18] sm:$0xff]
    %v2427 = vld [vmem:[#allocation7 + $0x20] sm:$0xff]
    %v2428 = vld [vmem:[#allocation7 + $0x28] sm:$0xff]
    %v2429 = vld [vmem:[#allocation7 + $0x30] sm:$0xff]
    %v2430 = vld [vmem:[#allocation7 + $0x38] sm:$0xff]
    %v2431 = vld [vmem:[#allocation7 + $0x40] sm:$0xff]
    %v2432 = vld [vmem:[#allocation7 + $0x48] sm:$0xff]
    %v2433 = vld [vmem:[#allocation7 + $0x50] sm:$0xff]
    %v2434 = vld [vmem:[#allocation7 + $0x58] sm:$0xff]
    %v2435 = vld [vmem:[#allocation7 + $0x60] sm:$0xff]
    %v2436 = vld [vmem:[#allocation7 + $0x68] sm:$0xff]
    %v2437 = vld [vmem:[#allocation7 + $0x70] sm:$0xff]
    %v2438 = vld [vmem:[#allocation7 + $0x78] sm:$0xff]
    %v2439 = vld [vmem:[#allocation7 + $0x80] sm:$0xff]
    %v2440 = vld [vmem:[#allocation7 + $0x88] sm:$0xff]
    %v2441 = vld [vmem:[#allocation7 + $0x90] sm:$0xff]
    %v2442 = vld [vmem:[#allocation7 + $0x98] sm:$0xff]
    %v2443 = vld [vmem:[#allocation7 + $0xa0] sm:$0xff]
    %v2444 = vld [vmem:[#allocation7 + $0xa8] sm:$0xff]
    %v2445 = vld [vmem:[#allocation7 + $0xb0] sm:$0xff]
    %v2446 = vld [vmem:[#allocation7 + $0xb8] sm:$0xff]
    %v2447 = vld [vmem:[#allocation7 + $0xc0] sm:$0xff]
    %v2448 = vld [vmem:[#allocation7 + $0xc8] sm:$0xff]
    %v2449 = vld [vmem:[#allocation7 + $0xd0] sm:$0xff]
    %v2450 = vld [vmem:[#allocation7 + $0xd8] sm:$0xff]
    %v2451 = vld [vmem:[#allocation7 + $0xe0] sm:$0xff]
    %v2452 = vld [vmem:[#allocation7 + $0xe8] sm:$0xff]
    %v2453 = vld [vmem:[#allocation7 + $0xf0] sm:$0xff]
    %v2454 = vld [vmem:[#allocation7 + $0xf8] sm:$0xff]
    %v2455 = vld [vmem:[#allocation7 + $0x100] sm:$0xff]
    %v2456 = vld [vmem:[#allocation7 + $0x108] sm:$0xff]
    %v2457 = vld [vmem:[#allocation7 + $0x110] sm:$0xff]
    %v2458 = vld [vmem:[#allocation7 + $0x118] sm:$0xff]
    %v2459 = vld [vmem:[#allocation7 + $0x120] sm:$0xff]
    %v2460 = vld [vmem:[#allocation7 + $0x128] sm:$0xff]
    %v2461 = vld [vmem:[#allocation7 + $0x130] sm:$0xff]
    %v2462 = vld [vmem:[#allocation7 + $0x138] sm:$0xff]
    %v2463 = vld [vmem:[#allocation7 + $0x140] sm:$0xff]
    %v2464 = vld [vmem:[#allocation7 + $0x148] sm:$0xff]
    %v2465 = vld [vmem:[#allocation7 + $0x150] sm:$0xff]
    %v2466 = vld [vmem:[#allocation7 + $0x158] sm:$0xff]
    %v2467 = vld [vmem:[#allocation7 + $0x160] sm:$0xff]
    %v2468 = vld [vmem:[#allocation7 + $0x168] sm:$0xff]
    %v2469 = vld [vmem:[#allocation7 + $0x170] sm:$0xff]
    %v2470 = vld [vmem:[#allocation7 + $0x178] sm:$0xff]
    %v2471 = vld [vmem:[#allocation7 + $0x180] sm:$0xff]
    %v2472 = vld [vmem:[#allocation7 + $0x188] sm:$0xff]
    %v2473 = vld [vmem:[#allocation7 + $0x190] sm:$0xff]
    %v2474 = vld [vmem:[#allocation7 + $0x198] sm:$0xff]
    %v2475 = vld [vmem:[#allocation7 + $0x1a0] sm:$0xff]
    %v2476 = vld [vmem:[#allocation7 + $0x1a8] sm:$0xff]
    %v2477 = vld [vmem:[#allocation7 + $0x1b0] sm:$0xff]
    %v2478 = vld [vmem:[#allocation7 + $0x1b8] sm:$0xff]
    %v2479 = vld [vmem:[#allocation7 + $0x1c0] sm:$0xff]
    %v2480 = vld [vmem:[#allocation7 + $0x1c8] sm:$0xff]
    %v2481 = vld [vmem:[#allocation7 + $0x1d0] sm:$0xff]
    %v2482 = vld [vmem:[#allocation7 + $0x1d8] sm:$0xff]
    %v2483 = vld [vmem:[#allocation7 + $0x1e0] sm:$0xff]
    %v2484 = vld [vmem:[#allocation7 + $0x1e8] sm:$0xff]
    %v2485 = vld [vmem:[#allocation7 + $0x1f0] sm:$0xff]
    %v2486 = vld [vmem:[#allocation7 + $0x1f8] sm:$0xff]
    %v2487 = vld [vmem:[#allocation7 + $0x200] sm:$0xff]
    %v2488 = vld [vmem:[#allocation7 + $0x208] sm:$0xff]
    %v2489 = vld [vmem:[#allocation7 + $0x210] sm:$0xff]
    %v2490 = vld [vmem:[#allocation7 + $0x218] sm:$0xff]
    %v2491 = vld [vmem:[#allocation7 + $0x220] sm:$0xff]
    %v2492 = vld [vmem:[#allocation7 + $0x228] sm:$0xff]
    %v2493 = vld [vmem:[#allocation7 + $0x230] sm:$0xff]
    %v2494 = vld [vmem:[#allocation7 + $0x238] sm:$0xff]
    %v2495 = vld [vmem:[#allocation7 + $0x240] sm:$0xff]
    %v2496 = vld [vmem:[#allocation7 + $0x248] sm:$0xff]
    %v2497 = vld [vmem:[#allocation7 + $0x250] sm:$0xff]
    %v2498 = vld [vmem:[#allocation7 + $0x258] sm:$0xff]
    %v2499 = vld [vmem:[#allocation7 + $0x260] sm:$0xff]
    %v2500 = vld [vmem:[#allocation7 + $0x268] sm:$0xff]
    %v2501 = vld [vmem:[#allocation7 + $0x270] sm:$0xff]
    %v2502 = vld [vmem:[#allocation7 + $0x278] sm:$0xff]
    %v2503 = vld [vmem:[#allocation7 + $0x280] sm:$0xff]
    %v2504 = vld [vmem:[#allocation7 + $0x288] sm:$0xff]
    %v2505 = vld [vmem:[#allocation7 + $0x290] sm:$0xff]
    %v2506 = vld [vmem:[#allocation7 + $0x298] sm:$0xff]
    %v2507 = vld [vmem:[#allocation7 + $0x2a0] sm:$0xff]
    %v2508 = vld [vmem:[#allocation7 + $0x2a8] sm:$0xff]
    %v2509 = vld [vmem:[#allocation7 + $0x2b0] sm:$0xff]
    %v2510 = vld [vmem:[#allocation7 + $0x2b8] sm:$0xff]
    %v2511 = vld [vmem:[#allocation7 + $0x2c0] sm:$0xff]
    %v2512 = vld [vmem:[#allocation7 + $0x2c8] sm:$0xff]
    %v2513 = vld [vmem:[#allocation7 + $0x2d0] sm:$0xff]
    %v2514 = vld [vmem:[#allocation7 + $0x2d8] sm:$0xff]
    %v2515 = vld [vmem:[#allocation7 + $0x2e0] sm:$0xff]
    %v2516 = vld [vmem:[#allocation7 + $0x2e8] sm:$0xff]
    %v2517 = vld [vmem:[#allocation7 + $0x2f0] sm:$0xff]
    %v2518 = vld [vmem:[#allocation7 + $0x2f8] sm:$0xff]
    %v2519 = vld [vmem:[#allocation7 + $0x300] sm:$0xff]
    %v2520 = vld [vmem:[#allocation7 + $0x308] sm:$0xff]
    %v2521 = vld [vmem:[#allocation7 + $0x310] sm:$0xff]
    %v2522 = vld [vmem:[#allocation7 + $0x318] sm:$0xff]
    %v2523 = vld [vmem:[#allocation7 + $0x320] sm:$0xff]
    %v2524 = vld [vmem:[#allocation7 + $0x328] sm:$0xff]
    %v2525 = vld [vmem:[#allocation7 + $0x330] sm:$0xff]
    %v2526 = vld [vmem:[#allocation7 + $0x338] sm:$0xff]
    %v2527 = vld [vmem:[#allocation7 + $0x340] sm:$0xff]
    %v2528 = vld [vmem:[#allocation7 + $0x348] sm:$0xff]
    %v2529 = vld [vmem:[#allocation7 + $0x350] sm:$0xff]
    %v2530 = vld [vmem:[#allocation7 + $0x358] sm:$0xff]
    %v2531 = vld [vmem:[#allocation7 + $0x360] sm:$0xff]
    %v2532 = vld [vmem:[#allocation7 + $0x368] sm:$0xff]
    %v2533 = vld [vmem:[#allocation7 + $0x370] sm:$0xff]
    %v2534 = vld [vmem:[#allocation7 + $0x378] sm:$0xff]
    %v2535 = vld [vmem:[#allocation7 + $0x380] sm:$0xff]
    %v2536 = vld [vmem:[#allocation7 + $0x388] sm:$0xff]
    %v2537 = vld [vmem:[#allocation7 + $0x390] sm:$0xff]
    %v2538 = vld [vmem:[#allocation7 + $0x398] sm:$0xff]
    %v2539 = vld [vmem:[#allocation7 + $0x3a0] sm:$0xff]
    %v2540 = vld [vmem:[#allocation7 + $0x3a8] sm:$0xff]
    %v2541 = vld [vmem:[#allocation7 + $0x3b0] sm:$0xff]
    %v2542 = vld [vmem:[#allocation7 + $0x3b8] sm:$0xff]
    %v2543 = vld [vmem:[#allocation7 + $0x3c0] sm:$0xff]
    %v2544 = vld [vmem:[#allocation7 + $0x3c8] sm:$0xff]
    %v2545 = vld [vmem:[#allocation7 + $0x3d0] sm:$0xff]
    %v2546 = vld [vmem:[#allocation7 + $0x3d8] sm:$0xff]
    %v2547 = vld [vmem:[#allocation7 + $0x3e0] sm:$0xff]
    %v2548 = vld [vmem:[#allocation7 + $0x3e8] sm:$0xff]
    %v2549 = vld [vmem:[#allocation7 + $0x3f0] sm:$0xff]
    %v2550 = vld [vmem:[#allocation7 + $0x3f8] sm:$0xff]
    %v2551 = vld [vmem:[#allocation7 + $0x400] sm:$0xff]
    %v2552 = vld [vmem:[#allocation7 + $0x408] sm:$0xff]
    %v2553 = vld [vmem:[#allocation7 + $0x410] sm:$0xff]
    %v2554 = vld [vmem:[#allocation7 + $0x418] sm:$0xff]
    %v2555 = vld [vmem:[#allocation7 + $0x420] sm:$0xff]
    %v2556 = vld [vmem:[#allocation7 + $0x428] sm:$0xff]
    %v2557 = vld [vmem:[#allocation7 + $0x430] sm:$0xff]
    %v2558 = vld [vmem:[#allocation7 + $0x438] sm:$0xff]
    %v2559 = vld [vmem:[#allocation7 + $0x440] sm:$0xff]
    %v2560 = vld [vmem:[#allocation7 + $0x448] sm:$0xff]
    %v2561 = vld [vmem:[#allocation7 + $0x450] sm:$0xff]
    %v2562 = vld [vmem:[#allocation7 + $0x458] sm:$0xff]
    %v2563 = vld [vmem:[#allocation7 + $0x460] sm:$0xff]
    %v2564 = vld [vmem:[#allocation7 + $0x468] sm:$0xff]
    %v2565 = vld [vmem:[#allocation7 + $0x470] sm:$0xff]
    %v2566 = vld [vmem:[#allocation7 + $0x478] sm:$0xff]
    %v2567 = vld [vmem:[#allocation7 + $0x480] sm:$0xff]
    %v2568 = vld [vmem:[#allocation7 + $0x488] sm:$0xff]
    %v2569 = vld [vmem:[#allocation7 + $0x490] sm:$0xff]
    %v2570 = vld [vmem:[#allocation7 + $0x498] sm:$0xff]
    %v2571 = vld [vmem:[#allocation7 + $0x4a0] sm:$0xff]
    %v2572 = vld [vmem:[#allocation7 + $0x4a8] sm:$0xff]
    %v2573 = vld [vmem:[#allocation7 + $0x4b0] sm:$0xff]
    %v2574 = vld [vmem:[#allocation7 + $0x4b8] sm:$0xff]
    %v2575 = vld [vmem:[#allocation7 + $0x4c0] sm:$0xff]
    %v2576 = vld [vmem:[#allocation7 + $0x4c8] sm:$0xff]
    %v2577 = vld [vmem:[#allocation7 + $0x4d0] sm:$0xff]
    %v2578 = vld [vmem:[#allocation7 + $0x4d8] sm:$0xff]
    %v2579 = vld [vmem:[#allocation7 + $0x4e0] sm:$0xff]
    %v2580 = vld [vmem:[#allocation7 + $0x4e8] sm:$0xff]
    %v2581 = vld [vmem:[#allocation7 + $0x4f0] sm:$0xff]
    %v2582 = vld [vmem:[#allocation7 + $0x4f8] sm:$0xff]
    %v2583 = vld [vmem:[#allocation7 + $0x500] sm:$0xff]
    %v2584 = vld [vmem:[#allocation7 + $0x508] sm:$0xff]
    %v2585 = vld [vmem:[#allocation7 + $0x510] sm:$0xff]
    %v2586 = vld [vmem:[#allocation7 + $0x518] sm:$0xff]
    %v2587 = vld [vmem:[#allocation7 + $0x520] sm:$0xff]
    %v2588 = vld [vmem:[#allocation7 + $0x528] sm:$0xff]
    %v2589 = vld [vmem:[#allocation7 + $0x530] sm:$0xff]
    %v2590 = vld [vmem:[#allocation7 + $0x538] sm:$0xff]
    %v2591 = vld [vmem:[#allocation7 + $0x540] sm:$0xff]
    %v2592 = vld [vmem:[#allocation7 + $0x548] sm:$0xff]
    %v2593 = vld [vmem:[#allocation7 + $0x550] sm:$0xff]
    %v2594 = vld [vmem:[#allocation7 + $0x558] sm:$0xff]
    %v2595 = vld [vmem:[#allocation7 + $0x560] sm:$0xff]
    %v2596 = vld [vmem:[#allocation7 + $0x568] sm:$0xff]
    %v2597 = vld [vmem:[#allocation7 + $0x570] sm:$0xff]
    %v2598 = vld [vmem:[#allocation7 + $0x578] sm:$0xff]
    %v2599 = vld [vmem:[#allocation7 + $0x580] sm:$0xff]
    %v2600 = vld [vmem:[#allocation7 + $0x588] sm:$0xff]
    %v2601 = vld [vmem:[#allocation7 + $0x590] sm:$0xff]
    %v2602 = vld [vmem:[#allocation7 + $0x598] sm:$0xff]
    %v2603 = vld [vmem:[#allocation7 + $0x5a0] sm:$0xff]
    %v2604 = vld [vmem:[#allocation7 + $0x5a8] sm:$0xff]
    %v2605 = vld [vmem:[#allocation7 + $0x5b0] sm:$0xff]
    %v2606 = vld [vmem:[#allocation7 + $0x5b8] sm:$0xff]
    %v2607 = vld [vmem:[#allocation7 + $0x5c0] sm:$0xff]
    %v2608 = vld [vmem:[#allocation7 + $0x5c8] sm:$0xff]
    %v2609 = vld [vmem:[#allocation7 + $0x5d0] sm:$0xff]
    %v2610 = vld [vmem:[#allocation7 + $0x5d8] sm:$0xff]
    %v2611 = vld [vmem:[#allocation7 + $0x5e0] sm:$0xff]
    %v2612 = vld [vmem:[#allocation7 + $0x5e8] sm:$0xff]
    %v2613 = vld [vmem:[#allocation7 + $0x5f0] sm:$0xff]
    %v2614 = vld [vmem:[#allocation7 + $0x5f8] sm:$0xff]
    %v2615 = vld [vmem:[#allocation7 + $0x600] sm:$0xff]
    %v2616 = vld [vmem:[#allocation7 + $0x608] sm:$0xff]
    %v2617 = vld [vmem:[#allocation7 + $0x610] sm:$0xff]
    %v2618 = vld [vmem:[#allocation7 + $0x618] sm:$0xff]
    %v2619 = vld [vmem:[#allocation7 + $0x620] sm:$0xff]
    %v2620 = vld [vmem:[#allocation7 + $0x628] sm:$0xff]
    %v2621 = vld [vmem:[#allocation7 + $0x630] sm:$0xff]
    %v2622 = vld [vmem:[#allocation7 + $0x638] sm:$0xff]
    %v2623 = vld [vmem:[#allocation7 + $0x640] sm:$0xff]
    %v2624 = vld [vmem:[#allocation7 + $0x648] sm:$0xff]
    %v2625 = vld [vmem:[#allocation7 + $0x650] sm:$0xff]
    %v2626 = vld [vmem:[#allocation7 + $0x658] sm:$0xff]
    %v2627 = vld [vmem:[#allocation7 + $0x660] sm:$0xff]
    %v2628 = vld [vmem:[#allocation7 + $0x668] sm:$0xff]
    %v2629 = vld [vmem:[#allocation7 + $0x670] sm:$0xff]
    %v2630 = vld [vmem:[#allocation7 + $0x678] sm:$0xff]
    %v2631 = vld [vmem:[#allocation7 + $0x680] sm:$0xff]
    %v2632 = vld [vmem:[#allocation7 + $0x688] sm:$0xff]
    %v2633 = vld [vmem:[#allocation7 + $0x690] sm:$0xff]
    %v2634 = vld [vmem:[#allocation7 + $0x698] sm:$0xff]
    %v2635 = vld [vmem:[#allocation7 + $0x6a0] sm:$0xff]
    %v2636 = vld [vmem:[#allocation7 + $0x6a8] sm:$0xff]
    %v2637 = vld [vmem:[#allocation7 + $0x6b0] sm:$0xff]
    %v2638 = vld [vmem:[#allocation7 + $0x6b8] sm:$0xff]
    %v2639 = vld [vmem:[#allocation7 + $0x6c0] sm:$0xff]
    %v2640 = vld [vmem:[#allocation7 + $0x6c8] sm:$0xff]
    %v2641 = vld [vmem:[#allocation7 + $0x6d0] sm:$0xff]
    %v2642 = vld [vmem:[#allocation7 + $0x6d8] sm:$0xff]
    %v2643 = vld [vmem:[#allocation7 + $0x6e0] sm:$0xff]
    %v2644 = vld [vmem:[#allocation7 + $0x6e8] sm:$0xff]
    %v2645 = vld [vmem:[#allocation7 + $0x6f0] sm:$0xff]
    %v2646 = vld [vmem:[#allocation7 + $0x6f8] sm:$0xff]
    %v2647 = vld [vmem:[#allocation7 + $0x700] sm:$0xff]
    %v2648 = vld [vmem:[#allocation7 + $0x708] sm:$0xff]
    %v2649 = vld [vmem:[#allocation7 + $0x710] sm:$0xff]
    %v2650 = vld [vmem:[#allocation7 + $0x718] sm:$0xff]
    %v2651 = vld [vmem:[#allocation7 + $0x720] sm:$0xff]
    %v2652 = vld [vmem:[#allocation7 + $0x728] sm:$0xff]
    %v2653 = vld [vmem:[#allocation7 + $0x730] sm:$0xff]
    %v2654 = vld [vmem:[#allocation7 + $0x738] sm:$0xff]
    %v2655 = vld [vmem:[#allocation7 + $0x740] sm:$0xff]
    %v2656 = vld [vmem:[#allocation7 + $0x748] sm:$0xff]
    %v2657 = vld [vmem:[#allocation7 + $0x750] sm:$0xff]
    %v2658 = vld [vmem:[#allocation7 + $0x758] sm:$0xff]
    %v2659 = vld [vmem:[#allocation7 + $0x760] sm:$0xff]
    %v2660 = vld [vmem:[#allocation7 + $0x768] sm:$0xff]
    %v2661 = vld [vmem:[#allocation7 + $0x770] sm:$0xff]
    %v2662 = vld [vmem:[#allocation7 + $0x778] sm:$0xff]
    %v2663 = vld [vmem:[#allocation7 + $0x780] sm:$0xff]
    %v2664 = vld [vmem:[#allocation7 + $0x788] sm:$0xff]
    %v2665 = vld [vmem:[#allocation7 + $0x790] sm:$0xff]
    %v2666 = vld [vmem:[#allocation7 + $0x798] sm:$0xff]
    %v2667 = vld [vmem:[#allocation7 + $0x7a0] sm:$0xff]
    %v2668 = vld [vmem:[#allocation7 + $0x7a8] sm:$0xff]
    %v2669 = vld [vmem:[#allocation7 + $0x7b0] sm:$0xff]
    %v2670 = vld [vmem:[#allocation7 + $0x7b8] sm:$0xff]
    %v2671 = vld [vmem:[#allocation7 + $0x7c0] sm:$0xff]
    %v2672 = vld [vmem:[#allocation7 + $0x7c8] sm:$0xff]
    %v2673 = vld [vmem:[#allocation7 + $0x7d0] sm:$0xff]
    %v2674 = vld [vmem:[#allocation7 + $0x7d8] sm:$0xff]
    %v2675 = vld [vmem:[#allocation7 + $0x7e0] sm:$0xff]
    %v2676 = vld [vmem:[#allocation7 + $0x7e8] sm:$0xff]
    %v2677 = vld [vmem:[#allocation7 + $0x7f0] sm:$0xff]
    %v2678 = vld [vmem:[#allocation7 + $0x7f8] sm:$0xff]
    %v2679 = vld [vmem:[#allocation7 + $0x800] sm:$0xff]
    %v2680 = vld [vmem:[#allocation7 + $0x808] sm:$0xff]
    %v2681 = vld [vmem:[#allocation7 + $0x810] sm:$0xff]
    %v2682 = vld [vmem:[#allocation7 + $0x818] sm:$0xff]
    %v2683 = vld [vmem:[#allocation7 + $0x820] sm:$0xff]
    %v2684 = vld [vmem:[#allocation7 + $0x828] sm:$0xff]
    %v2685 = vld [vmem:[#allocation7 + $0x830] sm:$0xff]
    %v2686 = vld [vmem:[#allocation7 + $0x838] sm:$0xff]
    %v2687 = vld [vmem:[#allocation7 + $0x840] sm:$0xff]
    %v2688 = vld [vmem:[#allocation7 + $0x848] sm:$0xff]
    %v2689 = vld [vmem:[#allocation7 + $0x850] sm:$0xff]
    %v2690 = vld [vmem:[#allocation7 + $0x858] sm:$0xff]
    %v2691 = vld [vmem:[#allocation7 + $0x860] sm:$0xff]
    %v2692 = vld [vmem:[#allocation7 + $0x868] sm:$0xff]
    %v2693 = vld [vmem:[#allocation7 + $0x870] sm:$0xff]
    %v2694 = vld [vmem:[#allocation7 + $0x878] sm:$0xff]
    %v2695 = vld [vmem:[#allocation7 + $0x880] sm:$0xff]
    %v2696 = vld [vmem:[#allocation7 + $0x888] sm:$0xff]
    %v2697 = vld [vmem:[#allocation7 + $0x890] sm:$0xff]
    %v2698 = vld [vmem:[#allocation7 + $0x898] sm:$0xff]
    %v2699 = vld [vmem:[#allocation7 + $0x8a0] sm:$0xff]
    %v2700 = vld [vmem:[#allocation7 + $0x8a8] sm:$0xff]
    %v2701 = vld [vmem:[#allocation7 + $0x8b0] sm:$0xff]
    %v2702 = vld [vmem:[#allocation7 + $0x8b8] sm:$0xff]
    %v2703 = vld [vmem:[#allocation7 + $0x8c0] sm:$0xff]
    %v2704 = vld [vmem:[#allocation7 + $0x8c8] sm:$0xff]
    %v2705 = vld [vmem:[#allocation7 + $0x8d0] sm:$0xff]
    %v2706 = vld [vmem:[#allocation7 + $0x8d8] sm:$0xff]
    %v2707 = vld [vmem:[#allocation7 + $0x8e0] sm:$0xff]
    %v2708 = vld [vmem:[#allocation7 + $0x8e8] sm:$0xff]
    %v2709 = vld [vmem:[#allocation7 + $0x8f0] sm:$0xff]
    %v2710 = vld [vmem:[#allocation7 + $0x8f8] sm:$0xff]
    %v2711 = vld [vmem:[#allocation8] sm:$0x7]
    %v2713 = vlaneseq
    %v2714 = vshrl.u32 %v2713, 7
    %v2715 = vsub.s32 0, %v2714
    %v2716 = vrot.slane %v2711, %v2715
    %v2717 = vlaneseq
    %v2718 = vshrl.u32 %v2717, 7
    %v2719 = vsub.s32 1, %v2718
    %v2720 = vrot.slane %v2711, %v2719
    %v2721 = vlaneseq
    %v2722 = vshrl.u32 %v2721, 7
    %v2723 = vsub.s32 2, %v2722
    %v2724 = vrot.slane %v2711, %v2723
    %v2728 = vand.u32 %v2469, 4294901760
    %2729 = vmatprep.subr.mxu0 %v2728
    %v2730 = vand.u32 %v2468, 4294901760
    %2731 = vmatpush1.msra.mxu0 %v2730
    %v2732 = vand.u32 %v2466, 4294901760
    %2733 = vmatprep.subr.mxu0 %v2732
    %v2734 = vand.u32 %v2465, 4294901760
    %2735 = vmatpush1.msra.mxu0 %v2734
    %v2736 = vand.u32 %v2463, 4294901760
    %2737 = vmatprep.subr.mxu0 %v2736
    %v2738 = vand.u32 %v2462, 4294901760
    %2739 = vmatpush1.msra.mxu0 %v2738
    %v2740 = vand.u32 %v2460, 4294901760
    %2741 = vmatprep.subr.mxu0 %v2740
    %v2742 = vand.u32 %v2459, 4294901760
    %2743 = vmatpush1.msra.mxu0 %v2742
    %v2744 = vand.u32 %v2457, 4294901760
    %2745 = vmatprep.subr.mxu0 %v2744
    %v2746 = vand.u32 %v2456, 4294901760
    %2747 = vmatpush1.msra.mxu0 %v2746
    %v2748 = vand.u32 %v2454, 4294901760
    %2749 = vmatprep.subr.mxu0 %v2748
    %v2750 = vand.u32 %v2453, 4294901760
    %2751 = vmatpush1.msra.mxu0 %v2750
    %v2752 = vand.u32 %v2451, 4294901760
    %2753 = vmatprep.subr.mxu0 %v2752
    %v2754 = vand.u32 %v2450, 4294901760
    %2755 = vmatpush1.msra.mxu0 %v2754
    %v2756 = vand.u32 %v2448, 4294901760
    %2757 = vmatprep.subr.mxu0 %v2756
    %v2758 = vand.u32 %v2447, 4294901760
    %2759 = vmatpush1.msra.mxu0 %v2758
    %v2760 = vand.u32 %v2445, 4294901760
    %2761 = vmatprep.subr.mxu0 %v2760
    %v2762 = vand.u32 %v2444, 4294901760
    %2763 = vmatpush1.msra.mxu0 %v2762
    %v2764 = vand.u32 %v2442, 4294901760
    %2765 = vmatprep.subr.mxu0 %v2764
    %v2766 = vand.u32 %v2441, 4294901760
    %2767 = vmatpush1.msra.mxu0 %v2766
    %v2768 = vand.u32 %v2439, 4294901760
    %2769 = vmatprep.subr.mxu0 %v2768
    %v2770 = vand.u32 %v2438, 4294901760
    %2771 = vmatpush1.msra.mxu0 %v2770
    %v2772 = vand.u32 %v2436, 4294901760
    %2773 = vmatprep.subr.mxu0 %v2772
    %v2774 = vand.u32 %v2435, 4294901760
    %2775 = vmatpush1.msra.mxu0 %v2774
    %v2776 = vand.u32 %v2433, 4294901760
    %2777 = vmatprep.subr.mxu0 %v2776
    %v2778 = vand.u32 %v2432, 4294901760
    %2779 = vmatpush1.msra.mxu0 %v2778
    %v2780 = vand.u32 %v2430, 4294901760
    %2781 = vmatprep.subr.mxu0 %v2780
    %v2782 = vand.u32 %v2429, 4294901760
    %2783 = vmatpush1.msra.mxu0 %v2782
    %v2784 = vand.u32 %v2427, 4294901760
    %2785 = vmatprep.subr.mxu0 %v2784
    %v2786 = vand.u32 %v2426, 4294901760
    %2787 = vmatpush1.msra.mxu0 %v2786
    %v2788 = vand.u32 %v2424, 4294901760
    %2789 = vmatprep.subr.mxu0 %v2788
    %v2790 = vand.u32 %v2423, 4294901760
    %2791 = vmatpush1.msra.mxu0 %v2790
    %v2792 = vand.u32 %v2517, 4294901760
    %2793 = vmatprep.subr.mxu0 %v2792
    %v2794 = vand.u32 %v2516, 4294901760
    %2795 = vmatpush2.msra.mxu0 %v2794
    %v2796 = vand.u32 %v2514, 4294901760
    %2797 = vmatprep.subr.mxu0 %v2796
    %v2798 = vand.u32 %v2513, 4294901760
    %2799 = vmatpush2.msra.mxu0 %v2798
    %v2800 = vand.u32 %v2511, 4294901760
    %2801 = vmatprep.subr.mxu0 %v2800
    %v2802 = vand.u32 %v2510, 4294901760
    %2803 = vmatpush2.msra.mxu0 %v2802
    %v2804 = vand.u32 %v2508, 4294901760
    %2805 = vmatprep.subr.mxu0 %v2804
    %v2806 = vand.u32 %v2507, 4294901760
    %2807 = vmatpush2.msra.mxu0 %v2806
    %v2808 = vand.u32 %v2505, 4294901760
    %2809 = vmatprep.subr.mxu0 %v2808
    %v2810 = vand.u32 %v2504, 4294901760
    %2811 = vmatpush2.msra.mxu0 %v2810
    %v2812 = vand.u32 %v2502, 4294901760
    %2813 = vmatprep.subr.mxu0 %v2812
    %v2814 = vand.u32 %v2501, 4294901760
    %2815 = vmatpush2.msra.mxu0 %v2814
    %v2816 = vand.u32 %v2499, 4294901760
    %2817 = vmatprep.subr.mxu0 %v2816
    %v2818 = vand.u32 %v2498, 4294901760
    %2819 = vmatpush2.msra.mxu0 %v2818
    %v2820 = vand.u32 %v2496, 4294901760
    %2821 = vmatprep.subr.mxu0 %v2820
    %v2822 = vand.u32 %v2495, 4294901760
    %2823 = vmatpush2.msra.mxu0 %v2822
    %v2824 = vand.u32 %v2493, 4294901760
    %2825 = vmatprep.subr.mxu0 %v2824
    %v2826 = vand.u32 %v2492, 4294901760
    %2827 = vmatpush2.msra.mxu0 %v2826
    %v2828 = vand.u32 %v2490, 4294901760
    %2829 = vmatprep.subr.mxu0 %v2828
    %v2830 = vand.u32 %v2489, 4294901760
    %2831 = vmatpush2.msra.mxu0 %v2830
    %v2832 = vand.u32 %v2487, 4294901760
    %2833 = vmatprep.subr.mxu0 %v2832
    %v2834 = vand.u32 %v2486, 4294901760
    %2835 = vmatpush2.msra.mxu0 %v2834
    %v2836 = vand.u32 %v2484, 4294901760
    %2837 = vmatprep.subr.mxu0 %v2836
    %v2838 = vand.u32 %v2483, 4294901760
    %2839 = vmatpush2.msra.mxu0 %v2838
    %v2840 = vand.u32 %v2481, 4294901760
    %2841 = vmatprep.subr.mxu0 %v2840
    %v2842 = vand.u32 %v2480, 4294901760
    %2843 = vmatpush2.msra.mxu0 %v2842
    %v2844 = vand.u32 %v2478, 4294901760
    %2845 = vmatprep.subr.mxu0 %v2844
    %v2846 = vand.u32 %v2477, 4294901760
    %2847 = vmatpush2.msra.mxu0 %v2846
    %v2848 = vand.u32 %v2475, 4294901760
    %2849 = vmatprep.subr.mxu0 %v2848
    %v2850 = vand.u32 %v2474, 4294901760
    %2851 = vmatpush2.msra.mxu0 %v2850
    %v2852 = vand.u32 %v2472, 4294901760
    %2853 = vmatprep.subr.mxu0 %v2852
    %v2854 = vand.u32 %v2471, 4294901760
    %2855 = vmatpush2.msra.mxu0 %v2854
    %v2856 = vand.u32 %v2418, 4294901760
    %v2857 = vsub.f32 %v2418, %v2856
    %v2858 = vand.u32 %v2857, 4294901760
    %v2859 = vsub.f32 %v2857, %v2858
    %v2860 = vand.u32 %v2859, 4294901760
    %2861 = vmatprep.mubr.f32.mxu0 %v2860
    %v2862 = vand.u32 %v2417, 4294901760
    %v2863 = vsub.f32 %v2417, %v2862
    %v2864 = vand.u32 %v2863, 4294901760
    %v2865 = vsub.f32 %v2863, %v2864
    %v2866 = vand.u32 %v2865, 4294901760
    %2867 = vmatmul.mubr.f32.gmra.mxu0 %v2866
    %v2868 = vpop.f32.mrf.mxu0
    %v2869 = vadd.f32 %v2716, %v2868
    %v2870 = vpop.f32.mrf.mxu0
    %v2871 = vadd.f32 %v2720, %v2870
    %2872 = vdwg.mxu0
    %v2873 = vand.u32 %v2469, 4294901760
    %v2874 = vsub.f32 %v2469, %v2873
    %v2875 = vand.u32 %v2874, 4294901760
    %v2876 = vsub.f32 %v2874, %v2875
    %v2877 = vand.u32 %v2876, 4294901760
    %2878 = vmatprep.subr.mxu0 %v2877
    %v2879 = vand.u32 %v2468, 4294901760
    %v2880 = vsub.f32 %v2468, %v2879
    %v2881 = vand.u32 %v2880, 4294901760
    %v2882 = vsub.f32 %v2880, %v2881
    %v2883 = vand.u32 %v2882, 4294901760
    %2884 = vmatpush1.msra.mxu0 %v2883
    %v2885 = vand.u32 %v2466, 4294901760
    %v2886 = vsub.f32 %v2466, %v2885
    %v2887 = vand.u32 %v2886, 4294901760
    %v2888 = vsub.f32 %v2886, %v2887
    %v2889 = vand.u32 %v2888, 4294901760
    %2890 = vmatprep.subr.mxu0 %v2889
    %v2891 = vand.u32 %v2465, 4294901760
    %v2892 = vsub.f32 %v2465, %v2891
    %v2893 = vand.u32 %v2892, 4294901760
    %v2894 = vsub.f32 %v2892, %v2893
    %v2895 = vand.u32 %v2894, 4294901760
    %2896 = vmatpush1.msra.mxu0 %v2895
    %v2897 = vand.u32 %v2463, 4294901760
    %v2898 = vsub.f32 %v2463, %v2897
    %v2899 = vand.u32 %v2898, 4294901760
    %v2900 = vsub.f32 %v2898, %v2899
    %v2901 = vand.u32 %v2900, 4294901760
    %2902 = vmatprep.subr.mxu0 %v2901
    %v2903 = vand.u32 %v2462, 4294901760
    %v2904 = vsub.f32 %v2462, %v2903
    %v2905 = vand.u32 %v2904, 4294901760
    %v2906 = vsub.f32 %v2904, %v2905
    %v2907 = vand.u32 %v2906, 4294901760
    %2908 = vmatpush1.msra.mxu0 %v2907
    %v2909 = vand.u32 %v2460, 4294901760
    %v2910 = vsub.f32 %v2460, %v2909
    %v2911 = vand.u32 %v2910, 4294901760
    %v2912 = vsub.f32 %v2910, %v2911
    %v2913 = vand.u32 %v2912, 4294901760
    %2914 = vmatprep.subr.mxu0 %v2913
    %v2915 = vand.u32 %v2459, 4294901760
    %v2916 = vsub.f32 %v2459, %v2915
    %v2917 = vand.u32 %v2916, 4294901760
    %v2918 = vsub.f32 %v2916, %v2917
    %v2919 = vand.u32 %v2918, 4294901760
    %2920 = vmatpush1.msra.mxu0 %v2919
    %v2921 = vand.u32 %v2457, 4294901760
    %v2922 = vsub.f32 %v2457, %v2921
    %v2923 = vand.u32 %v2922, 4294901760
    %v2924 = vsub.f32 %v2922, %v2923
    %v2925 = vand.u32 %v2924, 4294901760
    %2926 = vmatprep.subr.mxu0 %v2925
    %v2927 = vand.u32 %v2456, 4294901760
    %v2928 = vsub.f32 %v2456, %v2927
    %v2929 = vand.u32 %v2928, 4294901760
    %v2930 = vsub.f32 %v2928, %v2929
    %v2931 = vand.u32 %v2930, 4294901760
    %2932 = vmatpush1.msra.mxu0 %v2931
    %v2933 = vand.u32 %v2454, 4294901760
    %v2934 = vsub.f32 %v2454, %v2933
    %v2935 = vand.u32 %v2934, 4294901760
    %v2936 = vsub.f32 %v2934, %v2935
    %v2937 = vand.u32 %v2936, 4294901760
    %2938 = vmatprep.subr.mxu0 %v2937
    %v2939 = vand.u32 %v2453, 4294901760
    %v2940 = vsub.f32 %v2453, %v2939
    %v2941 = vand.u32 %v2940, 4294901760
    %v2942 = vsub.f32 %v2940, %v2941
    %v2943 = vand.u32 %v2942, 4294901760
    %2944 = vmatpush1.msra.mxu0 %v2943
    %v2945 = vand.u32 %v2451, 4294901760
    %v2946 = vsub.f32 %v2451, %v2945
    %v2947 = vand.u32 %v2946, 4294901760
    %v2948 = vsub.f32 %v2946, %v2947
    %v2949 = vand.u32 %v2948, 4294901760
    %2950 = vmatprep.subr.mxu0 %v2949
    %v2951 = vand.u32 %v2450, 4294901760
    %v2952 = vsub.f32 %v2450, %v2951
    %v2953 = vand.u32 %v2952, 4294901760
    %v2954 = vsub.f32 %v2952, %v2953
    %v2955 = vand.u32 %v2954, 4294901760
    %2956 = vmatpush1.msra.mxu0 %v2955
    %v2957 = vand.u32 %v2448, 4294901760
    %v2958 = vsub.f32 %v2448, %v2957
    %v2959 = vand.u32 %v2958, 4294901760
    %v2960 = vsub.f32 %v2958, %v2959
    %v2961 = vand.u32 %v2960, 4294901760
    %2962 = vmatprep.subr.mxu0 %v2961
    %v2963 = vand.u32 %v2447, 4294901760
    %v2964 = vsub.f32 %v2447, %v2963
    %v2965 = vand.u32 %v2964, 4294901760
    %v2966 = vsub.f32 %v2964, %v2965
    %v2967 = vand.u32 %v2966, 4294901760
    %2968 = vmatpush1.msra.mxu0 %v2967
    %v2969 = vand.u32 %v2445, 4294901760
    %v2970 = vsub.f32 %v2445, %v2969
    %v2971 = vand.u32 %v2970, 4294901760
    %v2972 = vsub.f32 %v2970, %v2971
    %v2973 = vand.u32 %v2972, 4294901760
    %2974 = vmatprep.subr.mxu0 %v2973
    %v2975 = vand.u32 %v2444, 4294901760
    %v2976 = vsub.f32 %v2444, %v2975
    %v2977 = vand.u32 %v2976, 4294901760
    %v2978 = vsub.f32 %v2976, %v2977
    %v2979 = vand.u32 %v2978, 4294901760
    %2980 = vmatpush1.msra.mxu0 %v2979
    %v2981 = vand.u32 %v2442, 4294901760
    %v2982 = vsub.f32 %v2442, %v2981
    %v2983 = vand.u32 %v2982, 4294901760
    %v2984 = vsub.f32 %v2982, %v2983
    %v2985 = vand.u32 %v2984, 4294901760
    %2986 = vmatprep.subr.mxu0 %v2985
    %v2987 = vand.u32 %v2441, 4294901760
    %v2988 = vsub.f32 %v2441, %v2987
    %v2989 = vand.u32 %v2988, 4294901760
    %v2990 = vsub.f32 %v2988, %v2989
    %v2991 = vand.u32 %v2990, 4294901760
    %2992 = vmatpush1.msra.mxu0 %v2991
    %v2993 = vand.u32 %v2439, 4294901760
    %v2994 = vsub.f32 %v2439, %v2993
    %v2995 = vand.u32 %v2994, 4294901760
    %v2996 = vsub.f32 %v2994, %v2995
    %v2997 = vand.u32 %v2996, 4294901760
    %2998 = vmatprep.subr.mxu0 %v2997
    %v2999 = vand.u32 %v2438, 4294901760
    %v3000 = vsub.f32 %v2438, %v2999
    %v3001 = vand.u32 %v3000, 4294901760
    %v3002 = vsub.f32 %v3000, %v3001
    %v3003 = vand.u32 %v3002, 4294901760
    %3004 = vmatpush1.msra.mxu0 %v3003
    %v3005 = vand.u32 %v2436, 4294901760
    %v3006 = vsub.f32 %v2436, %v3005
    %v3007 = vand.u32 %v3006, 4294901760
    %v3008 = vsub.f32 %v3006, %v3007
    %v3009 = vand.u32 %v3008, 4294901760
    %3010 = vmatprep.subr.mxu0 %v3009
    %v3011 = vand.u32 %v2435, 4294901760
    %v3012 = vsub.f32 %v2435, %v3011
    %v3013 = vand.u32 %v3012, 4294901760
    %v3014 = vsub.f32 %v3012, %v3013
    %v3015 = vand.u32 %v3014, 4294901760
    %3016 = vmatpush1.msra.mxu0 %v3015
    %v3017 = vand.u32 %v2433, 4294901760
    %v3018 = vsub.f32 %v2433, %v3017
    %v3019 = vand.u32 %v3018, 4294901760
    %v3020 = vsub.f32 %v3018, %v3019
    %v3021 = vand.u32 %v3020, 4294901760
    %3022 = vmatprep.subr.mxu0 %v3021
    %v3023 = vand.u32 %v2432, 4294901760
    %v3024 = vsub.f32 %v2432, %v3023
    %v3025 = vand.u32 %v3024, 4294901760
    %v3026 = vsub.f32 %v3024, %v3025
    %v3027 = vand.u32 %v3026, 4294901760
    %3028 = vmatpush1.msra.mxu0 %v3027
    %v3029 = vand.u32 %v2430, 4294901760
    %v3030 = vsub.f32 %v2430, %v3029
    %v3031 = vand.u32 %v3030, 4294901760
    %v3032 = vsub.f32 %v3030, %v3031
    %v3033 = vand.u32 %v3032, 4294901760
    %3034 = vmatprep.subr.mxu0 %v3033
    %v3035 = vand.u32 %v2429, 4294901760
    %v3036 = vsub.f32 %v2429, %v3035
    %v3037 = vand.u32 %v3036, 4294901760
    %v3038 = vsub.f32 %v3036, %v3037
    %v3039 = vand.u32 %v3038, 4294901760
    %3040 = vmatpush1.msra.mxu0 %v3039
    %v3041 = vand.u32 %v2427, 4294901760
    %v3042 = vsub.f32 %v2427, %v3041
    %v3043 = vand.u32 %v3042, 4294901760
    %v3044 = vsub.f32 %v3042, %v3043
    %v3045 = vand.u32 %v3044, 4294901760
    %3046 = vmatprep.subr.mxu0 %v3045
    %v3047 = vand.u32 %v2426, 4294901760
    %v3048 = vsub.f32 %v2426, %v3047
    %v3049 = vand.u32 %v3048, 4294901760
    %v3050 = vsub.f32 %v3048, %v3049
    %v3051 = vand.u32 %v3050, 4294901760
    %3052 = vmatpush1.msra.mxu0 %v3051
    %v3053 = vand.u32 %v2424, 4294901760
    %v3054 = vsub.f32 %v2424, %v3053
    %v3055 = vand.u32 %v3054, 4294901760
    %v3056 = vsub.f32 %v3054, %v3055
    %v3057 = vand.u32 %v3056, 4294901760
    %3058 = vmatprep.subr.mxu0 %v3057
    %v3059 = vand.u32 %v2423, 4294901760
    %v3060 = vsub.f32 %v2423, %v3059
    %v3061 = vand.u32 %v3060, 4294901760
    %v3062 = vsub.f32 %v3060, %v3061
    %v3063 = vand.u32 %v3062, 4294901760
    %3064 = vmatpush1.msra.mxu0 %v3063
    %v3065 = vand.u32 %v2517, 4294901760
    %v3066 = vsub.f32 %v2517, %v3065
    %v3067 = vand.u32 %v3066, 4294901760
    %v3068 = vsub.f32 %v3066, %v3067
    %v3069 = vand.u32 %v3068, 4294901760
    %3070 = vmatprep.subr.mxu0 %v3069
    %v3071 = vand.u32 %v2516, 4294901760
    %v3072 = vsub.f32 %v2516, %v3071
    %v3073 = vand.u32 %v3072, 4294901760
    %v3074 = vsub.f32 %v3072, %v3073
    %v3075 = vand.u32 %v3074, 4294901760
    %3076 = vmatpush2.msra.mxu0 %v3075
    %v3077 = vand.u32 %v2514, 4294901760
    %v3078 = vsub.f32 %v2514, %v3077
    %v3079 = vand.u32 %v3078, 4294901760
    %v3080 = vsub.f32 %v3078, %v3079
    %v3081 = vand.u32 %v3080, 4294901760
    %3082 = vmatprep.subr.mxu0 %v3081
    %v3083 = vand.u32 %v2513, 4294901760
    %v3084 = vsub.f32 %v2513, %v3083
    %v3085 = vand.u32 %v3084, 4294901760
    %v3086 = vsub.f32 %v3084, %v3085
    %v3087 = vand.u32 %v3086, 4294901760
    %3088 = vmatpush2.msra.mxu0 %v3087
    %v3089 = vand.u32 %v2511, 4294901760
    %v3090 = vsub.f32 %v2511, %v3089
    %v3091 = vand.u32 %v3090, 4294901760
    %v3092 = vsub.f32 %v3090, %v3091
    %v3093 = vand.u32 %v3092, 4294901760
    %3094 = vmatprep.subr.mxu0 %v3093
    %v3095 = vand.u32 %v2510, 4294901760
    %v3096 = vsub.f32 %v2510, %v3095
    %v3097 = vand.u32 %v3096, 4294901760
    %v3098 = vsub.f32 %v3096, %v3097
    %v3099 = vand.u32 %v3098, 4294901760
    %3100 = vmatpush2.msra.mxu0 %v3099
    %v3101 = vand.u32 %v2508, 4294901760
    %v3102 = vsub.f32 %v2508, %v3101
    %v3103 = vand.u32 %v3102, 4294901760
    %v3104 = vsub.f32 %v3102, %v3103
    %v3105 = vand.u32 %v3104, 4294901760
    %3106 = vmatprep.subr.mxu0 %v3105
    %v3107 = vand.u32 %v2507, 4294901760
    %v3108 = vsub.f32 %v2507, %v3107
    %v3109 = vand.u32 %v3108, 4294901760
    %v3110 = vsub.f32 %v3108, %v3109
    %v3111 = vand.u32 %v3110, 4294901760
    %3112 = vmatpush2.msra.mxu0 %v3111
    %v3113 = vand.u32 %v2505, 4294901760
    %v3114 = vsub.f32 %v2505, %v3113
    %v3115 = vand.u32 %v3114, 4294901760
    %v3116 = vsub.f32 %v3114, %v3115
    %v3117 = vand.u32 %v3116, 4294901760
    %3118 = vmatprep.subr.mxu0 %v3117
    %v3119 = vand.u32 %v2504, 4294901760
    %v3120 = vsub.f32 %v2504, %v3119
    %v3121 = vand.u32 %v3120, 4294901760
    %v3122 = vsub.f32 %v3120, %v3121
    %v3123 = vand.u32 %v3122, 4294901760
    %3124 = vmatpush2.msra.mxu0 %v3123
    %v3125 = vand.u32 %v2502, 4294901760
    %v3126 = vsub.f32 %v2502, %v3125
    %v3127 = vand.u32 %v3126, 4294901760
    %v3128 = vsub.f32 %v3126, %v3127
    %v3129 = vand.u32 %v3128, 4294901760
    %3130 = vmatprep.subr.mxu0 %v3129
    %v3131 = vand.u32 %v2501, 4294901760
    %v3132 = vsub.f32 %v2501, %v3131
    %v3133 = vand.u32 %v3132, 4294901760
    %v3134 = vsub.f32 %v3132, %v3133
    %v3135 = vand.u32 %v3134, 4294901760
    %3136 = vmatpush2.msra.mxu0 %v3135
    %v3137 = vand.u32 %v2499, 4294901760
    %v3138 = vsub.f32 %v2499, %v3137
    %v3139 = vand.u32 %v3138, 4294901760
    %v3140 = vsub.f32 %v3138, %v3139
    %v3141 = vand.u32 %v3140, 4294901760
    %3142 = vmatprep.subr.mxu0 %v3141
    %v3143 = vand.u32 %v2498, 4294901760
    %v3144 = vsub.f32 %v2498, %v3143
    %v3145 = vand.u32 %v3144, 4294901760
    %v3146 = vsub.f32 %v3144, %v3145
    %v3147 = vand.u32 %v3146, 4294901760
    %3148 = vmatpush2.msra.mxu0 %v3147
    %v3149 = vand.u32 %v2496, 4294901760
    %v3150 = vsub.f32 %v2496, %v3149
    %v3151 = vand.u32 %v3150, 4294901760
    %v3152 = vsub.f32 %v3150, %v3151
    %v3153 = vand.u32 %v3152, 4294901760
    %3154 = vmatprep.subr.mxu0 %v3153
    %v3155 = vand.u32 %v2495, 4294901760
    %v3156 = vsub.f32 %v2495, %v3155
    %v3157 = vand.u32 %v3156, 4294901760
    %v3158 = vsub.f32 %v3156, %v3157
    %v3159 = vand.u32 %v3158, 4294901760
    %3160 = vmatpush2.msra.mxu0 %v3159
    %v3161 = vand.u32 %v2493, 4294901760
    %v3162 = vsub.f32 %v2493, %v3161
    %v3163 = vand.u32 %v3162, 4294901760
    %v3164 = vsub.f32 %v3162, %v3163
    %v3165 = vand.u32 %v3164, 4294901760
    %3166 = vmatprep.subr.mxu0 %v3165
    %v3167 = vand.u32 %v2492, 4294901760
    %v3168 = vsub.f32 %v2492, %v3167
    %v3169 = vand.u32 %v3168, 4294901760
    %v3170 = vsub.f32 %v3168, %v3169
    %v3171 = vand.u32 %v3170, 4294901760
    %3172 = vmatpush2.msra.mxu0 %v3171
    %v3173 = vand.u32 %v2490, 4294901760
    %v3174 = vsub.f32 %v2490, %v3173
    %v3175 = vand.u32 %v3174, 4294901760
    %v3176 = vsub.f32 %v3174, %v3175
    %v3177 = vand.u32 %v3176, 4294901760
    %3178 = vmatprep.subr.mxu0 %v3177
    %v3179 = vand.u32 %v2489, 4294901760
    %v3180 = vsub.f32 %v2489, %v3179
    %v3181 = vand.u32 %v3180, 4294901760
    %v3182 = vsub.f32 %v3180, %v3181
    %v3183 = vand.u32 %v3182, 4294901760
    %3184 = vmatpush2.msra.mxu0 %v3183
    %v3185 = vand.u32 %v2487, 4294901760
    %v3186 = vsub.f32 %v2487, %v3185
    %v3187 = vand.u32 %v3186, 4294901760
    %v3188 = vsub.f32 %v3186, %v3187
    %v3189 = vand.u32 %v3188, 4294901760
    %3190 = vmatprep.subr.mxu0 %v3189
    %v3191 = vand.u32 %v2486, 4294901760
    %v3192 = vsub.f32 %v2486, %v3191
    %v3193 = vand.u32 %v3192, 4294901760
    %v3194 = vsub.f32 %v3192, %v3193
    %v3195 = vand.u32 %v3194, 4294901760
    %3196 = vmatpush2.msra.mxu0 %v3195
    %v3197 = vand.u32 %v2484, 4294901760
    %v3198 = vsub.f32 %v2484, %v3197
    %v3199 = vand.u32 %v3198, 4294901760
    %v3200 = vsub.f32 %v3198, %v3199
    %v3201 = vand.u32 %v3200, 4294901760
    %3202 = vmatprep.subr.mxu0 %v3201
    %v3203 = vand.u32 %v2483, 4294901760
    %v3204 = vsub.f32 %v2483, %v3203
    %v3205 = vand.u32 %v3204, 4294901760
    %v3206 = vsub.f32 %v3204, %v3205
    %v3207 = vand.u32 %v3206, 4294901760
    %3208 = vmatpush2.msra.mxu0 %v3207
    %v3209 = vand.u32 %v2481, 4294901760
    %v3210 = vsub.f32 %v2481, %v3209
    %v3211 = vand.u32 %v3210, 4294901760
    %v3212 = vsub.f32 %v3210, %v3211
    %v3213 = vand.u32 %v3212, 4294901760
    %3214 = vmatprep.subr.mxu0 %v3213
    %v3215 = vand.u32 %v2480, 4294901760
    %v3216 = vsub.f32 %v2480, %v3215
    %v3217 = vand.u32 %v3216, 4294901760
    %v3218 = vsub.f32 %v3216, %v3217
    %v3219 = vand.u32 %v3218, 4294901760
    %3220 = vmatpush2.msra.mxu0 %v3219
    %v3221 = vand.u32 %v2478, 4294901760
    %v3222 = vsub.f32 %v2478, %v3221
    %v3223 = vand.u32 %v3222, 4294901760
    %v3224 = vsub.f32 %v3222, %v3223
    %v3225 = vand.u32 %v3224, 4294901760
    %3226 = vmatprep.subr.mxu0 %v3225
    %v3227 = vand.u32 %v2477, 4294901760
    %v3228 = vsub.f32 %v2477, %v3227
    %v3229 = vand.u32 %v3228, 4294901760
    %v3230 = vsub.f32 %v3228, %v3229
    %v3231 = vand.u32 %v3230, 4294901760
    %3232 = vmatpush2.msra.mxu0 %v3231
    %v3233 = vand.u32 %v2475, 4294901760
    %v3234 = vsub.f32 %v2475, %v3233
    %v3235 = vand.u32 %v3234, 4294901760
    %v3236 = vsub.f32 %v3234, %v3235
    %v3237 = vand.u32 %v3236, 4294901760
    %3238 = vmatprep.subr.mxu0 %v3237
    %v3239 = vand.u32 %v2474, 4294901760
    %v3240 = vsub.f32 %v2474, %v3239
    %v3241 = vand.u32 %v3240, 4294901760
    %v3242 = vsub.f32 %v3240, %v3241
    %v3243 = vand.u32 %v3242, 4294901760
    %3244 = vmatpush2.msra.mxu0 %v3243
    %v3245 = vand.u32 %v2472, 4294901760
    %v3246 = vsub.f32 %v2472, %v3245
    %v3247 = vand.u32 %v3246, 4294901760
    %v3248 = vsub.f32 %v3246, %v3247
    %v3249 = vand.u32 %v3248, 4294901760
    %3250 = vmatprep.subr.mxu0 %v3249
    %v3251 = vand.u32 %v2471, 4294901760
    %v3252 = vsub.f32 %v2471, %v3251
    %v3253 = vand.u32 %v3252, 4294901760
    %v3254 = vsub.f32 %v3252, %v3253
    %v3255 = vand.u32 %v3254, 4294901760
    %3256 = vmatpush2.msra.mxu0 %v3255
    %v3257 = vand.u32 %v2418, 4294901760
    %3258 = vmatprep.mubr.f32.mxu0 %v3257
    %v3259 = vand.u32 %v2417, 4294901760
    %3260 = vmatmul.mubr.f32.gmra.mxu0 %v3259
    %v3261 = vpop.f32.mrf.mxu0
    %v3262 = vadd.f32 %v2869, %v3261
    %v3263 = vpop.f32.mrf.mxu0
    %v3264 = vadd.f32 %v2871, %v3263
    %3265 = vdwg.mxu0
    %v3266 = vand.u32 %v2469, 4294901760
    %v3267 = vsub.f32 %v2469, %v3266
    %3268 = vmatprep.subr.mxu0 %v3267
    %v3269 = vand.u32 %v2468, 4294901760
    %v3270 = vsub.f32 %v2468, %v3269
    %3271 = vmatpush1.msra.mxu0 %v3270
    %v3272 = vand.u32 %v2466, 4294901760
    %v3273 = vsub.f32 %v2466, %v3272
    %3274 = vmatprep.subr.mxu0 %v3273
    %v3275 = vand.u32 %v2465, 4294901760
    %v3276 = vsub.f32 %v2465, %v3275
    %3277 = vmatpush1.msra.mxu0 %v3276
    %v3278 = vand.u32 %v2463, 4294901760
    %v3279 = vsub.f32 %v2463, %v3278
    %3280 = vmatprep.subr.mxu0 %v3279
    %v3281 = vand.u32 %v2462, 4294901760
    %v3282 = vsub.f32 %v2462, %v3281
    %3283 = vmatpush1.msra.mxu0 %v3282
    %v3284 = vand.u32 %v2460, 4294901760
    %v3285 = vsub.f32 %v2460, %v3284
    %3286 = vmatprep.subr.mxu0 %v3285
    %v3287 = vand.u32 %v2459, 4294901760
    %v3288 = vsub.f32 %v2459, %v3287
    %3289 = vmatpush1.msra.mxu0 %v3288
    %v3290 = vand.u32 %v2457, 4294901760
    %v3291 = vsub.f32 %v2457, %v3290
    %3292 = vmatprep.subr.mxu0 %v3291
    %v3293 = vand.u32 %v2456, 4294901760
    %v3294 = vsub.f32 %v2456, %v3293
    %3295 = vmatpush1.msra.mxu0 %v3294
    %v3296 = vand.u32 %v2454, 4294901760
    %v3297 = vsub.f32 %v2454, %v3296
    %3298 = vmatprep.subr.mxu0 %v3297
    %v3299 = vand.u32 %v2453, 4294901760
    %v3300 = vsub.f32 %v2453, %v3299
    %3301 = vmatpush1.msra.mxu0 %v3300
    %v3302 = vand.u32 %v2451, 4294901760
    %v3303 = vsub.f32 %v2451, %v3302
    %3304 = vmatprep.subr.mxu0 %v3303
    %v3305 = vand.u32 %v2450, 4294901760
    %v3306 = vsub.f32 %v2450, %v3305
    %3307 = vmatpush1.msra.mxu0 %v3306
    %v3308 = vand.u32 %v2448, 4294901760
    %v3309 = vsub.f32 %v2448, %v3308
    %3310 = vmatprep.subr.mxu0 %v3309
    %v3311 = vand.u32 %v2447, 4294901760
    %v3312 = vsub.f32 %v2447, %v3311
    %3313 = vmatpush1.msra.mxu0 %v3312
    %v3314 = vand.u32 %v2445, 4294901760
    %v3315 = vsub.f32 %v2445, %v3314
    %3316 = vmatprep.subr.mxu0 %v3315
    %v3317 = vand.u32 %v2444, 4294901760
    %v3318 = vsub.f32 %v2444, %v3317
    %3319 = vmatpush1.msra.mxu0 %v3318
    %v3320 = vand.u32 %v2442, 4294901760
    %v3321 = vsub.f32 %v2442, %v3320
    %3322 = vmatprep.subr.mxu0 %v3321
    %v3323 = vand.u32 %v2441, 4294901760
    %v3324 = vsub.f32 %v2441, %v3323
    %3325 = vmatpush1.msra.mxu0 %v3324
    %v3326 = vand.u32 %v2439, 4294901760
    %v3327 = vsub.f32 %v2439, %v3326
    %3328 = vmatprep.subr.mxu0 %v3327
    %v3329 = vand.u32 %v2438, 4294901760
    %v3330 = vsub.f32 %v2438, %v3329
    %3331 = vmatpush1.msra.mxu0 %v3330
    %v3332 = vand.u32 %v2436, 4294901760
    %v3333 = vsub.f32 %v2436, %v3332
    %3334 = vmatprep.subr.mxu0 %v3333
    %v3335 = vand.u32 %v2435, 4294901760
    %v3336 = vsub.f32 %v2435, %v3335
    %3337 = vmatpush1.msra.mxu0 %v3336
    %v3338 = vand.u32 %v2433, 4294901760
    %v3339 = vsub.f32 %v2433, %v3338
    %3340 = vmatprep.subr.mxu0 %v3339
    %v3341 = vand.u32 %v2432, 4294901760
    %v3342 = vsub.f32 %v2432, %v3341
    %3343 = vmatpush1.msra.mxu0 %v3342
    %v3344 = vand.u32 %v2430, 4294901760
    %v3345 = vsub.f32 %v2430, %v3344
    %3346 = vmatprep.subr.mxu0 %v3345
    %v3347 = vand.u32 %v2429, 4294901760
    %v3348 = vsub.f32 %v2429, %v3347
    %3349 = vmatpush1.msra.mxu0 %v3348
    %v3350 = vand.u32 %v2427, 4294901760
    %v3351 = vsub.f32 %v2427, %v3350
    %3352 = vmatprep.subr.mxu0 %v3351
    %v3353 = vand.u32 %v2426, 4294901760
    %v3354 = vsub.f32 %v2426, %v3353
    %3355 = vmatpush1.msra.mxu0 %v3354
    %v3356 = vand.u32 %v2424, 4294901760
    %v3357 = vsub.f32 %v2424, %v3356
    %3358 = vmatprep.subr.mxu0 %v3357
    %v3359 = vand.u32 %v2423, 4294901760
    %v3360 = vsub.f32 %v2423, %v3359
    %3361 = vmatpush1.msra.mxu0 %v3360
    %v3362 = vand.u32 %v2517, 4294901760
    %v3363 = vsub.f32 %v2517, %v3362
    %3364 = vmatprep.subr.mxu0 %v3363
    %v3365 = vand.u32 %v2516, 4294901760
    %v3366 = vsub.f32 %v2516, %v3365
    %3367 = vmatpush2.msra.mxu0 %v3366
    %v3368 = vand.u32 %v2514, 4294901760
    %v3369 = vsub.f32 %v2514, %v3368
    %3370 = vmatprep.subr.mxu0 %v3369
    %v3371 = vand.u32 %v2513, 4294901760
    %v3372 = vsub.f32 %v2513, %v3371
    %3373 = vmatpush2.msra.mxu0 %v3372
    %v3374 = vand.u32 %v2511, 4294901760
    %v3375 = vsub.f32 %v2511, %v3374
    %3376 = vmatprep.subr.mxu0 %v3375
    %v3377 = vand.u32 %v2510, 4294901760
    %v3378 = vsub.f32 %v2510, %v3377
    %3379 = vmatpush2.msra.mxu0 %v3378
    %v3380 = vand.u32 %v2508, 4294901760
    %v3381 = vsub.f32 %v2508, %v3380
    %3382 = vmatprep.subr.mxu0 %v3381
    %v3383 = vand.u32 %v2507, 4294901760
    %v3384 = vsub.f32 %v2507, %v3383
    %3385 = vmatpush2.msra.mxu0 %v3384
    %v3386 = vand.u32 %v2505, 4294901760
    %v3387 = vsub.f32 %v2505, %v3386
    %3388 = vmatprep.subr.mxu0 %v3387
    %v3389 = vand.u32 %v2504, 4294901760
    %v3390 = vsub.f32 %v2504, %v3389
    %3391 = vmatpush2.msra.mxu0 %v3390
    %v3392 = vand.u32 %v2502, 4294901760
    %v3393 = vsub.f32 %v2502, %v3392
    %3394 = vmatprep.subr.mxu0 %v3393
    %v3395 = vand.u32 %v2501, 4294901760
    %v3396 = vsub.f32 %v2501, %v3395
    %3397 = vmatpush2.msra.mxu0 %v3396
    %v3398 = vand.u32 %v2499, 4294901760
    %v3399 = vsub.f32 %v2499, %v3398
    %3400 = vmatprep.subr.mxu0 %v3399
    %v3401 = vand.u32 %v2498, 4294901760
    %v3402 = vsub.f32 %v2498, %v3401
    %3403 = vmatpush2.msra.mxu0 %v3402
    %v3404 = vand.u32 %v2496, 4294901760
    %v3405 = vsub.f32 %v2496, %v3404
    %3406 = vmatprep.subr.mxu0 %v3405
    %v3407 = vand.u32 %v2495, 4294901760
    %v3408 = vsub.f32 %v2495, %v3407
    %3409 = vmatpush2.msra.mxu0 %v3408
    %v3410 = vand.u32 %v2493, 4294901760
    %v3411 = vsub.f32 %v2493, %v3410
    %3412 = vmatprep.subr.mxu0 %v3411
    %v3413 = vand.u32 %v2492, 4294901760
    %v3414 = vsub.f32 %v2492, %v3413
    %3415 = vmatpush2.msra.mxu0 %v3414
    %v3416 = vand.u32 %v2490, 4294901760
    %v3417 = vsub.f32 %v2490, %v3416
    %3418 = vmatprep.subr.mxu0 %v3417
    %v3419 = vand.u32 %v2489, 4294901760
    %v3420 = vsub.f32 %v2489, %v3419
    %3421 = vmatpush2.msra.mxu0 %v3420
    %v3422 = vand.u32 %v2487, 4294901760
    %v3423 = vsub.f32 %v2487, %v3422
    %3424 = vmatprep.subr.mxu0 %v3423
    %v3425 = vand.u32 %v2486, 4294901760
    %v3426 = vsub.f32 %v2486, %v3425
    %3427 = vmatpush2.msra.mxu0 %v3426
    %v3428 = vand.u32 %v2484, 4294901760
    %v3429 = vsub.f32 %v2484, %v3428
    %3430 = vmatprep.subr.mxu0 %v3429
    %v3431 = vand.u32 %v2483, 4294901760
    %v3432 = vsub.f32 %v2483, %v3431
    %3433 = vmatpush2.msra.mxu0 %v3432
    %v3434 = vand.u32 %v2481, 4294901760
    %v3435 = vsub.f32 %v2481, %v3434
    %3436 = vmatprep.subr.mxu0 %v3435
    %v3437 = vand.u32 %v2480, 4294901760
    %v3438 = vsub.f32 %v2480, %v3437
    %3439 = vmatpush2.msra.mxu0 %v3438
    %v3440 = vand.u32 %v2478, 4294901760
    %v3441 = vsub.f32 %v2478, %v3440
    %3442 = vmatprep.subr.mxu0 %v3441
    %v3443 = vand.u32 %v2477, 4294901760
    %v3444 = vsub.f32 %v2477, %v3443
    %3445 = vmatpush2.msra.mxu0 %v3444
    %v3446 = vand.u32 %v2475, 4294901760
    %v3447 = vsub.f32 %v2475, %v3446
    %3448 = vmatprep.subr.mxu0 %v3447
    %v3449 = vand.u32 %v2474, 4294901760
    %v3450 = vsub.f32 %v2474, %v3449
    %3451 = vmatpush2.msra.mxu0 %v3450
    %v3452 = vand.u32 %v2472, 4294901760
    %v3453 = vsub.f32 %v2472, %v3452
    %3454 = vmatprep.subr.mxu0 %v3453
    %v3455 = vand.u32 %v2471, 4294901760
    %v3456 = vsub.f32 %v2471, %v3455
    %3457 = vmatpush2.msra.mxu0 %v3456
    %v3458 = vand.u32 %v2418, 4294901760
    %v3459 = vsub.f32 %v2418, %v3458
    %3460 = vmatprep.mubr.f32.mxu0 %v3459
    %v3461 = vand.u32 %v2417, 4294901760
    %v3462 = vsub.f32 %v2417, %v3461
    %3463 = vmatmul.mubr.f32.gmra.mxu0 %v3462
    %v3464 = vpop.f32.mrf.mxu0
    %v3465 = vadd.f32 %v3262, %v3464
    %v3466 = vpop.f32.mrf.mxu0
    %v3467 = vadd.f32 %v3264, %v3466
    %3468 = vdwg.mxu0
    %v3469 = vand.u32 %v2469, 4294901760
    %3470 = vmatprep.subr.mxu0 %v3469
    %v3471 = vand.u32 %v2468, 4294901760
    %3472 = vmatpush1.msra.mxu0 %v3471
    %v3473 = vand.u32 %v2466, 4294901760
    %3474 = vmatprep.subr.mxu0 %v3473
    %v3475 = vand.u32 %v2465, 4294901760
    %3476 = vmatpush1.msra.mxu0 %v3475
    %v3477 = vand.u32 %v2463, 4294901760
    %3478 = vmatprep.subr.mxu0 %v3477
    %v3479 = vand.u32 %v2462, 4294901760
    %3480 = vmatpush1.msra.mxu0 %v3479
    %v3481 = vand.u32 %v2460, 4294901760
    %3482 = vmatprep.subr.mxu0 %v3481
    %v3483 = vand.u32 %v2459, 4294901760
    %3484 = vmatpush1.msra.mxu0 %v3483
    %v3485 = vand.u32 %v2457, 4294901760
    %3486 = vmatprep.subr.mxu0 %v3485
    %v3487 = vand.u32 %v2456, 4294901760
    %3488 = vmatpush1.msra.mxu0 %v3487
    %v3489 = vand.u32 %v2454, 4294901760
    %3490 = vmatprep.subr.mxu0 %v3489
    %v3491 = vand.u32 %v2453, 4294901760
    %3492 = vmatpush1.msra.mxu0 %v3491
    %v3493 = vand.u32 %v2451, 4294901760
    %3494 = vmatprep.subr.mxu0 %v3493
    %v3495 = vand.u32 %v2450, 4294901760
    %3496 = vmatpush1.msra.mxu0 %v3495
    %v3497 = vand.u32 %v2448, 4294901760
    %3498 = vmatprep.subr.mxu0 %v3497
    %v3499 = vand.u32 %v2447, 4294901760
    %3500 = vmatpush1.msra.mxu0 %v3499
    %v3501 = vand.u32 %v2445, 4294901760
    %3502 = vmatprep.subr.mxu0 %v3501
    %v3503 = vand.u32 %v2444, 4294901760
    %3504 = vmatpush1.msra.mxu0 %v3503
    %v3505 = vand.u32 %v2442, 4294901760
    %3506 = vmatprep.subr.mxu0 %v3505
    %v3507 = vand.u32 %v2441, 4294901760
    %3508 = vmatpush1.msra.mxu0 %v3507
    %v3509 = vand.u32 %v2439, 4294901760
    %3510 = vmatprep.subr.mxu0 %v3509
    %v3511 = vand.u32 %v2438, 4294901760
    %3512 = vmatpush1.msra.mxu0 %v3511
    %v3513 = vand.u32 %v2436, 4294901760
    %3514 = vmatprep.subr.mxu0 %v3513
    %v3515 = vand.u32 %v2435, 4294901760
    %3516 = vmatpush1.msra.mxu0 %v3515
    %v3517 = vand.u32 %v2433, 4294901760
    %3518 = vmatprep.subr.mxu0 %v3517
    %v3519 = vand.u32 %v2432, 4294901760
    %3520 = vmatpush1.msra.mxu0 %v3519
    %v3521 = vand.u32 %v2430, 4294901760
    %3522 = vmatprep.subr.mxu0 %v3521
    %v3523 = vand.u32 %v2429, 4294901760
    %3524 = vmatpush1.msra.mxu0 %v3523
    %v3525 = vand.u32 %v2427, 4294901760
    %3526 = vmatprep.subr.mxu0 %v3525
    %v3527 = vand.u32 %v2426, 4294901760
    %3528 = vmatpush1.msra.mxu0 %v3527
    %v3529 = vand.u32 %v2424, 4294901760
    %3530 = vmatprep.subr.mxu0 %v3529
    %v3531 = vand.u32 %v2423, 4294901760
    %3532 = vmatpush1.msra.mxu0 %v3531
    %v3533 = vand.u32 %v2517, 4294901760
    %3534 = vmatprep.subr.mxu0 %v3533
    %v3535 = vand.u32 %v2516, 4294901760
    %3536 = vmatpush2.msra.mxu0 %v3535
    %v3537 = vand.u32 %v2514, 4294901760
    %3538 = vmatprep.subr.mxu0 %v3537
    %v3539 = vand.u32 %v2513, 4294901760
    %3540 = vmatpush2.msra.mxu0 %v3539
    %v3541 = vand.u32 %v2511, 4294901760
    %3542 = vmatprep.subr.mxu0 %v3541
    %v3543 = vand.u32 %v2510, 4294901760
    %3544 = vmatpush2.msra.mxu0 %v3543
    %v3545 = vand.u32 %v2508, 4294901760
    %3546 = vmatprep.subr.mxu0 %v3545
    %v3547 = vand.u32 %v2507, 4294901760
    %3548 = vmatpush2.msra.mxu0 %v3547
    %v3549 = vand.u32 %v2505, 4294901760
    %3550 = vmatprep.subr.mxu0 %v3549
    %v3551 = vand.u32 %v2504, 4294901760
    %3552 = vmatpush2.msra.mxu0 %v3551
    %v3553 = vand.u32 %v2502, 4294901760
    %3554 = vmatprep.subr.mxu0 %v3553
    %v3555 = vand.u32 %v2501, 4294901760
    %3556 = vmatpush2.msra.mxu0 %v3555
    %v3557 = vand.u32 %v2499, 4294901760
    %3558 = vmatprep.subr.mxu0 %v3557
    %v3559 = vand.u32 %v2498, 4294901760
    %3560 = vmatpush2.msra.mxu0 %v3559
    %v3561 = vand.u32 %v2496, 4294901760
    %3562 = vmatprep.subr.mxu0 %v3561
    %v3563 = vand.u32 %v2495, 4294901760
    %3564 = vmatpush2.msra.mxu0 %v3563
    %v3565 = vand.u32 %v2493, 4294901760
    %3566 = vmatprep.subr.mxu0 %v3565
    %v3567 = vand.u32 %v2492, 4294901760
    %3568 = vmatpush2.msra.mxu0 %v3567
    %v3569 = vand.u32 %v2490, 4294901760
    %3570 = vmatprep.subr.mxu0 %v3569
    %v3571 = vand.u32 %v2489, 4294901760
    %3572 = vmatpush2.msra.mxu0 %v3571
    %v3573 = vand.u32 %v2487, 4294901760
    %3574 = vmatprep.subr.mxu0 %v3573
    %v3575 = vand.u32 %v2486, 4294901760
    %3576 = vmatpush2.msra.mxu0 %v3575
    %v3577 = vand.u32 %v2484, 4294901760
    %3578 = vmatprep.subr.mxu0 %v3577
    %v3579 = vand.u32 %v2483, 4294901760
    %3580 = vmatpush2.msra.mxu0 %v3579
    %v3581 = vand.u32 %v2481, 4294901760
    %3582 = vmatprep.subr.mxu0 %v3581
    %v3583 = vand.u32 %v2480, 4294901760
    %3584 = vmatpush2.msra.mxu0 %v3583
    %v3585 = vand.u32 %v2478, 4294901760
    %3586 = vmatprep.subr.mxu0 %v3585
    %v3587 = vand.u32 %v2477, 4294901760
    %3588 = vmatpush2.msra.mxu0 %v3587
    %v3589 = vand.u32 %v2475, 4294901760
    %3590 = vmatprep.subr.mxu0 %v3589
    %v3591 = vand.u32 %v2474, 4294901760
    %3592 = vmatpush2.msra.mxu0 %v3591
    %v3593 = vand.u32 %v2472, 4294901760
    %3594 = vmatprep.subr.mxu0 %v3593
    %v3595 = vand.u32 %v2471, 4294901760
    %3596 = vmatpush2.msra.mxu0 %v3595
    %v3597 = vand.u32 %v2418, 4294901760
    %v3598 = vsub.f32 %v2418, %v3597
    %v3599 = vand.u32 %v3598, 4294901760
    %3600 = vmatprep.mubr.f32.mxu0 %v3599
    %v3601 = vand.u32 %v2417, 4294901760
    %v3602 = vsub.f32 %v2417, %v3601
    %v3603 = vand.u32 %v3602, 4294901760
    %3604 = vmatmul.mubr.f32.gmra.mxu0 %v3603
    %v3605 = vpop.f32.mrf.mxu0
    %v3606 = vadd.f32 %v3465, %v3605
    %v3607 = vpop.f32.mrf.mxu0
    %v3608 = vadd.f32 %v3467, %v3607
    %3609 = vdwg.mxu0
    %v3610 = vand.u32 %v2469, 4294901760
    %v3611 = vsub.f32 %v2469, %v3610
    %v3612 = vand.u32 %v3611, 4294901760
    %3613 = vmatprep.subr.mxu0 %v3612
    %v3614 = vand.u32 %v2468, 4294901760
    %v3615 = vsub.f32 %v2468, %v3614
    %v3616 = vand.u32 %v3615, 4294901760
    %3617 = vmatpush1.msra.mxu0 %v3616
    %v3618 = vand.u32 %v2466, 4294901760
    %v3619 = vsub.f32 %v2466, %v3618
    %v3620 = vand.u32 %v3619, 4294901760
    %3621 = vmatprep.subr.mxu0 %v3620
    %v3622 = vand.u32 %v2465, 4294901760
    %v3623 = vsub.f32 %v2465, %v3622
    %v3624 = vand.u32 %v3623, 4294901760
    %3625 = vmatpush1.msra.mxu0 %v3624
    %v3626 = vand.u32 %v2463, 4294901760
    %v3627 = vsub.f32 %v2463, %v3626
    %v3628 = vand.u32 %v3627, 4294901760
    %3629 = vmatprep.subr.mxu0 %v3628
    %v3630 = vand.u32 %v2462, 4294901760
    %v3631 = vsub.f32 %v2462, %v3630
    %v3632 = vand.u32 %v3631, 4294901760
    %3633 = vmatpush1.msra.mxu0 %v3632
    %v3634 = vand.u32 %v2460, 4294901760
    %v3635 = vsub.f32 %v2460, %v3634
    %v3636 = vand.u32 %v3635, 4294901760
    %3637 = vmatprep.subr.mxu0 %v3636
    %v3638 = vand.u32 %v2459, 4294901760
    %v3639 = vsub.f32 %v2459, %v3638
    %v3640 = vand.u32 %v3639, 4294901760
    %3641 = vmatpush1.msra.mxu0 %v3640
    %v3642 = vand.u32 %v2457, 4294901760
    %v3643 = vsub.f32 %v2457, %v3642
    %v3644 = vand.u32 %v3643, 4294901760
    %3645 = vmatprep.subr.mxu0 %v3644
    %v3646 = vand.u32 %v2456, 4294901760
    %v3647 = vsub.f32 %v2456, %v3646
    %v3648 = vand.u32 %v3647, 4294901760
    %3649 = vmatpush1.msra.mxu0 %v3648
    %v3650 = vand.u32 %v2454, 4294901760
    %v3651 = vsub.f32 %v2454, %v3650
    %v3652 = vand.u32 %v3651, 4294901760
    %3653 = vmatprep.subr.mxu0 %v3652
    %v3654 = vand.u32 %v2453, 4294901760
    %v3655 = vsub.f32 %v2453, %v3654
    %v3656 = vand.u32 %v3655, 4294901760
    %3657 = vmatpush1.msra.mxu0 %v3656
    %v3658 = vand.u32 %v2451, 4294901760
    %v3659 = vsub.f32 %v2451, %v3658
    %v3660 = vand.u32 %v3659, 4294901760
    %3661 = vmatprep.subr.mxu0 %v3660
    %v3662 = vand.u32 %v2450, 4294901760
    %v3663 = vsub.f32 %v2450, %v3662
    %v3664 = vand.u32 %v3663, 4294901760
    %3665 = vmatpush1.msra.mxu0 %v3664
    %v3666 = vand.u32 %v2448, 4294901760
    %v3667 = vsub.f32 %v2448, %v3666
    %v3668 = vand.u32 %v3667, 4294901760
    %3669 = vmatprep.subr.mxu0 %v3668
    %v3670 = vand.u32 %v2447, 4294901760
    %v3671 = vsub.f32 %v2447, %v3670
    %v3672 = vand.u32 %v3671, 4294901760
    %3673 = vmatpush1.msra.mxu0 %v3672
    %v3674 = vand.u32 %v2445, 4294901760
    %v3675 = vsub.f32 %v2445, %v3674
    %v3676 = vand.u32 %v3675, 4294901760
    %3677 = vmatprep.subr.mxu0 %v3676
    %v3678 = vand.u32 %v2444, 4294901760
    %v3679 = vsub.f32 %v2444, %v3678
    %v3680 = vand.u32 %v3679, 4294901760
    %3681 = vmatpush1.msra.mxu0 %v3680
    %v3682 = vand.u32 %v2442, 4294901760
    %v3683 = vsub.f32 %v2442, %v3682
    %v3684 = vand.u32 %v3683, 4294901760
    %3685 = vmatprep.subr.mxu0 %v3684
    %v3686 = vand.u32 %v2441, 4294901760
    %v3687 = vsub.f32 %v2441, %v3686
    %v3688 = vand.u32 %v3687, 4294901760
    %3689 = vmatpush1.msra.mxu0 %v3688
    %v3690 = vand.u32 %v2439, 4294901760
    %v3691 = vsub.f32 %v2439, %v3690
    %v3692 = vand.u32 %v3691, 4294901760
    %3693 = vmatprep.subr.mxu0 %v3692
    %v3694 = vand.u32 %v2438, 4294901760
    %v3695 = vsub.f32 %v2438, %v3694
    %v3696 = vand.u32 %v3695, 4294901760
    %3697 = vmatpush1.msra.mxu0 %v3696
    %v3698 = vand.u32 %v2436, 4294901760
    %v3699 = vsub.f32 %v2436, %v3698
    %v3700 = vand.u32 %v3699, 4294901760
    %3701 = vmatprep.subr.mxu0 %v3700
    %v3702 = vand.u32 %v2435, 4294901760
    %v3703 = vsub.f32 %v2435, %v3702
    %v3704 = vand.u32 %v3703, 4294901760
    %3705 = vmatpush1.msra.mxu0 %v3704
    %v3706 = vand.u32 %v2433, 4294901760
    %v3707 = vsub.f32 %v2433, %v3706
    %v3708 = vand.u32 %v3707, 4294901760
    %3709 = vmatprep.subr.mxu0 %v3708
    %v3710 = vand.u32 %v2432, 4294901760
    %v3711 = vsub.f32 %v2432, %v3710
    %v3712 = vand.u32 %v3711, 4294901760
    %3713 = vmatpush1.msra.mxu0 %v3712
    %v3714 = vand.u32 %v2430, 4294901760
    %v3715 = vsub.f32 %v2430, %v3714
    %v3716 = vand.u32 %v3715, 4294901760
    %3717 = vmatprep.subr.mxu0 %v3716
    %v3718 = vand.u32 %v2429, 4294901760
    %v3719 = vsub.f32 %v2429, %v3718
    %v3720 = vand.u32 %v3719, 4294901760
    %3721 = vmatpush1.msra.mxu0 %v3720
    %v3722 = vand.u32 %v2427, 4294901760
    %v3723 = vsub.f32 %v2427, %v3722
    %v3724 = vand.u32 %v3723, 4294901760
    %3725 = vmatprep.subr.mxu0 %v3724
    %v3726 = vand.u32 %v2426, 4294901760
    %v3727 = vsub.f32 %v2426, %v3726
    %v3728 = vand.u32 %v3727, 4294901760
    %3729 = vmatpush1.msra.mxu0 %v3728
    %v3730 = vand.u32 %v2424, 4294901760
    %v3731 = vsub.f32 %v2424, %v3730
    %v3732 = vand.u32 %v3731, 4294901760
    %3733 = vmatprep.subr.mxu0 %v3732
    %v3734 = vand.u32 %v2423, 4294901760
    %v3735 = vsub.f32 %v2423, %v3734
    %v3736 = vand.u32 %v3735, 4294901760
    %3737 = vmatpush1.msra.mxu0 %v3736
    %v3738 = vand.u32 %v2517, 4294901760
    %v3739 = vsub.f32 %v2517, %v3738
    %v3740 = vand.u32 %v3739, 4294901760
    %3741 = vmatprep.subr.mxu0 %v3740
    %v3742 = vand.u32 %v2516, 4294901760
    %v3743 = vsub.f32 %v2516, %v3742
    %v3744 = vand.u32 %v3743, 4294901760
    %3745 = vmatpush2.msra.mxu0 %v3744
    %v3746 = vand.u32 %v2514, 4294901760
    %v3747 = vsub.f32 %v2514, %v3746
    %v3748 = vand.u32 %v3747, 4294901760
    %3749 = vmatprep.subr.mxu0 %v3748
    %v3750 = vand.u32 %v2513, 4294901760
    %v3751 = vsub.f32 %v2513, %v3750
    %v3752 = vand.u32 %v3751, 4294901760
    %3753 = vmatpush2.msra.mxu0 %v3752
    %v3754 = vand.u32 %v2511, 4294901760
    %v3755 = vsub.f32 %v2511, %v3754
    %v3756 = vand.u32 %v3755, 4294901760
    %3757 = vmatprep.subr.mxu0 %v3756
    %v3758 = vand.u32 %v2510, 4294901760
    %v3759 = vsub.f32 %v2510, %v3758
    %v3760 = vand.u32 %v3759, 4294901760
    %3761 = vmatpush2.msra.mxu0 %v3760
    %v3762 = vand.u32 %v2508, 4294901760
    %v3763 = vsub.f32 %v2508, %v3762
    %v3764 = vand.u32 %v3763, 4294901760
    %3765 = vmatprep.subr.mxu0 %v3764
    %v3766 = vand.u32 %v2507, 4294901760
    %v3767 = vsub.f32 %v2507, %v3766
    %v3768 = vand.u32 %v3767, 4294901760
    %3769 = vmatpush2.msra.mxu0 %v3768
    %v3770 = vand.u32 %v2505, 4294901760
    %v3771 = vsub.f32 %v2505, %v3770
    %v3772 = vand.u32 %v3771, 4294901760
    %3773 = vmatprep.subr.mxu0 %v3772
    %v3774 = vand.u32 %v2504, 4294901760
    %v3775 = vsub.f32 %v2504, %v3774
    %v3776 = vand.u32 %v3775, 4294901760
    %3777 = vmatpush2.msra.mxu0 %v3776
    %v3778 = vand.u32 %v2502, 4294901760
    %v3779 = vsub.f32 %v2502, %v3778
    %v3780 = vand.u32 %v3779, 4294901760
    %3781 = vmatprep.subr.mxu0 %v3780
    %v3782 = vand.u32 %v2501, 4294901760
    %v3783 = vsub.f32 %v2501, %v3782
    %v3784 = vand.u32 %v3783, 4294901760
    %3785 = vmatpush2.msra.mxu0 %v3784
    %v3786 = vand.u32 %v2499, 4294901760
    %v3787 = vsub.f32 %v2499, %v3786
    %v3788 = vand.u32 %v3787, 4294901760
    %3789 = vmatprep.subr.mxu0 %v3788
    %v3790 = vand.u32 %v2498, 4294901760
    %v3791 = vsub.f32 %v2498, %v3790
    %v3792 = vand.u32 %v3791, 4294901760
    %3793 = vmatpush2.msra.mxu0 %v3792
    %v3794 = vand.u32 %v2496, 4294901760
    %v3795 = vsub.f32 %v2496, %v3794
    %v3796 = vand.u32 %v3795, 4294901760
    %3797 = vmatprep.subr.mxu0 %v3796
    %v3798 = vand.u32 %v2495, 4294901760
    %v3799 = vsub.f32 %v2495, %v3798
    %v3800 = vand.u32 %v3799, 4294901760
    %3801 = vmatpush2.msra.mxu0 %v3800
    %v3802 = vand.u32 %v2493, 4294901760
    %v3803 = vsub.f32 %v2493, %v3802
    %v3804 = vand.u32 %v3803, 4294901760
    %3805 = vmatprep.subr.mxu0 %v3804
    %v3806 = vand.u32 %v2492, 4294901760
    %v3807 = vsub.f32 %v2492, %v3806
    %v3808 = vand.u32 %v3807, 4294901760
    %3809 = vmatpush2.msra.mxu0 %v3808
    %v3810 = vand.u32 %v2490, 4294901760
    %v3811 = vsub.f32 %v2490, %v3810
    %v3812 = vand.u32 %v3811, 4294901760
    %3813 = vmatprep.subr.mxu0 %v3812
    %v3814 = vand.u32 %v2489, 4294901760
    %v3815 = vsub.f32 %v2489, %v3814
    %v3816 = vand.u32 %v3815, 4294901760
    %3817 = vmatpush2.msra.mxu0 %v3816
    %v3818 = vand.u32 %v2487, 4294901760
    %v3819 = vsub.f32 %v2487, %v3818
    %v3820 = vand.u32 %v3819, 4294901760
    %3821 = vmatprep.subr.mxu0 %v3820
    %v3822 = vand.u32 %v2486, 4294901760
    %v3823 = vsub.f32 %v2486, %v3822
    %v3824 = vand.u32 %v3823, 4294901760
    %3825 = vmatpush2.msra.mxu0 %v3824
    %v3826 = vand.u32 %v2484, 4294901760
    %v3827 = vsub.f32 %v2484, %v3826
    %v3828 = vand.u32 %v3827, 4294901760
    %3829 = vmatprep.subr.mxu0 %v3828
    %v3830 = vand.u32 %v2483, 4294901760
    %v3831 = vsub.f32 %v2483, %v3830
    %v3832 = vand.u32 %v3831, 4294901760
    %3833 = vmatpush2.msra.mxu0 %v3832
    %v3834 = vand.u32 %v2481, 4294901760
    %v3835 = vsub.f32 %v2481, %v3834
    %v3836 = vand.u32 %v3835, 4294901760
    %3837 = vmatprep.subr.mxu0 %v3836
    %v3838 = vand.u32 %v2480, 4294901760
    %v3839 = vsub.f32 %v2480, %v3838
    %v3840 = vand.u32 %v3839, 4294901760
    %3841 = vmatpush2.msra.mxu0 %v3840
    %v3842 = vand.u32 %v2478, 4294901760
    %v3843 = vsub.f32 %v2478, %v3842
    %v3844 = vand.u32 %v3843, 4294901760
    %3845 = vmatprep.subr.mxu0 %v3844
    %v3846 = vand.u32 %v2477, 4294901760
    %v3847 = vsub.f32 %v2477, %v3846
    %v3848 = vand.u32 %v3847, 4294901760
    %3849 = vmatpush2.msra.mxu0 %v3848
    %v3850 = vand.u32 %v2475, 4294901760
    %v3851 = vsub.f32 %v2475, %v3850
    %v3852 = vand.u32 %v3851, 4294901760
    %3853 = vmatprep.subr.mxu0 %v3852
    %v3854 = vand.u32 %v2474, 4294901760
    %v3855 = vsub.f32 %v2474, %v3854
    %v3856 = vand.u32 %v3855, 4294901760
    %3857 = vmatpush2.msra.mxu0 %v3856
    %v3858 = vand.u32 %v2472, 4294901760
    %v3859 = vsub.f32 %v2472, %v3858
    %v3860 = vand.u32 %v3859, 4294901760
    %3861 = vmatprep.subr.mxu0 %v3860
    %v3862 = vand.u32 %v2471, 4294901760
    %v3863 = vsub.f32 %v2471, %v3862
    %v3864 = vand.u32 %v3863, 4294901760
    %3865 = vmatpush2.msra.mxu0 %v3864
    %v3866 = vand.u32 %v2418, 4294901760
    %3867 = vmatprep.mubr.f32.mxu0 %v3866
    %v3868 = vand.u32 %v2417, 4294901760
    %3869 = vmatmul.mubr.f32.gmra.mxu0 %v3868
    %v3870 = vpop.f32.mrf.mxu0
    %v3871 = vadd.f32 %v3606, %v3870
    %v3872 = vpop.f32.mrf.mxu0
    %v3873 = vadd.f32 %v3608, %v3872
    %3874 = vdwg.mxu0
    %v3875 = vand.u32 %v2469, 4294901760
    %3876 = vmatprep.subr.mxu0 %v3875
    %v3877 = vand.u32 %v2468, 4294901760
    %3878 = vmatpush1.msra.mxu0 %v3877
    %v3879 = vand.u32 %v2466, 4294901760
    %3880 = vmatprep.subr.mxu0 %v3879
    %v3881 = vand.u32 %v2465, 4294901760
    %3882 = vmatpush1.msra.mxu0 %v3881
    %v3883 = vand.u32 %v2463, 4294901760
    %3884 = vmatprep.subr.mxu0 %v3883
    %v3885 = vand.u32 %v2462, 4294901760
    %3886 = vmatpush1.msra.mxu0 %v3885
    %v3887 = vand.u32 %v2460, 4294901760
    %3888 = vmatprep.subr.mxu0 %v3887
    %v3889 = vand.u32 %v2459, 4294901760
    %3890 = vmatpush1.msra.mxu0 %v3889
    %v3891 = vand.u32 %v2457, 4294901760
    %3892 = vmatprep.subr.mxu0 %v3891
    %v3893 = vand.u32 %v2456, 4294901760
    %3894 = vmatpush1.msra.mxu0 %v3893
    %v3895 = vand.u32 %v2454, 4294901760
    %3896 = vmatprep.subr.mxu0 %v3895
    %v3897 = vand.u32 %v2453, 4294901760
    %3898 = vmatpush1.msra.mxu0 %v3897
    %v3899 = vand.u32 %v2451, 4294901760
    %3900 = vmatprep.subr.mxu0 %v3899
    %v3901 = vand.u32 %v2450, 4294901760
    %3902 = vmatpush1.msra.mxu0 %v3901
    %v3903 = vand.u32 %v2448, 4294901760
    %3904 = vmatprep.subr.mxu0 %v3903
    %v3905 = vand.u32 %v2447, 4294901760
    %3906 = vmatpush1.msra.mxu0 %v3905
    %v3907 = vand.u32 %v2445, 4294901760
    %3908 = vmatprep.subr.mxu0 %v3907
    %v3909 = vand.u32 %v2444, 4294901760
    %3910 = vmatpush1.msra.mxu0 %v3909
    %v3911 = vand.u32 %v2442, 4294901760
    %3912 = vmatprep.subr.mxu0 %v3911
    %v3913 = vand.u32 %v2441, 4294901760
    %3914 = vmatpush1.msra.mxu0 %v3913
    %v3915 = vand.u32 %v2439, 4294901760
    %3916 = vmatprep.subr.mxu0 %v3915
    %v3917 = vand.u32 %v2438, 4294901760
    %3918 = vmatpush1.msra.mxu0 %v3917
    %v3919 = vand.u32 %v2436, 4294901760
    %3920 = vmatprep.subr.mxu0 %v3919
    %v3921 = vand.u32 %v2435, 4294901760
    %3922 = vmatpush1.msra.mxu0 %v3921
    %v3923 = vand.u32 %v2433, 4294901760
    %3924 = vmatprep.subr.mxu0 %v3923
    %v3925 = vand.u32 %v2432, 4294901760
    %3926 = vmatpush1.msra.mxu0 %v3925
    %v3927 = vand.u32 %v2430, 4294901760
    %3928 = vmatprep.subr.mxu0 %v3927
    %v3929 = vand.u32 %v2429, 4294901760
    %3930 = vmatpush1.msra.mxu0 %v3929
    %v3931 = vand.u32 %v2427, 4294901760
    %3932 = vmatprep.subr.mxu0 %v3931
    %v3933 = vand.u32 %v2426, 4294901760
    %3934 = vmatpush1.msra.mxu0 %v3933
    %v3935 = vand.u32 %v2424, 4294901760
    %3936 = vmatprep.subr.mxu0 %v3935
    %v3937 = vand.u32 %v2423, 4294901760
    %3938 = vmatpush1.msra.mxu0 %v3937
    %v3939 = vand.u32 %v2517, 4294901760
    %3940 = vmatprep.subr.mxu0 %v3939
    %v3941 = vand.u32 %v2516, 4294901760
    %3942 = vmatpush2.msra.mxu0 %v3941
    %v3943 = vand.u32 %v2514, 4294901760
    %3944 = vmatprep.subr.mxu0 %v3943
    %v3945 = vand.u32 %v2513, 4294901760
    %3946 = vmatpush2.msra.mxu0 %v3945
    %v3947 = vand.u32 %v2511, 4294901760
    %3948 = vmatprep.subr.mxu0 %v3947
    %v3949 = vand.u32 %v2510, 4294901760
    %3950 = vmatpush2.msra.mxu0 %v3949
    %v3951 = vand.u32 %v2508, 4294901760
    %3952 = vmatprep.subr.mxu0 %v3951
    %v3953 = vand.u32 %v2507, 4294901760
    %3954 = vmatpush2.msra.mxu0 %v3953
    %v3955 = vand.u32 %v2505, 4294901760
    %3956 = vmatprep.subr.mxu0 %v3955
    %v3957 = vand.u32 %v2504, 4294901760
    %3958 = vmatpush2.msra.mxu0 %v3957
    %v3959 = vand.u32 %v2502, 4294901760
    %3960 = vmatprep.subr.mxu0 %v3959
    %v3961 = vand.u32 %v2501, 4294901760
    %3962 = vmatpush2.msra.mxu0 %v3961
    %v3963 = vand.u32 %v2499, 4294901760
    %3964 = vmatprep.subr.mxu0 %v3963
    %v3965 = vand.u32 %v2498, 4294901760
    %3966 = vmatpush2.msra.mxu0 %v3965
    %v3967 = vand.u32 %v2496, 4294901760
    %3968 = vmatprep.subr.mxu0 %v3967
    %v3969 = vand.u32 %v2495, 4294901760
    %3970 = vmatpush2.msra.mxu0 %v3969
    %v3971 = vand.u32 %v2493, 4294901760
    %3972 = vmatprep.subr.mxu0 %v3971
    %v3973 = vand.u32 %v2492, 4294901760
    %3974 = vmatpush2.msra.mxu0 %v3973
    %v3975 = vand.u32 %v2490, 4294901760
    %3976 = vmatprep.subr.mxu0 %v3975
    %v3977 = vand.u32 %v2489, 4294901760
    %3978 = vmatpush2.msra.mxu0 %v3977
    %v3979 = vand.u32 %v2487, 4294901760
    %3980 = vmatprep.subr.mxu0 %v3979
    %v3981 = vand.u32 %v2486, 4294901760
    %3982 = vmatpush2.msra.mxu0 %v3981
    %v3983 = vand.u32 %v2484, 4294901760
    %3984 = vmatprep.subr.mxu0 %v3983
    %v3985 = vand.u32 %v2483, 4294901760
    %3986 = vmatpush2.msra.mxu0 %v3985
    %v3987 = vand.u32 %v2481, 4294901760
    %3988 = vmatprep.subr.mxu0 %v3987
    %v3989 = vand.u32 %v2480, 4294901760
    %3990 = vmatpush2.msra.mxu0 %v3989
    %v3991 = vand.u32 %v2478, 4294901760
    %3992 = vmatprep.subr.mxu0 %v3991
    %v3993 = vand.u32 %v2477, 4294901760
    %3994 = vmatpush2.msra.mxu0 %v3993
    %v3995 = vand.u32 %v2475, 4294901760
    %3996 = vmatprep.subr.mxu0 %v3995
    %v3997 = vand.u32 %v2474, 4294901760
    %3998 = vmatpush2.msra.mxu0 %v3997
    %v3999 = vand.u32 %v2472, 4294901760
    %4000 = vmatprep.subr.mxu0 %v3999
    %v4001 = vand.u32 %v2471, 4294901760
    %4002 = vmatpush2.msra.mxu0 %v4001
    %v4003 = vand.u32 %v2418, 4294901760
    %4004 = vmatprep.mubr.f32.mxu0 %v4003
    %v4005 = vand.u32 %v2417, 4294901760
    %4006 = vmatmul.mubr.f32.gmra.mxu0 %v4005
    %v4007 = vpop.f32.mrf.mxu0
    %v4008 = vadd.f32 %v3871, %v4007
    %v4009 = vpop.f32.mrf.mxu0
    %v4010 = vadd.f32 %v3873, %v4009
    %4011 = vdwg.mxu0
    %v4012 = vand.u32 %v2565, 4294901760
    %4013 = vmatprep.subr.mxu0 %v4012
    %v4014 = vand.u32 %v2564, 4294901760
    %4015 = vmatpush1.msra.mxu0 %v4014
    %v4016 = vand.u32 %v2562, 4294901760
    %4017 = vmatprep.subr.mxu0 %v4016
    %v4018 = vand.u32 %v2561, 4294901760
    %4019 = vmatpush1.msra.mxu0 %v4018
    %v4020 = vand.u32 %v2559, 4294901760
    %4021 = vmatprep.subr.mxu0 %v4020
    %v4022 = vand.u32 %v2558, 4294901760
    %4023 = vmatpush1.msra.mxu0 %v4022
    %v4024 = vand.u32 %v2556, 4294901760
    %4025 = vmatprep.subr.mxu0 %v4024
    %v4026 = vand.u32 %v2555, 4294901760
    %4027 = vmatpush1.msra.mxu0 %v4026
    %v4028 = vand.u32 %v2553, 4294901760
    %4029 = vmatprep.subr.mxu0 %v4028
    %v4030 = vand.u32 %v2552, 4294901760
    %4031 = vmatpush1.msra.mxu0 %v4030
    %v4032 = vand.u32 %v2550, 4294901760
    %4033 = vmatprep.subr.mxu0 %v4032
    %v4034 = vand.u32 %v2549, 4294901760
    %4035 = vmatpush1.msra.mxu0 %v4034
    %v4036 = vand.u32 %v2547, 4294901760
    %4037 = vmatprep.subr.mxu0 %v4036
    %v4038 = vand.u32 %v2546, 4294901760
    %4039 = vmatpush1.msra.mxu0 %v4038
    %v4040 = vand.u32 %v2544, 4294901760
    %4041 = vmatprep.subr.mxu0 %v4040
    %v4042 = vand.u32 %v2543, 4294901760
    %4043 = vmatpush1.msra.mxu0 %v4042
    %v4044 = vand.u32 %v2541, 4294901760
    %4045 = vmatprep.subr.mxu0 %v4044
    %v4046 = vand.u32 %v2540, 4294901760
    %4047 = vmatpush1.msra.mxu0 %v4046
    %v4048 = vand.u32 %v2538, 4294901760
    %4049 = vmatprep.subr.mxu0 %v4048
    %v4050 = vand.u32 %v2537, 4294901760
    %4051 = vmatpush1.msra.mxu0 %v4050
    %v4052 = vand.u32 %v2535, 4294901760
    %4053 = vmatprep.subr.mxu0 %v4052
    %v4054 = vand.u32 %v2534, 4294901760
    %4055 = vmatpush1.msra.mxu0 %v4054
    %v4056 = vand.u32 %v2532, 4294901760
    %4057 = vmatprep.subr.mxu0 %v4056
    %v4058 = vand.u32 %v2531, 4294901760
    %4059 = vmatpush1.msra.mxu0 %v4058
    %v4060 = vand.u32 %v2529, 4294901760
    %4061 = vmatprep.subr.mxu0 %v4060
    %v4062 = vand.u32 %v2528, 4294901760
    %4063 = vmatpush1.msra.mxu0 %v4062
    %v4064 = vand.u32 %v2526, 4294901760
    %4065 = vmatprep.subr.mxu0 %v4064
    %v4066 = vand.u32 %v2525, 4294901760
    %4067 = vmatpush1.msra.mxu0 %v4066
    %v4068 = vand.u32 %v2523, 4294901760
    %4069 = vmatprep.subr.mxu0 %v4068
    %v4070 = vand.u32 %v2522, 4294901760
    %4071 = vmatpush1.msra.mxu0 %v4070
    %v4072 = vand.u32 %v2520, 4294901760
    %4073 = vmatprep.subr.mxu0 %v4072
    %v4074 = vand.u32 %v2519, 4294901760
    %4075 = vmatpush1.msra.mxu0 %v4074
    %v4076 = vand.u32 %v2613, 4294901760
    %4077 = vmatprep.subr.mxu0 %v4076
    %v4078 = vand.u32 %v2612, 4294901760
    %4079 = vmatpush2.msra.mxu0 %v4078
    %v4080 = vand.u32 %v2610, 4294901760
    %4081 = vmatprep.subr.mxu0 %v4080
    %v4082 = vand.u32 %v2609, 4294901760
    %4083 = vmatpush2.msra.mxu0 %v4082
    %v4084 = vand.u32 %v2607, 4294901760
    %4085 = vmatprep.subr.mxu0 %v4084
    %v4086 = vand.u32 %v2606, 4294901760
    %4087 = vmatpush2.msra.mxu0 %v4086
    %v4088 = vand.u32 %v2604, 4294901760
    %4089 = vmatprep.subr.mxu0 %v4088
    %v4090 = vand.u32 %v2603, 4294901760
    %4091 = vmatpush2.msra.mxu0 %v4090
    %v4092 = vand.u32 %v2601, 4294901760
    %4093 = vmatprep.subr.mxu0 %v4092
    %v4094 = vand.u32 %v2600, 4294901760
    %4095 = vmatpush2.msra.mxu0 %v4094
    %v4096 = vand.u32 %v2598, 4294901760
    %4097 = vmatprep.subr.mxu0 %v4096
    %v4098 = vand.u32 %v2597, 4294901760
    %4099 = vmatpush2.msra.mxu0 %v4098
    %v4100 = vand.u32 %v2595, 4294901760
    %4101 = vmatprep.subr.mxu0 %v4100
    %v4102 = vand.u32 %v2594, 4294901760
    %4103 = vmatpush2.msra.mxu0 %v4102
    %v4104 = vand.u32 %v2592, 4294901760
    %4105 = vmatprep.subr.mxu0 %v4104
    %v4106 = vand.u32 %v2591, 4294901760
    %4107 = vmatpush2.msra.mxu0 %v4106
    %v4108 = vand.u32 %v2589, 4294901760
    %4109 = vmatprep.subr.mxu0 %v4108
    %v4110 = vand.u32 %v2588, 4294901760
    %4111 = vmatpush2.msra.mxu0 %v4110
    %v4112 = vand.u32 %v2586, 4294901760
    %4113 = vmatprep.subr.mxu0 %v4112
    %v4114 = vand.u32 %v2585, 4294901760
    %4115 = vmatpush2.msra.mxu0 %v4114
    %v4116 = vand.u32 %v2583, 4294901760
    %4117 = vmatprep.subr.mxu0 %v4116
    %v4118 = vand.u32 %v2582, 4294901760
    %4119 = vmatpush2.msra.mxu0 %v4118
    %v4120 = vand.u32 %v2580, 4294901760
    %4121 = vmatprep.subr.mxu0 %v4120
    %v4122 = vand.u32 %v2579, 4294901760
    %4123 = vmatpush2.msra.mxu0 %v4122
    %v4124 = vand.u32 %v2577, 4294901760
    %4125 = vmatprep.subr.mxu0 %v4124
    %v4126 = vand.u32 %v2576, 4294901760
    %4127 = vmatpush2.msra.mxu0 %v4126
    %v4128 = vand.u32 %v2574, 4294901760
    %4129 = vmatprep.subr.mxu0 %v4128
    %v4130 = vand.u32 %v2573, 4294901760
    %4131 = vmatpush2.msra.mxu0 %v4130
    %v4132 = vand.u32 %v2571, 4294901760
    %4133 = vmatprep.subr.mxu0 %v4132
    %v4134 = vand.u32 %v2570, 4294901760
    %4135 = vmatpush2.msra.mxu0 %v4134
    %v4136 = vand.u32 %v2568, 4294901760
    %4137 = vmatprep.subr.mxu0 %v4136
    %v4138 = vand.u32 %v2567, 4294901760
    %4139 = vmatpush2.msra.mxu0 %v4138
    %v4140 = vand.u32 %v2420, 4294901760
    %v4141 = vsub.f32 %v2420, %v4140
    %v4142 = vand.u32 %v4141, 4294901760
    %v4143 = vsub.f32 %v4141, %v4142
    %v4144 = vand.u32 %v4143, 4294901760
    %4145 = vmatprep.mubr.f32.mxu0 %v4144
    %v4146 = vand.u32 %v2419, 4294901760
    %v4147 = vsub.f32 %v2419, %v4146
    %v4148 = vand.u32 %v4147, 4294901760
    %v4149 = vsub.f32 %v4147, %v4148
    %v4150 = vand.u32 %v4149, 4294901760
    %4151 = vmatmul.mubr.f32.gmra.mxu0 %v4150
    %v4152 = vpop.f32.mrf.mxu0
    %v4153 = vadd.f32 %v4008, %v4152
    %v4154 = vpop.f32.mrf.mxu0
    %v4155 = vadd.f32 %v4010, %v4154
    %4156 = vdwg.mxu0
    %v4157 = vand.u32 %v2565, 4294901760
    %v4158 = vsub.f32 %v2565, %v4157
    %v4159 = vand.u32 %v4158, 4294901760
    %v4160 = vsub.f32 %v4158, %v4159
    %v4161 = vand.u32 %v4160, 4294901760
    %4162 = vmatprep.subr.mxu0 %v4161
    %v4163 = vand.u32 %v2564, 4294901760
    %v4164 = vsub.f32 %v2564, %v4163
    %v4165 = vand.u32 %v4164, 4294901760
    %v4166 = vsub.f32 %v4164, %v4165
    %v4167 = vand.u32 %v4166, 4294901760
    %4168 = vmatpush1.msra.mxu0 %v4167
    %v4169 = vand.u32 %v2562, 4294901760
    %v4170 = vsub.f32 %v2562, %v4169
    %v4171 = vand.u32 %v4170, 4294901760
    %v4172 = vsub.f32 %v4170, %v4171
    %v4173 = vand.u32 %v4172, 4294901760
    %4174 = vmatprep.subr.mxu0 %v4173
    %v4175 = vand.u32 %v2561, 4294901760
    %v4176 = vsub.f32 %v2561, %v4175
    %v4177 = vand.u32 %v4176, 4294901760
    %v4178 = vsub.f32 %v4176, %v4177
    %v4179 = vand.u32 %v4178, 4294901760
    %4180 = vmatpush1.msra.mxu0 %v4179
    %v4181 = vand.u32 %v2559, 4294901760
    %v4182 = vsub.f32 %v2559, %v4181
    %v4183 = vand.u32 %v4182, 4294901760
    %v4184 = vsub.f32 %v4182, %v4183
    %v4185 = vand.u32 %v4184, 4294901760
    %4186 = vmatprep.subr.mxu0 %v4185
    %v4187 = vand.u32 %v2558, 4294901760
    %v4188 = vsub.f32 %v2558, %v4187
    %v4189 = vand.u32 %v4188, 4294901760
    %v4190 = vsub.f32 %v4188, %v4189
    %v4191 = vand.u32 %v4190, 4294901760
    %4192 = vmatpush1.msra.mxu0 %v4191
    %v4193 = vand.u32 %v2556, 4294901760
    %v4194 = vsub.f32 %v2556, %v4193
    %v4195 = vand.u32 %v4194, 4294901760
    %v4196 = vsub.f32 %v4194, %v4195
    %v4197 = vand.u32 %v4196, 4294901760
    %4198 = vmatprep.subr.mxu0 %v4197
    %v4199 = vand.u32 %v2555, 4294901760
    %v4200 = vsub.f32 %v2555, %v4199
    %v4201 = vand.u32 %v4200, 4294901760
    %v4202 = vsub.f32 %v4200, %v4201
    %v4203 = vand.u32 %v4202, 4294901760
    %4204 = vmatpush1.msra.mxu0 %v4203
    %v4205 = vand.u32 %v2553, 4294901760
    %v4206 = vsub.f32 %v2553, %v4205
    %v4207 = vand.u32 %v4206, 4294901760
    %v4208 = vsub.f32 %v4206, %v4207
    %v4209 = vand.u32 %v4208, 4294901760
    %4210 = vmatprep.subr.mxu0 %v4209
    %v4211 = vand.u32 %v2552, 4294901760
    %v4212 = vsub.f32 %v2552, %v4211
    %v4213 = vand.u32 %v4212, 4294901760
    %v4214 = vsub.f32 %v4212, %v4213
    %v4215 = vand.u32 %v4214, 4294901760
    %4216 = vmatpush1.msra.mxu0 %v4215
    %v4217 = vand.u32 %v2550, 4294901760
    %v4218 = vsub.f32 %v2550, %v4217
    %v4219 = vand.u32 %v4218, 4294901760
    %v4220 = vsub.f32 %v4218, %v4219
    %v4221 = vand.u32 %v4220, 4294901760
    %4222 = vmatprep.subr.mxu0 %v4221
    %v4223 = vand.u32 %v2549, 4294901760
    %v4224 = vsub.f32 %v2549, %v4223
    %v4225 = vand.u32 %v4224, 4294901760
    %v4226 = vsub.f32 %v4224, %v4225
    %v4227 = vand.u32 %v4226, 4294901760
    %4228 = vmatpush1.msra.mxu0 %v4227
    %v4229 = vand.u32 %v2547, 4294901760
    %v4230 = vsub.f32 %v2547, %v4229
    %v4231 = vand.u32 %v4230, 4294901760
    %v4232 = vsub.f32 %v4230, %v4231
    %v4233 = vand.u32 %v4232, 4294901760
    %4234 = vmatprep.subr.mxu0 %v4233
    %v4235 = vand.u32 %v2546, 4294901760
    %v4236 = vsub.f32 %v2546, %v4235
    %v4237 = vand.u32 %v4236, 4294901760
    %v4238 = vsub.f32 %v4236, %v4237
    %v4239 = vand.u32 %v4238, 4294901760
    %4240 = vmatpush1.msra.mxu0 %v4239
    %v4241 = vand.u32 %v2544, 4294901760
    %v4242 = vsub.f32 %v2544, %v4241
    %v4243 = vand.u32 %v4242, 4294901760
    %v4244 = vsub.f32 %v4242, %v4243
    %v4245 = vand.u32 %v4244, 4294901760
    %4246 = vmatprep.subr.mxu0 %v4245
    %v4247 = vand.u32 %v2543, 4294901760
    %v4248 = vsub.f32 %v2543, %v4247
    %v4249 = vand.u32 %v4248, 4294901760
    %v4250 = vsub.f32 %v4248, %v4249
    %v4251 = vand.u32 %v4250, 4294901760
    %4252 = vmatpush1.msra.mxu0 %v4251
    %v4253 = vand.u32 %v2541, 4294901760
    %v4254 = vsub.f32 %v2541, %v4253
    %v4255 = vand.u32 %v4254, 4294901760
    %v4256 = vsub.f32 %v4254, %v4255
    %v4257 = vand.u32 %v4256, 4294901760
    %4258 = vmatprep.subr.mxu0 %v4257
    %v4259 = vand.u32 %v2540, 4294901760
    %v4260 = vsub.f32 %v2540, %v4259
    %v4261 = vand.u32 %v4260, 4294901760
    %v4262 = vsub.f32 %v4260, %v4261
    %v4263 = vand.u32 %v4262, 4294901760
    %4264 = vmatpush1.msra.mxu0 %v4263
    %v4265 = vand.u32 %v2538, 4294901760
    %v4266 = vsub.f32 %v2538, %v4265
    %v4267 = vand.u32 %v4266, 4294901760
    %v4268 = vsub.f32 %v4266, %v4267
    %v4269 = vand.u32 %v4268, 4294901760
    %4270 = vmatprep.subr.mxu0 %v4269
    %v4271 = vand.u32 %v2537, 4294901760
    %v4272 = vsub.f32 %v2537, %v4271
    %v4273 = vand.u32 %v4272, 4294901760
    %v4274 = vsub.f32 %v4272, %v4273
    %v4275 = vand.u32 %v4274, 4294901760
    %4276 = vmatpush1.msra.mxu0 %v4275
    %v4277 = vand.u32 %v2535, 4294901760
    %v4278 = vsub.f32 %v2535, %v4277
    %v4279 = vand.u32 %v4278, 4294901760
    %v4280 = vsub.f32 %v4278, %v4279
    %v4281 = vand.u32 %v4280, 4294901760
    %4282 = vmatprep.subr.mxu0 %v4281
    %v4283 = vand.u32 %v2534, 4294901760
    %v4284 = vsub.f32 %v2534, %v4283
    %v4285 = vand.u32 %v4284, 4294901760
    %v4286 = vsub.f32 %v4284, %v4285
    %v4287 = vand.u32 %v4286, 4294901760
    %4288 = vmatpush1.msra.mxu0 %v4287
    %v4289 = vand.u32 %v2532, 4294901760
    %v4290 = vsub.f32 %v2532, %v4289
    %v4291 = vand.u32 %v4290, 4294901760
    %v4292 = vsub.f32 %v4290, %v4291
    %v4293 = vand.u32 %v4292, 4294901760
    %4294 = vmatprep.subr.mxu0 %v4293
    %v4295 = vand.u32 %v2531, 4294901760
    %v4296 = vsub.f32 %v2531, %v4295
    %v4297 = vand.u32 %v4296, 4294901760
    %v4298 = vsub.f32 %v4296, %v4297
    %v4299 = vand.u32 %v4298, 4294901760
    %4300 = vmatpush1.msra.mxu0 %v4299
    %v4301 = vand.u32 %v2529, 4294901760
    %v4302 = vsub.f32 %v2529, %v4301
    %v4303 = vand.u32 %v4302, 4294901760
    %v4304 = vsub.f32 %v4302, %v4303
    %v4305 = vand.u32 %v4304, 4294901760
    %4306 = vmatprep.subr.mxu0 %v4305
    %v4307 = vand.u32 %v2528, 4294901760
    %v4308 = vsub.f32 %v2528, %v4307
    %v4309 = vand.u32 %v4308, 4294901760
    %v4310 = vsub.f32 %v4308, %v4309
    %v4311 = vand.u32 %v4310, 4294901760
    %4312 = vmatpush1.msra.mxu0 %v4311
    %v4313 = vand.u32 %v2526, 4294901760
    %v4314 = vsub.f32 %v2526, %v4313
    %v4315 = vand.u32 %v4314, 4294901760
    %v4316 = vsub.f32 %v4314, %v4315
    %v4317 = vand.u32 %v4316, 4294901760
    %4318 = vmatprep.subr.mxu0 %v4317
    %v4319 = vand.u32 %v2525, 4294901760
    %v4320 = vsub.f32 %v2525, %v4319
    %v4321 = vand.u32 %v4320, 4294901760
    %v4322 = vsub.f32 %v4320, %v4321
    %v4323 = vand.u32 %v4322, 4294901760
    %4324 = vmatpush1.msra.mxu0 %v4323
    %v4325 = vand.u32 %v2523, 4294901760
    %v4326 = vsub.f32 %v2523, %v4325
    %v4327 = vand.u32 %v4326, 4294901760
    %v4328 = vsub.f32 %v4326, %v4327
    %v4329 = vand.u32 %v4328, 4294901760
    %4330 = vmatprep.subr.mxu0 %v4329
    %v4331 = vand.u32 %v2522, 4294901760
    %v4332 = vsub.f32 %v2522, %v4331
    %v4333 = vand.u32 %v4332, 4294901760
    %v4334 = vsub.f32 %v4332, %v4333
    %v4335 = vand.u32 %v4334, 4294901760
    %4336 = vmatpush1.msra.mxu0 %v4335
    %v4337 = vand.u32 %v2520, 4294901760
    %v4338 = vsub.f32 %v2520, %v4337
    %v4339 = vand.u32 %v4338, 4294901760
    %v4340 = vsub.f32 %v4338, %v4339
    %v4341 = vand.u32 %v4340, 4294901760
    %4342 = vmatprep.subr.mxu0 %v4341
    %v4343 = vand.u32 %v2519, 4294901760
    %v4344 = vsub.f32 %v2519, %v4343
    %v4345 = vand.u32 %v4344, 4294901760
    %v4346 = vsub.f32 %v4344, %v4345
    %v4347 = vand.u32 %v4346, 4294901760
    %4348 = vmatpush1.msra.mxu0 %v4347
    %v4349 = vand.u32 %v2613, 4294901760
    %v4350 = vsub.f32 %v2613, %v4349
    %v4351 = vand.u32 %v4350, 4294901760
    %v4352 = vsub.f32 %v4350, %v4351
    %v4353 = vand.u32 %v4352, 4294901760
    %4354 = vmatprep.subr.mxu0 %v4353
    %v4355 = vand.u32 %v2612, 4294901760
    %v4356 = vsub.f32 %v2612, %v4355
    %v4357 = vand.u32 %v4356, 4294901760
    %v4358 = vsub.f32 %v4356, %v4357
    %v4359 = vand.u32 %v4358, 4294901760
    %4360 = vmatpush2.msra.mxu0 %v4359
    %v4361 = vand.u32 %v2610, 4294901760
    %v4362 = vsub.f32 %v2610, %v4361
    %v4363 = vand.u32 %v4362, 4294901760
    %v4364 = vsub.f32 %v4362, %v4363
    %v4365 = vand.u32 %v4364, 4294901760
    %4366 = vmatprep.subr.mxu0 %v4365
    %v4367 = vand.u32 %v2609, 4294901760
    %v4368 = vsub.f32 %v2609, %v4367
    %v4369 = vand.u32 %v4368, 4294901760
    %v4370 = vsub.f32 %v4368, %v4369
    %v4371 = vand.u32 %v4370, 4294901760
    %4372 = vmatpush2.msra.mxu0 %v4371
    %v4373 = vand.u32 %v2607, 4294901760
    %v4374 = vsub.f32 %v2607, %v4373
    %v4375 = vand.u32 %v4374, 4294901760
    %v4376 = vsub.f32 %v4374, %v4375
    %v4377 = vand.u32 %v4376, 4294901760
    %4378 = vmatprep.subr.mxu0 %v4377
    %v4379 = vand.u32 %v2606, 4294901760
    %v4380 = vsub.f32 %v2606, %v4379
    %v4381 = vand.u32 %v4380, 4294901760
    %v4382 = vsub.f32 %v4380, %v4381
    %v4383 = vand.u32 %v4382, 4294901760
    %4384 = vmatpush2.msra.mxu0 %v4383
    %v4385 = vand.u32 %v2604, 4294901760
    %v4386 = vsub.f32 %v2604, %v4385
    %v4387 = vand.u32 %v4386, 4294901760
    %v4388 = vsub.f32 %v4386, %v4387
    %v4389 = vand.u32 %v4388, 4294901760
    %4390 = vmatprep.subr.mxu0 %v4389
    %v4391 = vand.u32 %v2603, 4294901760
    %v4392 = vsub.f32 %v2603, %v4391
    %v4393 = vand.u32 %v4392, 4294901760
    %v4394 = vsub.f32 %v4392, %v4393
    %v4395 = vand.u32 %v4394, 4294901760
    %4396 = vmatpush2.msra.mxu0 %v4395
    %v4397 = vand.u32 %v2601, 4294901760
    %v4398 = vsub.f32 %v2601, %v4397
    %v4399 = vand.u32 %v4398, 4294901760
    %v4400 = vsub.f32 %v4398, %v4399
    %v4401 = vand.u32 %v4400, 4294901760
    %4402 = vmatprep.subr.mxu0 %v4401
    %v4403 = vand.u32 %v2600, 4294901760
    %v4404 = vsub.f32 %v2600, %v4403
    %v4405 = vand.u32 %v4404, 4294901760
    %v4406 = vsub.f32 %v4404, %v4405
    %v4407 = vand.u32 %v4406, 4294901760
    %4408 = vmatpush2.msra.mxu0 %v4407
    %v4409 = vand.u32 %v2598, 4294901760
    %v4410 = vsub.f32 %v2598, %v4409
    %v4411 = vand.u32 %v4410, 4294901760
    %v4412 = vsub.f32 %v4410, %v4411
    %v4413 = vand.u32 %v4412, 4294901760
    %4414 = vmatprep.subr.mxu0 %v4413
    %v4415 = vand.u32 %v2597, 4294901760
    %v4416 = vsub.f32 %v2597, %v4415
    %v4417 = vand.u32 %v4416, 4294901760
    %v4418 = vsub.f32 %v4416, %v4417
    %v4419 = vand.u32 %v4418, 4294901760
    %4420 = vmatpush2.msra.mxu0 %v4419
    %v4421 = vand.u32 %v2595, 4294901760
    %v4422 = vsub.f32 %v2595, %v4421
    %v4423 = vand.u32 %v4422, 4294901760
    %v4424 = vsub.f32 %v4422, %v4423
    %v4425 = vand.u32 %v4424, 4294901760
    %4426 = vmatprep.subr.mxu0 %v4425
    %v4427 = vand.u32 %v2594, 4294901760
    %v4428 = vsub.f32 %v2594, %v4427
    %v4429 = vand.u32 %v4428, 4294901760
    %v4430 = vsub.f32 %v4428, %v4429
    %v4431 = vand.u32 %v4430, 4294901760
    %4432 = vmatpush2.msra.mxu0 %v4431
    %v4433 = vand.u32 %v2592, 4294901760
    %v4434 = vsub.f32 %v2592, %v4433
    %v4435 = vand.u32 %v4434, 4294901760
    %v4436 = vsub.f32 %v4434, %v4435
    %v4437 = vand.u32 %v4436, 4294901760
    %4438 = vmatprep.subr.mxu0 %v4437
    %v4439 = vand.u32 %v2591, 4294901760
    %v4440 = vsub.f32 %v2591, %v4439
    %v4441 = vand.u32 %v4440, 4294901760
    %v4442 = vsub.f32 %v4440, %v4441
    %v4443 = vand.u32 %v4442, 4294901760
    %4444 = vmatpush2.msra.mxu0 %v4443
    %v4445 = vand.u32 %v2589, 4294901760
    %v4446 = vsub.f32 %v2589, %v4445
    %v4447 = vand.u32 %v4446, 4294901760
    %v4448 = vsub.f32 %v4446, %v4447
    %v4449 = vand.u32 %v4448, 4294901760
    %4450 = vmatprep.subr.mxu0 %v4449
    %v4451 = vand.u32 %v2588, 4294901760
    %v4452 = vsub.f32 %v2588, %v4451
    %v4453 = vand.u32 %v4452, 4294901760
    %v4454 = vsub.f32 %v4452, %v4453
    %v4455 = vand.u32 %v4454, 4294901760
    %4456 = vmatpush2.msra.mxu0 %v4455
    %v4457 = vand.u32 %v2586, 4294901760
    %v4458 = vsub.f32 %v2586, %v4457
    %v4459 = vand.u32 %v4458, 4294901760
    %v4460 = vsub.f32 %v4458, %v4459
    %v4461 = vand.u32 %v4460, 4294901760
    %4462 = vmatprep.subr.mxu0 %v4461
    %v4463 = vand.u32 %v2585, 4294901760
    %v4464 = vsub.f32 %v2585, %v4463
    %v4465 = vand.u32 %v4464, 4294901760
    %v4466 = vsub.f32 %v4464, %v4465
    %v4467 = vand.u32 %v4466, 4294901760
    %4468 = vmatpush2.msra.mxu0 %v4467
    %v4469 = vand.u32 %v2583, 4294901760
    %v4470 = vsub.f32 %v2583, %v4469
    %v4471 = vand.u32 %v4470, 4294901760
    %v4472 = vsub.f32 %v4470, %v4471
    %v4473 = vand.u32 %v4472, 4294901760
    %4474 = vmatprep.subr.mxu0 %v4473
    %v4475 = vand.u32 %v2582, 4294901760
    %v4476 = vsub.f32 %v2582, %v4475
    %v4477 = vand.u32 %v4476, 4294901760
    %v4478 = vsub.f32 %v4476, %v4477
    %v4479 = vand.u32 %v4478, 4294901760
    %4480 = vmatpush2.msra.mxu0 %v4479
    %v4481 = vand.u32 %v2580, 4294901760
    %v4482 = vsub.f32 %v2580, %v4481
    %v4483 = vand.u32 %v4482, 4294901760
    %v4484 = vsub.f32 %v4482, %v4483
    %v4485 = vand.u32 %v4484, 4294901760
    %4486 = vmatprep.subr.mxu0 %v4485
    %v4487 = vand.u32 %v2579, 4294901760
    %v4488 = vsub.f32 %v2579, %v4487
    %v4489 = vand.u32 %v4488, 4294901760
    %v4490 = vsub.f32 %v4488, %v4489
    %v4491 = vand.u32 %v4490, 4294901760
    %4492 = vmatpush2.msra.mxu0 %v4491
    %v4493 = vand.u32 %v2577, 4294901760
    %v4494 = vsub.f32 %v2577, %v4493
    %v4495 = vand.u32 %v4494, 4294901760
    %v4496 = vsub.f32 %v4494, %v4495
    %v4497 = vand.u32 %v4496, 4294901760
    %4498 = vmatprep.subr.mxu0 %v4497
    %v4499 = vand.u32 %v2576, 4294901760
    %v4500 = vsub.f32 %v2576, %v4499
    %v4501 = vand.u32 %v4500, 4294901760
    %v4502 = vsub.f32 %v4500, %v4501
    %v4503 = vand.u32 %v4502, 4294901760
    %4504 = vmatpush2.msra.mxu0 %v4503
    %v4505 = vand.u32 %v2574, 4294901760
    %v4506 = vsub.f32 %v2574, %v4505
    %v4507 = vand.u32 %v4506, 4294901760
    %v4508 = vsub.f32 %v4506, %v4507
    %v4509 = vand.u32 %v4508, 4294901760
    %4510 = vmatprep.subr.mxu0 %v4509
    %v4511 = vand.u32 %v2573, 4294901760
    %v4512 = vsub.f32 %v2573, %v4511
    %v4513 = vand.u32 %v4512, 4294901760
    %v4514 = vsub.f32 %v4512, %v4513
    %v4515 = vand.u32 %v4514, 4294901760
    %4516 = vmatpush2.msra.mxu0 %v4515
    %v4517 = vand.u32 %v2571, 4294901760
    %v4518 = vsub.f32 %v2571, %v4517
    %v4519 = vand.u32 %v4518, 4294901760
    %v4520 = vsub.f32 %v4518, %v4519
    %v4521 = vand.u32 %v4520, 4294901760
    %4522 = vmatprep.subr.mxu0 %v4521
    %v4523 = vand.u32 %v2570, 4294901760
    %v4524 = vsub.f32 %v2570, %v4523
    %v4525 = vand.u32 %v4524, 4294901760
    %v4526 = vsub.f32 %v4524, %v4525
    %v4527 = vand.u32 %v4526, 4294901760
    %4528 = vmatpush2.msra.mxu0 %v4527
    %v4529 = vand.u32 %v2568, 4294901760
    %v4530 = vsub.f32 %v2568, %v4529
    %v4531 = vand.u32 %v4530, 4294901760
    %v4532 = vsub.f32 %v4530, %v4531
    %v4533 = vand.u32 %v4532, 4294901760
    %4534 = vmatprep.subr.mxu0 %v4533
    %v4535 = vand.u32 %v2567, 4294901760
    %v4536 = vsub.f32 %v2567, %v4535
    %v4537 = vand.u32 %v4536, 4294901760
    %v4538 = vsub.f32 %v4536, %v4537
    %v4539 = vand.u32 %v4538, 4294901760
    %4540 = vmatpush2.msra.mxu0 %v4539
    %v4541 = vand.u32 %v2420, 4294901760
    %4542 = vmatprep.mubr.f32.mxu0 %v4541
    %v4543 = vand.u32 %v2419, 4294901760
    %4544 = vmatmul.mubr.f32.gmra.mxu0 %v4543
    %v4545 = vpop.f32.mrf.mxu0
    %v4546 = vadd.f32 %v4153, %v4545
    %v4547 = vpop.f32.mrf.mxu0
    %v4548 = vadd.f32 %v4155, %v4547
    %4549 = vdwg.mxu0
    %v4550 = vand.u32 %v2565, 4294901760
    %v4551 = vsub.f32 %v2565, %v4550
    %4552 = vmatprep.subr.mxu0 %v4551
    %v4553 = vand.u32 %v2564, 4294901760
    %v4554 = vsub.f32 %v2564, %v4553
    %4555 = vmatpush1.msra.mxu0 %v4554
    %v4556 = vand.u32 %v2562, 4294901760
    %v4557 = vsub.f32 %v2562, %v4556
    %4558 = vmatprep.subr.mxu0 %v4557
    %v4559 = vand.u32 %v2561, 4294901760
    %v4560 = vsub.f32 %v2561, %v4559
    %4561 = vmatpush1.msra.mxu0 %v4560
    %v4562 = vand.u32 %v2559, 4294901760
    %v4563 = vsub.f32 %v2559, %v4562
    %4564 = vmatprep.subr.mxu0 %v4563
    %v4565 = vand.u32 %v2558, 4294901760
    %v4566 = vsub.f32 %v2558, %v4565
    %4567 = vmatpush1.msra.mxu0 %v4566
    %v4568 = vand.u32 %v2556, 4294901760
    %v4569 = vsub.f32 %v2556, %v4568
    %4570 = vmatprep.subr.mxu0 %v4569
    %v4571 = vand.u32 %v2555, 4294901760
    %v4572 = vsub.f32 %v2555, %v4571
    %4573 = vmatpush1.msra.mxu0 %v4572
    %v4574 = vand.u32 %v2553, 4294901760
    %v4575 = vsub.f32 %v2553, %v4574
    %4576 = vmatprep.subr.mxu0 %v4575
    %v4577 = vand.u32 %v2552, 4294901760
    %v4578 = vsub.f32 %v2552, %v4577
    %4579 = vmatpush1.msra.mxu0 %v4578
    %v4580 = vand.u32 %v2550, 4294901760
    %v4581 = vsub.f32 %v2550, %v4580
    %4582 = vmatprep.subr.mxu0 %v4581
    %v4583 = vand.u32 %v2549, 4294901760
    %v4584 = vsub.f32 %v2549, %v4583
    %4585 = vmatpush1.msra.mxu0 %v4584
    %v4586 = vand.u32 %v2547, 4294901760
    %v4587 = vsub.f32 %v2547, %v4586
    %4588 = vmatprep.subr.mxu0 %v4587
    %v4589 = vand.u32 %v2546, 4294901760
    %v4590 = vsub.f32 %v2546, %v4589
    %4591 = vmatpush1.msra.mxu0 %v4590
    %v4592 = vand.u32 %v2544, 4294901760
    %v4593 = vsub.f32 %v2544, %v4592
    %4594 = vmatprep.subr.mxu0 %v4593
    %v4595 = vand.u32 %v2543, 4294901760
    %v4596 = vsub.f32 %v2543, %v4595
    %4597 = vmatpush1.msra.mxu0 %v4596
    %v4598 = vand.u32 %v2541, 4294901760
    %v4599 = vsub.f32 %v2541, %v4598
    %4600 = vmatprep.subr.mxu0 %v4599
    %v4601 = vand.u32 %v2540, 4294901760
    %v4602 = vsub.f32 %v2540, %v4601
    %4603 = vmatpush1.msra.mxu0 %v4602
    %v4604 = vand.u32 %v2538, 4294901760
    %v4605 = vsub.f32 %v2538, %v4604
    %4606 = vmatprep.subr.mxu0 %v4605
    %v4607 = vand.u32 %v2537, 4294901760
    %v4608 = vsub.f32 %v2537, %v4607
    %4609 = vmatpush1.msra.mxu0 %v4608
    %v4610 = vand.u32 %v2535, 4294901760
    %v4611 = vsub.f32 %v2535, %v4610
    %4612 = vmatprep.subr.mxu0 %v4611
    %v4613 = vand.u32 %v2534, 4294901760
    %v4614 = vsub.f32 %v2534, %v4613
    %4615 = vmatpush1.msra.mxu0 %v4614
    %v4616 = vand.u32 %v2532, 4294901760
    %v4617 = vsub.f32 %v2532, %v4616
    %4618 = vmatprep.subr.mxu0 %v4617
    %v4619 = vand.u32 %v2531, 4294901760
    %v4620 = vsub.f32 %v2531, %v4619
    %4621 = vmatpush1.msra.mxu0 %v4620
    %v4622 = vand.u32 %v2529, 4294901760
    %v4623 = vsub.f32 %v2529, %v4622
    %4624 = vmatprep.subr.mxu0 %v4623
    %v4625 = vand.u32 %v2528, 4294901760
    %v4626 = vsub.f32 %v2528, %v4625
    %4627 = vmatpush1.msra.mxu0 %v4626
    %v4628 = vand.u32 %v2526, 4294901760
    %v4629 = vsub.f32 %v2526, %v4628
    %4630 = vmatprep.subr.mxu0 %v4629
    %v4631 = vand.u32 %v2525, 4294901760
    %v4632 = vsub.f32 %v2525, %v4631
    %4633 = vmatpush1.msra.mxu0 %v4632
    %v4634 = vand.u32 %v2523, 4294901760
    %v4635 = vsub.f32 %v2523, %v4634
    %4636 = vmatprep.subr.mxu0 %v4635
    %v4637 = vand.u32 %v2522, 4294901760
    %v4638 = vsub.f32 %v2522, %v4637
    %4639 = vmatpush1.msra.mxu0 %v4638
    %v4640 = vand.u32 %v2520, 4294901760
    %v4641 = vsub.f32 %v2520, %v4640
    %4642 = vmatprep.subr.mxu0 %v4641
    %v4643 = vand.u32 %v2519, 4294901760
    %v4644 = vsub.f32 %v2519, %v4643
    %4645 = vmatpush1.msra.mxu0 %v4644
    %v4646 = vand.u32 %v2613, 4294901760
    %v4647 = vsub.f32 %v2613, %v4646
    %4648 = vmatprep.subr.mxu0 %v4647
    %v4649 = vand.u32 %v2612, 4294901760
    %v4650 = vsub.f32 %v2612, %v4649
    %4651 = vmatpush2.msra.mxu0 %v4650
    %v4652 = vand.u32 %v2610, 4294901760
    %v4653 = vsub.f32 %v2610, %v4652
    %4654 = vmatprep.subr.mxu0 %v4653
    %v4655 = vand.u32 %v2609, 4294901760
    %v4656 = vsub.f32 %v2609, %v4655
    %4657 = vmatpush2.msra.mxu0 %v4656
    %v4658 = vand.u32 %v2607, 4294901760
    %v4659 = vsub.f32 %v2607, %v4658
    %4660 = vmatprep.subr.mxu0 %v4659
    %v4661 = vand.u32 %v2606, 4294901760
    %v4662 = vsub.f32 %v2606, %v4661
    %4663 = vmatpush2.msra.mxu0 %v4662
    %v4664 = vand.u32 %v2604, 4294901760
    %v4665 = vsub.f32 %v2604, %v4664
    %4666 = vmatprep.subr.mxu0 %v4665
    %v4667 = vand.u32 %v2603, 4294901760
    %v4668 = vsub.f32 %v2603, %v4667
    %4669 = vmatpush2.msra.mxu0 %v4668
    %v4670 = vand.u32 %v2601, 4294901760
    %v4671 = vsub.f32 %v2601, %v4670
    %4672 = vmatprep.subr.mxu0 %v4671
    %v4673 = vand.u32 %v2600, 4294901760
    %v4674 = vsub.f32 %v2600, %v4673
    %4675 = vmatpush2.msra.mxu0 %v4674
    %v4676 = vand.u32 %v2598, 4294901760
    %v4677 = vsub.f32 %v2598, %v4676
    %4678 = vmatprep.subr.mxu0 %v4677
    %v4679 = vand.u32 %v2597, 4294901760
    %v4680 = vsub.f32 %v2597, %v4679
    %4681 = vmatpush2.msra.mxu0 %v4680
    %v4682 = vand.u32 %v2595, 4294901760
    %v4683 = vsub.f32 %v2595, %v4682
    %4684 = vmatprep.subr.mxu0 %v4683
    %v4685 = vand.u32 %v2594, 4294901760
    %v4686 = vsub.f32 %v2594, %v4685
    %4687 = vmatpush2.msra.mxu0 %v4686
    %v4688 = vand.u32 %v2592, 4294901760
    %v4689 = vsub.f32 %v2592, %v4688
    %4690 = vmatprep.subr.mxu0 %v4689
    %v4691 = vand.u32 %v2591, 4294901760
    %v4692 = vsub.f32 %v2591, %v4691
    %4693 = vmatpush2.msra.mxu0 %v4692
    %v4694 = vand.u32 %v2589, 4294901760
    %v4695 = vsub.f32 %v2589, %v4694
    %4696 = vmatprep.subr.mxu0 %v4695
    %v4697 = vand.u32 %v2588, 4294901760
    %v4698 = vsub.f32 %v2588, %v4697
    %4699 = vmatpush2.msra.mxu0 %v4698
    %v4700 = vand.u32 %v2586, 4294901760
    %v4701 = vsub.f32 %v2586, %v4700
    %4702 = vmatprep.subr.mxu0 %v4701
    %v4703 = vand.u32 %v2585, 4294901760
    %v4704 = vsub.f32 %v2585, %v4703
    %4705 = vmatpush2.msra.mxu0 %v4704
    %v4706 = vand.u32 %v2583, 4294901760
    %v4707 = vsub.f32 %v2583, %v4706
    %4708 = vmatprep.subr.mxu0 %v4707
    %v4709 = vand.u32 %v2582, 4294901760
    %v4710 = vsub.f32 %v2582, %v4709
    %4711 = vmatpush2.msra.mxu0 %v4710
    %v4712 = vand.u32 %v2580, 4294901760
    %v4713 = vsub.f32 %v2580, %v4712
    %4714 = vmatprep.subr.mxu0 %v4713
    %v4715 = vand.u32 %v2579, 4294901760
    %v4716 = vsub.f32 %v2579, %v4715
    %4717 = vmatpush2.msra.mxu0 %v4716
    %v4718 = vand.u32 %v2577, 4294901760
    %v4719 = vsub.f32 %v2577, %v4718
    %4720 = vmatprep.subr.mxu0 %v4719
    %v4721 = vand.u32 %v2576, 4294901760
    %v4722 = vsub.f32 %v2576, %v4721
    %4723 = vmatpush2.msra.mxu0 %v4722
    %v4724 = vand.u32 %v2574, 4294901760
    %v4725 = vsub.f32 %v2574, %v4724
    %4726 = vmatprep.subr.mxu0 %v4725
    %v4727 = vand.u32 %v2573, 4294901760
    %v4728 = vsub.f32 %v2573, %v4727
    %4729 = vmatpush2.msra.mxu0 %v4728
    %v4730 = vand.u32 %v2571, 4294901760
    %v4731 = vsub.f32 %v2571, %v4730
    %4732 = vmatprep.subr.mxu0 %v4731
    %v4733 = vand.u32 %v2570, 4294901760
    %v4734 = vsub.f32 %v2570, %v4733
    %4735 = vmatpush2.msra.mxu0 %v4734
    %v4736 = vand.u32 %v2568, 4294901760
    %v4737 = vsub.f32 %v2568, %v4736
    %4738 = vmatprep.subr.mxu0 %v4737
    %v4739 = vand.u32 %v2567, 4294901760
    %v4740 = vsub.f32 %v2567, %v4739
    %4741 = vmatpush2.msra.mxu0 %v4740
    %v4742 = vand.u32 %v2420, 4294901760
    %v4743 = vsub.f32 %v2420, %v4742
    %4744 = vmatprep.mubr.f32.mxu0 %v4743
    %v4745 = vand.u32 %v2419, 4294901760
    %v4746 = vsub.f32 %v2419, %v4745
    %4747 = vmatmul.mubr.f32.gmra.mxu0 %v4746
    %v4748 = vpop.f32.mrf.mxu0
    %v4749 = vadd.f32 %v4546, %v4748
    %v4750 = vpop.f32.mrf.mxu0
    %v4751 = vadd.f32 %v4548, %v4750
    %4752 = vdwg.mxu0
    %v4753 = vand.u32 %v2565, 4294901760
    %4754 = vmatprep.subr.mxu0 %v4753
    %v4755 = vand.u32 %v2564, 4294901760
    %4756 = vmatpush1.msra.mxu0 %v4755
    %v4757 = vand.u32 %v2562, 4294901760
    %4758 = vmatprep.subr.mxu0 %v4757
    %v4759 = vand.u32 %v2561, 4294901760
    %4760 = vmatpush1.msra.mxu0 %v4759
    %v4761 = vand.u32 %v2559, 4294901760
    %4762 = vmatprep.subr.mxu0 %v4761
    %v4763 = vand.u32 %v2558, 4294901760
    %4764 = vmatpush1.msra.mxu0 %v4763
    %v4765 = vand.u32 %v2556, 4294901760
    %4766 = vmatprep.subr.mxu0 %v4765
    %v4767 = vand.u32 %v2555, 4294901760
    %4768 = vmatpush1.msra.mxu0 %v4767
    %v4769 = vand.u32 %v2553, 4294901760
    %4770 = vmatprep.subr.mxu0 %v4769
    %v4771 = vand.u32 %v2552, 4294901760
    %4772 = vmatpush1.msra.mxu0 %v4771
    %v4773 = vand.u32 %v2550, 4294901760
    %4774 = vmatprep.subr.mxu0 %v4773
    %v4775 = vand.u32 %v2549, 4294901760
    %4776 = vmatpush1.msra.mxu0 %v4775
    %v4777 = vand.u32 %v2547, 4294901760
    %4778 = vmatprep.subr.mxu0 %v4777
    %v4779 = vand.u32 %v2546, 4294901760
    %4780 = vmatpush1.msra.mxu0 %v4779
    %v4781 = vand.u32 %v2544, 4294901760
    %4782 = vmatprep.subr.mxu0 %v4781
    %v4783 = vand.u32 %v2543, 4294901760
    %4784 = vmatpush1.msra.mxu0 %v4783
    %v4785 = vand.u32 %v2541, 4294901760
    %4786 = vmatprep.subr.mxu0 %v4785
    %v4787 = vand.u32 %v2540, 4294901760
    %4788 = vmatpush1.msra.mxu0 %v4787
    %v4789 = vand.u32 %v2538, 4294901760
    %4790 = vmatprep.subr.mxu0 %v4789
    %v4791 = vand.u32 %v2537, 4294901760
    %4792 = vmatpush1.msra.mxu0 %v4791
    %v4793 = vand.u32 %v2535, 4294901760
    %4794 = vmatprep.subr.mxu0 %v4793
    %v4795 = vand.u32 %v2534, 4294901760
    %4796 = vmatpush1.msra.mxu0 %v4795
    %v4797 = vand.u32 %v2532, 4294901760
    %4798 = vmatprep.subr.mxu0 %v4797
    %v4799 = vand.u32 %v2531, 4294901760
    %4800 = vmatpush1.msra.mxu0 %v4799
    %v4801 = vand.u32 %v2529, 4294901760
    %4802 = vmatprep.subr.mxu0 %v4801
    %v4803 = vand.u32 %v2528, 4294901760
    %4804 = vmatpush1.msra.mxu0 %v4803
    %v4805 = vand.u32 %v2526, 4294901760
    %4806 = vmatprep.subr.mxu0 %v4805
    %v4807 = vand.u32 %v2525, 4294901760
    %4808 = vmatpush1.msra.mxu0 %v4807
    %v4809 = vand.u32 %v2523, 4294901760
    %4810 = vmatprep.subr.mxu0 %v4809
    %v4811 = vand.u32 %v2522, 4294901760
    %4812 = vmatpush1.msra.mxu0 %v4811
    %v4813 = vand.u32 %v2520, 4294901760
    %4814 = vmatprep.subr.mxu0 %v4813
    %v4815 = vand.u32 %v2519, 4294901760
    %4816 = vmatpush1.msra.mxu0 %v4815
    %v4817 = vand.u32 %v2613, 4294901760
    %4818 = vmatprep.subr.mxu0 %v4817
    %v4819 = vand.u32 %v2612, 4294901760
    %4820 = vmatpush2.msra.mxu0 %v4819
    %v4821 = vand.u32 %v2610, 4294901760
    %4822 = vmatprep.subr.mxu0 %v4821
    %v4823 = vand.u32 %v2609, 4294901760
    %4824 = vmatpush2.msra.mxu0 %v4823
    %v4825 = vand.u32 %v2607, 4294901760
    %4826 = vmatprep.subr.mxu0 %v4825
    %v4827 = vand.u32 %v2606, 4294901760
    %4828 = vmatpush2.msra.mxu0 %v4827
    %v4829 = vand.u32 %v2604, 4294901760
    %4830 = vmatprep.subr.mxu0 %v4829
    %v4831 = vand.u32 %v2603, 4294901760
    %4832 = vmatpush2.msra.mxu0 %v4831
    %v4833 = vand.u32 %v2601, 4294901760
    %4834 = vmatprep.subr.mxu0 %v4833
    %v4835 = vand.u32 %v2600, 4294901760
    %4836 = vmatpush2.msra.mxu0 %v4835
    %v4837 = vand.u32 %v2598, 4294901760
    %4838 = vmatprep.subr.mxu0 %v4837
    %v4839 = vand.u32 %v2597, 4294901760
    %4840 = vmatpush2.msra.mxu0 %v4839
    %v4841 = vand.u32 %v2595, 4294901760
    %4842 = vmatprep.subr.mxu0 %v4841
    %v4843 = vand.u32 %v2594, 4294901760
    %4844 = vmatpush2.msra.mxu0 %v4843
    %v4845 = vand.u32 %v2592, 4294901760
    %4846 = vmatprep.subr.mxu0 %v4845
    %v4847 = vand.u32 %v2591, 4294901760
    %4848 = vmatpush2.msra.mxu0 %v4847
    %v4849 = vand.u32 %v2589, 4294901760
    %4850 = vmatprep.subr.mxu0 %v4849
    %v4851 = vand.u32 %v2588, 4294901760
    %4852 = vmatpush2.msra.mxu0 %v4851
    %v4853 = vand.u32 %v2586, 4294901760
    %4854 = vmatprep.subr.mxu0 %v4853
    %v4855 = vand.u32 %v2585, 4294901760
    %4856 = vmatpush2.msra.mxu0 %v4855
    %v4857 = vand.u32 %v2583, 4294901760
    %4858 = vmatprep.subr.mxu0 %v4857
    %v4859 = vand.u32 %v2582, 4294901760
    %4860 = vmatpush2.msra.mxu0 %v4859
    %v4861 = vand.u32 %v2580, 4294901760
    %4862 = vmatprep.subr.mxu0 %v4861
    %v4863 = vand.u32 %v2579, 4294901760
    %4864 = vmatpush2.msra.mxu0 %v4863
    %v4865 = vand.u32 %v2577, 4294901760
    %4866 = vmatprep.subr.mxu0 %v4865
    %v4867 = vand.u32 %v2576, 4294901760
    %4868 = vmatpush2.msra.mxu0 %v4867
    %v4869 = vand.u32 %v2574, 4294901760
    %4870 = vmatprep.subr.mxu0 %v4869
    %v4871 = vand.u32 %v2573, 4294901760
    %4872 = vmatpush2.msra.mxu0 %v4871
    %v4873 = vand.u32 %v2571, 4294901760
    %4874 = vmatprep.subr.mxu0 %v4873
    %v4875 = vand.u32 %v2570, 4294901760
    %4876 = vmatpush2.msra.mxu0 %v4875
    %v4877 = vand.u32 %v2568, 4294901760
    %4878 = vmatprep.subr.mxu0 %v4877
    %v4879 = vand.u32 %v2567, 4294901760
    %4880 = vmatpush2.msra.mxu0 %v4879
    %v4881 = vand.u32 %v2420, 4294901760
    %v4882 = vsub.f32 %v2420, %v4881
    %v4883 = vand.u32 %v4882, 4294901760
    %4884 = vmatprep.mubr.f32.mxu0 %v4883
    %v4885 = vand.u32 %v2419, 4294901760
    %v4886 = vsub.f32 %v2419, %v4885
    %v4887 = vand.u32 %v4886, 4294901760
    %4888 = vmatmul.mubr.f32.gmra.mxu0 %v4887
    %v4889 = vpop.f32.mrf.mxu0
    %v4890 = vadd.f32 %v4749, %v4889
    %v4891 = vpop.f32.mrf.mxu0
    %v4892 = vadd.f32 %v4751, %v4891
    %4893 = vdwg.mxu0
    %v4894 = vand.u32 %v2565, 4294901760
    %v4895 = vsub.f32 %v2565, %v4894
    %v4896 = vand.u32 %v4895, 4294901760
    %4897 = vmatprep.subr.mxu0 %v4896
    %v4898 = vand.u32 %v2564, 4294901760
    %v4899 = vsub.f32 %v2564, %v4898
    %v4900 = vand.u32 %v4899, 4294901760
    %4901 = vmatpush1.msra.mxu0 %v4900
    %v4902 = vand.u32 %v2562, 4294901760
    %v4903 = vsub.f32 %v2562, %v4902
    %v4904 = vand.u32 %v4903, 4294901760
    %4905 = vmatprep.subr.mxu0 %v4904
    %v4906 = vand.u32 %v2561, 4294901760
    %v4907 = vsub.f32 %v2561, %v4906
    %v4908 = vand.u32 %v4907, 4294901760
    %4909 = vmatpush1.msra.mxu0 %v4908
    %v4910 = vand.u32 %v2559, 4294901760
    %v4911 = vsub.f32 %v2559, %v4910
    %v4912 = vand.u32 %v4911, 4294901760
    %4913 = vmatprep.subr.mxu0 %v4912
    %v4914 = vand.u32 %v2558, 4294901760
    %v4915 = vsub.f32 %v2558, %v4914
    %v4916 = vand.u32 %v4915, 4294901760
    %4917 = vmatpush1.msra.mxu0 %v4916
    %v4918 = vand.u32 %v2556, 4294901760
    %v4919 = vsub.f32 %v2556, %v4918
    %v4920 = vand.u32 %v4919, 4294901760
    %4921 = vmatprep.subr.mxu0 %v4920
    %v4922 = vand.u32 %v2555, 4294901760
    %v4923 = vsub.f32 %v2555, %v4922
    %v4924 = vand.u32 %v4923, 4294901760
    %4925 = vmatpush1.msra.mxu0 %v4924
    %v4926 = vand.u32 %v2553, 4294901760
    %v4927 = vsub.f32 %v2553, %v4926
    %v4928 = vand.u32 %v4927, 4294901760
    %4929 = vmatprep.subr.mxu0 %v4928
    %v4930 = vand.u32 %v2552, 4294901760
    %v4931 = vsub.f32 %v2552, %v4930
    %v4932 = vand.u32 %v4931, 4294901760
    %4933 = vmatpush1.msra.mxu0 %v4932
    %v4934 = vand.u32 %v2550, 4294901760
    %v4935 = vsub.f32 %v2550, %v4934
    %v4936 = vand.u32 %v4935, 4294901760
    %4937 = vmatprep.subr.mxu0 %v4936
    %v4938 = vand.u32 %v2549, 4294901760
    %v4939 = vsub.f32 %v2549, %v4938
    %v4940 = vand.u32 %v4939, 4294901760
    %4941 = vmatpush1.msra.mxu0 %v4940
    %v4942 = vand.u32 %v2547, 4294901760
    %v4943 = vsub.f32 %v2547, %v4942
    %v4944 = vand.u32 %v4943, 4294901760
    %4945 = vmatprep.subr.mxu0 %v4944
    %v4946 = vand.u32 %v2546, 4294901760
    %v4947 = vsub.f32 %v2546, %v4946
    %v4948 = vand.u32 %v4947, 4294901760
    %4949 = vmatpush1.msra.mxu0 %v4948
    %v4950 = vand.u32 %v2544, 4294901760
    %v4951 = vsub.f32 %v2544, %v4950
    %v4952 = vand.u32 %v4951, 4294901760
    %4953 = vmatprep.subr.mxu0 %v4952
    %v4954 = vand.u32 %v2543, 4294901760
    %v4955 = vsub.f32 %v2543, %v4954
    %v4956 = vand.u32 %v4955, 4294901760
    %4957 = vmatpush1.msra.mxu0 %v4956
    %v4958 = vand.u32 %v2541, 4294901760
    %v4959 = vsub.f32 %v2541, %v4958
    %v4960 = vand.u32 %v4959, 4294901760
    %4961 = vmatprep.subr.mxu0 %v4960
    %v4962 = vand.u32 %v2540, 4294901760
    %v4963 = vsub.f32 %v2540, %v4962
    %v4964 = vand.u32 %v4963, 4294901760
    %4965 = vmatpush1.msra.mxu0 %v4964
    %v4966 = vand.u32 %v2538, 4294901760
    %v4967 = vsub.f32 %v2538, %v4966
    %v4968 = vand.u32 %v4967, 4294901760
    %4969 = vmatprep.subr.mxu0 %v4968
    %v4970 = vand.u32 %v2537, 4294901760
    %v4971 = vsub.f32 %v2537, %v4970
    %v4972 = vand.u32 %v4971, 4294901760
    %4973 = vmatpush1.msra.mxu0 %v4972
    %v4974 = vand.u32 %v2535, 4294901760
    %v4975 = vsub.f32 %v2535, %v4974
    %v4976 = vand.u32 %v4975, 4294901760
    %4977 = vmatprep.subr.mxu0 %v4976
    %v4978 = vand.u32 %v2534, 4294901760
    %v4979 = vsub.f32 %v2534, %v4978
    %v4980 = vand.u32 %v4979, 4294901760
    %4981 = vmatpush1.msra.mxu0 %v4980
    %v4982 = vand.u32 %v2532, 4294901760
    %v4983 = vsub.f32 %v2532, %v4982
    %v4984 = vand.u32 %v4983, 4294901760
    %4985 = vmatprep.subr.mxu0 %v4984
    %v4986 = vand.u32 %v2531, 4294901760
    %v4987 = vsub.f32 %v2531, %v4986
    %v4988 = vand.u32 %v4987, 4294901760
    %4989 = vmatpush1.msra.mxu0 %v4988
    %v4990 = vand.u32 %v2529, 4294901760
    %v4991 = vsub.f32 %v2529, %v4990
    %v4992 = vand.u32 %v4991, 4294901760
    %4993 = vmatprep.subr.mxu0 %v4992
    %v4994 = vand.u32 %v2528, 4294901760
    %v4995 = vsub.f32 %v2528, %v4994
    %v4996 = vand.u32 %v4995, 4294901760
    %4997 = vmatpush1.msra.mxu0 %v4996
    %v4998 = vand.u32 %v2526, 4294901760
    %v4999 = vsub.f32 %v2526, %v4998
    %v5000 = vand.u32 %v4999, 4294901760
    %5001 = vmatprep.subr.mxu0 %v5000
    %v5002 = vand.u32 %v2525, 4294901760
    %v5003 = vsub.f32 %v2525, %v5002
    %v5004 = vand.u32 %v5003, 4294901760
    %5005 = vmatpush1.msra.mxu0 %v5004
    %v5006 = vand.u32 %v2523, 4294901760
    %v5007 = vsub.f32 %v2523, %v5006
    %v5008 = vand.u32 %v5007, 4294901760
    %5009 = vmatprep.subr.mxu0 %v5008
    %v5010 = vand.u32 %v2522, 4294901760
    %v5011 = vsub.f32 %v2522, %v5010
    %v5012 = vand.u32 %v5011, 4294901760
    %5013 = vmatpush1.msra.mxu0 %v5012
    %v5014 = vand.u32 %v2520, 4294901760
    %v5015 = vsub.f32 %v2520, %v5014
    %v5016 = vand.u32 %v5015, 4294901760
    %5017 = vmatprep.subr.mxu0 %v5016
    %v5018 = vand.u32 %v2519, 4294901760
    %v5019 = vsub.f32 %v2519, %v5018
    %v5020 = vand.u32 %v5019, 4294901760
    %5021 = vmatpush1.msra.mxu0 %v5020
    %v5022 = vand.u32 %v2613, 4294901760
    %v5023 = vsub.f32 %v2613, %v5022
    %v5024 = vand.u32 %v5023, 4294901760
    %5025 = vmatprep.subr.mxu0 %v5024
    %v5026 = vand.u32 %v2612, 4294901760
    %v5027 = vsub.f32 %v2612, %v5026
    %v5028 = vand.u32 %v5027, 4294901760
    %5029 = vmatpush2.msra.mxu0 %v5028
    %v5030 = vand.u32 %v2610, 4294901760
    %v5031 = vsub.f32 %v2610, %v5030
    %v5032 = vand.u32 %v5031, 4294901760
    %5033 = vmatprep.subr.mxu0 %v5032
    %v5034 = vand.u32 %v2609, 4294901760
    %v5035 = vsub.f32 %v2609, %v5034
    %v5036 = vand.u32 %v5035, 4294901760
    %5037 = vmatpush2.msra.mxu0 %v5036
    %v5038 = vand.u32 %v2607, 4294901760
    %v5039 = vsub.f32 %v2607, %v5038
    %v5040 = vand.u32 %v5039, 4294901760
    %5041 = vmatprep.subr.mxu0 %v5040
    %v5042 = vand.u32 %v2606, 4294901760
    %v5043 = vsub.f32 %v2606, %v5042
    %v5044 = vand.u32 %v5043, 4294901760
    %5045 = vmatpush2.msra.mxu0 %v5044
    %v5046 = vand.u32 %v2604, 4294901760
    %v5047 = vsub.f32 %v2604, %v5046
    %v5048 = vand.u32 %v5047, 4294901760
    %5049 = vmatprep.subr.mxu0 %v5048
    %v5050 = vand.u32 %v2603, 4294901760
    %v5051 = vsub.f32 %v2603, %v5050
    %v5052 = vand.u32 %v5051, 4294901760
    %5053 = vmatpush2.msra.mxu0 %v5052
    %v5054 = vand.u32 %v2601, 4294901760
    %v5055 = vsub.f32 %v2601, %v5054
    %v5056 = vand.u32 %v5055, 4294901760
    %5057 = vmatprep.subr.mxu0 %v5056
    %v5058 = vand.u32 %v2600, 4294901760
    %v5059 = vsub.f32 %v2600, %v5058
    %v5060 = vand.u32 %v5059, 4294901760
    %5061 = vmatpush2.msra.mxu0 %v5060
    %v5062 = vand.u32 %v2598, 4294901760
    %v5063 = vsub.f32 %v2598, %v5062
    %v5064 = vand.u32 %v5063, 4294901760
    %5065 = vmatprep.subr.mxu0 %v5064
    %v5066 = vand.u32 %v2597, 4294901760
    %v5067 = vsub.f32 %v2597, %v5066
    %v5068 = vand.u32 %v5067, 4294901760
    %5069 = vmatpush2.msra.mxu0 %v5068
    %v5070 = vand.u32 %v2595, 4294901760
    %v5071 = vsub.f32 %v2595, %v5070
    %v5072 = vand.u32 %v5071, 4294901760
    %5073 = vmatprep.subr.mxu0 %v5072
    %v5074 = vand.u32 %v2594, 4294901760
    %v5075 = vsub.f32 %v2594, %v5074
    %v5076 = vand.u32 %v5075, 4294901760
    %5077 = vmatpush2.msra.mxu0 %v5076
    %v5078 = vand.u32 %v2592, 4294901760
    %v5079 = vsub.f32 %v2592, %v5078
    %v5080 = vand.u32 %v5079, 4294901760
    %5081 = vmatprep.subr.mxu0 %v5080
    %v5082 = vand.u32 %v2591, 4294901760
    %v5083 = vsub.f32 %v2591, %v5082
    %v5084 = vand.u32 %v5083, 4294901760
    %5085 = vmatpush2.msra.mxu0 %v5084
    %v5086 = vand.u32 %v2589, 4294901760
    %v5087 = vsub.f32 %v2589, %v5086
    %v5088 = vand.u32 %v5087, 4294901760
    %5089 = vmatprep.subr.mxu0 %v5088
    %v5090 = vand.u32 %v2588, 4294901760
    %v5091 = vsub.f32 %v2588, %v5090
    %v5092 = vand.u32 %v5091, 4294901760
    %5093 = vmatpush2.msra.mxu0 %v5092
    %v5094 = vand.u32 %v2586, 4294901760
    %v5095 = vsub.f32 %v2586, %v5094
    %v5096 = vand.u32 %v5095, 4294901760
    %5097 = vmatprep.subr.mxu0 %v5096
    %v5098 = vand.u32 %v2585, 4294901760
    %v5099 = vsub.f32 %v2585, %v5098
    %v5100 = vand.u32 %v5099, 4294901760
    %5101 = vmatpush2.msra.mxu0 %v5100
    %v5102 = vand.u32 %v2583, 4294901760
    %v5103 = vsub.f32 %v2583, %v5102
    %v5104 = vand.u32 %v5103, 4294901760
    %5105 = vmatprep.subr.mxu0 %v5104
    %v5106 = vand.u32 %v2582, 4294901760
    %v5107 = vsub.f32 %v2582, %v5106
    %v5108 = vand.u32 %v5107, 4294901760
    %5109 = vmatpush2.msra.mxu0 %v5108
    %v5110 = vand.u32 %v2580, 4294901760
    %v5111 = vsub.f32 %v2580, %v5110
    %v5112 = vand.u32 %v5111, 4294901760
    %5113 = vmatprep.subr.mxu0 %v5112
    %v5114 = vand.u32 %v2579, 4294901760
    %v5115 = vsub.f32 %v2579, %v5114
    %v5116 = vand.u32 %v5115, 4294901760
    %5117 = vmatpush2.msra.mxu0 %v5116
    %v5118 = vand.u32 %v2577, 4294901760
    %v5119 = vsub.f32 %v2577, %v5118
    %v5120 = vand.u32 %v5119, 4294901760
    %5121 = vmatprep.subr.mxu0 %v5120
    %v5122 = vand.u32 %v2576, 4294901760
    %v5123 = vsub.f32 %v2576, %v5122
    %v5124 = vand.u32 %v5123, 4294901760
    %5125 = vmatpush2.msra.mxu0 %v5124
    %v5126 = vand.u32 %v2574, 4294901760
    %v5127 = vsub.f32 %v2574, %v5126
    %v5128 = vand.u32 %v5127, 4294901760
    %5129 = vmatprep.subr.mxu0 %v5128
    %v5130 = vand.u32 %v2573, 4294901760
    %v5131 = vsub.f32 %v2573, %v5130
    %v5132 = vand.u32 %v5131, 4294901760
    %5133 = vmatpush2.msra.mxu0 %v5132
    %v5134 = vand.u32 %v2571, 4294901760
    %v5135 = vsub.f32 %v2571, %v5134
    %v5136 = vand.u32 %v5135, 4294901760
    %5137 = vmatprep.subr.mxu0 %v5136
    %v5138 = vand.u32 %v2570, 4294901760
    %v5139 = vsub.f32 %v2570, %v5138
    %v5140 = vand.u32 %v5139, 4294901760
    %5141 = vmatpush2.msra.mxu0 %v5140
    %v5142 = vand.u32 %v2568, 4294901760
    %v5143 = vsub.f32 %v2568, %v5142
    %v5144 = vand.u32 %v5143, 4294901760
    %5145 = vmatprep.subr.mxu0 %v5144
    %v5146 = vand.u32 %v2567, 4294901760
    %v5147 = vsub.f32 %v2567, %v5146
    %v5148 = vand.u32 %v5147, 4294901760
    %5149 = vmatpush2.msra.mxu0 %v5148
    %v5150 = vand.u32 %v2420, 4294901760
    %5151 = vmatprep.mubr.f32.mxu0 %v5150
    %v5152 = vand.u32 %v2419, 4294901760
    %5153 = vmatmul.mubr.f32.gmra.mxu0 %v5152
    %v5154 = vpop.f32.mrf.mxu0
    %v5155 = vadd.f32 %v4890, %v5154
    %v5156 = vpop.f32.mrf.mxu0
    %v5157 = vadd.f32 %v4892, %v5156
    %5158 = vdwg.mxu0
    %v5159 = vand.u32 %v2565, 4294901760
    %5160 = vmatprep.subr.mxu0 %v5159
    %v5161 = vand.u32 %v2564, 4294901760
    %5162 = vmatpush1.msra.mxu0 %v5161
    %v5163 = vand.u32 %v2562, 4294901760
    %5164 = vmatprep.subr.mxu0 %v5163
    %v5165 = vand.u32 %v2561, 4294901760
    %5166 = vmatpush1.msra.mxu0 %v5165
    %v5167 = vand.u32 %v2559, 4294901760
    %5168 = vmatprep.subr.mxu0 %v5167
    %v5169 = vand.u32 %v2558, 4294901760
    %5170 = vmatpush1.msra.mxu0 %v5169
    %v5171 = vand.u32 %v2556, 4294901760
    %5172 = vmatprep.subr.mxu0 %v5171
    %v5173 = vand.u32 %v2555, 4294901760
    %5174 = vmatpush1.msra.mxu0 %v5173
    %v5175 = vand.u32 %v2553, 4294901760
    %5176 = vmatprep.subr.mxu0 %v5175
    %v5177 = vand.u32 %v2552, 4294901760
    %5178 = vmatpush1.msra.mxu0 %v5177
    %v5179 = vand.u32 %v2550, 4294901760
    %5180 = vmatprep.subr.mxu0 %v5179
    %v5181 = vand.u32 %v2549, 4294901760
    %5182 = vmatpush1.msra.mxu0 %v5181
    %v5183 = vand.u32 %v2547, 4294901760
    %5184 = vmatprep.subr.mxu0 %v5183
    %v5185 = vand.u32 %v2546, 4294901760
    %5186 = vmatpush1.msra.mxu0 %v5185
    %v5187 = vand.u32 %v2544, 4294901760
    %5188 = vmatprep.subr.mxu0 %v5187
    %v5189 = vand.u32 %v2543, 4294901760
    %5190 = vmatpush1.msra.mxu0 %v5189
    %v5191 = vand.u32 %v2541, 4294901760
    %5192 = vmatprep.subr.mxu0 %v5191
    %v5193 = vand.u32 %v2540, 4294901760
    %5194 = vmatpush1.msra.mxu0 %v5193
    %v5195 = vand.u32 %v2538, 4294901760
    %5196 = vmatprep.subr.mxu0 %v5195
    %v5197 = vand.u32 %v2537, 4294901760
    %5198 = vmatpush1.msra.mxu0 %v5197
    %v5199 = vand.u32 %v2535, 4294901760
    %5200 = vmatprep.subr.mxu0 %v5199
    %v5201 = vand.u32 %v2534, 4294901760
    %5202 = vmatpush1.msra.mxu0 %v5201
    %v5203 = vand.u32 %v2532, 4294901760
    %5204 = vmatprep.subr.mxu0 %v5203
    %v5205 = vand.u32 %v2531, 4294901760
    %5206 = vmatpush1.msra.mxu0 %v5205
    %v5207 = vand.u32 %v2529, 4294901760
    %5208 = vmatprep.subr.mxu0 %v5207
    %v5209 = vand.u32 %v2528, 4294901760
    %5210 = vmatpush1.msra.mxu0 %v5209
    %v5211 = vand.u32 %v2526, 4294901760
    %5212 = vmatprep.subr.mxu0 %v5211
    %v5213 = vand.u32 %v2525, 4294901760
    %5214 = vmatpush1.msra.mxu0 %v5213
    %v5215 = vand.u32 %v2523, 4294901760
    %5216 = vmatprep.subr.mxu0 %v5215
    %v5217 = vand.u32 %v2522, 4294901760
    %5218 = vmatpush1.msra.mxu0 %v5217
    %v5219 = vand.u32 %v2520, 4294901760
    %5220 = vmatprep.subr.mxu0 %v5219
    %v5221 = vand.u32 %v2519, 4294901760
    %5222 = vmatpush1.msra.mxu0 %v5221
    %v5223 = vand.u32 %v2613, 4294901760
    %5224 = vmatprep.subr.mxu0 %v5223
    %v5225 = vand.u32 %v2612, 4294901760
    %5226 = vmatpush2.msra.mxu0 %v5225
    %v5227 = vand.u32 %v2610, 4294901760
    %5228 = vmatprep.subr.mxu0 %v5227
    %v5229 = vand.u32 %v2609, 4294901760
    %5230 = vmatpush2.msra.mxu0 %v5229
    %v5231 = vand.u32 %v2607, 4294901760
    %5232 = vmatprep.subr.mxu0 %v5231
    %v5233 = vand.u32 %v2606, 4294901760
    %5234 = vmatpush2.msra.mxu0 %v5233
    %v5235 = vand.u32 %v2604, 4294901760
    %5236 = vmatprep.subr.mxu0 %v5235
    %v5237 = vand.u32 %v2603, 4294901760
    %5238 = vmatpush2.msra.mxu0 %v5237
    %v5239 = vand.u32 %v2601, 4294901760
    %5240 = vmatprep.subr.mxu0 %v5239
    %v5241 = vand.u32 %v2600, 4294901760
    %5242 = vmatpush2.msra.mxu0 %v5241
    %v5243 = vand.u32 %v2598, 4294901760
    %5244 = vmatprep.subr.mxu0 %v5243
    %v5245 = vand.u32 %v2597, 4294901760
    %5246 = vmatpush2.msra.mxu0 %v5245
    %v5247 = vand.u32 %v2595, 4294901760
    %5248 = vmatprep.subr.mxu0 %v5247
    %v5249 = vand.u32 %v2594, 4294901760
    %5250 = vmatpush2.msra.mxu0 %v5249
    %v5251 = vand.u32 %v2592, 4294901760
    %5252 = vmatprep.subr.mxu0 %v5251
    %v5253 = vand.u32 %v2591, 4294901760
    %5254 = vmatpush2.msra.mxu0 %v5253
    %v5255 = vand.u32 %v2589, 4294901760
    %5256 = vmatprep.subr.mxu0 %v5255
    %v5257 = vand.u32 %v2588, 4294901760
    %5258 = vmatpush2.msra.mxu0 %v5257
    %v5259 = vand.u32 %v2586, 4294901760
    %5260 = vmatprep.subr.mxu0 %v5259
    %v5261 = vand.u32 %v2585, 4294901760
    %5262 = vmatpush2.msra.mxu0 %v5261
    %v5263 = vand.u32 %v2583, 4294901760
    %5264 = vmatprep.subr.mxu0 %v5263
    %v5265 = vand.u32 %v2582, 4294901760
    %5266 = vmatpush2.msra.mxu0 %v5265
    %v5267 = vand.u32 %v2580, 4294901760
    %5268 = vmatprep.subr.mxu0 %v5267
    %v5269 = vand.u32 %v2579, 4294901760
    %5270 = vmatpush2.msra.mxu0 %v5269
    %v5271 = vand.u32 %v2577, 4294901760
    %5272 = vmatprep.subr.mxu0 %v5271
    %v5273 = vand.u32 %v2576, 4294901760
    %5274 = vmatpush2.msra.mxu0 %v5273
    %v5275 = vand.u32 %v2574, 4294901760
    %5276 = vmatprep.subr.mxu0 %v5275
    %v5277 = vand.u32 %v2573, 4294901760
    %5278 = vmatpush2.msra.mxu0 %v5277
    %v5279 = vand.u32 %v2571, 4294901760
    %5280 = vmatprep.subr.mxu0 %v5279
    %v5281 = vand.u32 %v2570, 4294901760
    %5282 = vmatpush2.msra.mxu0 %v5281
    %v5283 = vand.u32 %v2568, 4294901760
    %5284 = vmatprep.subr.mxu0 %v5283
    %v5285 = vand.u32 %v2567, 4294901760
    %5286 = vmatpush2.msra.mxu0 %v5285
    %v5287 = vand.u32 %v2420, 4294901760
    %5288 = vmatprep.mubr.f32.mxu0 %v5287
    %v5289 = vand.u32 %v2419, 4294901760
    %5290 = vmatmul.mubr.f32.gmra.mxu0 %v5289
    %v5291 = vpop.f32.mrf.mxu0
    %v5292 = vadd.f32 %v5155, %v5291
    %v5293 = vpop.f32.mrf.mxu0
    %v5294 = vadd.f32 %v5157, %v5293
    %5295 = vdwg.mxu0
    %v5296 = vand.u32 %v2661, 4294901760
    %5297 = vmatprep.subr.mxu0 %v5296
    %v5298 = vand.u32 %v2660, 4294901760
    %5299 = vmatpush1.msra.mxu0 %v5298
    %v5300 = vand.u32 %v2658, 4294901760
    %5301 = vmatprep.subr.mxu0 %v5300
    %v5302 = vand.u32 %v2657, 4294901760
    %5303 = vmatpush1.msra.mxu0 %v5302
    %v5304 = vand.u32 %v2655, 4294901760
    %5305 = vmatprep.subr.mxu0 %v5304
    %v5306 = vand.u32 %v2654, 4294901760
    %5307 = vmatpush1.msra.mxu0 %v5306
    %v5308 = vand.u32 %v2652, 4294901760
    %5309 = vmatprep.subr.mxu0 %v5308
    %v5310 = vand.u32 %v2651, 4294901760
    %5311 = vmatpush1.msra.mxu0 %v5310
    %v5312 = vand.u32 %v2649, 4294901760
    %5313 = vmatprep.subr.mxu0 %v5312
    %v5314 = vand.u32 %v2648, 4294901760
    %5315 = vmatpush1.msra.mxu0 %v5314
    %v5316 = vand.u32 %v2646, 4294901760
    %5317 = vmatprep.subr.mxu0 %v5316
    %v5318 = vand.u32 %v2645, 4294901760
    %5319 = vmatpush1.msra.mxu0 %v5318
    %v5320 = vand.u32 %v2643, 4294901760
    %5321 = vmatprep.subr.mxu0 %v5320
    %v5322 = vand.u32 %v2642, 4294901760
    %5323 = vmatpush1.msra.mxu0 %v5322
    %v5324 = vand.u32 %v2640, 4294901760
    %5325 = vmatprep.subr.mxu0 %v5324
    %v5326 = vand.u32 %v2639, 4294901760
    %5327 = vmatpush1.msra.mxu0 %v5326
    %v5328 = vand.u32 %v2637, 4294901760
    %5329 = vmatprep.subr.mxu0 %v5328
    %v5330 = vand.u32 %v2636, 4294901760
    %5331 = vmatpush1.msra.mxu0 %v5330
    %v5332 = vand.u32 %v2634, 4294901760
    %5333 = vmatprep.subr.mxu0 %v5332
    %v5334 = vand.u32 %v2633, 4294901760
    %5335 = vmatpush1.msra.mxu0 %v5334
    %v5336 = vand.u32 %v2631, 4294901760
    %5337 = vmatprep.subr.mxu0 %v5336
    %v5338 = vand.u32 %v2630, 4294901760
    %5339 = vmatpush1.msra.mxu0 %v5338
    %v5340 = vand.u32 %v2628, 4294901760
    %5341 = vmatprep.subr.mxu0 %v5340
    %v5342 = vand.u32 %v2627, 4294901760
    %5343 = vmatpush1.msra.mxu0 %v5342
    %v5344 = vand.u32 %v2625, 4294901760
    %5345 = vmatprep.subr.mxu0 %v5344
    %v5346 = vand.u32 %v2624, 4294901760
    %5347 = vmatpush1.msra.mxu0 %v5346
    %v5348 = vand.u32 %v2622, 4294901760
    %5349 = vmatprep.subr.mxu0 %v5348
    %v5350 = vand.u32 %v2621, 4294901760
    %5351 = vmatpush1.msra.mxu0 %v5350
    %v5352 = vand.u32 %v2619, 4294901760
    %5353 = vmatprep.subr.mxu0 %v5352
    %v5354 = vand.u32 %v2618, 4294901760
    %5355 = vmatpush1.msra.mxu0 %v5354
    %v5356 = vand.u32 %v2616, 4294901760
    %5357 = vmatprep.subr.mxu0 %v5356
    %v5358 = vand.u32 %v2615, 4294901760
    %5359 = vmatpush1.msra.mxu0 %v5358
    %v5360 = vand.u32 %v2709, 4294901760
    %5361 = vmatprep.subr.mxu0 %v5360
    %v5362 = vand.u32 %v2708, 4294901760
    %5363 = vmatpush2.msra.mxu0 %v5362
    %v5364 = vand.u32 %v2706, 4294901760
    %5365 = vmatprep.subr.mxu0 %v5364
    %v5366 = vand.u32 %v2705, 4294901760
    %5367 = vmatpush2.msra.mxu0 %v5366
    %v5368 = vand.u32 %v2703, 4294901760
    %5369 = vmatprep.subr.mxu0 %v5368
    %v5370 = vand.u32 %v2702, 4294901760
    %5371 = vmatpush2.msra.mxu0 %v5370
    %v5372 = vand.u32 %v2700, 4294901760
    %5373 = vmatprep.subr.mxu0 %v5372
    %v5374 = vand.u32 %v2699, 4294901760
    %5375 = vmatpush2.msra.mxu0 %v5374
    %v5376 = vand.u32 %v2697, 4294901760
    %5377 = vmatprep.subr.mxu0 %v5376
    %v5378 = vand.u32 %v2696, 4294901760
    %5379 = vmatpush2.msra.mxu0 %v5378
    %v5380 = vand.u32 %v2694, 4294901760
    %5381 = vmatprep.subr.mxu0 %v5380
    %v5382 = vand.u32 %v2693, 4294901760
    %5383 = vmatpush2.msra.mxu0 %v5382
    %v5384 = vand.u32 %v2691, 4294901760
    %5385 = vmatprep.subr.mxu0 %v5384
    %v5386 = vand.u32 %v2690, 4294901760
    %5387 = vmatpush2.msra.mxu0 %v5386
    %v5388 = vand.u32 %v2688, 4294901760
    %5389 = vmatprep.subr.mxu0 %v5388
    %v5390 = vand.u32 %v2687, 4294901760
    %5391 = vmatpush2.msra.mxu0 %v5390
    %v5392 = vand.u32 %v2685, 4294901760
    %5393 = vmatprep.subr.mxu0 %v5392
    %v5394 = vand.u32 %v2684, 4294901760
    %5395 = vmatpush2.msra.mxu0 %v5394
    %v5396 = vand.u32 %v2682, 4294901760
    %5397 = vmatprep.subr.mxu0 %v5396
    %v5398 = vand.u32 %v2681, 4294901760
    %5399 = vmatpush2.msra.mxu0 %v5398
    %v5400 = vand.u32 %v2679, 4294901760
    %5401 = vmatprep.subr.mxu0 %v5400
    %v5402 = vand.u32 %v2678, 4294901760
    %5403 = vmatpush2.msra.mxu0 %v5402
    %v5404 = vand.u32 %v2676, 4294901760
    %5405 = vmatprep.subr.mxu0 %v5404
    %v5406 = vand.u32 %v2675, 4294901760
    %5407 = vmatpush2.msra.mxu0 %v5406
    %v5408 = vand.u32 %v2673, 4294901760
    %5409 = vmatprep.subr.mxu0 %v5408
    %v5410 = vand.u32 %v2672, 4294901760
    %5411 = vmatpush2.msra.mxu0 %v5410
    %v5412 = vand.u32 %v2670, 4294901760
    %5413 = vmatprep.subr.mxu0 %v5412
    %v5414 = vand.u32 %v2669, 4294901760
    %5415 = vmatpush2.msra.mxu0 %v5414
    %v5416 = vand.u32 %v2667, 4294901760
    %5417 = vmatprep.subr.mxu0 %v5416
    %v5418 = vand.u32 %v2666, 4294901760
    %5419 = vmatpush2.msra.mxu0 %v5418
    %v5420 = vand.u32 %v2664, 4294901760
    %5421 = vmatprep.subr.mxu0 %v5420
    %v5422 = vand.u32 %v2663, 4294901760
    %5423 = vmatpush2.msra.mxu0 %v5422
    %v5424 = vand.u32 %v2422, 4294901760
    %v5425 = vsub.f32 %v2422, %v5424
    %v5426 = vand.u32 %v5425, 4294901760
    %v5427 = vsub.f32 %v5425, %v5426
    %v5428 = vand.u32 %v5427, 4294901760
    %5429 = vmatprep.mubr.f32.mxu0 %v5428
    %v5430 = vand.u32 %v2421, 4294901760
    %v5431 = vsub.f32 %v2421, %v5430
    %v5432 = vand.u32 %v5431, 4294901760
    %v5433 = vsub.f32 %v5431, %v5432
    %v5434 = vand.u32 %v5433, 4294901760
    %5435 = vmatmul.mubr.f32.gmra.mxu0 %v5434
    %v5436 = vpop.f32.mrf.mxu0
    %v5437 = vadd.f32 %v5292, %v5436
    %v5438 = vpop.f32.mrf.mxu0
    %v5439 = vadd.f32 %v5294, %v5438
    %5440 = vdwg.mxu0
    %v5441 = vand.u32 %v2661, 4294901760
    %v5442 = vsub.f32 %v2661, %v5441
    %v5443 = vand.u32 %v5442, 4294901760
    %v5444 = vsub.f32 %v5442, %v5443
    %v5445 = vand.u32 %v5444, 4294901760
    %5446 = vmatprep.subr.mxu0 %v5445
    %v5447 = vand.u32 %v2660, 4294901760
    %v5448 = vsub.f32 %v2660, %v5447
    %v5449 = vand.u32 %v5448, 4294901760
    %v5450 = vsub.f32 %v5448, %v5449
    %v5451 = vand.u32 %v5450, 4294901760
    %5452 = vmatpush1.msra.mxu0 %v5451
    %v5453 = vand.u32 %v2658, 4294901760
    %v5454 = vsub.f32 %v2658, %v5453
    %v5455 = vand.u32 %v5454, 4294901760
    %v5456 = vsub.f32 %v5454, %v5455
    %v5457 = vand.u32 %v5456, 4294901760
    %5458 = vmatprep.subr.mxu0 %v5457
    %v5459 = vand.u32 %v2657, 4294901760
    %v5460 = vsub.f32 %v2657, %v5459
    %v5461 = vand.u32 %v5460, 4294901760
    %v5462 = vsub.f32 %v5460, %v5461
    %v5463 = vand.u32 %v5462, 4294901760
    %5464 = vmatpush1.msra.mxu0 %v5463
    %v5465 = vand.u32 %v2655, 4294901760
    %v5466 = vsub.f32 %v2655, %v5465
    %v5467 = vand.u32 %v5466, 4294901760
    %v5468 = vsub.f32 %v5466, %v5467
    %v5469 = vand.u32 %v5468, 4294901760
    %5470 = vmatprep.subr.mxu0 %v5469
    %v5471 = vand.u32 %v2654, 4294901760
    %v5472 = vsub.f32 %v2654, %v5471
    %v5473 = vand.u32 %v5472, 4294901760
    %v5474 = vsub.f32 %v5472, %v5473
    %v5475 = vand.u32 %v5474, 4294901760
    %5476 = vmatpush1.msra.mxu0 %v5475
    %v5477 = vand.u32 %v2652, 4294901760
    %v5478 = vsub.f32 %v2652, %v5477
    %v5479 = vand.u32 %v5478, 4294901760
    %v5480 = vsub.f32 %v5478, %v5479
    %v5481 = vand.u32 %v5480, 4294901760
    %5482 = vmatprep.subr.mxu0 %v5481
    %v5483 = vand.u32 %v2651, 4294901760
    %v5484 = vsub.f32 %v2651, %v5483
    %v5485 = vand.u32 %v5484, 4294901760
    %v5486 = vsub.f32 %v5484, %v5485
    %v5487 = vand.u32 %v5486, 4294901760
    %5488 = vmatpush1.msra.mxu0 %v5487
    %v5489 = vand.u32 %v2649, 4294901760
    %v5490 = vsub.f32 %v2649, %v5489
    %v5491 = vand.u32 %v5490, 4294901760
    %v5492 = vsub.f32 %v5490, %v5491
    %v5493 = vand.u32 %v5492, 4294901760
    %5494 = vmatprep.subr.mxu0 %v5493
    %v5495 = vand.u32 %v2648, 4294901760
    %v5496 = vsub.f32 %v2648, %v5495
    %v5497 = vand.u32 %v5496, 4294901760
    %v5498 = vsub.f32 %v5496, %v5497
    %v5499 = vand.u32 %v5498, 4294901760
    %5500 = vmatpush1.msra.mxu0 %v5499
    %v5501 = vand.u32 %v2646, 4294901760
    %v5502 = vsub.f32 %v2646, %v5501
    %v5503 = vand.u32 %v5502, 4294901760
    %v5504 = vsub.f32 %v5502, %v5503
    %v5505 = vand.u32 %v5504, 4294901760
    %5506 = vmatprep.subr.mxu0 %v5505
    %v5507 = vand.u32 %v2645, 4294901760
    %v5508 = vsub.f32 %v2645, %v5507
    %v5509 = vand.u32 %v5508, 4294901760
    %v5510 = vsub.f32 %v5508, %v5509
    %v5511 = vand.u32 %v5510, 4294901760
    %5512 = vmatpush1.msra.mxu0 %v5511
    %v5513 = vand.u32 %v2643, 4294901760
    %v5514 = vsub.f32 %v2643, %v5513
    %v5515 = vand.u32 %v5514, 4294901760
    %v5516 = vsub.f32 %v5514, %v5515
    %v5517 = vand.u32 %v5516, 4294901760
    %5518 = vmatprep.subr.mxu0 %v5517
    %v5519 = vand.u32 %v2642, 4294901760
    %v5520 = vsub.f32 %v2642, %v5519
    %v5521 = vand.u32 %v5520, 4294901760
    %v5522 = vsub.f32 %v5520, %v5521
    %v5523 = vand.u32 %v5522, 4294901760
    %5524 = vmatpush1.msra.mxu0 %v5523
    %v5525 = vand.u32 %v2640, 4294901760
    %v5526 = vsub.f32 %v2640, %v5525
    %v5527 = vand.u32 %v5526, 4294901760
    %v5528 = vsub.f32 %v5526, %v5527
    %v5529 = vand.u32 %v5528, 4294901760
    %5530 = vmatprep.subr.mxu0 %v5529
    %v5531 = vand.u32 %v2639, 4294901760
    %v5532 = vsub.f32 %v2639, %v5531
    %v5533 = vand.u32 %v5532, 4294901760
    %v5534 = vsub.f32 %v5532, %v5533
    %v5535 = vand.u32 %v5534, 4294901760
    %5536 = vmatpush1.msra.mxu0 %v5535
    %v5537 = vand.u32 %v2637, 4294901760
    %v5538 = vsub.f32 %v2637, %v5537
    %v5539 = vand.u32 %v5538, 4294901760
    %v5540 = vsub.f32 %v5538, %v5539
    %v5541 = vand.u32 %v5540, 4294901760
    %5542 = vmatprep.subr.mxu0 %v5541
    %v5543 = vand.u32 %v2636, 4294901760
    %v5544 = vsub.f32 %v2636, %v5543
    %v5545 = vand.u32 %v5544, 4294901760
    %v5546 = vsub.f32 %v5544, %v5545
    %v5547 = vand.u32 %v5546, 4294901760
    %5548 = vmatpush1.msra.mxu0 %v5547
    %v5549 = vand.u32 %v2634, 4294901760
    %v5550 = vsub.f32 %v2634, %v5549
    %v5551 = vand.u32 %v5550, 4294901760
    %v5552 = vsub.f32 %v5550, %v5551
    %v5553 = vand.u32 %v5552, 4294901760
    %5554 = vmatprep.subr.mxu0 %v5553
    %v5555 = vand.u32 %v2633, 4294901760
    %v5556 = vsub.f32 %v2633, %v5555
    %v5557 = vand.u32 %v5556, 4294901760
    %v5558 = vsub.f32 %v5556, %v5557
    %v5559 = vand.u32 %v5558, 4294901760
    %5560 = vmatpush1.msra.mxu0 %v5559
    %v5561 = vand.u32 %v2631, 4294901760
    %v5562 = vsub.f32 %v2631, %v5561
    %v5563 = vand.u32 %v5562, 4294901760
    %v5564 = vsub.f32 %v5562, %v5563
    %v5565 = vand.u32 %v5564, 4294901760
    %5566 = vmatprep.subr.mxu0 %v5565
    %v5567 = vand.u32 %v2630, 4294901760
    %v5568 = vsub.f32 %v2630, %v5567
    %v5569 = vand.u32 %v5568, 4294901760
    %v5570 = vsub.f32 %v5568, %v5569
    %v5571 = vand.u32 %v5570, 4294901760
    %5572 = vmatpush1.msra.mxu0 %v5571
    %v5573 = vand.u32 %v2628, 4294901760
    %v5574 = vsub.f32 %v2628, %v5573
    %v5575 = vand.u32 %v5574, 4294901760
    %v5576 = vsub.f32 %v5574, %v5575
    %v5577 = vand.u32 %v5576, 4294901760
    %5578 = vmatprep.subr.mxu0 %v5577
    %v5579 = vand.u32 %v2627, 4294901760
    %v5580 = vsub.f32 %v2627, %v5579
    %v5581 = vand.u32 %v5580, 4294901760
    %v5582 = vsub.f32 %v5580, %v5581
    %v5583 = vand.u32 %v5582, 4294901760
    %5584 = vmatpush1.msra.mxu0 %v5583
    %v5585 = vand.u32 %v2625, 4294901760
    %v5586 = vsub.f32 %v2625, %v5585
    %v5587 = vand.u32 %v5586, 4294901760
    %v5588 = vsub.f32 %v5586, %v5587
    %v5589 = vand.u32 %v5588, 4294901760
    %5590 = vmatprep.subr.mxu0 %v5589
    %v5591 = vand.u32 %v2624, 4294901760
    %v5592 = vsub.f32 %v2624, %v5591
    %v5593 = vand.u32 %v5592, 4294901760
    %v5594 = vsub.f32 %v5592, %v5593
    %v5595 = vand.u32 %v5594, 4294901760
    %5596 = vmatpush1.msra.mxu0 %v5595
    %v5597 = vand.u32 %v2622, 4294901760
    %v5598 = vsub.f32 %v2622, %v5597
    %v5599 = vand.u32 %v5598, 4294901760
    %v5600 = vsub.f32 %v5598, %v5599
    %v5601 = vand.u32 %v5600, 4294901760
    %5602 = vmatprep.subr.mxu0 %v5601
    %v5603 = vand.u32 %v2621, 4294901760
    %v5604 = vsub.f32 %v2621, %v5603
    %v5605 = vand.u32 %v5604, 4294901760
    %v5606 = vsub.f32 %v5604, %v5605
    %v5607 = vand.u32 %v5606, 4294901760
    %5608 = vmatpush1.msra.mxu0 %v5607
    %v5609 = vand.u32 %v2619, 4294901760
    %v5610 = vsub.f32 %v2619, %v5609
    %v5611 = vand.u32 %v5610, 4294901760
    %v5612 = vsub.f32 %v5610, %v5611
    %v5613 = vand.u32 %v5612, 4294901760
    %5614 = vmatprep.subr.mxu0 %v5613
    %v5615 = vand.u32 %v2618, 4294901760
    %v5616 = vsub.f32 %v2618, %v5615
    %v5617 = vand.u32 %v5616, 4294901760
    %v5618 = vsub.f32 %v5616, %v5617
    %v5619 = vand.u32 %v5618, 4294901760
    %5620 = vmatpush1.msra.mxu0 %v5619
    %v5621 = vand.u32 %v2616, 4294901760
    %v5622 = vsub.f32 %v2616, %v5621
    %v5623 = vand.u32 %v5622, 4294901760
    %v5624 = vsub.f32 %v5622, %v5623
    %v5625 = vand.u32 %v5624, 4294901760
    %5626 = vmatprep.subr.mxu0 %v5625
    %v5627 = vand.u32 %v2615, 4294901760
    %v5628 = vsub.f32 %v2615, %v5627
    %v5629 = vand.u32 %v5628, 4294901760
    %v5630 = vsub.f32 %v5628, %v5629
    %v5631 = vand.u32 %v5630, 4294901760
    %5632 = vmatpush1.msra.mxu0 %v5631
    %v5633 = vand.u32 %v2709, 4294901760
    %v5634 = vsub.f32 %v2709, %v5633
    %v5635 = vand.u32 %v5634, 4294901760
    %v5636 = vsub.f32 %v5634, %v5635
    %v5637 = vand.u32 %v5636, 4294901760
    %5638 = vmatprep.subr.mxu0 %v5637
    %v5639 = vand.u32 %v2708, 4294901760
    %v5640 = vsub.f32 %v2708, %v5639
    %v5641 = vand.u32 %v5640, 4294901760
    %v5642 = vsub.f32 %v5640, %v5641
    %v5643 = vand.u32 %v5642, 4294901760
    %5644 = vmatpush2.msra.mxu0 %v5643
    %v5645 = vand.u32 %v2706, 4294901760
    %v5646 = vsub.f32 %v2706, %v5645
    %v5647 = vand.u32 %v5646, 4294901760
    %v5648 = vsub.f32 %v5646, %v5647
    %v5649 = vand.u32 %v5648, 4294901760
    %5650 = vmatprep.subr.mxu0 %v5649
    %v5651 = vand.u32 %v2705, 4294901760
    %v5652 = vsub.f32 %v2705, %v5651
    %v5653 = vand.u32 %v5652, 4294901760
    %v5654 = vsub.f32 %v5652, %v5653
    %v5655 = vand.u32 %v5654, 4294901760
    %5656 = vmatpush2.msra.mxu0 %v5655
    %v5657 = vand.u32 %v2703, 4294901760
    %v5658 = vsub.f32 %v2703, %v5657
    %v5659 = vand.u32 %v5658, 4294901760
    %v5660 = vsub.f32 %v5658, %v5659
    %v5661 = vand.u32 %v5660, 4294901760
    %5662 = vmatprep.subr.mxu0 %v5661
    %v5663 = vand.u32 %v2702, 4294901760
    %v5664 = vsub.f32 %v2702, %v5663
    %v5665 = vand.u32 %v5664, 4294901760
    %v5666 = vsub.f32 %v5664, %v5665
    %v5667 = vand.u32 %v5666, 4294901760
    %5668 = vmatpush2.msra.mxu0 %v5667
    %v5669 = vand.u32 %v2700, 4294901760
    %v5670 = vsub.f32 %v2700, %v5669
    %v5671 = vand.u32 %v5670, 4294901760
    %v5672 = vsub.f32 %v5670, %v5671
    %v5673 = vand.u32 %v5672, 4294901760
    %5674 = vmatprep.subr.mxu0 %v5673
    %v5675 = vand.u32 %v2699, 4294901760
    %v5676 = vsub.f32 %v2699, %v5675
    %v5677 = vand.u32 %v5676, 4294901760
    %v5678 = vsub.f32 %v5676, %v5677
    %v5679 = vand.u32 %v5678, 4294901760
    %5680 = vmatpush2.msra.mxu0 %v5679
    %v5681 = vand.u32 %v2697, 4294901760
    %v5682 = vsub.f32 %v2697, %v5681
    %v5683 = vand.u32 %v5682, 4294901760
    %v5684 = vsub.f32 %v5682, %v5683
    %v5685 = vand.u32 %v5684, 4294901760
    %5686 = vmatprep.subr.mxu0 %v5685
    %v5687 = vand.u32 %v2696, 4294901760
    %v5688 = vsub.f32 %v2696, %v5687
    %v5689 = vand.u32 %v5688, 4294901760
    %v5690 = vsub.f32 %v5688, %v5689
    %v5691 = vand.u32 %v5690, 4294901760
    %5692 = vmatpush2.msra.mxu0 %v5691
    %v5693 = vand.u32 %v2694, 4294901760
    %v5694 = vsub.f32 %v2694, %v5693
    %v5695 = vand.u32 %v5694, 4294901760
    %v5696 = vsub.f32 %v5694, %v5695
    %v5697 = vand.u32 %v5696, 4294901760
    %5698 = vmatprep.subr.mxu0 %v5697
    %v5699 = vand.u32 %v2693, 4294901760
    %v5700 = vsub.f32 %v2693, %v5699
    %v5701 = vand.u32 %v5700, 4294901760
    %v5702 = vsub.f32 %v5700, %v5701
    %v5703 = vand.u32 %v5702, 4294901760
    %5704 = vmatpush2.msra.mxu0 %v5703
    %v5705 = vand.u32 %v2691, 4294901760
    %v5706 = vsub.f32 %v2691, %v5705
    %v5707 = vand.u32 %v5706, 4294901760
    %v5708 = vsub.f32 %v5706, %v5707
    %v5709 = vand.u32 %v5708, 4294901760
    %5710 = vmatprep.subr.mxu0 %v5709
    %v5711 = vand.u32 %v2690, 4294901760
    %v5712 = vsub.f32 %v2690, %v5711
    %v5713 = vand.u32 %v5712, 4294901760
    %v5714 = vsub.f32 %v5712, %v5713
    %v5715 = vand.u32 %v5714, 4294901760
    %5716 = vmatpush2.msra.mxu0 %v5715
    %v5717 = vand.u32 %v2688, 4294901760
    %v5718 = vsub.f32 %v2688, %v5717
    %v5719 = vand.u32 %v5718, 4294901760
    %v5720 = vsub.f32 %v5718, %v5719
    %v5721 = vand.u32 %v5720, 4294901760
    %5722 = vmatprep.subr.mxu0 %v5721
    %v5723 = vand.u32 %v2687, 4294901760
    %v5724 = vsub.f32 %v2687, %v5723
    %v5725 = vand.u32 %v5724, 4294901760
    %v5726 = vsub.f32 %v5724, %v5725
    %v5727 = vand.u32 %v5726, 4294901760
    %5728 = vmatpush2.msra.mxu0 %v5727
    %v5729 = vand.u32 %v2685, 4294901760
    %v5730 = vsub.f32 %v2685, %v5729
    %v5731 = vand.u32 %v5730, 4294901760
    %v5732 = vsub.f32 %v5730, %v5731
    %v5733 = vand.u32 %v5732, 4294901760
    %5734 = vmatprep.subr.mxu0 %v5733
    %v5735 = vand.u32 %v2684, 4294901760
    %v5736 = vsub.f32 %v2684, %v5735
    %v5737 = vand.u32 %v5736, 4294901760
    %v5738 = vsub.f32 %v5736, %v5737
    %v5739 = vand.u32 %v5738, 4294901760
    %5740 = vmatpush2.msra.mxu0 %v5739
    %v5741 = vand.u32 %v2682, 4294901760
    %v5742 = vsub.f32 %v2682, %v5741
    %v5743 = vand.u32 %v5742, 4294901760
    %v5744 = vsub.f32 %v5742, %v5743
    %v5745 = vand.u32 %v5744, 4294901760
    %5746 = vmatprep.subr.mxu0 %v5745
    %v5747 = vand.u32 %v2681, 4294901760
    %v5748 = vsub.f32 %v2681, %v5747
    %v5749 = vand.u32 %v5748, 4294901760
    %v5750 = vsub.f32 %v5748, %v5749
    %v5751 = vand.u32 %v5750, 4294901760
    %5752 = vmatpush2.msra.mxu0 %v5751
    %v5753 = vand.u32 %v2679, 4294901760
    %v5754 = vsub.f32 %v2679, %v5753
    %v5755 = vand.u32 %v5754, 4294901760
    %v5756 = vsub.f32 %v5754, %v5755
    %v5757 = vand.u32 %v5756, 4294901760
    %5758 = vmatprep.subr.mxu0 %v5757
    %v5759 = vand.u32 %v2678, 4294901760
    %v5760 = vsub.f32 %v2678, %v5759
    %v5761 = vand.u32 %v5760, 4294901760
    %v5762 = vsub.f32 %v5760, %v5761
    %v5763 = vand.u32 %v5762, 4294901760
    %5764 = vmatpush2.msra.mxu0 %v5763
    %v5765 = vand.u32 %v2676, 4294901760
    %v5766 = vsub.f32 %v2676, %v5765
    %v5767 = vand.u32 %v5766, 4294901760
    %v5768 = vsub.f32 %v5766, %v5767
    %v5769 = vand.u32 %v5768, 4294901760
    %5770 = vmatprep.subr.mxu0 %v5769
    %v5771 = vand.u32 %v2675, 4294901760
    %v5772 = vsub.f32 %v2675, %v5771
    %v5773 = vand.u32 %v5772, 4294901760
    %v5774 = vsub.f32 %v5772, %v5773
    %v5775 = vand.u32 %v5774, 4294901760
    %5776 = vmatpush2.msra.mxu0 %v5775
    %v5777 = vand.u32 %v2673, 4294901760
    %v5778 = vsub.f32 %v2673, %v5777
    %v5779 = vand.u32 %v5778, 4294901760
    %v5780 = vsub.f32 %v5778, %v5779
    %v5781 = vand.u32 %v5780, 4294901760
    %5782 = vmatprep.subr.mxu0 %v5781
    %v5783 = vand.u32 %v2672, 4294901760
    %v5784 = vsub.f32 %v2672, %v5783
    %v5785 = vand.u32 %v5784, 4294901760
    %v5786 = vsub.f32 %v5784, %v5785
    %v5787 = vand.u32 %v5786, 4294901760
    %5788 = vmatpush2.msra.mxu0 %v5787
    %v5789 = vand.u32 %v2670, 4294901760
    %v5790 = vsub.f32 %v2670, %v5789
    %v5791 = vand.u32 %v5790, 4294901760
    %v5792 = vsub.f32 %v5790, %v5791
    %v5793 = vand.u32 %v5792, 4294901760
    %5794 = vmatprep.subr.mxu0 %v5793
    %v5795 = vand.u32 %v2669, 4294901760
    %v5796 = vsub.f32 %v2669, %v5795
    %v5797 = vand.u32 %v5796, 4294901760
    %v5798 = vsub.f32 %v5796, %v5797
    %v5799 = vand.u32 %v5798, 4294901760
    %5800 = vmatpush2.msra.mxu0 %v5799
    %v5801 = vand.u32 %v2667, 4294901760
    %v5802 = vsub.f32 %v2667, %v5801
    %v5803 = vand.u32 %v5802, 4294901760
    %v5804 = vsub.f32 %v5802, %v5803
    %v5805 = vand.u32 %v5804, 4294901760
    %5806 = vmatprep.subr.mxu0 %v5805
    %v5807 = vand.u32 %v2666, 4294901760
    %v5808 = vsub.f32 %v2666, %v5807
    %v5809 = vand.u32 %v5808, 4294901760
    %v5810 = vsub.f32 %v5808, %v5809
    %v5811 = vand.u32 %v5810, 4294901760
    %5812 = vmatpush2.msra.mxu0 %v5811
    %v5813 = vand.u32 %v2664, 4294901760
    %v5814 = vsub.f32 %v2664, %v5813
    %v5815 = vand.u32 %v5814, 4294901760
    %v5816 = vsub.f32 %v5814, %v5815
    %v5817 = vand.u32 %v5816, 4294901760
    %5818 = vmatprep.subr.mxu0 %v5817
    %v5819 = vand.u32 %v2663, 4294901760
    %v5820 = vsub.f32 %v2663, %v5819
    %v5821 = vand.u32 %v5820, 4294901760
    %v5822 = vsub.f32 %v5820, %v5821
    %v5823 = vand.u32 %v5822, 4294901760
    %5824 = vmatpush2.msra.mxu0 %v5823
    %v5825 = vand.u32 %v2422, 4294901760
    %5826 = vmatprep.mubr.f32.mxu0 %v5825
    %v5827 = vand.u32 %v2421, 4294901760
    %5828 = vmatmul.mubr.f32.gmra.mxu0 %v5827
    %v5829 = vpop.f32.mrf.mxu0
    %v5830 = vadd.f32 %v5437, %v5829
    %v5831 = vpop.f32.mrf.mxu0
    %v5832 = vadd.f32 %v5439, %v5831
    %5833 = vdwg.mxu0
    %v5834 = vand.u32 %v2661, 4294901760
    %v5835 = vsub.f32 %v2661, %v5834
    %5836 = vmatprep.subr.mxu0 %v5835
    %v5837 = vand.u32 %v2660, 4294901760
    %v5838 = vsub.f32 %v2660, %v5837
    %5839 = vmatpush1.msra.mxu0 %v5838
    %v5840 = vand.u32 %v2658, 4294901760
    %v5841 = vsub.f32 %v2658, %v5840
    %5842 = vmatprep.subr.mxu0 %v5841
    %v5843 = vand.u32 %v2657, 4294901760
    %v5844 = vsub.f32 %v2657, %v5843
    %5845 = vmatpush1.msra.mxu0 %v5844
    %v5846 = vand.u32 %v2655, 4294901760
    %v5847 = vsub.f32 %v2655, %v5846
    %5848 = vmatprep.subr.mxu0 %v5847
    %v5849 = vand.u32 %v2654, 4294901760
    %v5850 = vsub.f32 %v2654, %v5849
    %5851 = vmatpush1.msra.mxu0 %v5850
    %v5852 = vand.u32 %v2652, 4294901760
    %v5853 = vsub.f32 %v2652, %v5852
    %5854 = vmatprep.subr.mxu0 %v5853
    %v5855 = vand.u32 %v2651, 4294901760
    %v5856 = vsub.f32 %v2651, %v5855
    %5857 = vmatpush1.msra.mxu0 %v5856
    %v5858 = vand.u32 %v2649, 4294901760
    %v5859 = vsub.f32 %v2649, %v5858
    %5860 = vmatprep.subr.mxu0 %v5859
    %v5861 = vand.u32 %v2648, 4294901760
    %v5862 = vsub.f32 %v2648, %v5861
    %5863 = vmatpush1.msra.mxu0 %v5862
    %v5864 = vand.u32 %v2646, 4294901760
    %v5865 = vsub.f32 %v2646, %v5864
    %5866 = vmatprep.subr.mxu0 %v5865
    %v5867 = vand.u32 %v2645, 4294901760
    %v5868 = vsub.f32 %v2645, %v5867
    %5869 = vmatpush1.msra.mxu0 %v5868
    %v5870 = vand.u32 %v2643, 4294901760
    %v5871 = vsub.f32 %v2643, %v5870
    %5872 = vmatprep.subr.mxu0 %v5871
    %v5873 = vand.u32 %v2642, 4294901760
    %v5874 = vsub.f32 %v2642, %v5873
    %5875 = vmatpush1.msra.mxu0 %v5874
    %v5876 = vand.u32 %v2640, 4294901760
    %v5877 = vsub.f32 %v2640, %v5876
    %5878 = vmatprep.subr.mxu0 %v5877
    %v5879 = vand.u32 %v2639, 4294901760
    %v5880 = vsub.f32 %v2639, %v5879
    %5881 = vmatpush1.msra.mxu0 %v5880
    %v5882 = vand.u32 %v2637, 4294901760
    %v5883 = vsub.f32 %v2637, %v5882
    %5884 = vmatprep.subr.mxu0 %v5883
    %v5885 = vand.u32 %v2636, 4294901760
    %v5886 = vsub.f32 %v2636, %v5885
    %5887 = vmatpush1.msra.mxu0 %v5886
    %v5888 = vand.u32 %v2634, 4294901760
    %v5889 = vsub.f32 %v2634, %v5888
    %5890 = vmatprep.subr.mxu0 %v5889
    %v5891 = vand.u32 %v2633, 4294901760
    %v5892 = vsub.f32 %v2633, %v5891
    %5893 = vmatpush1.msra.mxu0 %v5892
    %v5894 = vand.u32 %v2631, 4294901760
    %v5895 = vsub.f32 %v2631, %v5894
    %5896 = vmatprep.subr.mxu0 %v5895
    %v5897 = vand.u32 %v2630, 4294901760
    %v5898 = vsub.f32 %v2630, %v5897
    %5899 = vmatpush1.msra.mxu0 %v5898
    %v5900 = vand.u32 %v2628, 4294901760
    %v5901 = vsub.f32 %v2628, %v5900
    %5902 = vmatprep.subr.mxu0 %v5901
    %v5903 = vand.u32 %v2627, 4294901760
    %v5904 = vsub.f32 %v2627, %v5903
    %5905 = vmatpush1.msra.mxu0 %v5904
    %v5906 = vand.u32 %v2625, 4294901760
    %v5907 = vsub.f32 %v2625, %v5906
    %5908 = vmatprep.subr.mxu0 %v5907
    %v5909 = vand.u32 %v2624, 4294901760
    %v5910 = vsub.f32 %v2624, %v5909
    %5911 = vmatpush1.msra.mxu0 %v5910
    %v5912 = vand.u32 %v2622, 4294901760
    %v5913 = vsub.f32 %v2622, %v5912
    %5914 = vmatprep.subr.mxu0 %v5913
    %v5915 = vand.u32 %v2621, 4294901760
    %v5916 = vsub.f32 %v2621, %v5915
    %5917 = vmatpush1.msra.mxu0 %v5916
    %v5918 = vand.u32 %v2619, 4294901760
    %v5919 = vsub.f32 %v2619, %v5918
    %5920 = vmatprep.subr.mxu0 %v5919
    %v5921 = vand.u32 %v2618, 4294901760
    %v5922 = vsub.f32 %v2618, %v5921
    %5923 = vmatpush1.msra.mxu0 %v5922
    %v5924 = vand.u32 %v2616, 4294901760
    %v5925 = vsub.f32 %v2616, %v5924
    %5926 = vmatprep.subr.mxu0 %v5925
    %v5927 = vand.u32 %v2615, 4294901760
    %v5928 = vsub.f32 %v2615, %v5927
    %5929 = vmatpush1.msra.mxu0 %v5928
    %v5930 = vand.u32 %v2709, 4294901760
    %v5931 = vsub.f32 %v2709, %v5930
    %5932 = vmatprep.subr.mxu0 %v5931
    %v5933 = vand.u32 %v2708, 4294901760
    %v5934 = vsub.f32 %v2708, %v5933
    %5935 = vmatpush2.msra.mxu0 %v5934
    %v5936 = vand.u32 %v2706, 4294901760
    %v5937 = vsub.f32 %v2706, %v5936
    %5938 = vmatprep.subr.mxu0 %v5937
    %v5939 = vand.u32 %v2705, 4294901760
    %v5940 = vsub.f32 %v2705, %v5939
    %5941 = vmatpush2.msra.mxu0 %v5940
    %v5942 = vand.u32 %v2703, 4294901760
    %v5943 = vsub.f32 %v2703, %v5942
    %5944 = vmatprep.subr.mxu0 %v5943
    %v5945 = vand.u32 %v2702, 4294901760
    %v5946 = vsub.f32 %v2702, %v5945
    %5947 = vmatpush2.msra.mxu0 %v5946
    %v5948 = vand.u32 %v2700, 4294901760
    %v5949 = vsub.f32 %v2700, %v5948
    %5950 = vmatprep.subr.mxu0 %v5949
    %v5951 = vand.u32 %v2699, 4294901760
    %v5952 = vsub.f32 %v2699, %v5951
    %5953 = vmatpush2.msra.mxu0 %v5952
    %v5954 = vand.u32 %v2697, 4294901760
    %v5955 = vsub.f32 %v2697, %v5954
    %5956 = vmatprep.subr.mxu0 %v5955
    %v5957 = vand.u32 %v2696, 4294901760
    %v5958 = vsub.f32 %v2696, %v5957
    %5959 = vmatpush2.msra.mxu0 %v5958
    %v5960 = vand.u32 %v2694, 4294901760
    %v5961 = vsub.f32 %v2694, %v5960
    %5962 = vmatprep.subr.mxu0 %v5961
    %v5963 = vand.u32 %v2693, 4294901760
    %v5964 = vsub.f32 %v2693, %v5963
    %5965 = vmatpush2.msra.mxu0 %v5964
    %v5966 = vand.u32 %v2691, 4294901760
    %v5967 = vsub.f32 %v2691, %v5966
    %5968 = vmatprep.subr.mxu0 %v5967
    %v5969 = vand.u32 %v2690, 4294901760
    %v5970 = vsub.f32 %v2690, %v5969
    %5971 = vmatpush2.msra.mxu0 %v5970
    %v5972 = vand.u32 %v2688, 4294901760
    %v5973 = vsub.f32 %v2688, %v5972
    %5974 = vmatprep.subr.mxu0 %v5973
    %v5975 = vand.u32 %v2687, 4294901760
    %v5976 = vsub.f32 %v2687, %v5975
    %5977 = vmatpush2.msra.mxu0 %v5976
    %v5978 = vand.u32 %v2685, 4294901760
    %v5979 = vsub.f32 %v2685, %v5978
    %5980 = vmatprep.subr.mxu0 %v5979
    %v5981 = vand.u32 %v2684, 4294901760
    %v5982 = vsub.f32 %v2684, %v5981
    %5983 = vmatpush2.msra.mxu0 %v5982
    %v5984 = vand.u32 %v2682, 4294901760
    %v5985 = vsub.f32 %v2682, %v5984
    %5986 = vmatprep.subr.mxu0 %v5985
    %v5987 = vand.u32 %v2681, 4294901760
    %v5988 = vsub.f32 %v2681, %v5987
    %5989 = vmatpush2.msra.mxu0 %v5988
    %v5990 = vand.u32 %v2679, 4294901760
    %v5991 = vsub.f32 %v2679, %v5990
    %5992 = vmatprep.subr.mxu0 %v5991
    %v5993 = vand.u32 %v2678, 4294901760
    %v5994 = vsub.f32 %v2678, %v5993
    %5995 = vmatpush2.msra.mxu0 %v5994
    %v5996 = vand.u32 %v2676, 4294901760
    %v5997 = vsub.f32 %v2676, %v5996
    %5998 = vmatprep.subr.mxu0 %v5997
    %v5999 = vand.u32 %v2675, 4294901760
    %v6000 = vsub.f32 %v2675, %v5999
    %6001 = vmatpush2.msra.mxu0 %v6000
    %v6002 = vand.u32 %v2673, 4294901760
    %v6003 = vsub.f32 %v2673, %v6002
    %6004 = vmatprep.subr.mxu0 %v6003
    %v6005 = vand.u32 %v2672, 4294901760
    %v6006 = vsub.f32 %v2672, %v6005
    %6007 = vmatpush2.msra.mxu0 %v6006
    %v6008 = vand.u32 %v2670, 4294901760
    %v6009 = vsub.f32 %v2670, %v6008
    %6010 = vmatprep.subr.mxu0 %v6009
    %v6011 = vand.u32 %v2669, 4294901760
    %v6012 = vsub.f32 %v2669, %v6011
    %6013 = vmatpush2.msra.mxu0 %v6012
    %v6014 = vand.u32 %v2667, 4294901760
    %v6015 = vsub.f32 %v2667, %v6014
    %6016 = vmatprep.subr.mxu0 %v6015
    %v6017 = vand.u32 %v2666, 4294901760
    %v6018 = vsub.f32 %v2666, %v6017
    %6019 = vmatpush2.msra.mxu0 %v6018
    %v6020 = vand.u32 %v2664, 4294901760
    %v6021 = vsub.f32 %v2664, %v6020
    %6022 = vmatprep.subr.mxu0 %v6021
    %v6023 = vand.u32 %v2663, 4294901760
    %v6024 = vsub.f32 %v2663, %v6023
    %6025 = vmatpush2.msra.mxu0 %v6024
    %v6026 = vand.u32 %v2422, 4294901760
    %v6027 = vsub.f32 %v2422, %v6026
    %6028 = vmatprep.mubr.f32.mxu0 %v6027
    %v6029 = vand.u32 %v2421, 4294901760
    %v6030 = vsub.f32 %v2421, %v6029
    %6031 = vmatmul.mubr.f32.gmra.mxu0 %v6030
    %v6032 = vpop.f32.mrf.mxu0
    %v6033 = vadd.f32 %v5830, %v6032
    %v6034 = vpop.f32.mrf.mxu0
    %v6035 = vadd.f32 %v5832, %v6034
    %6036 = vdwg.mxu0
    %v6037 = vand.u32 %v2661, 4294901760
    %6038 = vmatprep.subr.mxu0 %v6037
    %v6039 = vand.u32 %v2660, 4294901760
    %6040 = vmatpush1.msra.mxu0 %v6039
    %v6041 = vand.u32 %v2658, 4294901760
    %6042 = vmatprep.subr.mxu0 %v6041
    %v6043 = vand.u32 %v2657, 4294901760
    %6044 = vmatpush1.msra.mxu0 %v6043
    %v6045 = vand.u32 %v2655, 4294901760
    %6046 = vmatprep.subr.mxu0 %v6045
    %v6047 = vand.u32 %v2654, 4294901760
    %6048 = vmatpush1.msra.mxu0 %v6047
    %v6049 = vand.u32 %v2652, 4294901760
    %6050 = vmatprep.subr.mxu0 %v6049
    %v6051 = vand.u32 %v2651, 4294901760
    %6052 = vmatpush1.msra.mxu0 %v6051
    %v6053 = vand.u32 %v2649, 4294901760
    %6054 = vmatprep.subr.mxu0 %v6053
    %v6055 = vand.u32 %v2648, 4294901760
    %6056 = vmatpush1.msra.mxu0 %v6055
    %v6057 = vand.u32 %v2646, 4294901760
    %6058 = vmatprep.subr.mxu0 %v6057
    %v6059 = vand.u32 %v2645, 4294901760
    %6060 = vmatpush1.msra.mxu0 %v6059
    %v6061 = vand.u32 %v2643, 4294901760
    %6062 = vmatprep.subr.mxu0 %v6061
    %v6063 = vand.u32 %v2642, 4294901760
    %6064 = vmatpush1.msra.mxu0 %v6063
    %v6065 = vand.u32 %v2640, 4294901760
    %6066 = vmatprep.subr.mxu0 %v6065
    %v6067 = vand.u32 %v2639, 4294901760
    %6068 = vmatpush1.msra.mxu0 %v6067
    %v6069 = vand.u32 %v2637, 4294901760
    %6070 = vmatprep.subr.mxu0 %v6069
    %v6071 = vand.u32 %v2636, 4294901760
    %6072 = vmatpush1.msra.mxu0 %v6071
    %v6073 = vand.u32 %v2634, 4294901760
    %6074 = vmatprep.subr.mxu0 %v6073
    %v6075 = vand.u32 %v2633, 4294901760
    %6076 = vmatpush1.msra.mxu0 %v6075
    %v6077 = vand.u32 %v2631, 4294901760
    %6078 = vmatprep.subr.mxu0 %v6077
    %v6079 = vand.u32 %v2630, 4294901760
    %6080 = vmatpush1.msra.mxu0 %v6079
    %v6081 = vand.u32 %v2628, 4294901760
    %6082 = vmatprep.subr.mxu0 %v6081
    %v6083 = vand.u32 %v2627, 4294901760
    %6084 = vmatpush1.msra.mxu0 %v6083
    %v6085 = vand.u32 %v2625, 4294901760
    %6086 = vmatprep.subr.mxu0 %v6085
    %v6087 = vand.u32 %v2624, 4294901760
    %6088 = vmatpush1.msra.mxu0 %v6087
    %v6089 = vand.u32 %v2622, 4294901760
    %6090 = vmatprep.subr.mxu0 %v6089
    %v6091 = vand.u32 %v2621, 4294901760
    %6092 = vmatpush1.msra.mxu0 %v6091
    %v6093 = vand.u32 %v2619, 4294901760
    %6094 = vmatprep.subr.mxu0 %v6093
    %v6095 = vand.u32 %v2618, 4294901760
    %6096 = vmatpush1.msra.mxu0 %v6095
    %v6097 = vand.u32 %v2616, 4294901760
    %6098 = vmatprep.subr.mxu0 %v6097
    %v6099 = vand.u32 %v2615, 4294901760
    %6100 = vmatpush1.msra.mxu0 %v6099
    %v6101 = vand.u32 %v2709, 4294901760
    %6102 = vmatprep.subr.mxu0 %v6101
    %v6103 = vand.u32 %v2708, 4294901760
    %6104 = vmatpush2.msra.mxu0 %v6103
    %v6105 = vand.u32 %v2706, 4294901760
    %6106 = vmatprep.subr.mxu0 %v6105
    %v6107 = vand.u32 %v2705, 4294901760
    %6108 = vmatpush2.msra.mxu0 %v6107
    %v6109 = vand.u32 %v2703, 4294901760
    %6110 = vmatprep.subr.mxu0 %v6109
    %v6111 = vand.u32 %v2702, 4294901760
    %6112 = vmatpush2.msra.mxu0 %v6111
    %v6113 = vand.u32 %v2700, 4294901760
    %6114 = vmatprep.subr.mxu0 %v6113
    %v6115 = vand.u32 %v2699, 4294901760
    %6116 = vmatpush2.msra.mxu0 %v6115
    %v6117 = vand.u32 %v2697, 4294901760
    %6118 = vmatprep.subr.mxu0 %v6117
    %v6119 = vand.u32 %v2696, 4294901760
    %6120 = vmatpush2.msra.mxu0 %v6119
    %v6121 = vand.u32 %v2694, 4294901760
    %6122 = vmatprep.subr.mxu0 %v6121
    %v6123 = vand.u32 %v2693, 4294901760
    %6124 = vmatpush2.msra.mxu0 %v6123
    %v6125 = vand.u32 %v2691, 4294901760
    %6126 = vmatprep.subr.mxu0 %v6125
    %v6127 = vand.u32 %v2690, 4294901760
    %6128 = vmatpush2.msra.mxu0 %v6127
    %v6129 = vand.u32 %v2688, 4294901760
    %6130 = vmatprep.subr.mxu0 %v6129
    %v6131 = vand.u32 %v2687, 4294901760
    %6132 = vmatpush2.msra.mxu0 %v6131
    %v6133 = vand.u32 %v2685, 4294901760
    %6134 = vmatprep.subr.mxu0 %v6133
    %v6135 = vand.u32 %v2684, 4294901760
    %6136 = vmatpush2.msra.mxu0 %v6135
    %v6137 = vand.u32 %v2682, 4294901760
    %6138 = vmatprep.subr.mxu0 %v6137
    %v6139 = vand.u32 %v2681, 4294901760
    %6140 = vmatpush2.msra.mxu0 %v6139
    %v6141 = vand.u32 %v2679, 4294901760
    %6142 = vmatprep.subr.mxu0 %v6141
    %v6143 = vand.u32 %v2678, 4294901760
    %6144 = vmatpush2.msra.mxu0 %v6143
    %v6145 = vand.u32 %v2676, 4294901760
    %6146 = vmatprep.subr.mxu0 %v6145
    %v6147 = vand.u32 %v2675, 4294901760
    %6148 = vmatpush2.msra.mxu0 %v6147
    %v6149 = vand.u32 %v2673, 4294901760
    %6150 = vmatprep.subr.mxu0 %v6149
    %v6151 = vand.u32 %v2672, 4294901760
    %6152 = vmatpush2.msra.mxu0 %v6151
    %v6153 = vand.u32 %v2670, 4294901760
    %6154 = vmatprep.subr.mxu0 %v6153
    %v6155 = vand.u32 %v2669, 4294901760
    %6156 = vmatpush2.msra.mxu0 %v6155
    %v6157 = vand.u32 %v2667, 4294901760
    %6158 = vmatprep.subr.mxu0 %v6157
    %v6159 = vand.u32 %v2666, 4294901760
    %6160 = vmatpush2.msra.mxu0 %v6159
    %v6161 = vand.u32 %v2664, 4294901760
    %6162 = vmatprep.subr.mxu0 %v6161
    %v6163 = vand.u32 %v2663, 4294901760
    %6164 = vmatpush2.msra.mxu0 %v6163
    %v6165 = vand.u32 %v2422, 4294901760
    %v6166 = vsub.f32 %v2422, %v6165
    %v6167 = vand.u32 %v6166, 4294901760
    %6168 = vmatprep.mubr.f32.mxu0 %v6167
    %v6169 = vand.u32 %v2421, 4294901760
    %v6170 = vsub.f32 %v2421, %v6169
    %v6171 = vand.u32 %v6170, 4294901760
    %6172 = vmatmul.mubr.f32.gmra.mxu0 %v6171
    %v6173 = vpop.f32.mrf.mxu0
    %v6174 = vadd.f32 %v6033, %v6173
    %v6175 = vpop.f32.mrf.mxu0
    %v6176 = vadd.f32 %v6035, %v6175
    %6177 = vdwg.mxu0
    %v6178 = vand.u32 %v2661, 4294901760
    %v6179 = vsub.f32 %v2661, %v6178
    %v6180 = vand.u32 %v6179, 4294901760
    %6181 = vmatprep.subr.mxu0 %v6180
    %v6182 = vand.u32 %v2660, 4294901760
    %v6183 = vsub.f32 %v2660, %v6182
    %v6184 = vand.u32 %v6183, 4294901760
    %6185 = vmatpush1.msra.mxu0 %v6184
    %v6186 = vand.u32 %v2658, 4294901760
    %v6187 = vsub.f32 %v2658, %v6186
    %v6188 = vand.u32 %v6187, 4294901760
    %6189 = vmatprep.subr.mxu0 %v6188
    %v6190 = vand.u32 %v2657, 4294901760
    %v6191 = vsub.f32 %v2657, %v6190
    %v6192 = vand.u32 %v6191, 4294901760
    %6193 = vmatpush1.msra.mxu0 %v6192
    %v6194 = vand.u32 %v2655, 4294901760
    %v6195 = vsub.f32 %v2655, %v6194
    %v6196 = vand.u32 %v6195, 4294901760
    %6197 = vmatprep.subr.mxu0 %v6196
    %v6198 = vand.u32 %v2654, 4294901760
    %v6199 = vsub.f32 %v2654, %v6198
    %v6200 = vand.u32 %v6199, 4294901760
    %6201 = vmatpush1.msra.mxu0 %v6200
    %v6202 = vand.u32 %v2652, 4294901760
    %v6203 = vsub.f32 %v2652, %v6202
    %v6204 = vand.u32 %v6203, 4294901760
    %6205 = vmatprep.subr.mxu0 %v6204
    %v6206 = vand.u32 %v2651, 4294901760
    %v6207 = vsub.f32 %v2651, %v6206
    %v6208 = vand.u32 %v6207, 4294901760
    %6209 = vmatpush1.msra.mxu0 %v6208
    %v6210 = vand.u32 %v2649, 4294901760
    %v6211 = vsub.f32 %v2649, %v6210
    %v6212 = vand.u32 %v6211, 4294901760
    %6213 = vmatprep.subr.mxu0 %v6212
    %v6214 = vand.u32 %v2648, 4294901760
    %v6215 = vsub.f32 %v2648, %v6214
    %v6216 = vand.u32 %v6215, 4294901760
    %6217 = vmatpush1.msra.mxu0 %v6216
    %v6218 = vand.u32 %v2646, 4294901760
    %v6219 = vsub.f32 %v2646, %v6218
    %v6220 = vand.u32 %v6219, 4294901760
    %6221 = vmatprep.subr.mxu0 %v6220
    %v6222 = vand.u32 %v2645, 4294901760
    %v6223 = vsub.f32 %v2645, %v6222
    %v6224 = vand.u32 %v6223, 4294901760
    %6225 = vmatpush1.msra.mxu0 %v6224
    %v6226 = vand.u32 %v2643, 4294901760
    %v6227 = vsub.f32 %v2643, %v6226
    %v6228 = vand.u32 %v6227, 4294901760
    %6229 = vmatprep.subr.mxu0 %v6228
    %v6230 = vand.u32 %v2642, 4294901760
    %v6231 = vsub.f32 %v2642, %v6230
    %v6232 = vand.u32 %v6231, 4294901760
    %6233 = vmatpush1.msra.mxu0 %v6232
    %v6234 = vand.u32 %v2640, 4294901760
    %v6235 = vsub.f32 %v2640, %v6234
    %v6236 = vand.u32 %v6235, 4294901760
    %6237 = vmatprep.subr.mxu0 %v6236
    %v6238 = vand.u32 %v2639, 4294901760
    %v6239 = vsub.f32 %v2639, %v6238
    %v6240 = vand.u32 %v6239, 4294901760
    %6241 = vmatpush1.msra.mxu0 %v6240
    %v6242 = vand.u32 %v2637, 4294901760
    %v6243 = vsub.f32 %v2637, %v6242
    %v6244 = vand.u32 %v6243, 4294901760
    %6245 = vmatprep.subr.mxu0 %v6244
    %v6246 = vand.u32 %v2636, 4294901760
    %v6247 = vsub.f32 %v2636, %v6246
    %v6248 = vand.u32 %v6247, 4294901760
    %6249 = vmatpush1.msra.mxu0 %v6248
    %v6250 = vand.u32 %v2634, 4294901760
    %v6251 = vsub.f32 %v2634, %v6250
    %v6252 = vand.u32 %v6251, 4294901760
    %6253 = vmatprep.subr.mxu0 %v6252
    %v6254 = vand.u32 %v2633, 4294901760
    %v6255 = vsub.f32 %v2633, %v6254
    %v6256 = vand.u32 %v6255, 4294901760
    %6257 = vmatpush1.msra.mxu0 %v6256
    %v6258 = vand.u32 %v2631, 4294901760
    %v6259 = vsub.f32 %v2631, %v6258
    %v6260 = vand.u32 %v6259, 4294901760
    %6261 = vmatprep.subr.mxu0 %v6260
    %v6262 = vand.u32 %v2630, 4294901760
    %v6263 = vsub.f32 %v2630, %v6262
    %v6264 = vand.u32 %v6263, 4294901760
    %6265 = vmatpush1.msra.mxu0 %v6264
    %v6266 = vand.u32 %v2628, 4294901760
    %v6267 = vsub.f32 %v2628, %v6266
    %v6268 = vand.u32 %v6267, 4294901760
    %6269 = vmatprep.subr.mxu0 %v6268
    %v6270 = vand.u32 %v2627, 4294901760
    %v6271 = vsub.f32 %v2627, %v6270
    %v6272 = vand.u32 %v6271, 4294901760
    %6273 = vmatpush1.msra.mxu0 %v6272
    %v6274 = vand.u32 %v2625, 4294901760
    %v6275 = vsub.f32 %v2625, %v6274
    %v6276 = vand.u32 %v6275, 4294901760
    %6277 = vmatprep.subr.mxu0 %v6276
    %v6278 = vand.u32 %v2624, 4294901760
    %v6279 = vsub.f32 %v2624, %v6278
    %v6280 = vand.u32 %v6279, 4294901760
    %6281 = vmatpush1.msra.mxu0 %v6280
    %v6282 = vand.u32 %v2622, 4294901760
    %v6283 = vsub.f32 %v2622, %v6282
    %v6284 = vand.u32 %v6283, 4294901760
    %6285 = vmatprep.subr.mxu0 %v6284
    %v6286 = vand.u32 %v2621, 4294901760
    %v6287 = vsub.f32 %v2621, %v6286
    %v6288 = vand.u32 %v6287, 4294901760
    %6289 = vmatpush1.msra.mxu0 %v6288
    %v6290 = vand.u32 %v2619, 4294901760
    %v6291 = vsub.f32 %v2619, %v6290
    %v6292 = vand.u32 %v6291, 4294901760
    %6293 = vmatprep.subr.mxu0 %v6292
    %v6294 = vand.u32 %v2618, 4294901760
    %v6295 = vsub.f32 %v2618, %v6294
    %v6296 = vand.u32 %v6295, 4294901760
    %6297 = vmatpush1.msra.mxu0 %v6296
    %v6298 = vand.u32 %v2616, 4294901760
    %v6299 = vsub.f32 %v2616, %v6298
    %v6300 = vand.u32 %v6299, 4294901760
    %6301 = vmatprep.subr.mxu0 %v6300
    %v6302 = vand.u32 %v2615, 4294901760
    %v6303 = vsub.f32 %v2615, %v6302
    %v6304 = vand.u32 %v6303, 4294901760
    %6305 = vmatpush1.msra.mxu0 %v6304
    %v6306 = vand.u32 %v2709, 4294901760
    %v6307 = vsub.f32 %v2709, %v6306
    %v6308 = vand.u32 %v6307, 4294901760
    %6309 = vmatprep.subr.mxu0 %v6308
    %v6310 = vand.u32 %v2708, 4294901760
    %v6311 = vsub.f32 %v2708, %v6310
    %v6312 = vand.u32 %v6311, 4294901760
    %6313 = vmatpush2.msra.mxu0 %v6312
    %v6314 = vand.u32 %v2706, 4294901760
    %v6315 = vsub.f32 %v2706, %v6314
    %v6316 = vand.u32 %v6315, 4294901760
    %6317 = vmatprep.subr.mxu0 %v6316
    %v6318 = vand.u32 %v2705, 4294901760
    %v6319 = vsub.f32 %v2705, %v6318
    %v6320 = vand.u32 %v6319, 4294901760
    %6321 = vmatpush2.msra.mxu0 %v6320
    %v6322 = vand.u32 %v2703, 4294901760
    %v6323 = vsub.f32 %v2703, %v6322
    %v6324 = vand.u32 %v6323, 4294901760
    %6325 = vmatprep.subr.mxu0 %v6324
    %v6326 = vand.u32 %v2702, 4294901760
    %v6327 = vsub.f32 %v2702, %v6326
    %v6328 = vand.u32 %v6327, 4294901760
    %6329 = vmatpush2.msra.mxu0 %v6328
    %v6330 = vand.u32 %v2700, 4294901760
    %v6331 = vsub.f32 %v2700, %v6330
    %v6332 = vand.u32 %v6331, 4294901760
    %6333 = vmatprep.subr.mxu0 %v6332
    %v6334 = vand.u32 %v2699, 4294901760
    %v6335 = vsub.f32 %v2699, %v6334
    %v6336 = vand.u32 %v6335, 4294901760
    %6337 = vmatpush2.msra.mxu0 %v6336
    %v6338 = vand.u32 %v2697, 4294901760
    %v6339 = vsub.f32 %v2697, %v6338
    %v6340 = vand.u32 %v6339, 4294901760
    %6341 = vmatprep.subr.mxu0 %v6340
    %v6342 = vand.u32 %v2696, 4294901760
    %v6343 = vsub.f32 %v2696, %v6342
    %v6344 = vand.u32 %v6343, 4294901760
    %6345 = vmatpush2.msra.mxu0 %v6344
    %v6346 = vand.u32 %v2694, 4294901760
    %v6347 = vsub.f32 %v2694, %v6346
    %v6348 = vand.u32 %v6347, 4294901760
    %6349 = vmatprep.subr.mxu0 %v6348
    %v6350 = vand.u32 %v2693, 4294901760
    %v6351 = vsub.f32 %v2693, %v6350
    %v6352 = vand.u32 %v6351, 4294901760
    %6353 = vmatpush2.msra.mxu0 %v6352
    %v6354 = vand.u32 %v2691, 4294901760
    %v6355 = vsub.f32 %v2691, %v6354
    %v6356 = vand.u32 %v6355, 4294901760
    %6357 = vmatprep.subr.mxu0 %v6356
    %v6358 = vand.u32 %v2690, 4294901760
    %v6359 = vsub.f32 %v2690, %v6358
    %v6360 = vand.u32 %v6359, 4294901760
    %6361 = vmatpush2.msra.mxu0 %v6360
    %v6362 = vand.u32 %v2688, 4294901760
    %v6363 = vsub.f32 %v2688, %v6362
    %v6364 = vand.u32 %v6363, 4294901760
    %6365 = vmatprep.subr.mxu0 %v6364
    %v6366 = vand.u32 %v2687, 4294901760
    %v6367 = vsub.f32 %v2687, %v6366
    %v6368 = vand.u32 %v6367, 4294901760
    %6369 = vmatpush2.msra.mxu0 %v6368
    %v6370 = vand.u32 %v2685, 4294901760
    %v6371 = vsub.f32 %v2685, %v6370
    %v6372 = vand.u32 %v6371, 4294901760
    %6373 = vmatprep.subr.mxu0 %v6372
    %v6374 = vand.u32 %v2684, 4294901760
    %v6375 = vsub.f32 %v2684, %v6374
    %v6376 = vand.u32 %v6375, 4294901760
    %6377 = vmatpush2.msra.mxu0 %v6376
    %v6378 = vand.u32 %v2682, 4294901760
    %v6379 = vsub.f32 %v2682, %v6378
    %v6380 = vand.u32 %v6379, 4294901760
    %6381 = vmatprep.subr.mxu0 %v6380
    %v6382 = vand.u32 %v2681, 4294901760
    %v6383 = vsub.f32 %v2681, %v6382
    %v6384 = vand.u32 %v6383, 4294901760
    %6385 = vmatpush2.msra.mxu0 %v6384
    %v6386 = vand.u32 %v2679, 4294901760
    %v6387 = vsub.f32 %v2679, %v6386
    %v6388 = vand.u32 %v6387, 4294901760
    %6389 = vmatprep.subr.mxu0 %v6388
    %v6390 = vand.u32 %v2678, 4294901760
    %v6391 = vsub.f32 %v2678, %v6390
    %v6392 = vand.u32 %v6391, 4294901760
    %6393 = vmatpush2.msra.mxu0 %v6392
    %v6394 = vand.u32 %v2676, 4294901760
    %v6395 = vsub.f32 %v2676, %v6394
    %v6396 = vand.u32 %v6395, 4294901760
    %6397 = vmatprep.subr.mxu0 %v6396
    %v6398 = vand.u32 %v2675, 4294901760
    %v6399 = vsub.f32 %v2675, %v6398
    %v6400 = vand.u32 %v6399, 4294901760
    %6401 = vmatpush2.msra.mxu0 %v6400
    %v6402 = vand.u32 %v2673, 4294901760
    %v6403 = vsub.f32 %v2673, %v6402
    %v6404 = vand.u32 %v6403, 4294901760
    %6405 = vmatprep.subr.mxu0 %v6404
    %v6406 = vand.u32 %v2672, 4294901760
    %v6407 = vsub.f32 %v2672, %v6406
    %v6408 = vand.u32 %v6407, 4294901760
    %6409 = vmatpush2.msra.mxu0 %v6408
    %v6410 = vand.u32 %v2670, 4294901760
    %v6411 = vsub.f32 %v2670, %v6410
    %v6412 = vand.u32 %v6411, 4294901760
    %6413 = vmatprep.subr.mxu0 %v6412
    %v6414 = vand.u32 %v2669, 4294901760
    %v6415 = vsub.f32 %v2669, %v6414
    %v6416 = vand.u32 %v6415, 4294901760
    %6417 = vmatpush2.msra.mxu0 %v6416
    %v6418 = vand.u32 %v2667, 4294901760
    %v6419 = vsub.f32 %v2667, %v6418
    %v6420 = vand.u32 %v6419, 4294901760
    %6421 = vmatprep.subr.mxu0 %v6420
    %v6422 = vand.u32 %v2666, 4294901760
    %v6423 = vsub.f32 %v2666, %v6422
    %v6424 = vand.u32 %v6423, 4294901760
    %6425 = vmatpush2.msra.mxu0 %v6424
    %v6426 = vand.u32 %v2664, 4294901760
    %v6427 = vsub.f32 %v2664, %v6426
    %v6428 = vand.u32 %v6427, 4294901760
    %6429 = vmatprep.subr.mxu0 %v6428
    %v6430 = vand.u32 %v2663, 4294901760
    %v6431 = vsub.f32 %v2663, %v6430
    %v6432 = vand.u32 %v6431, 4294901760
    %6433 = vmatpush2.msra.mxu0 %v6432
    %v6434 = vand.u32 %v2422, 4294901760
    %6435 = vmatprep.mubr.f32.mxu0 %v6434
    %v6436 = vand.u32 %v2421, 4294901760
    %6437 = vmatmul.mubr.f32.gmra.mxu0 %v6436
    %v6438 = vpop.f32.mrf.mxu0
    %v6439 = vadd.f32 %v6174, %v6438
    %v6440 = vpop.f32.mrf.mxu0
    %v6441 = vadd.f32 %v6176, %v6440
    %6442 = vdwg.mxu0
    %v6443 = vand.u32 %v2661, 4294901760
    %6444 = vmatprep.subr.mxu0 %v6443
    %v6445 = vand.u32 %v2660, 4294901760
    %6446 = vmatpush1.msra.mxu0 %v6445
    %v6447 = vand.u32 %v2658, 4294901760
    %6448 = vmatprep.subr.mxu0 %v6447
    %v6449 = vand.u32 %v2657, 4294901760
    %6450 = vmatpush1.msra.mxu0 %v6449
    %v6451 = vand.u32 %v2655, 4294901760
    %6452 = vmatprep.subr.mxu0 %v6451
    %v6453 = vand.u32 %v2654, 4294901760
    %6454 = vmatpush1.msra.mxu0 %v6453
    %v6455 = vand.u32 %v2652, 4294901760
    %6456 = vmatprep.subr.mxu0 %v6455
    %v6457 = vand.u32 %v2651, 4294901760
    %6458 = vmatpush1.msra.mxu0 %v6457
    %v6459 = vand.u32 %v2649, 4294901760
    %6460 = vmatprep.subr.mxu0 %v6459
    %v6461 = vand.u32 %v2648, 4294901760
    %6462 = vmatpush1.msra.mxu0 %v6461
    %v6463 = vand.u32 %v2646, 4294901760
    %6464 = vmatprep.subr.mxu0 %v6463
    %v6465 = vand.u32 %v2645, 4294901760
    %6466 = vmatpush1.msra.mxu0 %v6465
    %v6467 = vand.u32 %v2643, 4294901760
    %6468 = vmatprep.subr.mxu0 %v6467
    %v6469 = vand.u32 %v2642, 4294901760
    %6470 = vmatpush1.msra.mxu0 %v6469
    %v6471 = vand.u32 %v2640, 4294901760
    %6472 = vmatprep.subr.mxu0 %v6471
    %v6473 = vand.u32 %v2639, 4294901760
    %6474 = vmatpush1.msra.mxu0 %v6473
    %v6475 = vand.u32 %v2637, 4294901760
    %6476 = vmatprep.subr.mxu0 %v6475
    %v6477 = vand.u32 %v2636, 4294901760
    %6478 = vmatpush1.msra.mxu0 %v6477
    %v6479 = vand.u32 %v2634, 4294901760
    %6480 = vmatprep.subr.mxu0 %v6479
    %v6481 = vand.u32 %v2633, 4294901760
    %6482 = vmatpush1.msra.mxu0 %v6481
    %v6483 = vand.u32 %v2631, 4294901760
    %6484 = vmatprep.subr.mxu0 %v6483
    %v6485 = vand.u32 %v2630, 4294901760
    %6486 = vmatpush1.msra.mxu0 %v6485
    %v6487 = vand.u32 %v2628, 4294901760
    %6488 = vmatprep.subr.mxu0 %v6487
    %v6489 = vand.u32 %v2627, 4294901760
    %6490 = vmatpush1.msra.mxu0 %v6489
    %v6491 = vand.u32 %v2625, 4294901760
    %6492 = vmatprep.subr.mxu0 %v6491
    %v6493 = vand.u32 %v2624, 4294901760
    %6494 = vmatpush1.msra.mxu0 %v6493
    %v6495 = vand.u32 %v2622, 4294901760
    %6496 = vmatprep.subr.mxu0 %v6495
    %v6497 = vand.u32 %v2621, 4294901760
    %6498 = vmatpush1.msra.mxu0 %v6497
    %v6499 = vand.u32 %v2619, 4294901760
    %6500 = vmatprep.subr.mxu0 %v6499
    %v6501 = vand.u32 %v2618, 4294901760
    %6502 = vmatpush1.msra.mxu0 %v6501
    %v6503 = vand.u32 %v2616, 4294901760
    %6504 = vmatprep.subr.mxu0 %v6503
    %v6505 = vand.u32 %v2615, 4294901760
    %6506 = vmatpush1.msra.mxu0 %v6505
    %v6507 = vand.u32 %v2709, 4294901760
    %6508 = vmatprep.subr.mxu0 %v6507
    %v6509 = vand.u32 %v2708, 4294901760
    %6510 = vmatpush2.msra.mxu0 %v6509
    %v6511 = vand.u32 %v2706, 4294901760
    %6512 = vmatprep.subr.mxu0 %v6511
    %v6513 = vand.u32 %v2705, 4294901760
    %6514 = vmatpush2.msra.mxu0 %v6513
    %v6515 = vand.u32 %v2703, 4294901760
    %6516 = vmatprep.subr.mxu0 %v6515
    %v6517 = vand.u32 %v2702, 4294901760
    %6518 = vmatpush2.msra.mxu0 %v6517
    %v6519 = vand.u32 %v2700, 4294901760
    %6520 = vmatprep.subr.mxu0 %v6519
    %v6521 = vand.u32 %v2699, 4294901760
    %6522 = vmatpush2.msra.mxu0 %v6521
    %v6523 = vand.u32 %v2697, 4294901760
    %6524 = vmatprep.subr.mxu0 %v6523
    %v6525 = vand.u32 %v2696, 4294901760
    %6526 = vmatpush2.msra.mxu0 %v6525
    %v6527 = vand.u32 %v2694, 4294901760
    %6528 = vmatprep.subr.mxu0 %v6527
    %v6529 = vand.u32 %v2693, 4294901760
    %6530 = vmatpush2.msra.mxu0 %v6529
    %v6531 = vand.u32 %v2691, 4294901760
    %6532 = vmatprep.subr.mxu0 %v6531
    %v6533 = vand.u32 %v2690, 4294901760
    %6534 = vmatpush2.msra.mxu0 %v6533
    %v6535 = vand.u32 %v2688, 4294901760
    %6536 = vmatprep.subr.mxu0 %v6535
    %v6537 = vand.u32 %v2687, 4294901760
    %6538 = vmatpush2.msra.mxu0 %v6537
    %v6539 = vand.u32 %v2685, 4294901760
    %6540 = vmatprep.subr.mxu0 %v6539
    %v6541 = vand.u32 %v2684, 4294901760
    %6542 = vmatpush2.msra.mxu0 %v6541
    %v6543 = vand.u32 %v2682, 4294901760
    %6544 = vmatprep.subr.mxu0 %v6543
    %v6545 = vand.u32 %v2681, 4294901760
    %6546 = vmatpush2.msra.mxu0 %v6545
    %v6547 = vand.u32 %v2679, 4294901760
    %6548 = vmatprep.subr.mxu0 %v6547
    %v6549 = vand.u32 %v2678, 4294901760
    %6550 = vmatpush2.msra.mxu0 %v6549
    %v6551 = vand.u32 %v2676, 4294901760
    %6552 = vmatprep.subr.mxu0 %v6551
    %v6553 = vand.u32 %v2675, 4294901760
    %6554 = vmatpush2.msra.mxu0 %v6553
    %v6555 = vand.u32 %v2673, 4294901760
    %6556 = vmatprep.subr.mxu0 %v6555
    %v6557 = vand.u32 %v2672, 4294901760
    %6558 = vmatpush2.msra.mxu0 %v6557
    %v6559 = vand.u32 %v2670, 4294901760
    %6560 = vmatprep.subr.mxu0 %v6559
    %v6561 = vand.u32 %v2669, 4294901760
    %6562 = vmatpush2.msra.mxu0 %v6561
    %v6563 = vand.u32 %v2667, 4294901760
    %6564 = vmatprep.subr.mxu0 %v6563
    %v6565 = vand.u32 %v2666, 4294901760
    %6566 = vmatpush2.msra.mxu0 %v6565
    %v6567 = vand.u32 %v2664, 4294901760
    %6568 = vmatprep.subr.mxu0 %v6567
    %v6569 = vand.u32 %v2663, 4294901760
    %6570 = vmatpush2.msra.mxu0 %v6569
    %v6571 = vand.u32 %v2422, 4294901760
    %6572 = vmatprep.mubr.f32.mxu0 %v6571
    %v6573 = vand.u32 %v2421, 4294901760
    %6574 = vmatmul.mubr.f32.gmra.mxu0 %v6573
    %v6575 = vpop.f32.mrf.mxu0
    %v6576 = vadd.f32 %v6439, %v6575
    %v6577 = vpop.f32.mrf.mxu0
    %v6578 = vadd.f32 %v6441, %v6577
    %6579 = vdwg.mxu0
    %6580 = vmatprep.subr.mxu0 0.0
    %v6581 = vand.u32 %v2470, 4294901760
    %6582 = vmatpush1.msra.mxu0 %v6581
    %6583 = vmatprep.subr.mxu0 0.0
    %v6584 = vand.u32 %v2467, 4294901760
    %6585 = vmatpush1.msra.mxu0 %v6584
    %6586 = vmatprep.subr.mxu0 0.0
    %v6587 = vand.u32 %v2464, 4294901760
    %6588 = vmatpush1.msra.mxu0 %v6587
    %6589 = vmatprep.subr.mxu0 0.0
    %v6590 = vand.u32 %v2461, 4294901760
    %6591 = vmatpush1.msra.mxu0 %v6590
    %6592 = vmatprep.subr.mxu0 0.0
    %v6593 = vand.u32 %v2458, 4294901760
    %6594 = vmatpush1.msra.mxu0 %v6593
    %6595 = vmatprep.subr.mxu0 0.0
    %v6596 = vand.u32 %v2455, 4294901760
    %6597 = vmatpush1.msra.mxu0 %v6596
    %6598 = vmatprep.subr.mxu0 0.0
    %v6599 = vand.u32 %v2452, 4294901760
    %6600 = vmatpush1.msra.mxu0 %v6599
    %6601 = vmatprep.subr.mxu0 0.0
    %v6602 = vand.u32 %v2449, 4294901760
    %6603 = vmatpush1.msra.mxu0 %v6602
    %6604 = vmatprep.subr.mxu0 0.0
    %v6605 = vand.u32 %v2446, 4294901760
    %6606 = vmatpush1.msra.mxu0 %v6605
    %6607 = vmatprep.subr.mxu0 0.0
    %v6608 = vand.u32 %v2443, 4294901760
    %6609 = vmatpush1.msra.mxu0 %v6608
    %6610 = vmatprep.subr.mxu0 0.0
    %v6611 = vand.u32 %v2440, 4294901760
    %6612 = vmatpush1.msra.mxu0 %v6611
    %6613 = vmatprep.subr.mxu0 0.0
    %v6614 = vand.u32 %v2437, 4294901760
    %6615 = vmatpush1.msra.mxu0 %v6614
    %6616 = vmatprep.subr.mxu0 0.0
    %v6617 = vand.u32 %v2434, 4294901760
    %6618 = vmatpush1.msra.mxu0 %v6617
    %6619 = vmatprep.subr.mxu0 0.0
    %v6620 = vand.u32 %v2431, 4294901760
    %6621 = vmatpush1.msra.mxu0 %v6620
    %6622 = vmatprep.subr.mxu0 0.0
    %v6623 = vand.u32 %v2428, 4294901760
    %6624 = vmatpush1.msra.mxu0 %v6623
    %6625 = vmatprep.subr.mxu0 0.0
    %v6626 = vand.u32 %v2425, 4294901760
    %6627 = vmatpush1.msra.mxu0 %v6626
    %6628 = vmatprep.subr.mxu0 0.0
    %v6629 = vand.u32 %v2518, 4294901760
    %6630 = vmatpush2.msra.mxu0 %v6629
    %6631 = vmatprep.subr.mxu0 0.0
    %v6632 = vand.u32 %v2515, 4294901760
    %6633 = vmatpush2.msra.mxu0 %v6632
    %6634 = vmatprep.subr.mxu0 0.0
    %v6635 = vand.u32 %v2512, 4294901760
    %6636 = vmatpush2.msra.mxu0 %v6635
    %6637 = vmatprep.subr.mxu0 0.0
    %v6638 = vand.u32 %v2509, 4294901760
    %6639 = vmatpush2.msra.mxu0 %v6638
    %6640 = vmatprep.subr.mxu0 0.0
    %v6641 = vand.u32 %v2506, 4294901760
    %6642 = vmatpush2.msra.mxu0 %v6641
    %6643 = vmatprep.subr.mxu0 0.0
    %v6644 = vand.u32 %v2503, 4294901760
    %6645 = vmatpush2.msra.mxu0 %v6644
    %6646 = vmatprep.subr.mxu0 0.0
    %v6647 = vand.u32 %v2500, 4294901760
    %6648 = vmatpush2.msra.mxu0 %v6647
    %6649 = vmatprep.subr.mxu0 0.0
    %v6650 = vand.u32 %v2497, 4294901760
    %6651 = vmatpush2.msra.mxu0 %v6650
    %6652 = vmatprep.subr.mxu0 0.0
    %v6653 = vand.u32 %v2494, 4294901760
    %6654 = vmatpush2.msra.mxu0 %v6653
    %6655 = vmatprep.subr.mxu0 0.0
    %v6656 = vand.u32 %v2491, 4294901760
    %6657 = vmatpush2.msra.mxu0 %v6656
    %6658 = vmatprep.subr.mxu0 0.0
    %v6659 = vand.u32 %v2488, 4294901760
    %6660 = vmatpush2.msra.mxu0 %v6659
    %6661 = vmatprep.subr.mxu0 0.0
    %v6662 = vand.u32 %v2485, 4294901760
    %6663 = vmatpush2.msra.mxu0 %v6662
    %6664 = vmatprep.subr.mxu0 0.0
    %v6665 = vand.u32 %v2482, 4294901760
    %6666 = vmatpush2.msra.mxu0 %v6665
    %6667 = vmatprep.subr.mxu0 0.0
    %v6668 = vand.u32 %v2479, 4294901760
    %6669 = vmatpush2.msra.mxu0 %v6668
    %6670 = vmatprep.subr.mxu0 0.0
    %v6671 = vand.u32 %v2476, 4294901760
    %6672 = vmatpush2.msra.mxu0 %v6671
    %6673 = vmatprep.subr.mxu0 0.0
    %v6674 = vand.u32 %v2473, 4294901760
    %6675 = vmatpush2.msra.mxu0 %v6674
    %v6676 = vand.u32 %v2418, 4294901760
    %v6677 = vsub.f32 %v2418, %v6676
    %v6678 = vand.u32 %v6677, 4294901760
    %v6679 = vsub.f32 %v6677, %v6678
    %v6680 = vand.u32 %v6679, 4294901760
    %6681 = vmatprep.mubr.f32.mxu0 %v6680
    %v6682 = vand.u32 %v2417, 4294901760
    %v6683 = vsub.f32 %v2417, %v6682
    %v6684 = vand.u32 %v6683, 4294901760
    %v6685 = vsub.f32 %v6683, %v6684
    %v6686 = vand.u32 %v6685, 4294901760
    %6687 = vmatmul.mubr.f32.gmra.mxu0 %v6686
    %v6688 = vpop.f32.mrf.mxu0
    %v6689 = vadd.f32 %v2724, %v6688
    %v6690 = vpop.f32.mrf.mxu0
    %6691 = vdwg.mxu0
    %6692 = vmatprep.subr.mxu0 0.0
    %v6693 = vand.u32 %v2470, 4294901760
    %v6694 = vsub.f32 %v2470, %v6693
    %v6695 = vand.u32 %v6694, 4294901760
    %v6696 = vsub.f32 %v6694, %v6695
    %v6697 = vand.u32 %v6696, 4294901760
    %6698 = vmatpush1.msra.mxu0 %v6697
    %6699 = vmatprep.subr.mxu0 0.0
    %v6700 = vand.u32 %v2467, 4294901760
    %v6701 = vsub.f32 %v2467, %v6700
    %v6702 = vand.u32 %v6701, 4294901760
    %v6703 = vsub.f32 %v6701, %v6702
    %v6704 = vand.u32 %v6703, 4294901760
    %6705 = vmatpush1.msra.mxu0 %v6704
    %6706 = vmatprep.subr.mxu0 0.0
    %v6707 = vand.u32 %v2464, 4294901760
    %v6708 = vsub.f32 %v2464, %v6707
    %v6709 = vand.u32 %v6708, 4294901760
    %v6710 = vsub.f32 %v6708, %v6709
    %v6711 = vand.u32 %v6710, 4294901760
    %6712 = vmatpush1.msra.mxu0 %v6711
    %6713 = vmatprep.subr.mxu0 0.0
    %v6714 = vand.u32 %v2461, 4294901760
    %v6715 = vsub.f32 %v2461, %v6714
    %v6716 = vand.u32 %v6715, 4294901760
    %v6717 = vsub.f32 %v6715, %v6716
    %v6718 = vand.u32 %v6717, 4294901760
    %6719 = vmatpush1.msra.mxu0 %v6718
    %6720 = vmatprep.subr.mxu0 0.0
    %v6721 = vand.u32 %v2458, 4294901760
    %v6722 = vsub.f32 %v2458, %v6721
    %v6723 = vand.u32 %v6722, 4294901760
    %v6724 = vsub.f32 %v6722, %v6723
    %v6725 = vand.u32 %v6724, 4294901760
    %6726 = vmatpush1.msra.mxu0 %v6725
    %6727 = vmatprep.subr.mxu0 0.0
    %v6728 = vand.u32 %v2455, 4294901760
    %v6729 = vsub.f32 %v2455, %v6728
    %v6730 = vand.u32 %v6729, 4294901760
    %v6731 = vsub.f32 %v6729, %v6730
    %v6732 = vand.u32 %v6731, 4294901760
    %6733 = vmatpush1.msra.mxu0 %v6732
    %6734 = vmatprep.subr.mxu0 0.0
    %v6735 = vand.u32 %v2452, 4294901760
    %v6736 = vsub.f32 %v2452, %v6735
    %v6737 = vand.u32 %v6736, 4294901760
    %v6738 = vsub.f32 %v6736, %v6737
    %v6739 = vand.u32 %v6738, 4294901760
    %6740 = vmatpush1.msra.mxu0 %v6739
    %6741 = vmatprep.subr.mxu0 0.0
    %v6742 = vand.u32 %v2449, 4294901760
    %v6743 = vsub.f32 %v2449, %v6742
    %v6744 = vand.u32 %v6743, 4294901760
    %v6745 = vsub.f32 %v6743, %v6744
    %v6746 = vand.u32 %v6745, 4294901760
    %6747 = vmatpush1.msra.mxu0 %v6746
    %6748 = vmatprep.subr.mxu0 0.0
    %v6749 = vand.u32 %v2446, 4294901760
    %v6750 = vsub.f32 %v2446, %v6749
    %v6751 = vand.u32 %v6750, 4294901760
    %v6752 = vsub.f32 %v6750, %v6751
    %v6753 = vand.u32 %v6752, 4294901760
    %6754 = vmatpush1.msra.mxu0 %v6753
    %6755 = vmatprep.subr.mxu0 0.0
    %v6756 = vand.u32 %v2443, 4294901760
    %v6757 = vsub.f32 %v2443, %v6756
    %v6758 = vand.u32 %v6757, 4294901760
    %v6759 = vsub.f32 %v6757, %v6758
    %v6760 = vand.u32 %v6759, 4294901760
    %6761 = vmatpush1.msra.mxu0 %v6760
    %6762 = vmatprep.subr.mxu0 0.0
    %v6763 = vand.u32 %v2440, 4294901760
    %v6764 = vsub.f32 %v2440, %v6763
    %v6765 = vand.u32 %v6764, 4294901760
    %v6766 = vsub.f32 %v6764, %v6765
    %v6767 = vand.u32 %v6766, 4294901760
    %6768 = vmatpush1.msra.mxu0 %v6767
    %6769 = vmatprep.subr.mxu0 0.0
    %v6770 = vand.u32 %v2437, 4294901760
    %v6771 = vsub.f32 %v2437, %v6770
    %v6772 = vand.u32 %v6771, 4294901760
    %v6773 = vsub.f32 %v6771, %v6772
    %v6774 = vand.u32 %v6773, 4294901760
    %6775 = vmatpush1.msra.mxu0 %v6774
    %6776 = vmatprep.subr.mxu0 0.0
    %v6777 = vand.u32 %v2434, 4294901760
    %v6778 = vsub.f32 %v2434, %v6777
    %v6779 = vand.u32 %v6778, 4294901760
    %v6780 = vsub.f32 %v6778, %v6779
    %v6781 = vand.u32 %v6780, 4294901760
    %6782 = vmatpush1.msra.mxu0 %v6781
    %6783 = vmatprep.subr.mxu0 0.0
    %v6784 = vand.u32 %v2431, 4294901760
    %v6785 = vsub.f32 %v2431, %v6784
    %v6786 = vand.u32 %v6785, 4294901760
    %v6787 = vsub.f32 %v6785, %v6786
    %v6788 = vand.u32 %v6787, 4294901760
    %6789 = vmatpush1.msra.mxu0 %v6788
    %6790 = vmatprep.subr.mxu0 0.0
    %v6791 = vand.u32 %v2428, 4294901760
    %v6792 = vsub.f32 %v2428, %v6791
    %v6793 = vand.u32 %v6792, 4294901760
    %v6794 = vsub.f32 %v6792, %v6793
    %v6795 = vand.u32 %v6794, 4294901760
    %6796 = vmatpush1.msra.mxu0 %v6795
    %6797 = vmatprep.subr.mxu0 0.0
    %v6798 = vand.u32 %v2425, 4294901760
    %v6799 = vsub.f32 %v2425, %v6798
    %v6800 = vand.u32 %v6799, 4294901760
    %v6801 = vsub.f32 %v6799, %v6800
    %v6802 = vand.u32 %v6801, 4294901760
    %6803 = vmatpush1.msra.mxu0 %v6802
    %6804 = vmatprep.subr.mxu0 0.0
    %v6805 = vand.u32 %v2518, 4294901760
    %v6806 = vsub.f32 %v2518, %v6805
    %v6807 = vand.u32 %v6806, 4294901760
    %v6808 = vsub.f32 %v6806, %v6807
    %v6809 = vand.u32 %v6808, 4294901760
    %6810 = vmatpush2.msra.mxu0 %v6809
    %6811 = vmatprep.subr.mxu0 0.0
    %v6812 = vand.u32 %v2515, 4294901760
    %v6813 = vsub.f32 %v2515, %v6812
    %v6814 = vand.u32 %v6813, 4294901760
    %v6815 = vsub.f32 %v6813, %v6814
    %v6816 = vand.u32 %v6815, 4294901760
    %6817 = vmatpush2.msra.mxu0 %v6816
    %6818 = vmatprep.subr.mxu0 0.0
    %v6819 = vand.u32 %v2512, 4294901760
    %v6820 = vsub.f32 %v2512, %v6819
    %v6821 = vand.u32 %v6820, 4294901760
    %v6822 = vsub.f32 %v6820, %v6821
    %v6823 = vand.u32 %v6822, 4294901760
    %6824 = vmatpush2.msra.mxu0 %v6823
    %6825 = vmatprep.subr.mxu0 0.0
    %v6826 = vand.u32 %v2509, 4294901760
    %v6827 = vsub.f32 %v2509, %v6826
    %v6828 = vand.u32 %v6827, 4294901760
    %v6829 = vsub.f32 %v6827, %v6828
    %v6830 = vand.u32 %v6829, 4294901760
    %6831 = vmatpush2.msra.mxu0 %v6830
    %6832 = vmatprep.subr.mxu0 0.0
    %v6833 = vand.u32 %v2506, 4294901760
    %v6834 = vsub.f32 %v2506, %v6833
    %v6835 = vand.u32 %v6834, 4294901760
    %v6836 = vsub.f32 %v6834, %v6835
    %v6837 = vand.u32 %v6836, 4294901760
    %6838 = vmatpush2.msra.mxu0 %v6837
    %6839 = vmatprep.subr.mxu0 0.0
    %v6840 = vand.u32 %v2503, 4294901760
    %v6841 = vsub.f32 %v2503, %v6840
    %v6842 = vand.u32 %v6841, 4294901760
    %v6843 = vsub.f32 %v6841, %v6842
    %v6844 = vand.u32 %v6843, 4294901760
    %6845 = vmatpush2.msra.mxu0 %v6844
    %6846 = vmatprep.subr.mxu0 0.0
    %v6847 = vand.u32 %v2500, 4294901760
    %v6848 = vsub.f32 %v2500, %v6847
    %v6849 = vand.u32 %v6848, 4294901760
    %v6850 = vsub.f32 %v6848, %v6849
    %v6851 = vand.u32 %v6850, 4294901760
    %6852 = vmatpush2.msra.mxu0 %v6851
    %6853 = vmatprep.subr.mxu0 0.0
    %v6854 = vand.u32 %v2497, 4294901760
    %v6855 = vsub.f32 %v2497, %v6854
    %v6856 = vand.u32 %v6855, 4294901760
    %v6857 = vsub.f32 %v6855, %v6856
    %v6858 = vand.u32 %v6857, 4294901760
    %6859 = vmatpush2.msra.mxu0 %v6858
    %6860 = vmatprep.subr.mxu0 0.0
    %v6861 = vand.u32 %v2494, 4294901760
    %v6862 = vsub.f32 %v2494, %v6861
    %v6863 = vand.u32 %v6862, 4294901760
    %v6864 = vsub.f32 %v6862, %v6863
    %v6865 = vand.u32 %v6864, 4294901760
    %6866 = vmatpush2.msra.mxu0 %v6865
    %6867 = vmatprep.subr.mxu0 0.0
    %v6868 = vand.u32 %v2491, 4294901760
    %v6869 = vsub.f32 %v2491, %v6868
    %v6870 = vand.u32 %v6869, 4294901760
    %v6871 = vsub.f32 %v6869, %v6870
    %v6872 = vand.u32 %v6871, 4294901760
    %6873 = vmatpush2.msra.mxu0 %v6872
    %6874 = vmatprep.subr.mxu0 0.0
    %v6875 = vand.u32 %v2488, 4294901760
    %v6876 = vsub.f32 %v2488, %v6875
    %v6877 = vand.u32 %v6876, 4294901760
    %v6878 = vsub.f32 %v6876, %v6877
    %v6879 = vand.u32 %v6878, 4294901760
    %6880 = vmatpush2.msra.mxu0 %v6879
    %6881 = vmatprep.subr.mxu0 0.0
    %v6882 = vand.u32 %v2485, 4294901760
    %v6883 = vsub.f32 %v2485, %v6882
    %v6884 = vand.u32 %v6883, 4294901760
    %v6885 = vsub.f32 %v6883, %v6884
    %v6886 = vand.u32 %v6885, 4294901760
    %6887 = vmatpush2.msra.mxu0 %v6886
    %6888 = vmatprep.subr.mxu0 0.0
    %v6889 = vand.u32 %v2482, 4294901760
    %v6890 = vsub.f32 %v2482, %v6889
    %v6891 = vand.u32 %v6890, 4294901760
    %v6892 = vsub.f32 %v6890, %v6891
    %v6893 = vand.u32 %v6892, 4294901760
    %6894 = vmatpush2.msra.mxu0 %v6893
    %6895 = vmatprep.subr.mxu0 0.0
    %v6896 = vand.u32 %v2479, 4294901760
    %v6897 = vsub.f32 %v2479, %v6896
    %v6898 = vand.u32 %v6897, 4294901760
    %v6899 = vsub.f32 %v6897, %v6898
    %v6900 = vand.u32 %v6899, 4294901760
    %6901 = vmatpush2.msra.mxu0 %v6900
    %6902 = vmatprep.subr.mxu0 0.0
    %v6903 = vand.u32 %v2476, 4294901760
    %v6904 = vsub.f32 %v2476, %v6903
    %v6905 = vand.u32 %v6904, 4294901760
    %v6906 = vsub.f32 %v6904, %v6905
    %v6907 = vand.u32 %v6906, 4294901760
    %6908 = vmatpush2.msra.mxu0 %v6907
    %6909 = vmatprep.subr.mxu0 0.0
    %v6910 = vand.u32 %v2473, 4294901760
    %v6911 = vsub.f32 %v2473, %v6910
    %v6912 = vand.u32 %v6911, 4294901760
    %v6913 = vsub.f32 %v6911, %v6912
    %v6914 = vand.u32 %v6913, 4294901760
    %6915 = vmatpush2.msra.mxu0 %v6914
    %v6916 = vand.u32 %v2418, 4294901760
    %6917 = vmatprep.mubr.f32.mxu0 %v6916
    %v6918 = vand.u32 %v2417, 4294901760
    %6919 = vmatmul.mubr.f32.gmra.mxu0 %v6918
    %v6920 = vpop.f32.mrf.mxu0
    %v6921 = vadd.f32 %v6689, %v6920
    %v6922 = vpop.f32.mrf.mxu0
    %6923 = vdwg.mxu0
    %6924 = vmatprep.subr.mxu0 0.0
    %v6925 = vand.u32 %v2470, 4294901760
    %v6926 = vsub.f32 %v2470, %v6925
    %6927 = vmatpush1.msra.mxu0 %v6926
    %6928 = vmatprep.subr.mxu0 0.0
    %v6929 = vand.u32 %v2467, 4294901760
    %v6930 = vsub.f32 %v2467, %v6929
    %6931 = vmatpush1.msra.mxu0 %v6930
    %6932 = vmatprep.subr.mxu0 0.0
    %v6933 = vand.u32 %v2464, 4294901760
    %v6934 = vsub.f32 %v2464, %v6933
    %6935 = vmatpush1.msra.mxu0 %v6934
    %6936 = vmatprep.subr.mxu0 0.0
    %v6937 = vand.u32 %v2461, 4294901760
    %v6938 = vsub.f32 %v2461, %v6937
    %6939 = vmatpush1.msra.mxu0 %v6938
    %6940 = vmatprep.subr.mxu0 0.0
    %v6941 = vand.u32 %v2458, 4294901760
    %v6942 = vsub.f32 %v2458, %v6941
    %6943 = vmatpush1.msra.mxu0 %v6942
    %6944 = vmatprep.subr.mxu0 0.0
    %v6945 = vand.u32 %v2455, 4294901760
    %v6946 = vsub.f32 %v2455, %v6945
    %6947 = vmatpush1.msra.mxu0 %v6946
    %6948 = vmatprep.subr.mxu0 0.0
    %v6949 = vand.u32 %v2452, 4294901760
    %v6950 = vsub.f32 %v2452, %v6949
    %6951 = vmatpush1.msra.mxu0 %v6950
    %6952 = vmatprep.subr.mxu0 0.0
    %v6953 = vand.u32 %v2449, 4294901760
    %v6954 = vsub.f32 %v2449, %v6953
    %6955 = vmatpush1.msra.mxu0 %v6954
    %6956 = vmatprep.subr.mxu0 0.0
    %v6957 = vand.u32 %v2446, 4294901760
    %v6958 = vsub.f32 %v2446, %v6957
    %6959 = vmatpush1.msra.mxu0 %v6958
    %6960 = vmatprep.subr.mxu0 0.0
    %v6961 = vand.u32 %v2443, 4294901760
    %v6962 = vsub.f32 %v2443, %v6961
    %6963 = vmatpush1.msra.mxu0 %v6962
    %6964 = vmatprep.subr.mxu0 0.0
    %v6965 = vand.u32 %v2440, 4294901760
    %v6966 = vsub.f32 %v2440, %v6965
    %6967 = vmatpush1.msra.mxu0 %v6966
    %6968 = vmatprep.subr.mxu0 0.0
    %v6969 = vand.u32 %v2437, 4294901760
    %v6970 = vsub.f32 %v2437, %v6969
    %6971 = vmatpush1.msra.mxu0 %v6970
    %6972 = vmatprep.subr.mxu0 0.0
    %v6973 = vand.u32 %v2434, 4294901760
    %v6974 = vsub.f32 %v2434, %v6973
    %6975 = vmatpush1.msra.mxu0 %v6974
    %6976 = vmatprep.subr.mxu0 0.0
    %v6977 = vand.u32 %v2431, 4294901760
    %v6978 = vsub.f32 %v2431, %v6977
    %6979 = vmatpush1.msra.mxu0 %v6978
    %6980 = vmatprep.subr.mxu0 0.0
    %v6981 = vand.u32 %v2428, 4294901760
    %v6982 = vsub.f32 %v2428, %v6981
    %6983 = vmatpush1.msra.mxu0 %v6982
    %6984 = vmatprep.subr.mxu0 0.0
    %v6985 = vand.u32 %v2425, 4294901760
    %v6986 = vsub.f32 %v2425, %v6985
    %6987 = vmatpush1.msra.mxu0 %v6986
    %6988 = vmatprep.subr.mxu0 0.0
    %v6989 = vand.u32 %v2518, 4294901760
    %v6990 = vsub.f32 %v2518, %v6989
    %6991 = vmatpush2.msra.mxu0 %v6990
    %6992 = vmatprep.subr.mxu0 0.0
    %v6993 = vand.u32 %v2515, 4294901760
    %v6994 = vsub.f32 %v2515, %v6993
    %6995 = vmatpush2.msra.mxu0 %v6994
    %6996 = vmatprep.subr.mxu0 0.0
    %v6997 = vand.u32 %v2512, 4294901760
    %v6998 = vsub.f32 %v2512, %v6997
    %6999 = vmatpush2.msra.mxu0 %v6998
    %7000 = vmatprep.subr.mxu0 0.0
    %v7001 = vand.u32 %v2509, 4294901760
    %v7002 = vsub.f32 %v2509, %v7001
    %7003 = vmatpush2.msra.mxu0 %v7002
    %7004 = vmatprep.subr.mxu0 0.0
    %v7005 = vand.u32 %v2506, 4294901760
    %v7006 = vsub.f32 %v2506, %v7005
    %7007 = vmatpush2.msra.mxu0 %v7006
    %7008 = vmatprep.subr.mxu0 0.0
    %v7009 = vand.u32 %v2503, 4294901760
    %v7010 = vsub.f32 %v2503, %v7009
    %7011 = vmatpush2.msra.mxu0 %v7010
    %7012 = vmatprep.subr.mxu0 0.0
    %v7013 = vand.u32 %v2500, 4294901760
    %v7014 = vsub.f32 %v2500, %v7013
    %7015 = vmatpush2.msra.mxu0 %v7014
    %7016 = vmatprep.subr.mxu0 0.0
    %v7017 = vand.u32 %v2497, 4294901760
    %v7018 = vsub.f32 %v2497, %v7017
    %7019 = vmatpush2.msra.mxu0 %v7018
    %7020 = vmatprep.subr.mxu0 0.0
    %v7021 = vand.u32 %v2494, 4294901760
    %v7022 = vsub.f32 %v2494, %v7021
    %7023 = vmatpush2.msra.mxu0 %v7022
    %7024 = vmatprep.subr.mxu0 0.0
    %v7025 = vand.u32 %v2491, 4294901760
    %v7026 = vsub.f32 %v2491, %v7025
    %7027 = vmatpush2.msra.mxu0 %v7026
    %7028 = vmatprep.subr.mxu0 0.0
    %v7029 = vand.u32 %v2488, 4294901760
    %v7030 = vsub.f32 %v2488, %v7029
    %7031 = vmatpush2.msra.mxu0 %v7030
    %7032 = vmatprep.subr.mxu0 0.0
    %v7033 = vand.u32 %v2485, 4294901760
    %v7034 = vsub.f32 %v2485, %v7033
    %7035 = vmatpush2.msra.mxu0 %v7034
    %7036 = vmatprep.subr.mxu0 0.0
    %v7037 = vand.u32 %v2482, 4294901760
    %v7038 = vsub.f32 %v2482, %v7037
    %7039 = vmatpush2.msra.mxu0 %v7038
    %7040 = vmatprep.subr.mxu0 0.0
    %v7041 = vand.u32 %v2479, 4294901760
    %v7042 = vsub.f32 %v2479, %v7041
    %7043 = vmatpush2.msra.mxu0 %v7042
    %7044 = vmatprep.subr.mxu0 0.0
    %v7045 = vand.u32 %v2476, 4294901760
    %v7046 = vsub.f32 %v2476, %v7045
    %7047 = vmatpush2.msra.mxu0 %v7046
    %7048 = vmatprep.subr.mxu0 0.0
    %v7049 = vand.u32 %v2473, 4294901760
    %v7050 = vsub.f32 %v2473, %v7049
    %7051 = vmatpush2.msra.mxu0 %v7050
    %v7052 = vand.u32 %v2418, 4294901760
    %v7053 = vsub.f32 %v2418, %v7052
    %7054 = vmatprep.mubr.f32.mxu0 %v7053
    %v7055 = vand.u32 %v2417, 4294901760
    %v7056 = vsub.f32 %v2417, %v7055
    %7057 = vmatmul.mubr.f32.gmra.mxu0 %v7056
    %v7058 = vpop.f32.mrf.mxu0
    %v7059 = vadd.f32 %v6921, %v7058
    %v7060 = vpop.f32.mrf.mxu0
    %7061 = vdwg.mxu0
    %7062 = vmatprep.subr.mxu0 0.0
    %v7063 = vand.u32 %v2470, 4294901760
    %7064 = vmatpush1.msra.mxu0 %v7063
    %7065 = vmatprep.subr.mxu0 0.0
    %v7066 = vand.u32 %v2467, 4294901760
    %7067 = vmatpush1.msra.mxu0 %v7066
    %7068 = vmatprep.subr.mxu0 0.0
    %v7069 = vand.u32 %v2464, 4294901760
    %7070 = vmatpush1.msra.mxu0 %v7069
    %7071 = vmatprep.subr.mxu0 0.0
    %v7072 = vand.u32 %v2461, 4294901760
    %7073 = vmatpush1.msra.mxu0 %v7072
    %7074 = vmatprep.subr.mxu0 0.0
    %v7075 = vand.u32 %v2458, 4294901760
    %7076 = vmatpush1.msra.mxu0 %v7075
    %7077 = vmatprep.subr.mxu0 0.0
    %v7078 = vand.u32 %v2455, 4294901760
    %7079 = vmatpush1.msra.mxu0 %v7078
    %7080 = vmatprep.subr.mxu0 0.0
    %v7081 = vand.u32 %v2452, 4294901760
    %7082 = vmatpush1.msra.mxu0 %v7081
    %7083 = vmatprep.subr.mxu0 0.0
    %v7084 = vand.u32 %v2449, 4294901760
    %7085 = vmatpush1.msra.mxu0 %v7084
    %7086 = vmatprep.subr.mxu0 0.0
    %v7087 = vand.u32 %v2446, 4294901760
    %7088 = vmatpush1.msra.mxu0 %v7087
    %7089 = vmatprep.subr.mxu0 0.0
    %v7090 = vand.u32 %v2443, 4294901760
    %7091 = vmatpush1.msra.mxu0 %v7090
    %7092 = vmatprep.subr.mxu0 0.0
    %v7093 = vand.u32 %v2440, 4294901760
    %7094 = vmatpush1.msra.mxu0 %v7093
    %7095 = vmatprep.subr.mxu0 0.0
    %v7096 = vand.u32 %v2437, 4294901760
    %7097 = vmatpush1.msra.mxu0 %v7096
    %7098 = vmatprep.subr.mxu0 0.0
    %v7099 = vand.u32 %v2434, 4294901760
    %7100 = vmatpush1.msra.mxu0 %v7099
    %7101 = vmatprep.subr.mxu0 0.0
    %v7102 = vand.u32 %v2431, 4294901760
    %7103 = vmatpush1.msra.mxu0 %v7102
    %7104 = vmatprep.subr.mxu0 0.0
    %v7105 = vand.u32 %v2428, 4294901760
    %7106 = vmatpush1.msra.mxu0 %v7105
    %7107 = vmatprep.subr.mxu0 0.0
    %v7108 = vand.u32 %v2425, 4294901760
    %7109 = vmatpush1.msra.mxu0 %v7108
    %7110 = vmatprep.subr.mxu0 0.0
    %v7111 = vand.u32 %v2518, 4294901760
    %7112 = vmatpush2.msra.mxu0 %v7111
    %7113 = vmatprep.subr.mxu0 0.0
    %v7114 = vand.u32 %v2515, 4294901760
    %7115 = vmatpush2.msra.mxu0 %v7114
    %7116 = vmatprep.subr.mxu0 0.0
    %v7117 = vand.u32 %v2512, 4294901760
    %7118 = vmatpush2.msra.mxu0 %v7117
    %7119 = vmatprep.subr.mxu0 0.0
    %v7120 = vand.u32 %v2509, 4294901760
    %7121 = vmatpush2.msra.mxu0 %v7120
    %7122 = vmatprep.subr.mxu0 0.0
    %v7123 = vand.u32 %v2506, 4294901760
    %7124 = vmatpush2.msra.mxu0 %v7123
    %7125 = vmatprep.subr.mxu0 0.0
    %v7126 = vand.u32 %v2503, 4294901760
    %7127 = vmatpush2.msra.mxu0 %v7126
    %7128 = vmatprep.subr.mxu0 0.0
    %v7129 = vand.u32 %v2500, 4294901760
    %7130 = vmatpush2.msra.mxu0 %v7129
    %7131 = vmatprep.subr.mxu0 0.0
    %v7132 = vand.u32 %v2497, 4294901760
    %7133 = vmatpush2.msra.mxu0 %v7132
    %7134 = vmatprep.subr.mxu0 0.0
    %v7135 = vand.u32 %v2494, 4294901760
    %7136 = vmatpush2.msra.mxu0 %v7135
    %7137 = vmatprep.subr.mxu0 0.0
    %v7138 = vand.u32 %v2491, 4294901760
    %7139 = vmatpush2.msra.mxu0 %v7138
    %7140 = vmatprep.subr.mxu0 0.0
    %v7141 = vand.u32 %v2488, 4294901760
    %7142 = vmatpush2.msra.mxu0 %v7141
    %7143 = vmatprep.subr.mxu0 0.0
    %v7144 = vand.u32 %v2485, 4294901760
    %7145 = vmatpush2.msra.mxu0 %v7144
    %7146 = vmatprep.subr.mxu0 0.0
    %v7147 = vand.u32 %v2482, 4294901760
    %7148 = vmatpush2.msra.mxu0 %v7147
    %7149 = vmatprep.subr.mxu0 0.0
    %v7150 = vand.u32 %v2479, 4294901760
    %7151 = vmatpush2.msra.mxu0 %v7150
    %7152 = vmatprep.subr.mxu0 0.0
    %v7153 = vand.u32 %v2476, 4294901760
    %7154 = vmatpush2.msra.mxu0 %v7153
    %7155 = vmatprep.subr.mxu0 0.0
    %v7156 = vand.u32 %v2473, 4294901760
    %7157 = vmatpush2.msra.mxu0 %v7156
    %v7158 = vand.u32 %v2418, 4294901760
    %v7159 = vsub.f32 %v2418, %v7158
    %v7160 = vand.u32 %v7159, 4294901760
    %7161 = vmatprep.mubr.f32.mxu0 %v7160
    %v7162 = vand.u32 %v2417, 4294901760
    %v7163 = vsub.f32 %v2417, %v7162
    %v7164 = vand.u32 %v7163, 4294901760
    %7165 = vmatmul.mubr.f32.gmra.mxu0 %v7164
    %v7166 = vpop.f32.mrf.mxu0
    %v7167 = vadd.f32 %v7059, %v7166
    %v7168 = vpop.f32.mrf.mxu0
    %7169 = vdwg.mxu0
    %7170 = vmatprep.subr.mxu0 0.0
    %v7171 = vand.u32 %v2470, 4294901760
    %v7172 = vsub.f32 %v2470, %v7171
    %v7173 = vand.u32 %v7172, 4294901760
    %7174 = vmatpush1.msra.mxu0 %v7173
    %7175 = vmatprep.subr.mxu0 0.0
    %v7176 = vand.u32 %v2467, 4294901760
    %v7177 = vsub.f32 %v2467, %v7176
    %v7178 = vand.u32 %v7177, 4294901760
    %7179 = vmatpush1.msra.mxu0 %v7178
    %7180 = vmatprep.subr.mxu0 0.0
    %v7181 = vand.u32 %v2464, 4294901760
    %v7182 = vsub.f32 %v2464, %v7181
    %v7183 = vand.u32 %v7182, 4294901760
    %7184 = vmatpush1.msra.mxu0 %v7183
    %7185 = vmatprep.subr.mxu0 0.0
    %v7186 = vand.u32 %v2461, 4294901760
    %v7187 = vsub.f32 %v2461, %v7186
    %v7188 = vand.u32 %v7187, 4294901760
    %7189 = vmatpush1.msra.mxu0 %v7188
    %7190 = vmatprep.subr.mxu0 0.0
    %v7191 = vand.u32 %v2458, 4294901760
    %v7192 = vsub.f32 %v2458, %v7191
    %v7193 = vand.u32 %v7192, 4294901760
    %7194 = vmatpush1.msra.mxu0 %v7193
    %7195 = vmatprep.subr.mxu0 0.0
    %v7196 = vand.u32 %v2455, 4294901760
    %v7197 = vsub.f32 %v2455, %v7196
    %v7198 = vand.u32 %v7197, 4294901760
    %7199 = vmatpush1.msra.mxu0 %v7198
    %7200 = vmatprep.subr.mxu0 0.0
    %v7201 = vand.u32 %v2452, 4294901760
    %v7202 = vsub.f32 %v2452, %v7201
    %v7203 = vand.u32 %v7202, 4294901760
    %7204 = vmatpush1.msra.mxu0 %v7203
    %7205 = vmatprep.subr.mxu0 0.0
    %v7206 = vand.u32 %v2449, 4294901760
    %v7207 = vsub.f32 %v2449, %v7206
    %v7208 = vand.u32 %v7207, 4294901760
    %7209 = vmatpush1.msra.mxu0 %v7208
    %7210 = vmatprep.subr.mxu0 0.0
    %v7211 = vand.u32 %v2446, 4294901760
    %v7212 = vsub.f32 %v2446, %v7211
    %v7213 = vand.u32 %v7212, 4294901760
    %7214 = vmatpush1.msra.mxu0 %v7213
    %7215 = vmatprep.subr.mxu0 0.0
    %v7216 = vand.u32 %v2443, 4294901760
    %v7217 = vsub.f32 %v2443, %v7216
    %v7218 = vand.u32 %v7217, 4294901760
    %7219 = vmatpush1.msra.mxu0 %v7218
    %7220 = vmatprep.subr.mxu0 0.0
    %v7221 = vand.u32 %v2440, 4294901760
    %v7222 = vsub.f32 %v2440, %v7221
    %v7223 = vand.u32 %v7222, 4294901760
    %7224 = vmatpush1.msra.mxu0 %v7223
    %7225 = vmatprep.subr.mxu0 0.0
    %v7226 = vand.u32 %v2437, 4294901760
    %v7227 = vsub.f32 %v2437, %v7226
    %v7228 = vand.u32 %v7227, 4294901760
    %7229 = vmatpush1.msra.mxu0 %v7228
    %7230 = vmatprep.subr.mxu0 0.0
    %v7231 = vand.u32 %v2434, 4294901760
    %v7232 = vsub.f32 %v2434, %v7231
    %v7233 = vand.u32 %v7232, 4294901760
    %7234 = vmatpush1.msra.mxu0 %v7233
    %7235 = vmatprep.subr.mxu0 0.0
    %v7236 = vand.u32 %v2431, 4294901760
    %v7237 = vsub.f32 %v2431, %v7236
    %v7238 = vand.u32 %v7237, 4294901760
    %7239 = vmatpush1.msra.mxu0 %v7238
    %7240 = vmatprep.subr.mxu0 0.0
    %v7241 = vand.u32 %v2428, 4294901760
    %v7242 = vsub.f32 %v2428, %v7241
    %v7243 = vand.u32 %v7242, 4294901760
    %7244 = vmatpush1.msra.mxu0 %v7243
    %7245 = vmatprep.subr.mxu0 0.0
    %v7246 = vand.u32 %v2425, 4294901760
    %v7247 = vsub.f32 %v2425, %v7246
    %v7248 = vand.u32 %v7247, 4294901760
    %7249 = vmatpush1.msra.mxu0 %v7248
    %7250 = vmatprep.subr.mxu0 0.0
    %v7251 = vand.u32 %v2518, 4294901760
    %v7252 = vsub.f32 %v2518, %v7251
    %v7253 = vand.u32 %v7252, 4294901760
    %7254 = vmatpush2.msra.mxu0 %v7253
    %7255 = vmatprep.subr.mxu0 0.0
    %v7256 = vand.u32 %v2515, 4294901760
    %v7257 = vsub.f32 %v2515, %v7256
    %v7258 = vand.u32 %v7257, 4294901760
    %7259 = vmatpush2.msra.mxu0 %v7258
    %7260 = vmatprep.subr.mxu0 0.0
    %v7261 = vand.u32 %v2512, 4294901760
    %v7262 = vsub.f32 %v2512, %v7261
    %v7263 = vand.u32 %v7262, 4294901760
    %7264 = vmatpush2.msra.mxu0 %v7263
    %7265 = vmatprep.subr.mxu0 0.0
    %v7266 = vand.u32 %v2509, 4294901760
    %v7267 = vsub.f32 %v2509, %v7266
    %v7268 = vand.u32 %v7267, 4294901760
    %7269 = vmatpush2.msra.mxu0 %v7268
    %7270 = vmatprep.subr.mxu0 0.0
    %v7271 = vand.u32 %v2506, 4294901760
    %v7272 = vsub.f32 %v2506, %v7271
    %v7273 = vand.u32 %v7272, 4294901760
    %7274 = vmatpush2.msra.mxu0 %v7273
    %7275 = vmatprep.subr.mxu0 0.0
    %v7276 = vand.u32 %v2503, 4294901760
    %v7277 = vsub.f32 %v2503, %v7276
    %v7278 = vand.u32 %v7277, 4294901760
    %7279 = vmatpush2.msra.mxu0 %v7278
    %7280 = vmatprep.subr.mxu0 0.0
    %v7281 = vand.u32 %v2500, 4294901760
    %v7282 = vsub.f32 %v2500, %v7281
    %v7283 = vand.u32 %v7282, 4294901760
    %7284 = vmatpush2.msra.mxu0 %v7283
    %7285 = vmatprep.subr.mxu0 0.0
    %v7286 = vand.u32 %v2497, 4294901760
    %v7287 = vsub.f32 %v2497, %v7286
    %v7288 = vand.u32 %v7287, 4294901760
    %7289 = vmatpush2.msra.mxu0 %v7288
    %7290 = vmatprep.subr.mxu0 0.0
    %v7291 = vand.u32 %v2494, 4294901760
    %v7292 = vsub.f32 %v2494, %v7291
    %v7293 = vand.u32 %v7292, 4294901760
    %7294 = vmatpush2.msra.mxu0 %v7293
    %7295 = vmatprep.subr.mxu0 0.0
    %v7296 = vand.u32 %v2491, 4294901760
    %v7297 = vsub.f32 %v2491, %v7296
    %v7298 = vand.u32 %v7297, 4294901760
    %7299 = vmatpush2.msra.mxu0 %v7298
    %7300 = vmatprep.subr.mxu0 0.0
    %v7301 = vand.u32 %v2488, 4294901760
    %v7302 = vsub.f32 %v2488, %v7301
    %v7303 = vand.u32 %v7302, 4294901760
    %7304 = vmatpush2.msra.mxu0 %v7303
    %7305 = vmatprep.subr.mxu0 0.0
    %v7306 = vand.u32 %v2485, 4294901760
    %v7307 = vsub.f32 %v2485, %v7306
    %v7308 = vand.u32 %v7307, 4294901760
    %7309 = vmatpush2.msra.mxu0 %v7308
    %7310 = vmatprep.subr.mxu0 0.0
    %v7311 = vand.u32 %v2482, 4294901760
    %v7312 = vsub.f32 %v2482, %v7311
    %v7313 = vand.u32 %v7312, 4294901760
    %7314 = vmatpush2.msra.mxu0 %v7313
    %7315 = vmatprep.subr.mxu0 0.0
    %v7316 = vand.u32 %v2479, 4294901760
    %v7317 = vsub.f32 %v2479, %v7316
    %v7318 = vand.u32 %v7317, 4294901760
    %7319 = vmatpush2.msra.mxu0 %v7318
    %7320 = vmatprep.subr.mxu0 0.0
    %v7321 = vand.u32 %v2476, 4294901760
    %v7322 = vsub.f32 %v2476, %v7321
    %v7323 = vand.u32 %v7322, 4294901760
    %7324 = vmatpush2.msra.mxu0 %v7323
    %7325 = vmatprep.subr.mxu0 0.0
    %v7326 = vand.u32 %v2473, 4294901760
    %v7327 = vsub.f32 %v2473, %v7326
    %v7328 = vand.u32 %v7327, 4294901760
    %7329 = vmatpush2.msra.mxu0 %v7328
    %v7330 = vand.u32 %v2418, 4294901760
    %7331 = vmatprep.mubr.f32.mxu0 %v7330
    %v7332 = vand.u32 %v2417, 4294901760
    %7333 = vmatmul.mubr.f32.gmra.mxu0 %v7332
    %v7334 = vpop.f32.mrf.mxu0
    %v7335 = vadd.f32 %v7167, %v7334
    %v7336 = vpop.f32.mrf.mxu0
    %7337 = vdwg.mxu0
    %7338 = vmatprep.subr.mxu0 0.0
    %v7339 = vand.u32 %v2470, 4294901760
    %7340 = vmatpush1.msra.mxu0 %v7339
    %7341 = vmatprep.subr.mxu0 0.0
    %v7342 = vand.u32 %v2467, 4294901760
    %7343 = vmatpush1.msra.mxu0 %v7342
    %7344 = vmatprep.subr.mxu0 0.0
    %v7345 = vand.u32 %v2464, 4294901760
    %7346 = vmatpush1.msra.mxu0 %v7345
    %7347 = vmatprep.subr.mxu0 0.0
    %v7348 = vand.u32 %v2461, 4294901760
    %7349 = vmatpush1.msra.mxu0 %v7348
    %7350 = vmatprep.subr.mxu0 0.0
    %v7351 = vand.u32 %v2458, 4294901760
    %7352 = vmatpush1.msra.mxu0 %v7351
    %7353 = vmatprep.subr.mxu0 0.0
    %v7354 = vand.u32 %v2455, 4294901760
    %7355 = vmatpush1.msra.mxu0 %v7354
    %7356 = vmatprep.subr.mxu0 0.0
    %v7357 = vand.u32 %v2452, 4294901760
    %7358 = vmatpush1.msra.mxu0 %v7357
    %7359 = vmatprep.subr.mxu0 0.0
    %v7360 = vand.u32 %v2449, 4294901760
    %7361 = vmatpush1.msra.mxu0 %v7360
    %7362 = vmatprep.subr.mxu0 0.0
    %v7363 = vand.u32 %v2446, 4294901760
    %7364 = vmatpush1.msra.mxu0 %v7363
    %7365 = vmatprep.subr.mxu0 0.0
    %v7366 = vand.u32 %v2443, 4294901760
    %7367 = vmatpush1.msra.mxu0 %v7366
    %7368 = vmatprep.subr.mxu0 0.0
    %v7369 = vand.u32 %v2440, 4294901760
    %7370 = vmatpush1.msra.mxu0 %v7369
    %7371 = vmatprep.subr.mxu0 0.0
    %v7372 = vand.u32 %v2437, 4294901760
    %7373 = vmatpush1.msra.mxu0 %v7372
    %7374 = vmatprep.subr.mxu0 0.0
    %v7375 = vand.u32 %v2434, 4294901760
    %7376 = vmatpush1.msra.mxu0 %v7375
    %7377 = vmatprep.subr.mxu0 0.0
    %v7378 = vand.u32 %v2431, 4294901760
    %7379 = vmatpush1.msra.mxu0 %v7378
    %7380 = vmatprep.subr.mxu0 0.0
    %v7381 = vand.u32 %v2428, 4294901760
    %7382 = vmatpush1.msra.mxu0 %v7381
    %7383 = vmatprep.subr.mxu0 0.0
    %v7384 = vand.u32 %v2425, 4294901760
    %7385 = vmatpush1.msra.mxu0 %v7384
    %7386 = vmatprep.subr.mxu0 0.0
    %v7387 = vand.u32 %v2518, 4294901760
    %7388 = vmatpush2.msra.mxu0 %v7387
    %7389 = vmatprep.subr.mxu0 0.0
    %v7390 = vand.u32 %v2515, 4294901760
    %7391 = vmatpush2.msra.mxu0 %v7390
    %7392 = vmatprep.subr.mxu0 0.0
    %v7393 = vand.u32 %v2512, 4294901760
    %7394 = vmatpush2.msra.mxu0 %v7393
    %7395 = vmatprep.subr.mxu0 0.0
    %v7396 = vand.u32 %v2509, 4294901760
    %7397 = vmatpush2.msra.mxu0 %v7396
    %7398 = vmatprep.subr.mxu0 0.0
    %v7399 = vand.u32 %v2506, 4294901760
    %7400 = vmatpush2.msra.mxu0 %v7399
    %7401 = vmatprep.subr.mxu0 0.0
    %v7402 = vand.u32 %v2503, 4294901760
    %7403 = vmatpush2.msra.mxu0 %v7402
    %7404 = vmatprep.subr.mxu0 0.0
    %v7405 = vand.u32 %v2500, 4294901760
    %7406 = vmatpush2.msra.mxu0 %v7405
    %7407 = vmatprep.subr.mxu0 0.0
    %v7408 = vand.u32 %v2497, 4294901760
    %7409 = vmatpush2.msra.mxu0 %v7408
    %7410 = vmatprep.subr.mxu0 0.0
    %v7411 = vand.u32 %v2494, 4294901760
    %7412 = vmatpush2.msra.mxu0 %v7411
    %7413 = vmatprep.subr.mxu0 0.0
    %v7414 = vand.u32 %v2491, 4294901760
    %7415 = vmatpush2.msra.mxu0 %v7414
    %7416 = vmatprep.subr.mxu0 0.0
    %v7417 = vand.u32 %v2488, 4294901760
    %7418 = vmatpush2.msra.mxu0 %v7417
    %7419 = vmatprep.subr.mxu0 0.0
    %v7420 = vand.u32 %v2485, 4294901760
    %7421 = vmatpush2.msra.mxu0 %v7420
    %7422 = vmatprep.subr.mxu0 0.0
    %v7423 = vand.u32 %v2482, 4294901760
    %7424 = vmatpush2.msra.mxu0 %v7423
    %7425 = vmatprep.subr.mxu0 0.0
    %v7426 = vand.u32 %v2479, 4294901760
    %7427 = vmatpush2.msra.mxu0 %v7426
    %7428 = vmatprep.subr.mxu0 0.0
    %v7429 = vand.u32 %v2476, 4294901760
    %7430 = vmatpush2.msra.mxu0 %v7429
    %7431 = vmatprep.subr.mxu0 0.0
    %v7432 = vand.u32 %v2473, 4294901760
    %7433 = vmatpush2.msra.mxu0 %v7432
    %v7434 = vand.u32 %v2418, 4294901760
    %7435 = vmatprep.mubr.f32.mxu0 %v7434
    %v7436 = vand.u32 %v2417, 4294901760
    %7437 = vmatmul.mubr.f32.gmra.mxu0 %v7436
    %v7438 = vpop.f32.mrf.mxu0
    %v7439 = vadd.f32 %v7335, %v7438
    %v7440 = vpop.f32.mrf.mxu0
    %7441 = vdwg.mxu0
    %7442 = vmatprep.subr.mxu0 0.0
    %v7443 = vand.u32 %v2566, 4294901760
    %7444 = vmatpush1.msra.mxu0 %v7443
    %7445 = vmatprep.subr.mxu0 0.0
    %v7446 = vand.u32 %v2563, 4294901760
    %7447 = vmatpush1.msra.mxu0 %v7446
    %7448 = vmatprep.subr.mxu0 0.0
    %v7449 = vand.u32 %v2560, 4294901760
    %7450 = vmatpush1.msra.mxu0 %v7449
    %7451 = vmatprep.subr.mxu0 0.0
    %v7452 = vand.u32 %v2557, 4294901760
    %7453 = vmatpush1.msra.mxu0 %v7452
    %7454 = vmatprep.subr.mxu0 0.0
    %v7455 = vand.u32 %v2554, 4294901760
    %7456 = vmatpush1.msra.mxu0 %v7455
    %7457 = vmatprep.subr.mxu0 0.0
    %v7458 = vand.u32 %v2551, 4294901760
    %7459 = vmatpush1.msra.mxu0 %v7458
    %7460 = vmatprep.subr.mxu0 0.0
    %v7461 = vand.u32 %v2548, 4294901760
    %7462 = vmatpush1.msra.mxu0 %v7461
    %7463 = vmatprep.subr.mxu0 0.0
    %v7464 = vand.u32 %v2545, 4294901760
    %7465 = vmatpush1.msra.mxu0 %v7464
    %7466 = vmatprep.subr.mxu0 0.0
    %v7467 = vand.u32 %v2542, 4294901760
    %7468 = vmatpush1.msra.mxu0 %v7467
    %7469 = vmatprep.subr.mxu0 0.0
    %v7470 = vand.u32 %v2539, 4294901760
    %7471 = vmatpush1.msra.mxu0 %v7470
    %7472 = vmatprep.subr.mxu0 0.0
    %v7473 = vand.u32 %v2536, 4294901760
    %7474 = vmatpush1.msra.mxu0 %v7473
    %7475 = vmatprep.subr.mxu0 0.0
    %v7476 = vand.u32 %v2533, 4294901760
    %7477 = vmatpush1.msra.mxu0 %v7476
    %7478 = vmatprep.subr.mxu0 0.0
    %v7479 = vand.u32 %v2530, 4294901760
    %7480 = vmatpush1.msra.mxu0 %v7479
    %7481 = vmatprep.subr.mxu0 0.0
    %v7482 = vand.u32 %v2527, 4294901760
    %7483 = vmatpush1.msra.mxu0 %v7482
    %7484 = vmatprep.subr.mxu0 0.0
    %v7485 = vand.u32 %v2524, 4294901760
    %7486 = vmatpush1.msra.mxu0 %v7485
    %7487 = vmatprep.subr.mxu0 0.0
    %v7488 = vand.u32 %v2521, 4294901760
    %7489 = vmatpush1.msra.mxu0 %v7488
    %7490 = vmatprep.subr.mxu0 0.0
    %v7491 = vand.u32 %v2614, 4294901760
    %7492 = vmatpush2.msra.mxu0 %v7491
    %7493 = vmatprep.subr.mxu0 0.0
    %v7494 = vand.u32 %v2611, 4294901760
    %7495 = vmatpush2.msra.mxu0 %v7494
    %7496 = vmatprep.subr.mxu0 0.0
    %v7497 = vand.u32 %v2608, 4294901760
    %7498 = vmatpush2.msra.mxu0 %v7497
    %7499 = vmatprep.subr.mxu0 0.0
    %v7500 = vand.u32 %v2605, 4294901760
    %7501 = vmatpush2.msra.mxu0 %v7500
    %7502 = vmatprep.subr.mxu0 0.0
    %v7503 = vand.u32 %v2602, 4294901760
    %7504 = vmatpush2.msra.mxu0 %v7503
    %7505 = vmatprep.subr.mxu0 0.0
    %v7506 = vand.u32 %v2599, 4294901760
    %7507 = vmatpush2.msra.mxu0 %v7506
    %7508 = vmatprep.subr.mxu0 0.0
    %v7509 = vand.u32 %v2596, 4294901760
    %7510 = vmatpush2.msra.mxu0 %v7509
    %7511 = vmatprep.subr.mxu0 0.0
    %v7512 = vand.u32 %v2593, 4294901760
    %7513 = vmatpush2.msra.mxu0 %v7512
    %7514 = vmatprep.subr.mxu0 0.0
    %v7515 = vand.u32 %v2590, 4294901760
    %7516 = vmatpush2.msra.mxu0 %v7515
    %7517 = vmatprep.subr.mxu0 0.0
    %v7518 = vand.u32 %v2587, 4294901760
    %7519 = vmatpush2.msra.mxu0 %v7518
    %7520 = vmatprep.subr.mxu0 0.0
    %v7521 = vand.u32 %v2584, 4294901760
    %7522 = vmatpush2.msra.mxu0 %v7521
    %7523 = vmatprep.subr.mxu0 0.0
    %v7524 = vand.u32 %v2581, 4294901760
    %7525 = vmatpush2.msra.mxu0 %v7524
    %7526 = vmatprep.subr.mxu0 0.0
    %v7527 = vand.u32 %v2578, 4294901760
    %7528 = vmatpush2.msra.mxu0 %v7527
    %7529 = vmatprep.subr.mxu0 0.0
    %v7530 = vand.u32 %v2575, 4294901760
    %7531 = vmatpush2.msra.mxu0 %v7530
    %7532 = vmatprep.subr.mxu0 0.0
    %v7533 = vand.u32 %v2572, 4294901760
    %7534 = vmatpush2.msra.mxu0 %v7533
    %7535 = vmatprep.subr.mxu0 0.0
    %v7536 = vand.u32 %v2569, 4294901760
    %7537 = vmatpush2.msra.mxu0 %v7536
    %v7538 = vand.u32 %v2420, 4294901760
    %v7539 = vsub.f32 %v2420, %v7538
    %v7540 = vand.u32 %v7539, 4294901760
    %v7541 = vsub.f32 %v7539, %v7540
    %v7542 = vand.u32 %v7541, 4294901760
    %7543 = vmatprep.mubr.f32.mxu0 %v7542
    %v7544 = vand.u32 %v2419, 4294901760
    %v7545 = vsub.f32 %v2419, %v7544
    %v7546 = vand.u32 %v7545, 4294901760
    %v7547 = vsub.f32 %v7545, %v7546
    %v7548 = vand.u32 %v7547, 4294901760
    %7549 = vmatmul.mubr.f32.gmra.mxu0 %v7548
    %v7550 = vpop.f32.mrf.mxu0
    %v7551 = vadd.f32 %v7439, %v7550
    %v7552 = vpop.f32.mrf.mxu0
    %7553 = vdwg.mxu0
    %7554 = vmatprep.subr.mxu0 0.0
    %v7555 = vand.u32 %v2566, 4294901760
    %v7556 = vsub.f32 %v2566, %v7555
    %v7557 = vand.u32 %v7556, 4294901760
    %v7558 = vsub.f32 %v7556, %v7557
    %v7559 = vand.u32 %v7558, 4294901760
    %7560 = vmatpush1.msra.mxu0 %v7559
    %7561 = vmatprep.subr.mxu0 0.0
    %v7562 = vand.u32 %v2563, 4294901760
    %v7563 = vsub.f32 %v2563, %v7562
    %v7564 = vand.u32 %v7563, 4294901760
    %v7565 = vsub.f32 %v7563, %v7564
    %v7566 = vand.u32 %v7565, 4294901760
    %7567 = vmatpush1.msra.mxu0 %v7566
    %7568 = vmatprep.subr.mxu0 0.0
    %v7569 = vand.u32 %v2560, 4294901760
    %v7570 = vsub.f32 %v2560, %v7569
    %v7571 = vand.u32 %v7570, 4294901760
    %v7572 = vsub.f32 %v7570, %v7571
    %v7573 = vand.u32 %v7572, 4294901760
    %7574 = vmatpush1.msra.mxu0 %v7573
    %7575 = vmatprep.subr.mxu0 0.0
    %v7576 = vand.u32 %v2557, 4294901760
    %v7577 = vsub.f32 %v2557, %v7576
    %v7578 = vand.u32 %v7577, 4294901760
    %v7579 = vsub.f32 %v7577, %v7578
    %v7580 = vand.u32 %v7579, 4294901760
    %7581 = vmatpush1.msra.mxu0 %v7580
    %7582 = vmatprep.subr.mxu0 0.0
    %v7583 = vand.u32 %v2554, 4294901760
    %v7584 = vsub.f32 %v2554, %v7583
    %v7585 = vand.u32 %v7584, 4294901760
    %v7586 = vsub.f32 %v7584, %v7585
    %v7587 = vand.u32 %v7586, 4294901760
    %7588 = vmatpush1.msra.mxu0 %v7587
    %7589 = vmatprep.subr.mxu0 0.0
    %v7590 = vand.u32 %v2551, 4294901760
    %v7591 = vsub.f32 %v2551, %v7590
    %v7592 = vand.u32 %v7591, 4294901760
    %v7593 = vsub.f32 %v7591, %v7592
    %v7594 = vand.u32 %v7593, 4294901760
    %7595 = vmatpush1.msra.mxu0 %v7594
    %7596 = vmatprep.subr.mxu0 0.0
    %v7597 = vand.u32 %v2548, 4294901760
    %v7598 = vsub.f32 %v2548, %v7597
    %v7599 = vand.u32 %v7598, 4294901760
    %v7600 = vsub.f32 %v7598, %v7599
    %v7601 = vand.u32 %v7600, 4294901760
    %7602 = vmatpush1.msra.mxu0 %v7601
    %7603 = vmatprep.subr.mxu0 0.0
    %v7604 = vand.u32 %v2545, 4294901760
    %v7605 = vsub.f32 %v2545, %v7604
    %v7606 = vand.u32 %v7605, 4294901760
    %v7607 = vsub.f32 %v7605, %v7606
    %v7608 = vand.u32 %v7607, 4294901760
    %7609 = vmatpush1.msra.mxu0 %v7608
    %7610 = vmatprep.subr.mxu0 0.0
    %v7611 = vand.u32 %v2542, 4294901760
    %v7612 = vsub.f32 %v2542, %v7611
    %v7613 = vand.u32 %v7612, 4294901760
    %v7614 = vsub.f32 %v7612, %v7613
    %v7615 = vand.u32 %v7614, 4294901760
    %7616 = vmatpush1.msra.mxu0 %v7615
    %7617 = vmatprep.subr.mxu0 0.0
    %v7618 = vand.u32 %v2539, 4294901760
    %v7619 = vsub.f32 %v2539, %v7618
    %v7620 = vand.u32 %v7619, 4294901760
    %v7621 = vsub.f32 %v7619, %v7620
    %v7622 = vand.u32 %v7621, 4294901760
    %7623 = vmatpush1.msra.mxu0 %v7622
    %7624 = vmatprep.subr.mxu0 0.0
    %v7625 = vand.u32 %v2536, 4294901760
    %v7626 = vsub.f32 %v2536, %v7625
    %v7627 = vand.u32 %v7626, 4294901760
    %v7628 = vsub.f32 %v7626, %v7627
    %v7629 = vand.u32 %v7628, 4294901760
    %7630 = vmatpush1.msra.mxu0 %v7629
    %7631 = vmatprep.subr.mxu0 0.0
    %v7632 = vand.u32 %v2533, 4294901760
    %v7633 = vsub.f32 %v2533, %v7632
    %v7634 = vand.u32 %v7633, 4294901760
    %v7635 = vsub.f32 %v7633, %v7634
    %v7636 = vand.u32 %v7635, 4294901760
    %7637 = vmatpush1.msra.mxu0 %v7636
    %7638 = vmatprep.subr.mxu0 0.0
    %v7639 = vand.u32 %v2530, 4294901760
    %v7640 = vsub.f32 %v2530, %v7639
    %v7641 = vand.u32 %v7640, 4294901760
    %v7642 = vsub.f32 %v7640, %v7641
    %v7643 = vand.u32 %v7642, 4294901760
    %7644 = vmatpush1.msra.mxu0 %v7643
    %7645 = vmatprep.subr.mxu0 0.0
    %v7646 = vand.u32 %v2527, 4294901760
    %v7647 = vsub.f32 %v2527, %v7646
    %v7648 = vand.u32 %v7647, 4294901760
    %v7649 = vsub.f32 %v7647, %v7648
    %v7650 = vand.u32 %v7649, 4294901760
    %7651 = vmatpush1.msra.mxu0 %v7650
    %7652 = vmatprep.subr.mxu0 0.0
    %v7653 = vand.u32 %v2524, 4294901760
    %v7654 = vsub.f32 %v2524, %v7653
    %v7655 = vand.u32 %v7654, 4294901760
    %v7656 = vsub.f32 %v7654, %v7655
    %v7657 = vand.u32 %v7656, 4294901760
    %7658 = vmatpush1.msra.mxu0 %v7657
    %7659 = vmatprep.subr.mxu0 0.0
    %v7660 = vand.u32 %v2521, 4294901760
    %v7661 = vsub.f32 %v2521, %v7660
    %v7662 = vand.u32 %v7661, 4294901760
    %v7663 = vsub.f32 %v7661, %v7662
    %v7664 = vand.u32 %v7663, 4294901760
    %7665 = vmatpush1.msra.mxu0 %v7664
    %7666 = vmatprep.subr.mxu0 0.0
    %v7667 = vand.u32 %v2614, 4294901760
    %v7668 = vsub.f32 %v2614, %v7667
    %v7669 = vand.u32 %v7668, 4294901760
    %v7670 = vsub.f32 %v7668, %v7669
    %v7671 = vand.u32 %v7670, 4294901760
    %7672 = vmatpush2.msra.mxu0 %v7671
    %7673 = vmatprep.subr.mxu0 0.0
    %v7674 = vand.u32 %v2611, 4294901760
    %v7675 = vsub.f32 %v2611, %v7674
    %v7676 = vand.u32 %v7675, 4294901760
    %v7677 = vsub.f32 %v7675, %v7676
    %v7678 = vand.u32 %v7677, 4294901760
    %7679 = vmatpush2.msra.mxu0 %v7678
    %7680 = vmatprep.subr.mxu0 0.0
    %v7681 = vand.u32 %v2608, 4294901760
    %v7682 = vsub.f32 %v2608, %v7681
    %v7683 = vand.u32 %v7682, 4294901760
    %v7684 = vsub.f32 %v7682, %v7683
    %v7685 = vand.u32 %v7684, 4294901760
    %7686 = vmatpush2.msra.mxu0 %v7685
    %7687 = vmatprep.subr.mxu0 0.0
    %v7688 = vand.u32 %v2605, 4294901760
    %v7689 = vsub.f32 %v2605, %v7688
    %v7690 = vand.u32 %v7689, 4294901760
    %v7691 = vsub.f32 %v7689, %v7690
    %v7692 = vand.u32 %v7691, 4294901760
    %7693 = vmatpush2.msra.mxu0 %v7692
    %7694 = vmatprep.subr.mxu0 0.0
    %v7695 = vand.u32 %v2602, 4294901760
    %v7696 = vsub.f32 %v2602, %v7695
    %v7697 = vand.u32 %v7696, 4294901760
    %v7698 = vsub.f32 %v7696, %v7697
    %v7699 = vand.u32 %v7698, 4294901760
    %7700 = vmatpush2.msra.mxu0 %v7699
    %7701 = vmatprep.subr.mxu0 0.0
    %v7702 = vand.u32 %v2599, 4294901760
    %v7703 = vsub.f32 %v2599, %v7702
    %v7704 = vand.u32 %v7703, 4294901760
    %v7705 = vsub.f32 %v7703, %v7704
    %v7706 = vand.u32 %v7705, 4294901760
    %7707 = vmatpush2.msra.mxu0 %v7706
    %7708 = vmatprep.subr.mxu0 0.0
    %v7709 = vand.u32 %v2596, 4294901760
    %v7710 = vsub.f32 %v2596, %v7709
    %v7711 = vand.u32 %v7710, 4294901760
    %v7712 = vsub.f32 %v7710, %v7711
    %v7713 = vand.u32 %v7712, 4294901760
    %7714 = vmatpush2.msra.mxu0 %v7713
    %7715 = vmatprep.subr.mxu0 0.0
    %v7716 = vand.u32 %v2593, 4294901760
    %v7717 = vsub.f32 %v2593, %v7716
    %v7718 = vand.u32 %v7717, 4294901760
    %v7719 = vsub.f32 %v7717, %v7718
    %v7720 = vand.u32 %v7719, 4294901760
    %7721 = vmatpush2.msra.mxu0 %v7720
    %7722 = vmatprep.subr.mxu0 0.0
    %v7723 = vand.u32 %v2590, 4294901760
    %v7724 = vsub.f32 %v2590, %v7723
    %v7725 = vand.u32 %v7724, 4294901760
    %v7726 = vsub.f32 %v7724, %v7725
    %v7727 = vand.u32 %v7726, 4294901760
    %7728 = vmatpush2.msra.mxu0 %v7727
    %7729 = vmatprep.subr.mxu0 0.0
    %v7730 = vand.u32 %v2587, 4294901760
    %v7731 = vsub.f32 %v2587, %v7730
    %v7732 = vand.u32 %v7731, 4294901760
    %v7733 = vsub.f32 %v7731, %v7732
    %v7734 = vand.u32 %v7733, 4294901760
    %7735 = vmatpush2.msra.mxu0 %v7734
    %7736 = vmatprep.subr.mxu0 0.0
    %v7737 = vand.u32 %v2584, 4294901760
    %v7738 = vsub.f32 %v2584, %v7737
    %v7739 = vand.u32 %v7738, 4294901760
    %v7740 = vsub.f32 %v7738, %v7739
    %v7741 = vand.u32 %v7740, 4294901760
    %7742 = vmatpush2.msra.mxu0 %v7741
    %7743 = vmatprep.subr.mxu0 0.0
    %v7744 = vand.u32 %v2581, 4294901760
    %v7745 = vsub.f32 %v2581, %v7744
    %v7746 = vand.u32 %v7745, 4294901760
    %v7747 = vsub.f32 %v7745, %v7746
    %v7748 = vand.u32 %v7747, 4294901760
    %7749 = vmatpush2.msra.mxu0 %v7748
    %7750 = vmatprep.subr.mxu0 0.0
    %v7751 = vand.u32 %v2578, 4294901760
    %v7752 = vsub.f32 %v2578, %v7751
    %v7753 = vand.u32 %v7752, 4294901760
    %v7754 = vsub.f32 %v7752, %v7753
    %v7755 = vand.u32 %v7754, 4294901760
    %7756 = vmatpush2.msra.mxu0 %v7755
    %7757 = vmatprep.subr.mxu0 0.0
    %v7758 = vand.u32 %v2575, 4294901760
    %v7759 = vsub.f32 %v2575, %v7758
    %v7760 = vand.u32 %v7759, 4294901760
    %v7761 = vsub.f32 %v7759, %v7760
    %v7762 = vand.u32 %v7761, 4294901760
    %7763 = vmatpush2.msra.mxu0 %v7762
    %7764 = vmatprep.subr.mxu0 0.0
    %v7765 = vand.u32 %v2572, 4294901760
    %v7766 = vsub.f32 %v2572, %v7765
    %v7767 = vand.u32 %v7766, 4294901760
    %v7768 = vsub.f32 %v7766, %v7767
    %v7769 = vand.u32 %v7768, 4294901760
    %7770 = vmatpush2.msra.mxu0 %v7769
    %7771 = vmatprep.subr.mxu0 0.0
    %v7772 = vand.u32 %v2569, 4294901760
    %v7773 = vsub.f32 %v2569, %v7772
    %v7774 = vand.u32 %v7773, 4294901760
    %v7775 = vsub.f32 %v7773, %v7774
    %v7776 = vand.u32 %v7775, 4294901760
    %7777 = vmatpush2.msra.mxu0 %v7776
    %v7778 = vand.u32 %v2420, 4294901760
    %7779 = vmatprep.mubr.f32.mxu0 %v7778
    %v7780 = vand.u32 %v2419, 4294901760
    %7781 = vmatmul.mubr.f32.gmra.mxu0 %v7780
    %v7782 = vpop.f32.mrf.mxu0
    %v7783 = vadd.f32 %v7551, %v7782
    %v7784 = vpop.f32.mrf.mxu0
    %7785 = vdwg.mxu0
    %7786 = vmatprep.subr.mxu0 0.0
    %v7787 = vand.u32 %v2566, 4294901760
    %v7788 = vsub.f32 %v2566, %v7787
    %7789 = vmatpush1.msra.mxu0 %v7788
    %7790 = vmatprep.subr.mxu0 0.0
    %v7791 = vand.u32 %v2563, 4294901760
    %v7792 = vsub.f32 %v2563, %v7791
    %7793 = vmatpush1.msra.mxu0 %v7792
    %7794 = vmatprep.subr.mxu0 0.0
    %v7795 = vand.u32 %v2560, 4294901760
    %v7796 = vsub.f32 %v2560, %v7795
    %7797 = vmatpush1.msra.mxu0 %v7796
    %7798 = vmatprep.subr.mxu0 0.0
    %v7799 = vand.u32 %v2557, 4294901760
    %v7800 = vsub.f32 %v2557, %v7799
    %7801 = vmatpush1.msra.mxu0 %v7800
    %7802 = vmatprep.subr.mxu0 0.0
    %v7803 = vand.u32 %v2554, 4294901760
    %v7804 = vsub.f32 %v2554, %v7803
    %7805 = vmatpush1.msra.mxu0 %v7804
    %7806 = vmatprep.subr.mxu0 0.0
    %v7807 = vand.u32 %v2551, 4294901760
    %v7808 = vsub.f32 %v2551, %v7807
    %7809 = vmatpush1.msra.mxu0 %v7808
    %7810 = vmatprep.subr.mxu0 0.0
    %v7811 = vand.u32 %v2548, 4294901760
    %v7812 = vsub.f32 %v2548, %v7811
    %7813 = vmatpush1.msra.mxu0 %v7812
    %7814 = vmatprep.subr.mxu0 0.0
    %v7815 = vand.u32 %v2545, 4294901760
    %v7816 = vsub.f32 %v2545, %v7815
    %7817 = vmatpush1.msra.mxu0 %v7816
    %7818 = vmatprep.subr.mxu0 0.0
    %v7819 = vand.u32 %v2542, 4294901760
    %v7820 = vsub.f32 %v2542, %v7819
    %7821 = vmatpush1.msra.mxu0 %v7820
    %7822 = vmatprep.subr.mxu0 0.0
    %v7823 = vand.u32 %v2539, 4294901760
    %v7824 = vsub.f32 %v2539, %v7823
    %7825 = vmatpush1.msra.mxu0 %v7824
    %7826 = vmatprep.subr.mxu0 0.0
    %v7827 = vand.u32 %v2536, 4294901760
    %v7828 = vsub.f32 %v2536, %v7827
    %7829 = vmatpush1.msra.mxu0 %v7828
    %7830 = vmatprep.subr.mxu0 0.0
    %v7831 = vand.u32 %v2533, 4294901760
    %v7832 = vsub.f32 %v2533, %v7831
    %7833 = vmatpush1.msra.mxu0 %v7832
    %7834 = vmatprep.subr.mxu0 0.0
    %v7835 = vand.u32 %v2530, 4294901760
    %v7836 = vsub.f32 %v2530, %v7835
    %7837 = vmatpush1.msra.mxu0 %v7836
    %7838 = vmatprep.subr.mxu0 0.0
    %v7839 = vand.u32 %v2527, 4294901760
    %v7840 = vsub.f32 %v2527, %v7839
    %7841 = vmatpush1.msra.mxu0 %v7840
    %7842 = vmatprep.subr.mxu0 0.0
    %v7843 = vand.u32 %v2524, 4294901760
    %v7844 = vsub.f32 %v2524, %v7843
    %7845 = vmatpush1.msra.mxu0 %v7844
    %7846 = vmatprep.subr.mxu0 0.0
    %v7847 = vand.u32 %v2521, 4294901760
    %v7848 = vsub.f32 %v2521, %v7847
    %7849 = vmatpush1.msra.mxu0 %v7848
    %7850 = vmatprep.subr.mxu0 0.0
    %v7851 = vand.u32 %v2614, 4294901760
    %v7852 = vsub.f32 %v2614, %v7851
    %7853 = vmatpush2.msra.mxu0 %v7852
    %7854 = vmatprep.subr.mxu0 0.0
    %v7855 = vand.u32 %v2611, 4294901760
    %v7856 = vsub.f32 %v2611, %v7855
    %7857 = vmatpush2.msra.mxu0 %v7856
    %7858 = vmatprep.subr.mxu0 0.0
    %v7859 = vand.u32 %v2608, 4294901760
    %v7860 = vsub.f32 %v2608, %v7859
    %7861 = vmatpush2.msra.mxu0 %v7860
    %7862 = vmatprep.subr.mxu0 0.0
    %v7863 = vand.u32 %v2605, 4294901760
    %v7864 = vsub.f32 %v2605, %v7863
    %7865 = vmatpush2.msra.mxu0 %v7864
    %7866 = vmatprep.subr.mxu0 0.0
    %v7867 = vand.u32 %v2602, 4294901760
    %v7868 = vsub.f32 %v2602, %v7867
    %7869 = vmatpush2.msra.mxu0 %v7868
    %7870 = vmatprep.subr.mxu0 0.0
    %v7871 = vand.u32 %v2599, 4294901760
    %v7872 = vsub.f32 %v2599, %v7871
    %7873 = vmatpush2.msra.mxu0 %v7872
    %7874 = vmatprep.subr.mxu0 0.0
    %v7875 = vand.u32 %v2596, 4294901760
    %v7876 = vsub.f32 %v2596, %v7875
    %7877 = vmatpush2.msra.mxu0 %v7876
    %7878 = vmatprep.subr.mxu0 0.0
    %v7879 = vand.u32 %v2593, 4294901760
    %v7880 = vsub.f32 %v2593, %v7879
    %7881 = vmatpush2.msra.mxu0 %v7880
    %7882 = vmatprep.subr.mxu0 0.0
    %v7883 = vand.u32 %v2590, 4294901760
    %v7884 = vsub.f32 %v2590, %v7883
    %7885 = vmatpush2.msra.mxu0 %v7884
    %7886 = vmatprep.subr.mxu0 0.0
    %v7887 = vand.u32 %v2587, 4294901760
    %v7888 = vsub.f32 %v2587, %v7887
    %7889 = vmatpush2.msra.mxu0 %v7888
    %7890 = vmatprep.subr.mxu0 0.0
    %v7891 = vand.u32 %v2584, 4294901760
    %v7892 = vsub.f32 %v2584, %v7891
    %7893 = vmatpush2.msra.mxu0 %v7892
    %7894 = vmatprep.subr.mxu0 0.0
    %v7895 = vand.u32 %v2581, 4294901760
    %v7896 = vsub.f32 %v2581, %v7895
    %7897 = vmatpush2.msra.mxu0 %v7896
    %7898 = vmatprep.subr.mxu0 0.0
    %v7899 = vand.u32 %v2578, 4294901760
    %v7900 = vsub.f32 %v2578, %v7899
    %7901 = vmatpush2.msra.mxu0 %v7900
    %7902 = vmatprep.subr.mxu0 0.0
    %v7903 = vand.u32 %v2575, 4294901760
    %v7904 = vsub.f32 %v2575, %v7903
    %7905 = vmatpush2.msra.mxu0 %v7904
    %7906 = vmatprep.subr.mxu0 0.0
    %v7907 = vand.u32 %v2572, 4294901760
    %v7908 = vsub.f32 %v2572, %v7907
    %7909 = vmatpush2.msra.mxu0 %v7908
    %7910 = vmatprep.subr.mxu0 0.0
    %v7911 = vand.u32 %v2569, 4294901760
    %v7912 = vsub.f32 %v2569, %v7911
    %7913 = vmatpush2.msra.mxu0 %v7912
    %v7914 = vand.u32 %v2420, 4294901760
    %v7915 = vsub.f32 %v2420, %v7914
    %7916 = vmatprep.mubr.f32.mxu0 %v7915
    %v7917 = vand.u32 %v2419, 4294901760
    %v7918 = vsub.f32 %v2419, %v7917
    %7919 = vmatmul.mubr.f32.gmra.mxu0 %v7918
    %v7920 = vpop.f32.mrf.mxu0
    %v7921 = vadd.f32 %v7783, %v7920
    %v7922 = vpop.f32.mrf.mxu0
    %7923 = vdwg.mxu0
    %7924 = vmatprep.subr.mxu0 0.0
    %v7925 = vand.u32 %v2566, 4294901760
    %7926 = vmatpush1.msra.mxu0 %v7925
    %7927 = vmatprep.subr.mxu0 0.0
    %v7928 = vand.u32 %v2563, 4294901760
    %7929 = vmatpush1.msra.mxu0 %v7928
    %7930 = vmatprep.subr.mxu0 0.0
    %v7931 = vand.u32 %v2560, 4294901760
    %7932 = vmatpush1.msra.mxu0 %v7931
    %7933 = vmatprep.subr.mxu0 0.0
    %v7934 = vand.u32 %v2557, 4294901760
    %7935 = vmatpush1.msra.mxu0 %v7934
    %7936 = vmatprep.subr.mxu0 0.0
    %v7937 = vand.u32 %v2554, 4294901760
    %7938 = vmatpush1.msra.mxu0 %v7937
    %7939 = vmatprep.subr.mxu0 0.0
    %v7940 = vand.u32 %v2551, 4294901760
    %7941 = vmatpush1.msra.mxu0 %v7940
    %7942 = vmatprep.subr.mxu0 0.0
    %v7943 = vand.u32 %v2548, 4294901760
    %7944 = vmatpush1.msra.mxu0 %v7943
    %7945 = vmatprep.subr.mxu0 0.0
    %v7946 = vand.u32 %v2545, 4294901760
    %7947 = vmatpush1.msra.mxu0 %v7946
    %7948 = vmatprep.subr.mxu0 0.0
    %v7949 = vand.u32 %v2542, 4294901760
    %7950 = vmatpush1.msra.mxu0 %v7949
    %7951 = vmatprep.subr.mxu0 0.0
    %v7952 = vand.u32 %v2539, 4294901760
    %7953 = vmatpush1.msra.mxu0 %v7952
    %7954 = vmatprep.subr.mxu0 0.0
    %v7955 = vand.u32 %v2536, 4294901760
    %7956 = vmatpush1.msra.mxu0 %v7955
    %7957 = vmatprep.subr.mxu0 0.0
    %v7958 = vand.u32 %v2533, 4294901760
    %7959 = vmatpush1.msra.mxu0 %v7958
    %7960 = vmatprep.subr.mxu0 0.0
    %v7961 = vand.u32 %v2530, 4294901760
    %7962 = vmatpush1.msra.mxu0 %v7961
    %7963 = vmatprep.subr.mxu0 0.0
    %v7964 = vand.u32 %v2527, 4294901760
    %7965 = vmatpush1.msra.mxu0 %v7964
    %7966 = vmatprep.subr.mxu0 0.0
    %v7967 = vand.u32 %v2524, 4294901760
    %7968 = vmatpush1.msra.mxu0 %v7967
    %7969 = vmatprep.subr.mxu0 0.0
    %v7970 = vand.u32 %v2521, 4294901760
    %7971 = vmatpush1.msra.mxu0 %v7970
    %7972 = vmatprep.subr.mxu0 0.0
    %v7973 = vand.u32 %v2614, 4294901760
    %7974 = vmatpush2.msra.mxu0 %v7973
    %7975 = vmatprep.subr.mxu0 0.0
    %v7976 = vand.u32 %v2611, 4294901760
    %7977 = vmatpush2.msra.mxu0 %v7976
    %7978 = vmatprep.subr.mxu0 0.0
    %v7979 = vand.u32 %v2608, 4294901760
    %7980 = vmatpush2.msra.mxu0 %v7979
    %7981 = vmatprep.subr.mxu0 0.0
    %v7982 = vand.u32 %v2605, 4294901760
    %7983 = vmatpush2.msra.mxu0 %v7982
    %7984 = vmatprep.subr.mxu0 0.0
    %v7985 = vand.u32 %v2602, 4294901760
    %7986 = vmatpush2.msra.mxu0 %v7985
    %7987 = vmatprep.subr.mxu0 0.0
    %v7988 = vand.u32 %v2599, 4294901760
    %7989 = vmatpush2.msra.mxu0 %v7988
    %7990 = vmatprep.subr.mxu0 0.0
    %v7991 = vand.u32 %v2596, 4294901760
    %7992 = vmatpush2.msra.mxu0 %v7991
    %7993 = vmatprep.subr.mxu0 0.0
    %v7994 = vand.u32 %v2593, 4294901760
    %7995 = vmatpush2.msra.mxu0 %v7994
    %7996 = vmatprep.subr.mxu0 0.0
    %v7997 = vand.u32 %v2590, 4294901760
    %7998 = vmatpush2.msra.mxu0 %v7997
    %7999 = vmatprep.subr.mxu0 0.0
    %v8000 = vand.u32 %v2587, 4294901760
    %8001 = vmatpush2.msra.mxu0 %v8000
    %8002 = vmatprep.subr.mxu0 0.0
    %v8003 = vand.u32 %v2584, 4294901760
    %8004 = vmatpush2.msra.mxu0 %v8003
    %8005 = vmatprep.subr.mxu0 0.0
    %v8006 = vand.u32 %v2581, 4294901760
    %8007 = vmatpush2.msra.mxu0 %v8006
    %8008 = vmatprep.subr.mxu0 0.0
    %v8009 = vand.u32 %v2578, 4294901760
    %8010 = vmatpush2.msra.mxu0 %v8009
    %8011 = vmatprep.subr.mxu0 0.0
    %v8012 = vand.u32 %v2575, 4294901760
    %8013 = vmatpush2.msra.mxu0 %v8012
    %8014 = vmatprep.subr.mxu0 0.0
    %v8015 = vand.u32 %v2572, 4294901760
    %8016 = vmatpush2.msra.mxu0 %v8015
    %8017 = vmatprep.subr.mxu0 0.0
    %v8018 = vand.u32 %v2569, 4294901760
    %8019 = vmatpush2.msra.mxu0 %v8018
    %v8020 = vand.u32 %v2420, 4294901760
    %v8021 = vsub.f32 %v2420, %v8020
    %v8022 = vand.u32 %v8021, 4294901760
    %8023 = vmatprep.mubr.f32.mxu0 %v8022
    %v8024 = vand.u32 %v2419, 4294901760
    %v8025 = vsub.f32 %v2419, %v8024
    %v8026 = vand.u32 %v8025, 4294901760
    %8027 = vmatmul.mubr.f32.gmra.mxu0 %v8026
    %v8028 = vpop.f32.mrf.mxu0
    %v8029 = vadd.f32 %v7921, %v8028
    %v8030 = vpop.f32.mrf.mxu0
    %8031 = vdwg.mxu0
    %8032 = vmatprep.subr.mxu0 0.0
    %v8033 = vand.u32 %v2566, 4294901760
    %v8034 = vsub.f32 %v2566, %v8033
    %v8035 = vand.u32 %v8034, 4294901760
    %8036 = vmatpush1.msra.mxu0 %v8035
    %8037 = vmatprep.subr.mxu0 0.0
    %v8038 = vand.u32 %v2563, 4294901760
    %v8039 = vsub.f32 %v2563, %v8038
    %v8040 = vand.u32 %v8039, 4294901760
    %8041 = vmatpush1.msra.mxu0 %v8040
    %8042 = vmatprep.subr.mxu0 0.0
    %v8043 = vand.u32 %v2560, 4294901760
    %v8044 = vsub.f32 %v2560, %v8043
    %v8045 = vand.u32 %v8044, 4294901760
    %8046 = vmatpush1.msra.mxu0 %v8045
    %8047 = vmatprep.subr.mxu0 0.0
    %v8048 = vand.u32 %v2557, 4294901760
    %v8049 = vsub.f32 %v2557, %v8048
    %v8050 = vand.u32 %v8049, 4294901760
    %8051 = vmatpush1.msra.mxu0 %v8050
    %8052 = vmatprep.subr.mxu0 0.0
    %v8053 = vand.u32 %v2554, 4294901760
    %v8054 = vsub.f32 %v2554, %v8053
    %v8055 = vand.u32 %v8054, 4294901760
    %8056 = vmatpush1.msra.mxu0 %v8055
    %8057 = vmatprep.subr.mxu0 0.0
    %v8058 = vand.u32 %v2551, 4294901760
    %v8059 = vsub.f32 %v2551, %v8058
    %v8060 = vand.u32 %v8059, 4294901760
    %8061 = vmatpush1.msra.mxu0 %v8060
    %8062 = vmatprep.subr.mxu0 0.0
    %v8063 = vand.u32 %v2548, 4294901760
    %v8064 = vsub.f32 %v2548, %v8063
    %v8065 = vand.u32 %v8064, 4294901760
    %8066 = vmatpush1.msra.mxu0 %v8065
    %8067 = vmatprep.subr.mxu0 0.0
    %v8068 = vand.u32 %v2545, 4294901760
    %v8069 = vsub.f32 %v2545, %v8068
    %v8070 = vand.u32 %v8069, 4294901760
    %8071 = vmatpush1.msra.mxu0 %v8070
    %8072 = vmatprep.subr.mxu0 0.0
    %v8073 = vand.u32 %v2542, 4294901760
    %v8074 = vsub.f32 %v2542, %v8073
    %v8075 = vand.u32 %v8074, 4294901760
    %8076 = vmatpush1.msra.mxu0 %v8075
    %8077 = vmatprep.subr.mxu0 0.0
    %v8078 = vand.u32 %v2539, 4294901760
    %v8079 = vsub.f32 %v2539, %v8078
    %v8080 = vand.u32 %v8079, 4294901760
    %8081 = vmatpush1.msra.mxu0 %v8080
    %8082 = vmatprep.subr.mxu0 0.0
    %v8083 = vand.u32 %v2536, 4294901760
    %v8084 = vsub.f32 %v2536, %v8083
    %v8085 = vand.u32 %v8084, 4294901760
    %8086 = vmatpush1.msra.mxu0 %v8085
    %8087 = vmatprep.subr.mxu0 0.0
    %v8088 = vand.u32 %v2533, 4294901760
    %v8089 = vsub.f32 %v2533, %v8088
    %v8090 = vand.u32 %v8089, 4294901760
    %8091 = vmatpush1.msra.mxu0 %v8090
    %8092 = vmatprep.subr.mxu0 0.0
    %v8093 = vand.u32 %v2530, 4294901760
    %v8094 = vsub.f32 %v2530, %v8093
    %v8095 = vand.u32 %v8094, 4294901760
    %8096 = vmatpush1.msra.mxu0 %v8095
    %8097 = vmatprep.subr.mxu0 0.0
    %v8098 = vand.u32 %v2527, 4294901760
    %v8099 = vsub.f32 %v2527, %v8098
    %v8100 = vand.u32 %v8099, 4294901760
    %8101 = vmatpush1.msra.mxu0 %v8100
    %8102 = vmatprep.subr.mxu0 0.0
    %v8103 = vand.u32 %v2524, 4294901760
    %v8104 = vsub.f32 %v2524, %v8103
    %v8105 = vand.u32 %v8104, 4294901760
    %8106 = vmatpush1.msra.mxu0 %v8105
    %8107 = vmatprep.subr.mxu0 0.0
    %v8108 = vand.u32 %v2521, 4294901760
    %v8109 = vsub.f32 %v2521, %v8108
    %v8110 = vand.u32 %v8109, 4294901760
    %8111 = vmatpush1.msra.mxu0 %v8110
    %8112 = vmatprep.subr.mxu0 0.0
    %v8113 = vand.u32 %v2614, 4294901760
    %v8114 = vsub.f32 %v2614, %v8113
    %v8115 = vand.u32 %v8114, 4294901760
    %8116 = vmatpush2.msra.mxu0 %v8115
    %8117 = vmatprep.subr.mxu0 0.0
    %v8118 = vand.u32 %v2611, 4294901760
    %v8119 = vsub.f32 %v2611, %v8118
    %v8120 = vand.u32 %v8119, 4294901760
    %8121 = vmatpush2.msra.mxu0 %v8120
    %8122 = vmatprep.subr.mxu0 0.0
    %v8123 = vand.u32 %v2608, 4294901760
    %v8124 = vsub.f32 %v2608, %v8123
    %v8125 = vand.u32 %v8124, 4294901760
    %8126 = vmatpush2.msra.mxu0 %v8125
    %8127 = vmatprep.subr.mxu0 0.0
    %v8128 = vand.u32 %v2605, 4294901760
    %v8129 = vsub.f32 %v2605, %v8128
    %v8130 = vand.u32 %v8129, 4294901760
    %8131 = vmatpush2.msra.mxu0 %v8130
    %8132 = vmatprep.subr.mxu0 0.0
    %v8133 = vand.u32 %v2602, 4294901760
    %v8134 = vsub.f32 %v2602, %v8133
    %v8135 = vand.u32 %v8134, 4294901760
    %8136 = vmatpush2.msra.mxu0 %v8135
    %8137 = vmatprep.subr.mxu0 0.0
    %v8138 = vand.u32 %v2599, 4294901760
    %v8139 = vsub.f32 %v2599, %v8138
    %v8140 = vand.u32 %v8139, 4294901760
    %8141 = vmatpush2.msra.mxu0 %v8140
    %8142 = vmatprep.subr.mxu0 0.0
    %v8143 = vand.u32 %v2596, 4294901760
    %v8144 = vsub.f32 %v2596, %v8143
    %v8145 = vand.u32 %v8144, 4294901760
    %8146 = vmatpush2.msra.mxu0 %v8145
    %8147 = vmatprep.subr.mxu0 0.0
    %v8148 = vand.u32 %v2593, 4294901760
    %v8149 = vsub.f32 %v2593, %v8148
    %v8150 = vand.u32 %v8149, 4294901760
    %8151 = vmatpush2.msra.mxu0 %v8150
    %8152 = vmatprep.subr.mxu0 0.0
    %v8153 = vand.u32 %v2590, 4294901760
    %v8154 = vsub.f32 %v2590, %v8153
    %v8155 = vand.u32 %v8154, 4294901760
    %8156 = vmatpush2.msra.mxu0 %v8155
    %8157 = vmatprep.subr.mxu0 0.0
    %v8158 = vand.u32 %v2587, 4294901760
    %v8159 = vsub.f32 %v2587, %v8158
    %v8160 = vand.u32 %v8159, 4294901760
    %8161 = vmatpush2.msra.mxu0 %v8160
    %8162 = vmatprep.subr.mxu0 0.0
    %v8163 = vand.u32 %v2584, 4294901760
    %v8164 = vsub.f32 %v2584, %v8163
    %v8165 = vand.u32 %v8164, 4294901760
    %8166 = vmatpush2.msra.mxu0 %v8165
    %8167 = vmatprep.subr.mxu0 0.0
    %v8168 = vand.u32 %v2581, 4294901760
    %v8169 = vsub.f32 %v2581, %v8168
    %v8170 = vand.u32 %v8169, 4294901760
    %8171 = vmatpush2.msra.mxu0 %v8170
    %8172 = vmatprep.subr.mxu0 0.0
    %v8173 = vand.u32 %v2578, 4294901760
    %v8174 = vsub.f32 %v2578, %v8173
    %v8175 = vand.u32 %v8174, 4294901760
    %8176 = vmatpush2.msra.mxu0 %v8175
    %8177 = vmatprep.subr.mxu0 0.0
    %v8178 = vand.u32 %v2575, 4294901760
    %v8179 = vsub.f32 %v2575, %v8178
    %v8180 = vand.u32 %v8179, 4294901760
    %8181 = vmatpush2.msra.mxu0 %v8180
    %8182 = vmatprep.subr.mxu0 0.0
    %v8183 = vand.u32 %v2572, 4294901760
    %v8184 = vsub.f32 %v2572, %v8183
    %v8185 = vand.u32 %v8184, 4294901760
    %8186 = vmatpush2.msra.mxu0 %v8185
    %8187 = vmatprep.subr.mxu0 0.0
    %v8188 = vand.u32 %v2569, 4294901760
    %v8189 = vsub.f32 %v2569, %v8188
    %v8190 = vand.u32 %v8189, 4294901760
    %8191 = vmatpush2.msra.mxu0 %v8190
    %v8192 = vand.u32 %v2420, 4294901760
    %8193 = vmatprep.mubr.f32.mxu0 %v8192
    %v8194 = vand.u32 %v2419, 4294901760
    %8195 = vmatmul.mubr.f32.gmra.mxu0 %v8194
    %v8196 = vpop.f32.mrf.mxu0
    %v8197 = vadd.f32 %v8029, %v8196
    %v8198 = vpop.f32.mrf.mxu0
    %8199 = vdwg.mxu0
    %8200 = vmatprep.subr.mxu0 0.0
    %v8201 = vand.u32 %v2566, 4294901760
    %8202 = vmatpush1.msra.mxu0 %v8201
    %8203 = vmatprep.subr.mxu0 0.0
    %v8204 = vand.u32 %v2563, 4294901760
    %8205 = vmatpush1.msra.mxu0 %v8204
    %8206 = vmatprep.subr.mxu0 0.0
    %v8207 = vand.u32 %v2560, 4294901760
    %8208 = vmatpush1.msra.mxu0 %v8207
    %8209 = vmatprep.subr.mxu0 0.0
    %v8210 = vand.u32 %v2557, 4294901760
    %8211 = vmatpush1.msra.mxu0 %v8210
    %8212 = vmatprep.subr.mxu0 0.0
    %v8213 = vand.u32 %v2554, 4294901760
    %8214 = vmatpush1.msra.mxu0 %v8213
    %8215 = vmatprep.subr.mxu0 0.0
    %v8216 = vand.u32 %v2551, 4294901760
    %8217 = vmatpush1.msra.mxu0 %v8216
    %8218 = vmatprep.subr.mxu0 0.0
    %v8219 = vand.u32 %v2548, 4294901760
    %8220 = vmatpush1.msra.mxu0 %v8219
    %8221 = vmatprep.subr.mxu0 0.0
    %v8222 = vand.u32 %v2545, 4294901760
    %8223 = vmatpush1.msra.mxu0 %v8222
    %8224 = vmatprep.subr.mxu0 0.0
    %v8225 = vand.u32 %v2542, 4294901760
    %8226 = vmatpush1.msra.mxu0 %v8225
    %8227 = vmatprep.subr.mxu0 0.0
    %v8228 = vand.u32 %v2539, 4294901760
    %8229 = vmatpush1.msra.mxu0 %v8228
    %8230 = vmatprep.subr.mxu0 0.0
    %v8231 = vand.u32 %v2536, 4294901760
    %8232 = vmatpush1.msra.mxu0 %v8231
    %8233 = vmatprep.subr.mxu0 0.0
    %v8234 = vand.u32 %v2533, 4294901760
    %8235 = vmatpush1.msra.mxu0 %v8234
    %8236 = vmatprep.subr.mxu0 0.0
    %v8237 = vand.u32 %v2530, 4294901760
    %8238 = vmatpush1.msra.mxu0 %v8237
    %8239 = vmatprep.subr.mxu0 0.0
    %v8240 = vand.u32 %v2527, 4294901760
    %8241 = vmatpush1.msra.mxu0 %v8240
    %8242 = vmatprep.subr.mxu0 0.0
    %v8243 = vand.u32 %v2524, 4294901760
    %8244 = vmatpush1.msra.mxu0 %v8243
    %8245 = vmatprep.subr.mxu0 0.0
    %v8246 = vand.u32 %v2521, 4294901760
    %8247 = vmatpush1.msra.mxu0 %v8246
    %8248 = vmatprep.subr.mxu0 0.0
    %v8249 = vand.u32 %v2614, 4294901760
    %8250 = vmatpush2.msra.mxu0 %v8249
    %8251 = vmatprep.subr.mxu0 0.0
    %v8252 = vand.u32 %v2611, 4294901760
    %8253 = vmatpush2.msra.mxu0 %v8252
    %8254 = vmatprep.subr.mxu0 0.0
    %v8255 = vand.u32 %v2608, 4294901760
    %8256 = vmatpush2.msra.mxu0 %v8255
    %8257 = vmatprep.subr.mxu0 0.0
    %v8258 = vand.u32 %v2605, 4294901760
    %8259 = vmatpush2.msra.mxu0 %v8258
    %8260 = vmatprep.subr.mxu0 0.0
    %v8261 = vand.u32 %v2602, 4294901760
    %8262 = vmatpush2.msra.mxu0 %v8261
    %8263 = vmatprep.subr.mxu0 0.0
    %v8264 = vand.u32 %v2599, 4294901760
    %8265 = vmatpush2.msra.mxu0 %v8264
    %8266 = vmatprep.subr.mxu0 0.0
    %v8267 = vand.u32 %v2596, 4294901760
    %8268 = vmatpush2.msra.mxu0 %v8267
    %8269 = vmatprep.subr.mxu0 0.0
    %v8270 = vand.u32 %v2593, 4294901760
    %8271 = vmatpush2.msra.mxu0 %v8270
    %8272 = vmatprep.subr.mxu0 0.0
    %v8273 = vand.u32 %v2590, 4294901760
    %8274 = vmatpush2.msra.mxu0 %v8273
    %8275 = vmatprep.subr.mxu0 0.0
    %v8276 = vand.u32 %v2587, 4294901760
    %8277 = vmatpush2.msra.mxu0 %v8276
    %8278 = vmatprep.subr.mxu0 0.0
    %v8279 = vand.u32 %v2584, 4294901760
    %8280 = vmatpush2.msra.mxu0 %v8279
    %8281 = vmatprep.subr.mxu0 0.0
    %v8282 = vand.u32 %v2581, 4294901760
    %8283 = vmatpush2.msra.mxu0 %v8282
    %8284 = vmatprep.subr.mxu0 0.0
    %v8285 = vand.u32 %v2578, 4294901760
    %8286 = vmatpush2.msra.mxu0 %v8285
    %8287 = vmatprep.subr.mxu0 0.0
    %v8288 = vand.u32 %v2575, 4294901760
    %8289 = vmatpush2.msra.mxu0 %v8288
    %8290 = vmatprep.subr.mxu0 0.0
    %v8291 = vand.u32 %v2572, 4294901760
    %8292 = vmatpush2.msra.mxu0 %v8291
    %8293 = vmatprep.subr.mxu0 0.0
    %v8294 = vand.u32 %v2569, 4294901760
    %8295 = vmatpush2.msra.mxu0 %v8294
    %v8296 = vand.u32 %v2420, 4294901760
    %8297 = vmatprep.mubr.f32.mxu0 %v8296
    %v8298 = vand.u32 %v2419, 4294901760
    %8299 = vmatmul.mubr.f32.gmra.mxu0 %v8298
    %v8300 = vpop.f32.mrf.mxu0
    %v8301 = vadd.f32 %v8197, %v8300
    %v8302 = vpop.f32.mrf.mxu0
    %8303 = vdwg.mxu0
    %8304 = vmatprep.subr.mxu0 0.0
    %v8305 = vand.u32 %v2662, 4294901760
    %8306 = vmatpush1.msra.mxu0 %v8305
    %8307 = vmatprep.subr.mxu0 0.0
    %v8308 = vand.u32 %v2659, 4294901760
    %8309 = vmatpush1.msra.mxu0 %v8308
    %8310 = vmatprep.subr.mxu0 0.0
    %v8311 = vand.u32 %v2656, 4294901760
    %8312 = vmatpush1.msra.mxu0 %v8311
    %8313 = vmatprep.subr.mxu0 0.0
    %v8314 = vand.u32 %v2653, 4294901760
    %8315 = vmatpush1.msra.mxu0 %v8314
    %8316 = vmatprep.subr.mxu0 0.0
    %v8317 = vand.u32 %v2650, 4294901760
    %8318 = vmatpush1.msra.mxu0 %v8317
    %8319 = vmatprep.subr.mxu0 0.0
    %v8320 = vand.u32 %v2647, 4294901760
    %8321 = vmatpush1.msra.mxu0 %v8320
    %8322 = vmatprep.subr.mxu0 0.0
    %v8323 = vand.u32 %v2644, 4294901760
    %8324 = vmatpush1.msra.mxu0 %v8323
    %8325 = vmatprep.subr.mxu0 0.0
    %v8326 = vand.u32 %v2641, 4294901760
    %8327 = vmatpush1.msra.mxu0 %v8326
    %8328 = vmatprep.subr.mxu0 0.0
    %v8329 = vand.u32 %v2638, 4294901760
    %8330 = vmatpush1.msra.mxu0 %v8329
    %8331 = vmatprep.subr.mxu0 0.0
    %v8332 = vand.u32 %v2635, 4294901760
    %8333 = vmatpush1.msra.mxu0 %v8332
    %8334 = vmatprep.subr.mxu0 0.0
    %v8335 = vand.u32 %v2632, 4294901760
    %8336 = vmatpush1.msra.mxu0 %v8335
    %8337 = vmatprep.subr.mxu0 0.0
    %v8338 = vand.u32 %v2629, 4294901760
    %8339 = vmatpush1.msra.mxu0 %v8338
    %8340 = vmatprep.subr.mxu0 0.0
    %v8341 = vand.u32 %v2626, 4294901760
    %8342 = vmatpush1.msra.mxu0 %v8341
    %8343 = vmatprep.subr.mxu0 0.0
    %v8344 = vand.u32 %v2623, 4294901760
    %8345 = vmatpush1.msra.mxu0 %v8344
    %8346 = vmatprep.subr.mxu0 0.0
    %v8347 = vand.u32 %v2620, 4294901760
    %8348 = vmatpush1.msra.mxu0 %v8347
    %8349 = vmatprep.subr.mxu0 0.0
    %v8350 = vand.u32 %v2617, 4294901760
    %8351 = vmatpush1.msra.mxu0 %v8350
    %8352 = vmatprep.subr.mxu0 0.0
    %v8353 = vand.u32 %v2710, 4294901760
    %8354 = vmatpush2.msra.mxu0 %v8353
    %8355 = vmatprep.subr.mxu0 0.0
    %v8356 = vand.u32 %v2707, 4294901760
    %8357 = vmatpush2.msra.mxu0 %v8356
    %8358 = vmatprep.subr.mxu0 0.0
    %v8359 = vand.u32 %v2704, 4294901760
    %8360 = vmatpush2.msra.mxu0 %v8359
    %8361 = vmatprep.subr.mxu0 0.0
    %v8362 = vand.u32 %v2701, 4294901760
    %8363 = vmatpush2.msra.mxu0 %v8362
    %8364 = vmatprep.subr.mxu0 0.0
    %v8365 = vand.u32 %v2698, 4294901760
    %8366 = vmatpush2.msra.mxu0 %v8365
    %8367 = vmatprep.subr.mxu0 0.0
    %v8368 = vand.u32 %v2695, 4294901760
    %8369 = vmatpush2.msra.mxu0 %v8368
    %8370 = vmatprep.subr.mxu0 0.0
    %v8371 = vand.u32 %v2692, 4294901760
    %8372 = vmatpush2.msra.mxu0 %v8371
    %8373 = vmatprep.subr.mxu0 0.0
    %v8374 = vand.u32 %v2689, 4294901760
    %8375 = vmatpush2.msra.mxu0 %v8374
    %8376 = vmatprep.subr.mxu0 0.0
    %v8377 = vand.u32 %v2686, 4294901760
    %8378 = vmatpush2.msra.mxu0 %v8377
    %8379 = vmatprep.subr.mxu0 0.0
    %v8380 = vand.u32 %v2683, 4294901760
    %8381 = vmatpush2.msra.mxu0 %v8380
    %8382 = vmatprep.subr.mxu0 0.0
    %v8383 = vand.u32 %v2680, 4294901760
    %8384 = vmatpush2.msra.mxu0 %v8383
    %8385 = vmatprep.subr.mxu0 0.0
    %v8386 = vand.u32 %v2677, 4294901760
    %8387 = vmatpush2.msra.mxu0 %v8386
    %8388 = vmatprep.subr.mxu0 0.0
    %v8389 = vand.u32 %v2674, 4294901760
    %8390 = vmatpush2.msra.mxu0 %v8389
    %8391 = vmatprep.subr.mxu0 0.0
    %v8392 = vand.u32 %v2671, 4294901760
    %8393 = vmatpush2.msra.mxu0 %v8392
    %8394 = vmatprep.subr.mxu0 0.0
    %v8395 = vand.u32 %v2668, 4294901760
    %8396 = vmatpush2.msra.mxu0 %v8395
    %8397 = vmatprep.subr.mxu0 0.0
    %v8398 = vand.u32 %v2665, 4294901760
    %8399 = vmatpush2.msra.mxu0 %v8398
    %v8400 = vand.u32 %v2422, 4294901760
    %v8401 = vsub.f32 %v2422, %v8400
    %v8402 = vand.u32 %v8401, 4294901760
    %v8403 = vsub.f32 %v8401, %v8402
    %v8404 = vand.u32 %v8403, 4294901760
    %8405 = vmatprep.mubr.f32.mxu0 %v8404
    %v8406 = vand.u32 %v2421, 4294901760
    %v8407 = vsub.f32 %v2421, %v8406
    %v8408 = vand.u32 %v8407, 4294901760
    %v8409 = vsub.f32 %v8407, %v8408
    %v8410 = vand.u32 %v8409, 4294901760
    %8411 = vmatmul.mubr.f32.gmra.mxu0 %v8410
    %v8412 = vpop.f32.mrf.mxu0
    %v8413 = vadd.f32 %v8301, %v8412
    %v8414 = vpop.f32.mrf.mxu0
    %8415 = vdwg.mxu0
    %8416 = vmatprep.subr.mxu0 0.0
    %v8417 = vand.u32 %v2662, 4294901760
    %v8418 = vsub.f32 %v2662, %v8417
    %v8419 = vand.u32 %v8418, 4294901760
    %v8420 = vsub.f32 %v8418, %v8419
    %v8421 = vand.u32 %v8420, 4294901760
    %8422 = vmatpush1.msra.mxu0 %v8421
    %8423 = vmatprep.subr.mxu0 0.0
    %v8424 = vand.u32 %v2659, 4294901760
    %v8425 = vsub.f32 %v2659, %v8424
    %v8426 = vand.u32 %v8425, 4294901760
    %v8427 = vsub.f32 %v8425, %v8426
    %v8428 = vand.u32 %v8427, 4294901760
    %8429 = vmatpush1.msra.mxu0 %v8428
    %8430 = vmatprep.subr.mxu0 0.0
    %v8431 = vand.u32 %v2656, 4294901760
    %v8432 = vsub.f32 %v2656, %v8431
    %v8433 = vand.u32 %v8432, 4294901760
    %v8434 = vsub.f32 %v8432, %v8433
    %v8435 = vand.u32 %v8434, 4294901760
    %8436 = vmatpush1.msra.mxu0 %v8435
    %8437 = vmatprep.subr.mxu0 0.0
    %v8438 = vand.u32 %v2653, 4294901760
    %v8439 = vsub.f32 %v2653, %v8438
    %v8440 = vand.u32 %v8439, 4294901760
    %v8441 = vsub.f32 %v8439, %v8440
    %v8442 = vand.u32 %v8441, 4294901760
    %8443 = vmatpush1.msra.mxu0 %v8442
    %8444 = vmatprep.subr.mxu0 0.0
    %v8445 = vand.u32 %v2650, 4294901760
    %v8446 = vsub.f32 %v2650, %v8445
    %v8447 = vand.u32 %v8446, 4294901760
    %v8448 = vsub.f32 %v8446, %v8447
    %v8449 = vand.u32 %v8448, 4294901760
    %8450 = vmatpush1.msra.mxu0 %v8449
    %8451 = vmatprep.subr.mxu0 0.0
    %v8452 = vand.u32 %v2647, 4294901760
    %v8453 = vsub.f32 %v2647, %v8452
    %v8454 = vand.u32 %v8453, 4294901760
    %v8455 = vsub.f32 %v8453, %v8454
    %v8456 = vand.u32 %v8455, 4294901760
    %8457 = vmatpush1.msra.mxu0 %v8456
    %8458 = vmatprep.subr.mxu0 0.0
    %v8459 = vand.u32 %v2644, 4294901760
    %v8460 = vsub.f32 %v2644, %v8459
    %v8461 = vand.u32 %v8460, 4294901760
    %v8462 = vsub.f32 %v8460, %v8461
    %v8463 = vand.u32 %v8462, 4294901760
    %8464 = vmatpush1.msra.mxu0 %v8463
    %8465 = vmatprep.subr.mxu0 0.0
    %v8466 = vand.u32 %v2641, 4294901760
    %v8467 = vsub.f32 %v2641, %v8466
    %v8468 = vand.u32 %v8467, 4294901760
    %v8469 = vsub.f32 %v8467, %v8468
    %v8470 = vand.u32 %v8469, 4294901760
    %8471 = vmatpush1.msra.mxu0 %v8470
    %8472 = vmatprep.subr.mxu0 0.0
    %v8473 = vand.u32 %v2638, 4294901760
    %v8474 = vsub.f32 %v2638, %v8473
    %v8475 = vand.u32 %v8474, 4294901760
    %v8476 = vsub.f32 %v8474, %v8475
    %v8477 = vand.u32 %v8476, 4294901760
    %8478 = vmatpush1.msra.mxu0 %v8477
    %8479 = vmatprep.subr.mxu0 0.0
    %v8480 = vand.u32 %v2635, 4294901760
    %v8481 = vsub.f32 %v2635, %v8480
    %v8482 = vand.u32 %v8481, 4294901760
    %v8483 = vsub.f32 %v8481, %v8482
    %v8484 = vand.u32 %v8483, 4294901760
    %8485 = vmatpush1.msra.mxu0 %v8484
    %8486 = vmatprep.subr.mxu0 0.0
    %v8487 = vand.u32 %v2632, 4294901760
    %v8488 = vsub.f32 %v2632, %v8487
    %v8489 = vand.u32 %v8488, 4294901760
    %v8490 = vsub.f32 %v8488, %v8489
    %v8491 = vand.u32 %v8490, 4294901760
    %8492 = vmatpush1.msra.mxu0 %v8491
    %8493 = vmatprep.subr.mxu0 0.0
    %v8494 = vand.u32 %v2629, 4294901760
    %v8495 = vsub.f32 %v2629, %v8494
    %v8496 = vand.u32 %v8495, 4294901760
    %v8497 = vsub.f32 %v8495, %v8496
    %v8498 = vand.u32 %v8497, 4294901760
    %8499 = vmatpush1.msra.mxu0 %v8498
    %8500 = vmatprep.subr.mxu0 0.0
    %v8501 = vand.u32 %v2626, 4294901760
    %v8502 = vsub.f32 %v2626, %v8501
    %v8503 = vand.u32 %v8502, 4294901760
    %v8504 = vsub.f32 %v8502, %v8503
    %v8505 = vand.u32 %v8504, 4294901760
    %8506 = vmatpush1.msra.mxu0 %v8505
    %8507 = vmatprep.subr.mxu0 0.0
    %v8508 = vand.u32 %v2623, 4294901760
    %v8509 = vsub.f32 %v2623, %v8508
    %v8510 = vand.u32 %v8509, 4294901760
    %v8511 = vsub.f32 %v8509, %v8510
    %v8512 = vand.u32 %v8511, 4294901760
    %8513 = vmatpush1.msra.mxu0 %v8512
    %8514 = vmatprep.subr.mxu0 0.0
    %v8515 = vand.u32 %v2620, 4294901760
    %v8516 = vsub.f32 %v2620, %v8515
    %v8517 = vand.u32 %v8516, 4294901760
    %v8518 = vsub.f32 %v8516, %v8517
    %v8519 = vand.u32 %v8518, 4294901760
    %8520 = vmatpush1.msra.mxu0 %v8519
    %8521 = vmatprep.subr.mxu0 0.0
    %v8522 = vand.u32 %v2617, 4294901760
    %v8523 = vsub.f32 %v2617, %v8522
    %v8524 = vand.u32 %v8523, 4294901760
    %v8525 = vsub.f32 %v8523, %v8524
    %v8526 = vand.u32 %v8525, 4294901760
    %8527 = vmatpush1.msra.mxu0 %v8526
    %8528 = vmatprep.subr.mxu0 0.0
    %v8529 = vand.u32 %v2710, 4294901760
    %v8530 = vsub.f32 %v2710, %v8529
    %v8531 = vand.u32 %v8530, 4294901760
    %v8532 = vsub.f32 %v8530, %v8531
    %v8533 = vand.u32 %v8532, 4294901760
    %8534 = vmatpush2.msra.mxu0 %v8533
    %8535 = vmatprep.subr.mxu0 0.0
    %v8536 = vand.u32 %v2707, 4294901760
    %v8537 = vsub.f32 %v2707, %v8536
    %v8538 = vand.u32 %v8537, 4294901760
    %v8539 = vsub.f32 %v8537, %v8538
    %v8540 = vand.u32 %v8539, 4294901760
    %8541 = vmatpush2.msra.mxu0 %v8540
    %8542 = vmatprep.subr.mxu0 0.0
    %v8543 = vand.u32 %v2704, 4294901760
    %v8544 = vsub.f32 %v2704, %v8543
    %v8545 = vand.u32 %v8544, 4294901760
    %v8546 = vsub.f32 %v8544, %v8545
    %v8547 = vand.u32 %v8546, 4294901760
    %8548 = vmatpush2.msra.mxu0 %v8547
    %8549 = vmatprep.subr.mxu0 0.0
    %v8550 = vand.u32 %v2701, 4294901760
    %v8551 = vsub.f32 %v2701, %v8550
    %v8552 = vand.u32 %v8551, 4294901760
    %v8553 = vsub.f32 %v8551, %v8552
    %v8554 = vand.u32 %v8553, 4294901760
    %8555 = vmatpush2.msra.mxu0 %v8554
    %8556 = vmatprep.subr.mxu0 0.0
    %v8557 = vand.u32 %v2698, 4294901760
    %v8558 = vsub.f32 %v2698, %v8557
    %v8559 = vand.u32 %v8558, 4294901760
    %v8560 = vsub.f32 %v8558, %v8559
    %v8561 = vand.u32 %v8560, 4294901760
    %8562 = vmatpush2.msra.mxu0 %v8561
    %8563 = vmatprep.subr.mxu0 0.0
    %v8564 = vand.u32 %v2695, 4294901760
    %v8565 = vsub.f32 %v2695, %v8564
    %v8566 = vand.u32 %v8565, 4294901760
    %v8567 = vsub.f32 %v8565, %v8566
    %v8568 = vand.u32 %v8567, 4294901760
    %8569 = vmatpush2.msra.mxu0 %v8568
    %8570 = vmatprep.subr.mxu0 0.0
    %v8571 = vand.u32 %v2692, 4294901760
    %v8572 = vsub.f32 %v2692, %v8571
    %v8573 = vand.u32 %v8572, 4294901760
    %v8574 = vsub.f32 %v8572, %v8573
    %v8575 = vand.u32 %v8574, 4294901760
    %8576 = vmatpush2.msra.mxu0 %v8575
    %8577 = vmatprep.subr.mxu0 0.0
    %v8578 = vand.u32 %v2689, 4294901760
    %v8579 = vsub.f32 %v2689, %v8578
    %v8580 = vand.u32 %v8579, 4294901760
    %v8581 = vsub.f32 %v8579, %v8580
    %v8582 = vand.u32 %v8581, 4294901760
    %8583 = vmatpush2.msra.mxu0 %v8582
    %8584 = vmatprep.subr.mxu0 0.0
    %v8585 = vand.u32 %v2686, 4294901760
    %v8586 = vsub.f32 %v2686, %v8585
    %v8587 = vand.u32 %v8586, 4294901760
    %v8588 = vsub.f32 %v8586, %v8587
    %v8589 = vand.u32 %v8588, 4294901760
    %8590 = vmatpush2.msra.mxu0 %v8589
    %8591 = vmatprep.subr.mxu0 0.0
    %v8592 = vand.u32 %v2683, 4294901760
    %v8593 = vsub.f32 %v2683, %v8592
    %v8594 = vand.u32 %v8593, 4294901760
    %v8595 = vsub.f32 %v8593, %v8594
    %v8596 = vand.u32 %v8595, 4294901760
    %8597 = vmatpush2.msra.mxu0 %v8596
    %8598 = vmatprep.subr.mxu0 0.0
    %v8599 = vand.u32 %v2680, 4294901760
    %v8600 = vsub.f32 %v2680, %v8599
    %v8601 = vand.u32 %v8600, 4294901760
    %v8602 = vsub.f32 %v8600, %v8601
    %v8603 = vand.u32 %v8602, 4294901760
    %8604 = vmatpush2.msra.mxu0 %v8603
    %8605 = vmatprep.subr.mxu0 0.0
    %v8606 = vand.u32 %v2677, 4294901760
    %v8607 = vsub.f32 %v2677, %v8606
    %v8608 = vand.u32 %v8607, 4294901760
    %v8609 = vsub.f32 %v8607, %v8608
    %v8610 = vand.u32 %v8609, 4294901760
    %8611 = vmatpush2.msra.mxu0 %v8610
    %8612 = vmatprep.subr.mxu0 0.0
    %v8613 = vand.u32 %v2674, 4294901760
    %v8614 = vsub.f32 %v2674, %v8613
    %v8615 = vand.u32 %v8614, 4294901760
    %v8616 = vsub.f32 %v8614, %v8615
    %v8617 = vand.u32 %v8616, 4294901760
    %8618 = vmatpush2.msra.mxu0 %v8617
    %8619 = vmatprep.subr.mxu0 0.0
    %v8620 = vand.u32 %v2671, 4294901760
    %v8621 = vsub.f32 %v2671, %v8620
    %v8622 = vand.u32 %v8621, 4294901760
    %v8623 = vsub.f32 %v8621, %v8622
    %v8624 = vand.u32 %v8623, 4294901760
    %8625 = vmatpush2.msra.mxu0 %v8624
    %8626 = vmatprep.subr.mxu0 0.0
    %v8627 = vand.u32 %v2668, 4294901760
    %v8628 = vsub.f32 %v2668, %v8627
    %v8629 = vand.u32 %v8628, 4294901760
    %v8630 = vsub.f32 %v8628, %v8629
    %v8631 = vand.u32 %v8630, 4294901760
    %8632 = vmatpush2.msra.mxu0 %v8631
    %8633 = vmatprep.subr.mxu0 0.0
    %v8634 = vand.u32 %v2665, 4294901760
    %v8635 = vsub.f32 %v2665, %v8634
    %v8636 = vand.u32 %v8635, 4294901760
    %v8637 = vsub.f32 %v8635, %v8636
    %v8638 = vand.u32 %v8637, 4294901760
    %8639 = vmatpush2.msra.mxu0 %v8638
    %v8640 = vand.u32 %v2422, 4294901760
    %8641 = vmatprep.mubr.f32.mxu0 %v8640
    %v8642 = vand.u32 %v2421, 4294901760
    %8643 = vmatmul.mubr.f32.gmra.mxu0 %v8642
    %v8644 = vpop.f32.mrf.mxu0
    %v8645 = vadd.f32 %v8413, %v8644
    %v8646 = vpop.f32.mrf.mxu0
    %8647 = vdwg.mxu0
    %8648 = vmatprep.subr.mxu0 0.0
    %v8649 = vand.u32 %v2662, 4294901760
    %v8650 = vsub.f32 %v2662, %v8649
    %8651 = vmatpush1.msra.mxu0 %v8650
    %8652 = vmatprep.subr.mxu0 0.0
    %v8653 = vand.u32 %v2659, 4294901760
    %v8654 = vsub.f32 %v2659, %v8653
    %8655 = vmatpush1.msra.mxu0 %v8654
    %8656 = vmatprep.subr.mxu0 0.0
    %v8657 = vand.u32 %v2656, 4294901760
    %v8658 = vsub.f32 %v2656, %v8657
    %8659 = vmatpush1.msra.mxu0 %v8658
    %8660 = vmatprep.subr.mxu0 0.0
    %v8661 = vand.u32 %v2653, 4294901760
    %v8662 = vsub.f32 %v2653, %v8661
    %8663 = vmatpush1.msra.mxu0 %v8662
    %8664 = vmatprep.subr.mxu0 0.0
    %v8665 = vand.u32 %v2650, 4294901760
    %v8666 = vsub.f32 %v2650, %v8665
    %8667 = vmatpush1.msra.mxu0 %v8666
    %8668 = vmatprep.subr.mxu0 0.0
    %v8669 = vand.u32 %v2647, 4294901760
    %v8670 = vsub.f32 %v2647, %v8669
    %8671 = vmatpush1.msra.mxu0 %v8670
    %8672 = vmatprep.subr.mxu0 0.0
    %v8673 = vand.u32 %v2644, 4294901760
    %v8674 = vsub.f32 %v2644, %v8673
    %8675 = vmatpush1.msra.mxu0 %v8674
    %8676 = vmatprep.subr.mxu0 0.0
    %v8677 = vand.u32 %v2641, 4294901760
    %v8678 = vsub.f32 %v2641, %v8677
    %8679 = vmatpush1.msra.mxu0 %v8678
    %8680 = vmatprep.subr.mxu0 0.0
    %v8681 = vand.u32 %v2638, 4294901760
    %v8682 = vsub.f32 %v2638, %v8681
    %8683 = vmatpush1.msra.mxu0 %v8682
    %8684 = vmatprep.subr.mxu0 0.0
    %v8685 = vand.u32 %v2635, 4294901760
    %v8686 = vsub.f32 %v2635, %v8685
    %8687 = vmatpush1.msra.mxu0 %v8686
    %8688 = vmatprep.subr.mxu0 0.0
    %v8689 = vand.u32 %v2632, 4294901760
    %v8690 = vsub.f32 %v2632, %v8689
    %8691 = vmatpush1.msra.mxu0 %v8690
    %8692 = vmatprep.subr.mxu0 0.0
    %v8693 = vand.u32 %v2629, 4294901760
    %v8694 = vsub.f32 %v2629, %v8693
    %8695 = vmatpush1.msra.mxu0 %v8694
    %8696 = vmatprep.subr.mxu0 0.0
    %v8697 = vand.u32 %v2626, 4294901760
    %v8698 = vsub.f32 %v2626, %v8697
    %8699 = vmatpush1.msra.mxu0 %v8698
    %8700 = vmatprep.subr.mxu0 0.0
    %v8701 = vand.u32 %v2623, 4294901760
    %v8702 = vsub.f32 %v2623, %v8701
    %8703 = vmatpush1.msra.mxu0 %v8702
    %8704 = vmatprep.subr.mxu0 0.0
    %v8705 = vand.u32 %v2620, 4294901760
    %v8706 = vsub.f32 %v2620, %v8705
    %8707 = vmatpush1.msra.mxu0 %v8706
    %8708 = vmatprep.subr.mxu0 0.0
    %v8709 = vand.u32 %v2617, 4294901760
    %v8710 = vsub.f32 %v2617, %v8709
    %8711 = vmatpush1.msra.mxu0 %v8710
    %8712 = vmatprep.subr.mxu0 0.0
    %v8713 = vand.u32 %v2710, 4294901760
    %v8714 = vsub.f32 %v2710, %v8713
    %8715 = vmatpush2.msra.mxu0 %v8714
    %8716 = vmatprep.subr.mxu0 0.0
    %v8717 = vand.u32 %v2707, 4294901760
    %v8718 = vsub.f32 %v2707, %v8717
    %8719 = vmatpush2.msra.mxu0 %v8718
    %8720 = vmatprep.subr.mxu0 0.0
    %v8721 = vand.u32 %v2704, 4294901760
    %v8722 = vsub.f32 %v2704, %v8721
    %8723 = vmatpush2.msra.mxu0 %v8722
    %8724 = vmatprep.subr.mxu0 0.0
    %v8725 = vand.u32 %v2701, 4294901760
    %v8726 = vsub.f32 %v2701, %v8725
    %8727 = vmatpush2.msra.mxu0 %v8726
    %8728 = vmatprep.subr.mxu0 0.0
    %v8729 = vand.u32 %v2698, 4294901760
    %v8730 = vsub.f32 %v2698, %v8729
    %8731 = vmatpush2.msra.mxu0 %v8730
    %8732 = vmatprep.subr.mxu0 0.0
    %v8733 = vand.u32 %v2695, 4294901760
    %v8734 = vsub.f32 %v2695, %v8733
    %8735 = vmatpush2.msra.mxu0 %v8734
    %8736 = vmatprep.subr.mxu0 0.0
    %v8737 = vand.u32 %v2692, 4294901760
    %v8738 = vsub.f32 %v2692, %v8737
    %8739 = vmatpush2.msra.mxu0 %v8738
    %8740 = vmatprep.subr.mxu0 0.0
    %v8741 = vand.u32 %v2689, 4294901760
    %v8742 = vsub.f32 %v2689, %v8741
    %8743 = vmatpush2.msra.mxu0 %v8742
    %8744 = vmatprep.subr.mxu0 0.0
    %v8745 = vand.u32 %v2686, 4294901760
    %v8746 = vsub.f32 %v2686, %v8745
    %8747 = vmatpush2.msra.mxu0 %v8746
    %8748 = vmatprep.subr.mxu0 0.0
    %v8749 = vand.u32 %v2683, 4294901760
    %v8750 = vsub.f32 %v2683, %v8749
    %8751 = vmatpush2.msra.mxu0 %v8750
    %8752 = vmatprep.subr.mxu0 0.0
    %v8753 = vand.u32 %v2680, 4294901760
    %v8754 = vsub.f32 %v2680, %v8753
    %8755 = vmatpush2.msra.mxu0 %v8754
    %8756 = vmatprep.subr.mxu0 0.0
    %v8757 = vand.u32 %v2677, 4294901760
    %v8758 = vsub.f32 %v2677, %v8757
    %8759 = vmatpush2.msra.mxu0 %v8758
    %8760 = vmatprep.subr.mxu0 0.0
    %v8761 = vand.u32 %v2674, 4294901760
    %v8762 = vsub.f32 %v2674, %v8761
    %8763 = vmatpush2.msra.mxu0 %v8762
    %8764 = vmatprep.subr.mxu0 0.0
    %v8765 = vand.u32 %v2671, 4294901760
    %v8766 = vsub.f32 %v2671, %v8765
    %8767 = vmatpush2.msra.mxu0 %v8766
    %8768 = vmatprep.subr.mxu0 0.0
    %v8769 = vand.u32 %v2668, 4294901760
    %v8770 = vsub.f32 %v2668, %v8769
    %8771 = vmatpush2.msra.mxu0 %v8770
    %8772 = vmatprep.subr.mxu0 0.0
    %v8773 = vand.u32 %v2665, 4294901760
    %v8774 = vsub.f32 %v2665, %v8773
    %8775 = vmatpush2.msra.mxu0 %v8774
    %v8776 = vand.u32 %v2422, 4294901760
    %v8777 = vsub.f32 %v2422, %v8776
    %8778 = vmatprep.mubr.f32.mxu0 %v8777
    %v8779 = vand.u32 %v2421, 4294901760
    %v8780 = vsub.f32 %v2421, %v8779
    %8781 = vmatmul.mubr.f32.gmra.mxu0 %v8780
    %v8782 = vpop.f32.mrf.mxu0
    %v8783 = vadd.f32 %v8645, %v8782
    %v8784 = vpop.f32.mrf.mxu0
    %8785 = vdwg.mxu0
    %8786 = vmatprep.subr.mxu0 0.0
    %v8787 = vand.u32 %v2662, 4294901760
    %8788 = vmatpush1.msra.mxu0 %v8787
    %8789 = vmatprep.subr.mxu0 0.0
    %v8790 = vand.u32 %v2659, 4294901760
    %8791 = vmatpush1.msra.mxu0 %v8790
    %8792 = vmatprep.subr.mxu0 0.0
    %v8793 = vand.u32 %v2656, 4294901760
    %8794 = vmatpush1.msra.mxu0 %v8793
    %8795 = vmatprep.subr.mxu0 0.0
    %v8796 = vand.u32 %v2653, 4294901760
    %8797 = vmatpush1.msra.mxu0 %v8796
    %8798 = vmatprep.subr.mxu0 0.0
    %v8799 = vand.u32 %v2650, 4294901760
    %8800 = vmatpush1.msra.mxu0 %v8799
    %8801 = vmatprep.subr.mxu0 0.0
    %v8802 = vand.u32 %v2647, 4294901760
    %8803 = vmatpush1.msra.mxu0 %v8802
    %8804 = vmatprep.subr.mxu0 0.0
    %v8805 = vand.u32 %v2644, 4294901760
    %8806 = vmatpush1.msra.mxu0 %v8805
    %8807 = vmatprep.subr.mxu0 0.0
    %v8808 = vand.u32 %v2641, 4294901760
    %8809 = vmatpush1.msra.mxu0 %v8808
    %8810 = vmatprep.subr.mxu0 0.0
    %v8811 = vand.u32 %v2638, 4294901760
    %8812 = vmatpush1.msra.mxu0 %v8811
    %8813 = vmatprep.subr.mxu0 0.0
    %v8814 = vand.u32 %v2635, 4294901760
    %8815 = vmatpush1.msra.mxu0 %v8814
    %8816 = vmatprep.subr.mxu0 0.0
    %v8817 = vand.u32 %v2632, 4294901760
    %8818 = vmatpush1.msra.mxu0 %v8817
    %8819 = vmatprep.subr.mxu0 0.0
    %v8820 = vand.u32 %v2629, 4294901760
    %8821 = vmatpush1.msra.mxu0 %v8820
    %8822 = vmatprep.subr.mxu0 0.0
    %v8823 = vand.u32 %v2626, 4294901760
    %8824 = vmatpush1.msra.mxu0 %v8823
    %8825 = vmatprep.subr.mxu0 0.0
    %v8826 = vand.u32 %v2623, 4294901760
    %8827 = vmatpush1.msra.mxu0 %v8826
    %8828 = vmatprep.subr.mxu0 0.0
    %v8829 = vand.u32 %v2620, 4294901760
    %8830 = vmatpush1.msra.mxu0 %v8829
    %8831 = vmatprep.subr.mxu0 0.0
    %v8832 = vand.u32 %v2617, 4294901760
    %8833 = vmatpush1.msra.mxu0 %v8832
    %8834 = vmatprep.subr.mxu0 0.0
    %v8835 = vand.u32 %v2710, 4294901760
    %8836 = vmatpush2.msra.mxu0 %v8835
    %8837 = vmatprep.subr.mxu0 0.0
    %v8838 = vand.u32 %v2707, 4294901760
    %8839 = vmatpush2.msra.mxu0 %v8838
    %8840 = vmatprep.subr.mxu0 0.0
    %v8841 = vand.u32 %v2704, 4294901760
    %8842 = vmatpush2.msra.mxu0 %v8841
    %8843 = vmatprep.subr.mxu0 0.0
    %v8844 = vand.u32 %v2701, 4294901760
    %8845 = vmatpush2.msra.mxu0 %v8844
    %8846 = vmatprep.subr.mxu0 0.0
    %v8847 = vand.u32 %v2698, 4294901760
    %8848 = vmatpush2.msra.mxu0 %v8847
    %8849 = vmatprep.subr.mxu0 0.0
    %v8850 = vand.u32 %v2695, 4294901760
    %8851 = vmatpush2.msra.mxu0 %v8850
    %8852 = vmatprep.subr.mxu0 0.0
    %v8853 = vand.u32 %v2692, 4294901760
    %8854 = vmatpush2.msra.mxu0 %v8853
    %8855 = vmatprep.subr.mxu0 0.0
    %v8856 = vand.u32 %v2689, 4294901760
    %8857 = vmatpush2.msra.mxu0 %v8856
    %8858 = vmatprep.subr.mxu0 0.0
    %v8859 = vand.u32 %v2686, 4294901760
    %8860 = vmatpush2.msra.mxu0 %v8859
    %8861 = vmatprep.subr.mxu0 0.0
    %v8862 = vand.u32 %v2683, 4294901760
    %8863 = vmatpush2.msra.mxu0 %v8862
    %8864 = vmatprep.subr.mxu0 0.0
    %v8865 = vand.u32 %v2680, 4294901760
    %8866 = vmatpush2.msra.mxu0 %v8865
    %8867 = vmatprep.subr.mxu0 0.0
    %v8868 = vand.u32 %v2677, 4294901760
    %8869 = vmatpush2.msra.mxu0 %v8868
    %8870 = vmatprep.subr.mxu0 0.0
    %v8871 = vand.u32 %v2674, 4294901760
    %8872 = vmatpush2.msra.mxu0 %v8871
    %8873 = vmatprep.subr.mxu0 0.0
    %v8874 = vand.u32 %v2671, 4294901760
    %8875 = vmatpush2.msra.mxu0 %v8874
    %8876 = vmatprep.subr.mxu0 0.0
    %v8877 = vand.u32 %v2668, 4294901760
    %8878 = vmatpush2.msra.mxu0 %v8877
    %8879 = vmatprep.subr.mxu0 0.0
    %v8880 = vand.u32 %v2665, 4294901760
    %8881 = vmatpush2.msra.mxu0 %v8880
    %v8882 = vand.u32 %v2422, 4294901760
    %v8883 = vsub.f32 %v2422, %v8882
    %v8884 = vand.u32 %v8883, 4294901760
    %8885 = vmatprep.mubr.f32.mxu0 %v8884
    %v8886 = vand.u32 %v2421, 4294901760
    %v8887 = vsub.f32 %v2421, %v8886
    %v8888 = vand.u32 %v8887, 4294901760
    %8889 = vmatmul.mubr.f32.gmra.mxu0 %v8888
    %v8890 = vpop.f32.mrf.mxu0
    %v8891 = vadd.f32 %v8783, %v8890
    %v8892 = vpop.f32.mrf.mxu0
    %8893 = vdwg.mxu0
    %8894 = vmatprep.subr.mxu0 0.0
    %v8895 = vand.u32 %v2662, 4294901760
    %v8896 = vsub.f32 %v2662, %v8895
    %v8897 = vand.u32 %v8896, 4294901760
    %8898 = vmatpush1.msra.mxu0 %v8897
    %8899 = vmatprep.subr.mxu0 0.0
    %v8900 = vand.u32 %v2659, 4294901760
    %v8901 = vsub.f32 %v2659, %v8900
    %v8902 = vand.u32 %v8901, 4294901760
    %8903 = vmatpush1.msra.mxu0 %v8902
    %8904 = vmatprep.subr.mxu0 0.0
    %v8905 = vand.u32 %v2656, 4294901760
    %v8906 = vsub.f32 %v2656, %v8905
    %v8907 = vand.u32 %v8906, 4294901760
    %8908 = vmatpush1.msra.mxu0 %v8907
    %8909 = vmatprep.subr.mxu0 0.0
    %v8910 = vand.u32 %v2653, 4294901760
    %v8911 = vsub.f32 %v2653, %v8910
    %v8912 = vand.u32 %v8911, 4294901760
    %8913 = vmatpush1.msra.mxu0 %v8912
    %8914 = vmatprep.subr.mxu0 0.0
    %v8915 = vand.u32 %v2650, 4294901760
    %v8916 = vsub.f32 %v2650, %v8915
    %v8917 = vand.u32 %v8916, 4294901760
    %8918 = vmatpush1.msra.mxu0 %v8917
    %8919 = vmatprep.subr.mxu0 0.0
    %v8920 = vand.u32 %v2647, 4294901760
    %v8921 = vsub.f32 %v2647, %v8920
    %v8922 = vand.u32 %v8921, 4294901760
    %8923 = vmatpush1.msra.mxu0 %v8922
    %8924 = vmatprep.subr.mxu0 0.0
    %v8925 = vand.u32 %v2644, 4294901760
    %v8926 = vsub.f32 %v2644, %v8925
    %v8927 = vand.u32 %v8926, 4294901760
    %8928 = vmatpush1.msra.mxu0 %v8927
    %8929 = vmatprep.subr.mxu0 0.0
    %v8930 = vand.u32 %v2641, 4294901760
    %v8931 = vsub.f32 %v2641, %v8930
    %v8932 = vand.u32 %v8931, 4294901760
    %8933 = vmatpush1.msra.mxu0 %v8932
    %8934 = vmatprep.subr.mxu0 0.0
    %v8935 = vand.u32 %v2638, 4294901760
    %v8936 = vsub.f32 %v2638, %v8935
    %v8937 = vand.u32 %v8936, 4294901760
    %8938 = vmatpush1.msra.mxu0 %v8937
    %8939 = vmatprep.subr.mxu0 0.0
    %v8940 = vand.u32 %v2635, 4294901760
    %v8941 = vsub.f32 %v2635, %v8940
    %v8942 = vand.u32 %v8941, 4294901760
    %8943 = vmatpush1.msra.mxu0 %v8942
    %8944 = vmatprep.subr.mxu0 0.0
    %v8945 = vand.u32 %v2632, 4294901760
    %v8946 = vsub.f32 %v2632, %v8945
    %v8947 = vand.u32 %v8946, 4294901760
    %8948 = vmatpush1.msra.mxu0 %v8947
    %8949 = vmatprep.subr.mxu0 0.0
    %v8950 = vand.u32 %v2629, 4294901760
    %v8951 = vsub.f32 %v2629, %v8950
    %v8952 = vand.u32 %v8951, 4294901760
    %8953 = vmatpush1.msra.mxu0 %v8952
    %8954 = vmatprep.subr.mxu0 0.0
    %v8955 = vand.u32 %v2626, 4294901760
    %v8956 = vsub.f32 %v2626, %v8955
    %v8957 = vand.u32 %v8956, 4294901760
    %8958 = vmatpush1.msra.mxu0 %v8957
    %8959 = vmatprep.subr.mxu0 0.0
    %v8960 = vand.u32 %v2623, 4294901760
    %v8961 = vsub.f32 %v2623, %v8960
    %v8962 = vand.u32 %v8961, 4294901760
    %8963 = vmatpush1.msra.mxu0 %v8962
    %8964 = vmatprep.subr.mxu0 0.0
    %v8965 = vand.u32 %v2620, 4294901760
    %v8966 = vsub.f32 %v2620, %v8965
    %v8967 = vand.u32 %v8966, 4294901760
    %8968 = vmatpush1.msra.mxu0 %v8967
    %8969 = vmatprep.subr.mxu0 0.0
    %v8970 = vand.u32 %v2617, 4294901760
    %v8971 = vsub.f32 %v2617, %v8970
    %v8972 = vand.u32 %v8971, 4294901760
    %8973 = vmatpush1.msra.mxu0 %v8972
    %8974 = vmatprep.subr.mxu0 0.0
    %v8975 = vand.u32 %v2710, 4294901760
    %v8976 = vsub.f32 %v2710, %v8975
    %v8977 = vand.u32 %v8976, 4294901760
    %8978 = vmatpush2.msra.mxu0 %v8977
    %8979 = vmatprep.subr.mxu0 0.0
    %v8980 = vand.u32 %v2707, 4294901760
    %v8981 = vsub.f32 %v2707, %v8980
    %v8982 = vand.u32 %v8981, 4294901760
    %8983 = vmatpush2.msra.mxu0 %v8982
    %8984 = vmatprep.subr.mxu0 0.0
    %v8985 = vand.u32 %v2704, 4294901760
    %v8986 = vsub.f32 %v2704, %v8985
    %v8987 = vand.u32 %v8986, 4294901760
    %8988 = vmatpush2.msra.mxu0 %v8987
    %8989 = vmatprep.subr.mxu0 0.0
    %v8990 = vand.u32 %v2701, 4294901760
    %v8991 = vsub.f32 %v2701, %v8990
    %v8992 = vand.u32 %v8991, 4294901760
    %8993 = vmatpush2.msra.mxu0 %v8992
    %8994 = vmatprep.subr.mxu0 0.0
    %v8995 = vand.u32 %v2698, 4294901760
    %v8996 = vsub.f32 %v2698, %v8995
    %v8997 = vand.u32 %v8996, 4294901760
    %8998 = vmatpush2.msra.mxu0 %v8997
    %8999 = vmatprep.subr.mxu0 0.0
    %v9000 = vand.u32 %v2695, 4294901760
    %v9001 = vsub.f32 %v2695, %v9000
    %v9002 = vand.u32 %v9001, 4294901760
    %9003 = vmatpush2.msra.mxu0 %v9002
    %9004 = vmatprep.subr.mxu0 0.0
    %v9005 = vand.u32 %v2692, 4294901760
    %v9006 = vsub.f32 %v2692, %v9005
    %v9007 = vand.u32 %v9006, 4294901760
    %9008 = vmatpush2.msra.mxu0 %v9007
    %9009 = vmatprep.subr.mxu0 0.0
    %v9010 = vand.u32 %v2689, 4294901760
    %v9011 = vsub.f32 %v2689, %v9010
    %v9012 = vand.u32 %v9011, 4294901760
    %9013 = vmatpush2.msra.mxu0 %v9012
    %9014 = vmatprep.subr.mxu0 0.0
    %v9015 = vand.u32 %v2686, 4294901760
    %v9016 = vsub.f32 %v2686, %v9015
    %v9017 = vand.u32 %v9016, 4294901760
    %9018 = vmatpush2.msra.mxu0 %v9017
    %9019 = vmatprep.subr.mxu0 0.0
    %v9020 = vand.u32 %v2683, 4294901760
    %v9021 = vsub.f32 %v2683, %v9020
    %v9022 = vand.u32 %v9021, 4294901760
    %9023 = vmatpush2.msra.mxu0 %v9022
    %9024 = vmatprep.subr.mxu0 0.0
    %v9025 = vand.u32 %v2680, 4294901760
    %v9026 = vsub.f32 %v2680, %v9025
    %v9027 = vand.u32 %v9026, 4294901760
    %9028 = vmatpush2.msra.mxu0 %v9027
    %9029 = vmatprep.subr.mxu0 0.0
    %v9030 = vand.u32 %v2677, 4294901760
    %v9031 = vsub.f32 %v2677, %v9030
    %v9032 = vand.u32 %v9031, 4294901760
    %9033 = vmatpush2.msra.mxu0 %v9032
    %9034 = vmatprep.subr.mxu0 0.0
    %v9035 = vand.u32 %v2674, 4294901760
    %v9036 = vsub.f32 %v2674, %v9035
    %v9037 = vand.u32 %v9036, 4294901760
    %9038 = vmatpush2.msra.mxu0 %v9037
    %9039 = vmatprep.subr.mxu0 0.0
    %v9040 = vand.u32 %v2671, 4294901760
    %v9041 = vsub.f32 %v2671, %v9040
    %v9042 = vand.u32 %v9041, 4294901760
    %9043 = vmatpush2.msra.mxu0 %v9042
    %9044 = vmatprep.subr.mxu0 0.0
    %v9045 = vand.u32 %v2668, 4294901760
    %v9046 = vsub.f32 %v2668, %v9045
    %v9047 = vand.u32 %v9046, 4294901760
    %9048 = vmatpush2.msra.mxu0 %v9047
    %9049 = vmatprep.subr.mxu0 0.0
    %v9050 = vand.u32 %v2665, 4294901760
    %v9051 = vsub.f32 %v2665, %v9050
    %v9052 = vand.u32 %v9051, 4294901760
    %9053 = vmatpush2.msra.mxu0 %v9052
    %v9054 = vand.u32 %v2422, 4294901760
    %9055 = vmatprep.mubr.f32.mxu0 %v9054
    %v9056 = vand.u32 %v2421, 4294901760
    %9057 = vmatmul.mubr.f32.gmra.mxu0 %v9056
    %v9058 = vpop.f32.mrf.mxu0
    %v9059 = vadd.f32 %v8891, %v9058
    %v9060 = vpop.f32.mrf.mxu0
    %9061 = vdwg.mxu0
    %9062 = vmatprep.subr.mxu0 0.0
    %v9063 = vand.u32 %v2662, 4294901760
    %9064 = vmatpush1.msra.mxu0 %v9063
    %9065 = vmatprep.subr.mxu0 0.0
    %v9066 = vand.u32 %v2659, 4294901760
    %9067 = vmatpush1.msra.mxu0 %v9066
    %9068 = vmatprep.subr.mxu0 0.0
    %v9069 = vand.u32 %v2656, 4294901760
    %9070 = vmatpush1.msra.mxu0 %v9069
    %9071 = vmatprep.subr.mxu0 0.0
    %v9072 = vand.u32 %v2653, 4294901760
    %9073 = vmatpush1.msra.mxu0 %v9072
    %9074 = vmatprep.subr.mxu0 0.0
    %v9075 = vand.u32 %v2650, 4294901760
    %9076 = vmatpush1.msra.mxu0 %v9075
    %9077 = vmatprep.subr.mxu0 0.0
    %v9078 = vand.u32 %v2647, 4294901760
    %9079 = vmatpush1.msra.mxu0 %v9078
    %9080 = vmatprep.subr.mxu0 0.0
    %v9081 = vand.u32 %v2644, 4294901760
    %9082 = vmatpush1.msra.mxu0 %v9081
    %9083 = vmatprep.subr.mxu0 0.0
    %v9084 = vand.u32 %v2641, 4294901760
    %9085 = vmatpush1.msra.mxu0 %v9084
    %9086 = vmatprep.subr.mxu0 0.0
    %v9087 = vand.u32 %v2638, 4294901760
    %9088 = vmatpush1.msra.mxu0 %v9087
    %9089 = vmatprep.subr.mxu0 0.0
    %v9090 = vand.u32 %v2635, 4294901760
    %9091 = vmatpush1.msra.mxu0 %v9090
    %9092 = vmatprep.subr.mxu0 0.0
    %v9093 = vand.u32 %v2632, 4294901760
    %9094 = vmatpush1.msra.mxu0 %v9093
    %9095 = vmatprep.subr.mxu0 0.0
    %v9096 = vand.u32 %v2629, 4294901760
    %9097 = vmatpush1.msra.mxu0 %v9096
    %9098 = vmatprep.subr.mxu0 0.0
    %v9099 = vand.u32 %v2626, 4294901760
    %9100 = vmatpush1.msra.mxu0 %v9099
    %9101 = vmatprep.subr.mxu0 0.0
    %v9102 = vand.u32 %v2623, 4294901760
    %9103 = vmatpush1.msra.mxu0 %v9102
    %9104 = vmatprep.subr.mxu0 0.0
    %v9105 = vand.u32 %v2620, 4294901760
    %9106 = vmatpush1.msra.mxu0 %v9105
    %9107 = vmatprep.subr.mxu0 0.0
    %v9108 = vand.u32 %v2617, 4294901760
    %9109 = vmatpush1.msra.mxu0 %v9108
    %9110 = vmatprep.subr.mxu0 0.0
    %v9111 = vand.u32 %v2710, 4294901760
    %9112 = vmatpush2.msra.mxu0 %v9111
    %9113 = vmatprep.subr.mxu0 0.0
    %v9114 = vand.u32 %v2707, 4294901760
    %9115 = vmatpush2.msra.mxu0 %v9114
    %9116 = vmatprep.subr.mxu0 0.0
    %v9117 = vand.u32 %v2704, 4294901760
    %9118 = vmatpush2.msra.mxu0 %v9117
    %9119 = vmatprep.subr.mxu0 0.0
    %v9120 = vand.u32 %v2701, 4294901760
    %9121 = vmatpush2.msra.mxu0 %v9120
    %9122 = vmatprep.subr.mxu0 0.0
    %v9123 = vand.u32 %v2698, 4294901760
    %9124 = vmatpush2.msra.mxu0 %v9123
    %9125 = vmatprep.subr.mxu0 0.0
    %v9126 = vand.u32 %v2695, 4294901760
    %9127 = vmatpush2.msra.mxu0 %v9126
    %9128 = vmatprep.subr.mxu0 0.0
    %v9129 = vand.u32 %v2692, 4294901760
    %9130 = vmatpush2.msra.mxu0 %v9129
    %9131 = vmatprep.subr.mxu0 0.0
    %v9132 = vand.u32 %v2689, 4294901760
    %9133 = vmatpush2.msra.mxu0 %v9132
    %9134 = vmatprep.subr.mxu0 0.0
    %v9135 = vand.u32 %v2686, 4294901760
    %9136 = vmatpush2.msra.mxu0 %v9135
    %9137 = vmatprep.subr.mxu0 0.0
    %v9138 = vand.u32 %v2683, 4294901760
    %9139 = vmatpush2.msra.mxu0 %v9138
    %9140 = vmatprep.subr.mxu0 0.0
    %v9141 = vand.u32 %v2680, 4294901760
    %9142 = vmatpush2.msra.mxu0 %v9141
    %9143 = vmatprep.subr.mxu0 0.0
    %v9144 = vand.u32 %v2677, 4294901760
    %9145 = vmatpush2.msra.mxu0 %v9144
    %9146 = vmatprep.subr.mxu0 0.0
    %v9147 = vand.u32 %v2674, 4294901760
    %9148 = vmatpush2.msra.mxu0 %v9147
    %9149 = vmatprep.subr.mxu0 0.0
    %v9150 = vand.u32 %v2671, 4294901760
    %9151 = vmatpush2.msra.mxu0 %v9150
    %9152 = vmatprep.subr.mxu0 0.0
    %v9153 = vand.u32 %v2668, 4294901760
    %9154 = vmatpush2.msra.mxu0 %v9153
    %9155 = vmatprep.subr.mxu0 0.0
    %v9156 = vand.u32 %v2665, 4294901760
    %9157 = vmatpush2.msra.mxu0 %v9156
    %v9158 = vand.u32 %v2422, 4294901760
    %9159 = vmatprep.mubr.f32.mxu0 %v9158
    %v9160 = vand.u32 %v2421, 4294901760
    %9161 = vmatmul.mubr.f32.gmra.mxu0 %v9160
    %v9162 = vpop.f32.mrf.mxu0
    %v9163 = vadd.f32 %v9059, %v9162
    %v9164 = vpop.f32.mrf.mxu0
    %9165 = vdwg.mxu0
    %vm9166 = vcmp.gt.f32.partialorder %v6576, 0.0
    %vm9167 = vcmp.gt.f32.partialorder %v6578, 0.0
    %vm9168 = vcmp.gt.f32.partialorder %v9163, 0.0
    %v9169 = vmul.f32 %v6576, 0.01
    %v9170 = vmul.f32 %v6578, 0.01
    %v9171 = vmul.f32 %v9163, 0.01
    %v9172 = vsel %vm9166, %v6576, %v9169
    %v9173 = vsel %vm9167, %v6578, %v9170
    %v9174 = vsel %vm9168, %v9163, %v9171
    %v9175 = vld [vmem:[%s5] sm:$0xff]
    %v9176 = vld [vmem:[%s5 + $0x8] sm:$0xff]
    %v9177 = vld [vmem:[%s5 + $0x10] sm:$0xff]
    %v9178 = vld [vmem:[%s5 + $0x18] sm:$0xff]
    %v9179 = vld [vmem:[%s5 + $0x20] sm:$0xff]
    %v9180 = vld [vmem:[%s5 + $0x28] sm:$0xff]
    %v9181 = vld [vmem:[%s5 + $0x30] sm:$0xff]
    %v9182 = vld [vmem:[%s5 + $0x38] sm:$0xff]
    %v9183 = vld [vmem:[%s5 + $0x40] sm:$0xff]
    %v9184 = vld [vmem:[%s5 + $0x48] sm:$0xff]
    %v9185 = vld [vmem:[%s5 + $0x50] sm:$0xff]
    %v9186 = vld [vmem:[%s5 + $0x58] sm:$0xff]
    %v9187 = vld [vmem:[%s5 + $0x60] sm:$0xff]
    %v9188 = vld [vmem:[%s5 + $0x68] sm:$0xff]
    %v9189 = vld [vmem:[%s5 + $0x70] sm:$0xff]
    %v9190 = vld [vmem:[%s5 + $0x78] sm:$0xff]
    %v9191 = vld [vmem:[%s5 + $0x80] sm:$0xff]
    %v9192 = vld [vmem:[%s5 + $0x88] sm:$0xff]
    %v9193 = vld [vmem:[%s5 + $0x90] sm:$0xff]
    %v9194 = vld [vmem:[%s5 + $0x98] sm:$0xff]
    %v9195 = vld [vmem:[%s5 + $0xa0] sm:$0xff]
    %v9196 = vld [vmem:[%s5 + $0xa8] sm:$0xff]
    %v9197 = vld [vmem:[%s5 + $0xb0] sm:$0xff]
    %v9198 = vld [vmem:[%s5 + $0xb8] sm:$0xff]
    %v9199 = vld [vmem:[%s5 + $0xc0] sm:$0xff]
    %v9200 = vld [vmem:[%s5 + $0xc8] sm:$0xff]
    %v9201 = vld [vmem:[%s5 + $0xd0] sm:$0xff]
    %v9202 = vld [vmem:[%s5 + $0xd8] sm:$0xff]
    %v9203 = vld [vmem:[%s5 + $0xe0] sm:$0xff]
    %v9204 = vld [vmem:[%s5 + $0xe8] sm:$0xff]
    %v9205 = vld [vmem:[%s5 + $0xf0] sm:$0xff]
    %v9206 = vld [vmem:[%s5 + $0xf8] sm:$0xff]
    %v9207 = vld [vmem:[%s5 + $0x100] sm:$0xff]
    %v9208 = vld [vmem:[%s5 + $0x108] sm:$0xff]
    %v9209 = vld [vmem:[%s5 + $0x110] sm:$0xff]
    %v9210 = vld [vmem:[%s5 + $0x118] sm:$0xff]
    %v9211 = vld [vmem:[%s5 + $0x120] sm:$0xff]
    %v9212 = vld [vmem:[%s5 + $0x128] sm:$0xff]
    %v9213 = vld [vmem:[%s5 + $0x130] sm:$0xff]
    %v9214 = vld [vmem:[%s5 + $0x138] sm:$0xff]
    %v9215 = vld [vmem:[%s5 + $0x140] sm:$0xff]
    %v9216 = vld [vmem:[%s5 + $0x148] sm:$0xff]
    %v9217 = vld [vmem:[%s5 + $0x150] sm:$0xff]
    %v9218 = vld [vmem:[%s5 + $0x158] sm:$0xff]
    %v9219 = vld [vmem:[%s5 + $0x160] sm:$0xff]
    %v9220 = vld [vmem:[%s5 + $0x168] sm:$0xff]
    %v9221 = vld [vmem:[%s5 + $0x170] sm:$0xff]
    %v9222 = vld [vmem:[%s5 + $0x178] sm:$0xff]
    %v9223 = vld [vmem:[#allocation10] sm:$0x1]
    %v9225 = vlaneseq
    %v9226 = vshrl.u32 %v9225, 7
    %v9227 = vsub.s32 0, %v9226
    %v9228 = vrot.slane %v9223, %v9227
    %9230 = vmatprep.subr.mxu0 0.0
    %v9231 = vand.u32 %v9190, 4294901760
    %9232 = vmatpush1.msra.mxu0 %v9231
    %9233 = vmatprep.subr.mxu0 0.0
    %v9234 = vand.u32 %v9189, 4294901760
    %9235 = vmatpush1.msra.mxu0 %v9234
    %9236 = vmatprep.subr.mxu0 0.0
    %v9237 = vand.u32 %v9188, 4294901760
    %9238 = vmatpush1.msra.mxu0 %v9237
    %9239 = vmatprep.subr.mxu0 0.0
    %v9240 = vand.u32 %v9187, 4294901760
    %9241 = vmatpush1.msra.mxu0 %v9240
    %9242 = vmatprep.subr.mxu0 0.0
    %v9243 = vand.u32 %v9186, 4294901760
    %9244 = vmatpush1.msra.mxu0 %v9243
    %9245 = vmatprep.subr.mxu0 0.0
    %v9246 = vand.u32 %v9185, 4294901760
    %9247 = vmatpush1.msra.mxu0 %v9246
    %9248 = vmatprep.subr.mxu0 0.0
    %v9249 = vand.u32 %v9184, 4294901760
    %9250 = vmatpush1.msra.mxu0 %v9249
    %9251 = vmatprep.subr.mxu0 0.0
    %v9252 = vand.u32 %v9183, 4294901760
    %9253 = vmatpush1.msra.mxu0 %v9252
    %9254 = vmatprep.subr.mxu0 0.0
    %v9255 = vand.u32 %v9182, 4294901760
    %9256 = vmatpush1.msra.mxu0 %v9255
    %9257 = vmatprep.subr.mxu0 0.0
    %v9258 = vand.u32 %v9181, 4294901760
    %9259 = vmatpush1.msra.mxu0 %v9258
    %9260 = vmatprep.subr.mxu0 0.0
    %v9261 = vand.u32 %v9180, 4294901760
    %9262 = vmatpush1.msra.mxu0 %v9261
    %9263 = vmatprep.subr.mxu0 0.0
    %v9264 = vand.u32 %v9179, 4294901760
    %9265 = vmatpush1.msra.mxu0 %v9264
    %9266 = vmatprep.subr.mxu0 0.0
    %v9267 = vand.u32 %v9178, 4294901760
    %9268 = vmatpush1.msra.mxu0 %v9267
    %9269 = vmatprep.subr.mxu0 0.0
    %v9270 = vand.u32 %v9177, 4294901760
    %9271 = vmatpush1.msra.mxu0 %v9270
    %9272 = vmatprep.subr.mxu0 0.0
    %v9273 = vand.u32 %v9176, 4294901760
    %9274 = vmatpush1.msra.mxu0 %v9273
    %9275 = vmatprep.subr.mxu0 0.0
    %v9276 = vand.u32 %v9175, 4294901760
    %9277 = vmatpush1.msra.mxu0 %v9276
    %9278 = vmatprep.subr.mxu0 0.0
    %v9279 = vand.u32 %v9206, 4294901760
    %9280 = vmatpush2.msra.mxu0 %v9279
    %9281 = vmatprep.subr.mxu0 0.0
    %v9282 = vand.u32 %v9205, 4294901760
    %9283 = vmatpush2.msra.mxu0 %v9282
    %9284 = vmatprep.subr.mxu0 0.0
    %v9285 = vand.u32 %v9204, 4294901760
    %9286 = vmatpush2.msra.mxu0 %v9285
    %9287 = vmatprep.subr.mxu0 0.0
    %v9288 = vand.u32 %v9203, 4294901760
    %9289 = vmatpush2.msra.mxu0 %v9288
    %9290 = vmatprep.subr.mxu0 0.0
    %v9291 = vand.u32 %v9202, 4294901760
    %9292 = vmatpush2.msra.mxu0 %v9291
    %9293 = vmatprep.subr.mxu0 0.0
    %v9294 = vand.u32 %v9201, 4294901760
    %9295 = vmatpush2.msra.mxu0 %v9294
    %9296 = vmatprep.subr.mxu0 0.0
    %v9297 = vand.u32 %v9200, 4294901760
    %9298 = vmatpush2.msra.mxu0 %v9297
    %9299 = vmatprep.subr.mxu0 0.0
    %v9300 = vand.u32 %v9199, 4294901760
    %9301 = vmatpush2.msra.mxu0 %v9300
    %9302 = vmatprep.subr.mxu0 0.0
    %v9303 = vand.u32 %v9198, 4294901760
    %9304 = vmatpush2.msra.mxu0 %v9303
    %9305 = vmatprep.subr.mxu0 0.0
    %v9306 = vand.u32 %v9197, 4294901760
    %9307 = vmatpush2.msra.mxu0 %v9306
    %9308 = vmatprep.subr.mxu0 0.0
    %v9309 = vand.u32 %v9196, 4294901760
    %9310 = vmatpush2.msra.mxu0 %v9309
    %9311 = vmatprep.subr.mxu0 0.0
    %v9312 = vand.u32 %v9195, 4294901760
    %9313 = vmatpush2.msra.mxu0 %v9312
    %9314 = vmatprep.subr.mxu0 0.0
    %v9315 = vand.u32 %v9194, 4294901760
    %9316 = vmatpush2.msra.mxu0 %v9315
    %9317 = vmatprep.subr.mxu0 0.0
    %v9318 = vand.u32 %v9193, 4294901760
    %9319 = vmatpush2.msra.mxu0 %v9318
    %9320 = vmatprep.subr.mxu0 0.0
    %v9321 = vand.u32 %v9192, 4294901760
    %9322 = vmatpush2.msra.mxu0 %v9321
    %9323 = vmatprep.subr.mxu0 0.0
    %v9324 = vand.u32 %v9191, 4294901760
    %9325 = vmatpush2.msra.mxu0 %v9324
    %v9326 = vand.u32 %v9173, 4294901760
    %v9327 = vsub.f32 %v9173, %v9326
    %v9328 = vand.u32 %v9327, 4294901760
    %v9329 = vsub.f32 %v9327, %v9328
    %v9330 = vand.u32 %v9329, 4294901760
    %9331 = vmatprep.mubr.f32.mxu0 %v9330
    %v9332 = vand.u32 %v9172, 4294901760
    %v9333 = vsub.f32 %v9172, %v9332
    %v9334 = vand.u32 %v9333, 4294901760
    %v9335 = vsub.f32 %v9333, %v9334
    %v9336 = vand.u32 %v9335, 4294901760
    %9337 = vmatmul.mubr.f32.gmra.mxu0 %v9336
    %v9338 = vpop.f32.mrf.mxu0
    %v9339 = vadd.f32 %v9228, %v9338
    %v9340 = vpop.f32.mrf.mxu0
    %9341 = vdwg.mxu0
    %9342 = vmatprep.subr.mxu0 0.0
    %v9343 = vand.u32 %v9190, 4294901760
    %v9344 = vsub.f32 %v9190, %v9343
    %v9345 = vand.u32 %v9344, 4294901760
    %v9346 = vsub.f32 %v9344, %v9345
    %v9347 = vand.u32 %v9346, 4294901760
    %9348 = vmatpush1.msra.mxu0 %v9347
    %9349 = vmatprep.subr.mxu0 0.0
    %v9350 = vand.u32 %v9189, 4294901760
    %v9351 = vsub.f32 %v9189, %v9350
    %v9352 = vand.u32 %v9351, 4294901760
    %v9353 = vsub.f32 %v9351, %v9352
    %v9354 = vand.u32 %v9353, 4294901760
    %9355 = vmatpush1.msra.mxu0 %v9354
    %9356 = vmatprep.subr.mxu0 0.0
    %v9357 = vand.u32 %v9188, 4294901760
    %v9358 = vsub.f32 %v9188, %v9357
    %v9359 = vand.u32 %v9358, 4294901760
    %v9360 = vsub.f32 %v9358, %v9359
    %v9361 = vand.u32 %v9360, 4294901760
    %9362 = vmatpush1.msra.mxu0 %v9361
    %9363 = vmatprep.subr.mxu0 0.0
    %v9364 = vand.u32 %v9187, 4294901760
    %v9365 = vsub.f32 %v9187, %v9364
    %v9366 = vand.u32 %v9365, 4294901760
    %v9367 = vsub.f32 %v9365, %v9366
    %v9368 = vand.u32 %v9367, 4294901760
    %9369 = vmatpush1.msra.mxu0 %v9368
    %9370 = vmatprep.subr.mxu0 0.0
    %v9371 = vand.u32 %v9186, 4294901760
    %v9372 = vsub.f32 %v9186, %v9371
    %v9373 = vand.u32 %v9372, 4294901760
    %v9374 = vsub.f32 %v9372, %v9373
    %v9375 = vand.u32 %v9374, 4294901760
    %9376 = vmatpush1.msra.mxu0 %v9375
    %9377 = vmatprep.subr.mxu0 0.0
    %v9378 = vand.u32 %v9185, 4294901760
    %v9379 = vsub.f32 %v9185, %v9378
    %v9380 = vand.u32 %v9379, 4294901760
    %v9381 = vsub.f32 %v9379, %v9380
    %v9382 = vand.u32 %v9381, 4294901760
    %9383 = vmatpush1.msra.mxu0 %v9382
    %9384 = vmatprep.subr.mxu0 0.0
    %v9385 = vand.u32 %v9184, 4294901760
    %v9386 = vsub.f32 %v9184, %v9385
    %v9387 = vand.u32 %v9386, 4294901760
    %v9388 = vsub.f32 %v9386, %v9387
    %v9389 = vand.u32 %v9388, 4294901760
    %9390 = vmatpush1.msra.mxu0 %v9389
    %9391 = vmatprep.subr.mxu0 0.0
    %v9392 = vand.u32 %v9183, 4294901760
    %v9393 = vsub.f32 %v9183, %v9392
    %v9394 = vand.u32 %v9393, 4294901760
    %v9395 = vsub.f32 %v9393, %v9394
    %v9396 = vand.u32 %v9395, 4294901760
    %9397 = vmatpush1.msra.mxu0 %v9396
    %9398 = vmatprep.subr.mxu0 0.0
    %v9399 = vand.u32 %v9182, 4294901760
    %v9400 = vsub.f32 %v9182, %v9399
    %v9401 = vand.u32 %v9400, 4294901760
    %v9402 = vsub.f32 %v9400, %v9401
    %v9403 = vand.u32 %v9402, 4294901760
    %9404 = vmatpush1.msra.mxu0 %v9403
    %9405 = vmatprep.subr.mxu0 0.0
    %v9406 = vand.u32 %v9181, 4294901760
    %v9407 = vsub.f32 %v9181, %v9406
    %v9408 = vand.u32 %v9407, 4294901760
    %v9409 = vsub.f32 %v9407, %v9408
    %v9410 = vand.u32 %v9409, 4294901760
    %9411 = vmatpush1.msra.mxu0 %v9410
    %9412 = vmatprep.subr.mxu0 0.0
    %v9413 = vand.u32 %v9180, 4294901760
    %v9414 = vsub.f32 %v9180, %v9413
    %v9415 = vand.u32 %v9414, 4294901760
    %v9416 = vsub.f32 %v9414, %v9415
    %v9417 = vand.u32 %v9416, 4294901760
    %9418 = vmatpush1.msra.mxu0 %v9417
    %9419 = vmatprep.subr.mxu0 0.0
    %v9420 = vand.u32 %v9179, 4294901760
    %v9421 = vsub.f32 %v9179, %v9420
    %v9422 = vand.u32 %v9421, 4294901760
    %v9423 = vsub.f32 %v9421, %v9422
    %v9424 = vand.u32 %v9423, 4294901760
    %9425 = vmatpush1.msra.mxu0 %v9424
    %9426 = vmatprep.subr.mxu0 0.0
    %v9427 = vand.u32 %v9178, 4294901760
    %v9428 = vsub.f32 %v9178, %v9427
    %v9429 = vand.u32 %v9428, 4294901760
    %v9430 = vsub.f32 %v9428, %v9429
    %v9431 = vand.u32 %v9430, 4294901760
    %9432 = vmatpush1.msra.mxu0 %v9431
    %9433 = vmatprep.subr.mxu0 0.0
    %v9434 = vand.u32 %v9177, 4294901760
    %v9435 = vsub.f32 %v9177, %v9434
    %v9436 = vand.u32 %v9435, 4294901760
    %v9437 = vsub.f32 %v9435, %v9436
    %v9438 = vand.u32 %v9437, 4294901760
    %9439 = vmatpush1.msra.mxu0 %v9438
    %9440 = vmatprep.subr.mxu0 0.0
    %v9441 = vand.u32 %v9176, 4294901760
    %v9442 = vsub.f32 %v9176, %v9441
    %v9443 = vand.u32 %v9442, 4294901760
    %v9444 = vsub.f32 %v9442, %v9443
    %v9445 = vand.u32 %v9444, 4294901760
    %9446 = vmatpush1.msra.mxu0 %v9445
    %9447 = vmatprep.subr.mxu0 0.0
    %v9448 = vand.u32 %v9175, 4294901760
    %v9449 = vsub.f32 %v9175, %v9448
    %v9450 = vand.u32 %v9449, 4294901760
    %v9451 = vsub.f32 %v9449, %v9450
    %v9452 = vand.u32 %v9451, 4294901760
    %9453 = vmatpush1.msra.mxu0 %v9452
    %9454 = vmatprep.subr.mxu0 0.0
    %v9455 = vand.u32 %v9206, 4294901760
    %v9456 = vsub.f32 %v9206, %v9455
    %v9457 = vand.u32 %v9456, 4294901760
    %v9458 = vsub.f32 %v9456, %v9457
    %v9459 = vand.u32 %v9458, 4294901760
    %9460 = vmatpush2.msra.mxu0 %v9459
    %9461 = vmatprep.subr.mxu0 0.0
    %v9462 = vand.u32 %v9205, 4294901760
    %v9463 = vsub.f32 %v9205, %v9462
    %v9464 = vand.u32 %v9463, 4294901760
    %v9465 = vsub.f32 %v9463, %v9464
    %v9466 = vand.u32 %v9465, 4294901760
    %9467 = vmatpush2.msra.mxu0 %v9466
    %9468 = vmatprep.subr.mxu0 0.0
    %v9469 = vand.u32 %v9204, 4294901760
    %v9470 = vsub.f32 %v9204, %v9469
    %v9471 = vand.u32 %v9470, 4294901760
    %v9472 = vsub.f32 %v9470, %v9471
    %v9473 = vand.u32 %v9472, 4294901760
    %9474 = vmatpush2.msra.mxu0 %v9473
    %9475 = vmatprep.subr.mxu0 0.0
    %v9476 = vand.u32 %v9203, 4294901760
    %v9477 = vsub.f32 %v9203, %v9476
    %v9478 = vand.u32 %v9477, 4294901760
    %v9479 = vsub.f32 %v9477, %v9478
    %v9480 = vand.u32 %v9479, 4294901760
    %9481 = vmatpush2.msra.mxu0 %v9480
    %9482 = vmatprep.subr.mxu0 0.0
    %v9483 = vand.u32 %v9202, 4294901760
    %v9484 = vsub.f32 %v9202, %v9483
    %v9485 = vand.u32 %v9484, 4294901760
    %v9486 = vsub.f32 %v9484, %v9485
    %v9487 = vand.u32 %v9486, 4294901760
    %9488 = vmatpush2.msra.mxu0 %v9487
    %9489 = vmatprep.subr.mxu0 0.0
    %v9490 = vand.u32 %v9201, 4294901760
    %v9491 = vsub.f32 %v9201, %v9490
    %v9492 = vand.u32 %v9491, 4294901760
    %v9493 = vsub.f32 %v9491, %v9492
    %v9494 = vand.u32 %v9493, 4294901760
    %9495 = vmatpush2.msra.mxu0 %v9494
    %9496 = vmatprep.subr.mxu0 0.0
    %v9497 = vand.u32 %v9200, 4294901760
    %v9498 = vsub.f32 %v9200, %v9497
    %v9499 = vand.u32 %v9498, 4294901760
    %v9500 = vsub.f32 %v9498, %v9499
    %v9501 = vand.u32 %v9500, 4294901760
    %9502 = vmatpush2.msra.mxu0 %v9501
    %9503 = vmatprep.subr.mxu0 0.0
    %v9504 = vand.u32 %v9199, 4294901760
    %v9505 = vsub.f32 %v9199, %v9504
    %v9506 = vand.u32 %v9505, 4294901760
    %v9507 = vsub.f32 %v9505, %v9506
    %v9508 = vand.u32 %v9507, 4294901760
    %9509 = vmatpush2.msra.mxu0 %v9508
    %9510 = vmatprep.subr.mxu0 0.0
    %v9511 = vand.u32 %v9198, 4294901760
    %v9512 = vsub.f32 %v9198, %v9511
    %v9513 = vand.u32 %v9512, 4294901760
    %v9514 = vsub.f32 %v9512, %v9513
    %v9515 = vand.u32 %v9514, 4294901760
    %9516 = vmatpush2.msra.mxu0 %v9515
    %9517 = vmatprep.subr.mxu0 0.0
    %v9518 = vand.u32 %v9197, 4294901760
    %v9519 = vsub.f32 %v9197, %v9518
    %v9520 = vand.u32 %v9519, 4294901760
    %v9521 = vsub.f32 %v9519, %v9520
    %v9522 = vand.u32 %v9521, 4294901760
    %9523 = vmatpush2.msra.mxu0 %v9522
    %9524 = vmatprep.subr.mxu0 0.0
    %v9525 = vand.u32 %v9196, 4294901760
    %v9526 = vsub.f32 %v9196, %v9525
    %v9527 = vand.u32 %v9526, 4294901760
    %v9528 = vsub.f32 %v9526, %v9527
    %v9529 = vand.u32 %v9528, 4294901760
    %9530 = vmatpush2.msra.mxu0 %v9529
    %9531 = vmatprep.subr.mxu0 0.0
    %v9532 = vand.u32 %v9195, 4294901760
    %v9533 = vsub.f32 %v9195, %v9532
    %v9534 = vand.u32 %v9533, 4294901760
    %v9535 = vsub.f32 %v9533, %v9534
    %v9536 = vand.u32 %v9535, 4294901760
    %9537 = vmatpush2.msra.mxu0 %v9536
    %9538 = vmatprep.subr.mxu0 0.0
    %v9539 = vand.u32 %v9194, 4294901760
    %v9540 = vsub.f32 %v9194, %v9539
    %v9541 = vand.u32 %v9540, 4294901760
    %v9542 = vsub.f32 %v9540, %v9541
    %v9543 = vand.u32 %v9542, 4294901760
    %9544 = vmatpush2.msra.mxu0 %v9543
    %9545 = vmatprep.subr.mxu0 0.0
    %v9546 = vand.u32 %v9193, 4294901760
    %v9547 = vsub.f32 %v9193, %v9546
    %v9548 = vand.u32 %v9547, 4294901760
    %v9549 = vsub.f32 %v9547, %v9548
    %v9550 = vand.u32 %v9549, 4294901760
    %9551 = vmatpush2.msra.mxu0 %v9550
    %9552 = vmatprep.subr.mxu0 0.0
    %v9553 = vand.u32 %v9192, 4294901760
    %v9554 = vsub.f32 %v9192, %v9553
    %v9555 = vand.u32 %v9554, 4294901760
    %v9556 = vsub.f32 %v9554, %v9555
    %v9557 = vand.u32 %v9556, 4294901760
    %9558 = vmatpush2.msra.mxu0 %v9557
    %9559 = vmatprep.subr.mxu0 0.0
    %v9560 = vand.u32 %v9191, 4294901760
    %v9561 = vsub.f32 %v9191, %v9560
    %v9562 = vand.u32 %v9561, 4294901760
    %v9563 = vsub.f32 %v9561, %v9562
    %v9564 = vand.u32 %v9563, 4294901760
    %9565 = vmatpush2.msra.mxu0 %v9564
    %v9566 = vand.u32 %v9173, 4294901760
    %9567 = vmatprep.mubr.f32.mxu0 %v9566
    %v9568 = vand.u32 %v9172, 4294901760
    %9569 = vmatmul.mubr.f32.gmra.mxu0 %v9568
    %v9570 = vpop.f32.mrf.mxu0
    %v9571 = vadd.f32 %v9339, %v9570
    %v9572 = vpop.f32.mrf.mxu0
    %9573 = vdwg.mxu0
    %9574 = vmatprep.subr.mxu0 0.0
    %v9575 = vand.u32 %v9190, 4294901760
    %v9576 = vsub.f32 %v9190, %v9575
    %9577 = vmatpush1.msra.mxu0 %v9576
    %9578 = vmatprep.subr.mxu0 0.0
    %v9579 = vand.u32 %v9189, 4294901760
    %v9580 = vsub.f32 %v9189, %v9579
    %9581 = vmatpush1.msra.mxu0 %v9580
    %9582 = vmatprep.subr.mxu0 0.0
    %v9583 = vand.u32 %v9188, 4294901760
    %v9584 = vsub.f32 %v9188, %v9583
    %9585 = vmatpush1.msra.mxu0 %v9584
    %9586 = vmatprep.subr.mxu0 0.0
    %v9587 = vand.u32 %v9187, 4294901760
    %v9588 = vsub.f32 %v9187, %v9587
    %9589 = vmatpush1.msra.mxu0 %v9588
    %9590 = vmatprep.subr.mxu0 0.0
    %v9591 = vand.u32 %v9186, 4294901760
    %v9592 = vsub.f32 %v9186, %v9591
    %9593 = vmatpush1.msra.mxu0 %v9592
    %9594 = vmatprep.subr.mxu0 0.0
    %v9595 = vand.u32 %v9185, 4294901760
    %v9596 = vsub.f32 %v9185, %v9595
    %9597 = vmatpush1.msra.mxu0 %v9596
    %9598 = vmatprep.subr.mxu0 0.0
    %v9599 = vand.u32 %v9184, 4294901760
    %v9600 = vsub.f32 %v9184, %v9599
    %9601 = vmatpush1.msra.mxu0 %v9600
    %9602 = vmatprep.subr.mxu0 0.0
    %v9603 = vand.u32 %v9183, 4294901760
    %v9604 = vsub.f32 %v9183, %v9603
    %9605 = vmatpush1.msra.mxu0 %v9604
    %9606 = vmatprep.subr.mxu0 0.0
    %v9607 = vand.u32 %v9182, 4294901760
    %v9608 = vsub.f32 %v9182, %v9607
    %9609 = vmatpush1.msra.mxu0 %v9608
    %9610 = vmatprep.subr.mxu0 0.0
    %v9611 = vand.u32 %v9181, 4294901760
    %v9612 = vsub.f32 %v9181, %v9611
    %9613 = vmatpush1.msra.mxu0 %v9612
    %9614 = vmatprep.subr.mxu0 0.0
    %v9615 = vand.u32 %v9180, 4294901760
    %v9616 = vsub.f32 %v9180, %v9615
    %9617 = vmatpush1.msra.mxu0 %v9616
    %9618 = vmatprep.subr.mxu0 0.0
    %v9619 = vand.u32 %v9179, 4294901760
    %v9620 = vsub.f32 %v9179, %v9619
    %9621 = vmatpush1.msra.mxu0 %v9620
    %9622 = vmatprep.subr.mxu0 0.0
    %v9623 = vand.u32 %v9178, 4294901760
    %v9624 = vsub.f32 %v9178, %v9623
    %9625 = vmatpush1.msra.mxu0 %v9624
    %9626 = vmatprep.subr.mxu0 0.0
    %v9627 = vand.u32 %v9177, 4294901760
    %v9628 = vsub.f32 %v9177, %v9627
    %9629 = vmatpush1.msra.mxu0 %v9628
    %9630 = vmatprep.subr.mxu0 0.0
    %v9631 = vand.u32 %v9176, 4294901760
    %v9632 = vsub.f32 %v9176, %v9631
    %9633 = vmatpush1.msra.mxu0 %v9632
    %9634 = vmatprep.subr.mxu0 0.0
    %v9635 = vand.u32 %v9175, 4294901760
    %v9636 = vsub.f32 %v9175, %v9635
    %9637 = vmatpush1.msra.mxu0 %v9636
    %9638 = vmatprep.subr.mxu0 0.0
    %v9639 = vand.u32 %v9206, 4294901760
    %v9640 = vsub.f32 %v9206, %v9639
    %9641 = vmatpush2.msra.mxu0 %v9640
    %9642 = vmatprep.subr.mxu0 0.0
    %v9643 = vand.u32 %v9205, 4294901760
    %v9644 = vsub.f32 %v9205, %v9643
    %9645 = vmatpush2.msra.mxu0 %v9644
    %9646 = vmatprep.subr.mxu0 0.0
    %v9647 = vand.u32 %v9204, 4294901760
    %v9648 = vsub.f32 %v9204, %v9647
    %9649 = vmatpush2.msra.mxu0 %v9648
    %9650 = vmatprep.subr.mxu0 0.0
    %v9651 = vand.u32 %v9203, 4294901760
    %v9652 = vsub.f32 %v9203, %v9651
    %9653 = vmatpush2.msra.mxu0 %v9652
    %9654 = vmatprep.subr.mxu0 0.0
    %v9655 = vand.u32 %v9202, 4294901760
    %v9656 = vsub.f32 %v9202, %v9655
    %9657 = vmatpush2.msra.mxu0 %v9656
    %9658 = vmatprep.subr.mxu0 0.0
    %v9659 = vand.u32 %v9201, 4294901760
    %v9660 = vsub.f32 %v9201, %v9659
    %9661 = vmatpush2.msra.mxu0 %v9660
    %9662 = vmatprep.subr.mxu0 0.0
    %v9663 = vand.u32 %v9200, 4294901760
    %v9664 = vsub.f32 %v9200, %v9663
    %9665 = vmatpush2.msra.mxu0 %v9664
    %9666 = vmatprep.subr.mxu0 0.0
    %v9667 = vand.u32 %v9199, 4294901760
    %v9668 = vsub.f32 %v9199, %v9667
    %9669 = vmatpush2.msra.mxu0 %v9668
    %9670 = vmatprep.subr.mxu0 0.0
    %v9671 = vand.u32 %v9198, 4294901760
    %v9672 = vsub.f32 %v9198, %v9671
    %9673 = vmatpush2.msra.mxu0 %v9672
    %9674 = vmatprep.subr.mxu0 0.0
    %v9675 = vand.u32 %v9197, 4294901760
    %v9676 = vsub.f32 %v9197, %v9675
    %9677 = vmatpush2.msra.mxu0 %v9676
    %9678 = vmatprep.subr.mxu0 0.0
    %v9679 = vand.u32 %v9196, 4294901760
    %v9680 = vsub.f32 %v9196, %v9679
    %9681 = vmatpush2.msra.mxu0 %v9680
    %9682 = vmatprep.subr.mxu0 0.0
    %v9683 = vand.u32 %v9195, 4294901760
    %v9684 = vsub.f32 %v9195, %v9683
    %9685 = vmatpush2.msra.mxu0 %v9684
    %9686 = vmatprep.subr.mxu0 0.0
    %v9687 = vand.u32 %v9194, 4294901760
    %v9688 = vsub.f32 %v9194, %v9687
    %9689 = vmatpush2.msra.mxu0 %v9688
    %9690 = vmatprep.subr.mxu0 0.0
    %v9691 = vand.u32 %v9193, 4294901760
    %v9692 = vsub.f32 %v9193, %v9691
    %9693 = vmatpush2.msra.mxu0 %v9692
    %9694 = vmatprep.subr.mxu0 0.0
    %v9695 = vand.u32 %v9192, 4294901760
    %v9696 = vsub.f32 %v9192, %v9695
    %9697 = vmatpush2.msra.mxu0 %v9696
    %9698 = vmatprep.subr.mxu0 0.0
    %v9699 = vand.u32 %v9191, 4294901760
    %v9700 = vsub.f32 %v9191, %v9699
    %9701 = vmatpush2.msra.mxu0 %v9700
    %v9702 = vand.u32 %v9173, 4294901760
    %v9703 = vsub.f32 %v9173, %v9702
    %9704 = vmatprep.mubr.f32.mxu0 %v9703
    %v9705 = vand.u32 %v9172, 4294901760
    %v9706 = vsub.f32 %v9172, %v9705
    %9707 = vmatmul.mubr.f32.gmra.mxu0 %v9706
    %v9708 = vpop.f32.mrf.mxu0
    %v9709 = vadd.f32 %v9571, %v9708
    %v9710 = vpop.f32.mrf.mxu0
    %9711 = vdwg.mxu0
    %9712 = vmatprep.subr.mxu0 0.0
    %v9713 = vand.u32 %v9190, 4294901760
    %9714 = vmatpush1.msra.mxu0 %v9713
    %9715 = vmatprep.subr.mxu0 0.0
    %v9716 = vand.u32 %v9189, 4294901760
    %9717 = vmatpush1.msra.mxu0 %v9716
    %9718 = vmatprep.subr.mxu0 0.0
    %v9719 = vand.u32 %v9188, 4294901760
    %9720 = vmatpush1.msra.mxu0 %v9719
    %9721 = vmatprep.subr.mxu0 0.0
    %v9722 = vand.u32 %v9187, 4294901760
    %9723 = vmatpush1.msra.mxu0 %v9722
    %9724 = vmatprep.subr.mxu0 0.0
    %v9725 = vand.u32 %v9186, 4294901760
    %9726 = vmatpush1.msra.mxu0 %v9725
    %9727 = vmatprep.subr.mxu0 0.0
    %v9728 = vand.u32 %v9185, 4294901760
    %9729 = vmatpush1.msra.mxu0 %v9728
    %9730 = vmatprep.subr.mxu0 0.0
    %v9731 = vand.u32 %v9184, 4294901760
    %9732 = vmatpush1.msra.mxu0 %v9731
    %9733 = vmatprep.subr.mxu0 0.0
    %v9734 = vand.u32 %v9183, 4294901760
    %9735 = vmatpush1.msra.mxu0 %v9734
    %9736 = vmatprep.subr.mxu0 0.0
    %v9737 = vand.u32 %v9182, 4294901760
    %9738 = vmatpush1.msra.mxu0 %v9737
    %9739 = vmatprep.subr.mxu0 0.0
    %v9740 = vand.u32 %v9181, 4294901760
    %9741 = vmatpush1.msra.mxu0 %v9740
    %9742 = vmatprep.subr.mxu0 0.0
    %v9743 = vand.u32 %v9180, 4294901760
    %9744 = vmatpush1.msra.mxu0 %v9743
    %9745 = vmatprep.subr.mxu0 0.0
    %v9746 = vand.u32 %v9179, 4294901760
    %9747 = vmatpush1.msra.mxu0 %v9746
    %9748 = vmatprep.subr.mxu0 0.0
    %v9749 = vand.u32 %v9178, 4294901760
    %9750 = vmatpush1.msra.mxu0 %v9749
    %9751 = vmatprep.subr.mxu0 0.0
    %v9752 = vand.u32 %v9177, 4294901760
    %9753 = vmatpush1.msra.mxu0 %v9752
    %9754 = vmatprep.subr.mxu0 0.0
    %v9755 = vand.u32 %v9176, 4294901760
    %9756 = vmatpush1.msra.mxu0 %v9755
    %9757 = vmatprep.subr.mxu0 0.0
    %v9758 = vand.u32 %v9175, 4294901760
    %9759 = vmatpush1.msra.mxu0 %v9758
    %9760 = vmatprep.subr.mxu0 0.0
    %v9761 = vand.u32 %v9206, 4294901760
    %9762 = vmatpush2.msra.mxu0 %v9761
    %9763 = vmatprep.subr.mxu0 0.0
    %v9764 = vand.u32 %v9205, 4294901760
    %9765 = vmatpush2.msra.mxu0 %v9764
    %9766 = vmatprep.subr.mxu0 0.0
    %v9767 = vand.u32 %v9204, 4294901760
    %9768 = vmatpush2.msra.mxu0 %v9767
    %9769 = vmatprep.subr.mxu0 0.0
    %v9770 = vand.u32 %v9203, 4294901760
    %9771 = vmatpush2.msra.mxu0 %v9770
    %9772 = vmatprep.subr.mxu0 0.0
    %v9773 = vand.u32 %v9202, 4294901760
    %9774 = vmatpush2.msra.mxu0 %v9773
    %9775 = vmatprep.subr.mxu0 0.0
    %v9776 = vand.u32 %v9201, 4294901760
    %9777 = vmatpush2.msra.mxu0 %v9776
    %9778 = vmatprep.subr.mxu0 0.0
    %v9779 = vand.u32 %v9200, 4294901760
    %9780 = vmatpush2.msra.mxu0 %v9779
    %9781 = vmatprep.subr.mxu0 0.0
    %v9782 = vand.u32 %v9199, 4294901760
    %9783 = vmatpush2.msra.mxu0 %v9782
    %9784 = vmatprep.subr.mxu0 0.0
    %v9785 = vand.u32 %v9198, 4294901760
    %9786 = vmatpush2.msra.mxu0 %v9785
    %9787 = vmatprep.subr.mxu0 0.0
    %v9788 = vand.u32 %v9197, 4294901760
    %9789 = vmatpush2.msra.mxu0 %v9788
    %9790 = vmatprep.subr.mxu0 0.0
    %v9791 = vand.u32 %v9196, 4294901760
    %9792 = vmatpush2.msra.mxu0 %v9791
    %9793 = vmatprep.subr.mxu0 0.0
    %v9794 = vand.u32 %v9195, 4294901760
    %9795 = vmatpush2.msra.mxu0 %v9794
    %9796 = vmatprep.subr.mxu0 0.0
    %v9797 = vand.u32 %v9194, 4294901760
    %9798 = vmatpush2.msra.mxu0 %v9797
    %9799 = vmatprep.subr.mxu0 0.0
    %v9800 = vand.u32 %v9193, 4294901760
    %9801 = vmatpush2.msra.mxu0 %v9800
    %9802 = vmatprep.subr.mxu0 0.0
    %v9803 = vand.u32 %v9192, 4294901760
    %9804 = vmatpush2.msra.mxu0 %v9803
    %9805 = vmatprep.subr.mxu0 0.0
    %v9806 = vand.u32 %v9191, 4294901760
    %9807 = vmatpush2.msra.mxu0 %v9806
    %v9808 = vand.u32 %v9173, 4294901760
    %v9809 = vsub.f32 %v9173, %v9808
    %v9810 = vand.u32 %v9809, 4294901760
    %9811 = vmatprep.mubr.f32.mxu0 %v9810
    %v9812 = vand.u32 %v9172, 4294901760
    %v9813 = vsub.f32 %v9172, %v9812
    %v9814 = vand.u32 %v9813, 4294901760
    %9815 = vmatmul.mubr.f32.gmra.mxu0 %v9814
    %v9816 = vpop.f32.mrf.mxu0
    %v9817 = vadd.f32 %v9709, %v9816
    %v9818 = vpop.f32.mrf.mxu0
    %9819 = vdwg.mxu0
    %9820 = vmatprep.subr.mxu0 0.0
    %v9821 = vand.u32 %v9190, 4294901760
    %v9822 = vsub.f32 %v9190, %v9821
    %v9823 = vand.u32 %v9822, 4294901760
    %9824 = vmatpush1.msra.mxu0 %v9823
    %9825 = vmatprep.subr.mxu0 0.0
    %v9826 = vand.u32 %v9189, 4294901760
    %v9827 = vsub.f32 %v9189, %v9826
    %v9828 = vand.u32 %v9827, 4294901760
    %9829 = vmatpush1.msra.mxu0 %v9828
    %9830 = vmatprep.subr.mxu0 0.0
    %v9831 = vand.u32 %v9188, 4294901760
    %v9832 = vsub.f32 %v9188, %v9831
    %v9833 = vand.u32 %v9832, 4294901760
    %9834 = vmatpush1.msra.mxu0 %v9833
    %9835 = vmatprep.subr.mxu0 0.0
    %v9836 = vand.u32 %v9187, 4294901760
    %v9837 = vsub.f32 %v9187, %v9836
    %v9838 = vand.u32 %v9837, 4294901760
    %9839 = vmatpush1.msra.mxu0 %v9838
    %9840 = vmatprep.subr.mxu0 0.0
    %v9841 = vand.u32 %v9186, 4294901760
    %v9842 = vsub.f32 %v9186, %v9841
    %v9843 = vand.u32 %v9842, 4294901760
    %9844 = vmatpush1.msra.mxu0 %v9843
    %9845 = vmatprep.subr.mxu0 0.0
    %v9846 = vand.u32 %v9185, 4294901760
    %v9847 = vsub.f32 %v9185, %v9846
    %v9848 = vand.u32 %v9847, 4294901760
    %9849 = vmatpush1.msra.mxu0 %v9848
    %9850 = vmatprep.subr.mxu0 0.0
    %v9851 = vand.u32 %v9184, 4294901760
    %v9852 = vsub.f32 %v9184, %v9851
    %v9853 = vand.u32 %v9852, 4294901760
    %9854 = vmatpush1.msra.mxu0 %v9853
    %9855 = vmatprep.subr.mxu0 0.0
    %v9856 = vand.u32 %v9183, 4294901760
    %v9857 = vsub.f32 %v9183, %v9856
    %v9858 = vand.u32 %v9857, 4294901760
    %9859 = vmatpush1.msra.mxu0 %v9858
    %9860 = vmatprep.subr.mxu0 0.0
    %v9861 = vand.u32 %v9182, 4294901760
    %v9862 = vsub.f32 %v9182, %v9861
    %v9863 = vand.u32 %v9862, 4294901760
    %9864 = vmatpush1.msra.mxu0 %v9863
    %9865 = vmatprep.subr.mxu0 0.0
    %v9866 = vand.u32 %v9181, 4294901760
    %v9867 = vsub.f32 %v9181, %v9866
    %v9868 = vand.u32 %v9867, 4294901760
    %9869 = vmatpush1.msra.mxu0 %v9868
    %9870 = vmatprep.subr.mxu0 0.0
    %v9871 = vand.u32 %v9180, 4294901760
    %v9872 = vsub.f32 %v9180, %v9871
    %v9873 = vand.u32 %v9872, 4294901760
    %9874 = vmatpush1.msra.mxu0 %v9873
    %9875 = vmatprep.subr.mxu0 0.0
    %v9876 = vand.u32 %v9179, 4294901760
    %v9877 = vsub.f32 %v9179, %v9876
    %v9878 = vand.u32 %v9877, 4294901760
    %9879 = vmatpush1.msra.mxu0 %v9878
    %9880 = vmatprep.subr.mxu0 0.0
    %v9881 = vand.u32 %v9178, 4294901760
    %v9882 = vsub.f32 %v9178, %v9881
    %v9883 = vand.u32 %v9882, 4294901760
    %9884 = vmatpush1.msra.mxu0 %v9883
    %9885 = vmatprep.subr.mxu0 0.0
    %v9886 = vand.u32 %v9177, 4294901760
    %v9887 = vsub.f32 %v9177, %v9886
    %v9888 = vand.u32 %v9887, 4294901760
    %9889 = vmatpush1.msra.mxu0 %v9888
    %9890 = vmatprep.subr.mxu0 0.0
    %v9891 = vand.u32 %v9176, 4294901760
    %v9892 = vsub.f32 %v9176, %v9891
    %v9893 = vand.u32 %v9892, 4294901760
    %9894 = vmatpush1.msra.mxu0 %v9893
    %9895 = vmatprep.subr.mxu0 0.0
    %v9896 = vand.u32 %v9175, 4294901760
    %v9897 = vsub.f32 %v9175, %v9896
    %v9898 = vand.u32 %v9897, 4294901760
    %9899 = vmatpush1.msra.mxu0 %v9898
    %9900 = vmatprep.subr.mxu0 0.0
    %v9901 = vand.u32 %v9206, 4294901760
    %v9902 = vsub.f32 %v9206, %v9901
    %v9903 = vand.u32 %v9902, 4294901760
    %9904 = vmatpush2.msra.mxu0 %v9903
    %9905 = vmatprep.subr.mxu0 0.0
    %v9906 = vand.u32 %v9205, 4294901760
    %v9907 = vsub.f32 %v9205, %v9906
    %v9908 = vand.u32 %v9907, 4294901760
    %9909 = vmatpush2.msra.mxu0 %v9908
    %9910 = vmatprep.subr.mxu0 0.0
    %v9911 = vand.u32 %v9204, 4294901760
    %v9912 = vsub.f32 %v9204, %v9911
    %v9913 = vand.u32 %v9912, 4294901760
    %9914 = vmatpush2.msra.mxu0 %v9913
    %9915 = vmatprep.subr.mxu0 0.0
    %v9916 = vand.u32 %v9203, 4294901760
    %v9917 = vsub.f32 %v9203, %v9916
    %v9918 = vand.u32 %v9917, 4294901760
    %9919 = vmatpush2.msra.mxu0 %v9918
    %9920 = vmatprep.subr.mxu0 0.0
    %v9921 = vand.u32 %v9202, 4294901760
    %v9922 = vsub.f32 %v9202, %v9921
    %v9923 = vand.u32 %v9922, 4294901760
    %9924 = vmatpush2.msra.mxu0 %v9923
    %9925 = vmatprep.subr.mxu0 0.0
    %v9926 = vand.u32 %v9201, 4294901760
    %v9927 = vsub.f32 %v9201, %v9926
    %v9928 = vand.u32 %v9927, 4294901760
    %9929 = vmatpush2.msra.mxu0 %v9928
    %9930 = vmatprep.subr.mxu0 0.0
    %v9931 = vand.u32 %v9200, 4294901760
    %v9932 = vsub.f32 %v9200, %v9931
    %v9933 = vand.u32 %v9932, 4294901760
    %9934 = vmatpush2.msra.mxu0 %v9933
    %9935 = vmatprep.subr.mxu0 0.0
    %v9936 = vand.u32 %v9199, 4294901760
    %v9937 = vsub.f32 %v9199, %v9936
    %v9938 = vand.u32 %v9937, 4294901760
    %9939 = vmatpush2.msra.mxu0 %v9938
    %9940 = vmatprep.subr.mxu0 0.0
    %v9941 = vand.u32 %v9198, 4294901760
    %v9942 = vsub.f32 %v9198, %v9941
    %v9943 = vand.u32 %v9942, 4294901760
    %9944 = vmatpush2.msra.mxu0 %v9943
    %9945 = vmatprep.subr.mxu0 0.0
    %v9946 = vand.u32 %v9197, 4294901760
    %v9947 = vsub.f32 %v9197, %v9946
    %v9948 = vand.u32 %v9947, 4294901760
    %9949 = vmatpush2.msra.mxu0 %v9948
    %9950 = vmatprep.subr.mxu0 0.0
    %v9951 = vand.u32 %v9196, 4294901760
    %v9952 = vsub.f32 %v9196, %v9951
    %v9953 = vand.u32 %v9952, 4294901760
    %9954 = vmatpush2.msra.mxu0 %v9953
    %9955 = vmatprep.subr.mxu0 0.0
    %v9956 = vand.u32 %v9195, 4294901760
    %v9957 = vsub.f32 %v9195, %v9956
    %v9958 = vand.u32 %v9957, 4294901760
    %9959 = vmatpush2.msra.mxu0 %v9958
    %9960 = vmatprep.subr.mxu0 0.0
    %v9961 = vand.u32 %v9194, 4294901760
    %v9962 = vsub.f32 %v9194, %v9961
    %v9963 = vand.u32 %v9962, 4294901760
    %9964 = vmatpush2.msra.mxu0 %v9963
    %9965 = vmatprep.subr.mxu0 0.0
    %v9966 = vand.u32 %v9193, 4294901760
    %v9967 = vsub.f32 %v9193, %v9966
    %v9968 = vand.u32 %v9967, 4294901760
    %9969 = vmatpush2.msra.mxu0 %v9968
    %9970 = vmatprep.subr.mxu0 0.0
    %v9971 = vand.u32 %v9192, 4294901760
    %v9972 = vsub.f32 %v9192, %v9971
    %v9973 = vand.u32 %v9972, 4294901760
    %9974 = vmatpush2.msra.mxu0 %v9973
    %9975 = vmatprep.subr.mxu0 0.0
    %v9976 = vand.u32 %v9191, 4294901760
    %v9977 = vsub.f32 %v9191, %v9976
    %v9978 = vand.u32 %v9977, 4294901760
    %9979 = vmatpush2.msra.mxu0 %v9978
    %v9980 = vand.u32 %v9173, 4294901760
    %9981 = vmatprep.mubr.f32.mxu0 %v9980
    %v9982 = vand.u32 %v9172, 4294901760
    %9983 = vmatmul.mubr.f32.gmra.mxu0 %v9982
    %v9984 = vpop.f32.mrf.mxu0
    %v9985 = vadd.f32 %v9817, %v9984
    %v9986 = vpop.f32.mrf.mxu0
    %9987 = vdwg.mxu0
    %9988 = vmatprep.subr.mxu0 0.0
    %v9989 = vand.u32 %v9190, 4294901760
    %9990 = vmatpush1.msra.mxu0 %v9989
    %9991 = vmatprep.subr.mxu0 0.0
    %v9992 = vand.u32 %v9189, 4294901760
    %9993 = vmatpush1.msra.mxu0 %v9992
    %9994 = vmatprep.subr.mxu0 0.0
    %v9995 = vand.u32 %v9188, 4294901760
    %9996 = vmatpush1.msra.mxu0 %v9995
    %9997 = vmatprep.subr.mxu0 0.0
    %v9998 = vand.u32 %v9187, 4294901760
    %9999 = vmatpush1.msra.mxu0 %v9998
    %10000 = vmatprep.subr.mxu0 0.0
    %v10001 = vand.u32 %v9186, 4294901760
    %10002 = vmatpush1.msra.mxu0 %v10001
    %10003 = vmatprep.subr.mxu0 0.0
    %v10004 = vand.u32 %v9185, 4294901760
    %10005 = vmatpush1.msra.mxu0 %v10004
    %10006 = vmatprep.subr.mxu0 0.0
    %v10007 = vand.u32 %v9184, 4294901760
    %10008 = vmatpush1.msra.mxu0 %v10007
    %10009 = vmatprep.subr.mxu0 0.0
    %v10010 = vand.u32 %v9183, 4294901760
    %10011 = vmatpush1.msra.mxu0 %v10010
    %10012 = vmatprep.subr.mxu0 0.0
    %v10013 = vand.u32 %v9182, 4294901760
    %10014 = vmatpush1.msra.mxu0 %v10013
    %10015 = vmatprep.subr.mxu0 0.0
    %v10016 = vand.u32 %v9181, 4294901760
    %10017 = vmatpush1.msra.mxu0 %v10016
    %10018 = vmatprep.subr.mxu0 0.0
    %v10019 = vand.u32 %v9180, 4294901760
    %10020 = vmatpush1.msra.mxu0 %v10019
    %10021 = vmatprep.subr.mxu0 0.0
    %v10022 = vand.u32 %v9179, 4294901760
    %10023 = vmatpush1.msra.mxu0 %v10022
    %10024 = vmatprep.subr.mxu0 0.0
    %v10025 = vand.u32 %v9178, 4294901760
    %10026 = vmatpush1.msra.mxu0 %v10025
    %10027 = vmatprep.subr.mxu0 0.0
    %v10028 = vand.u32 %v9177, 4294901760
    %10029 = vmatpush1.msra.mxu0 %v10028
    %10030 = vmatprep.subr.mxu0 0.0
    %v10031 = vand.u32 %v9176, 4294901760
    %10032 = vmatpush1.msra.mxu0 %v10031
    %10033 = vmatprep.subr.mxu0 0.0
    %v10034 = vand.u32 %v9175, 4294901760
    %10035 = vmatpush1.msra.mxu0 %v10034
    %10036 = vmatprep.subr.mxu0 0.0
    %v10037 = vand.u32 %v9206, 4294901760
    %10038 = vmatpush2.msra.mxu0 %v10037
    %10039 = vmatprep.subr.mxu0 0.0
    %v10040 = vand.u32 %v9205, 4294901760
    %10041 = vmatpush2.msra.mxu0 %v10040
    %10042 = vmatprep.subr.mxu0 0.0
    %v10043 = vand.u32 %v9204, 4294901760
    %10044 = vmatpush2.msra.mxu0 %v10043
    %10045 = vmatprep.subr.mxu0 0.0
    %v10046 = vand.u32 %v9203, 4294901760
    %10047 = vmatpush2.msra.mxu0 %v10046
    %10048 = vmatprep.subr.mxu0 0.0
    %v10049 = vand.u32 %v9202, 4294901760
    %10050 = vmatpush2.msra.mxu0 %v10049
    %10051 = vmatprep.subr.mxu0 0.0
    %v10052 = vand.u32 %v9201, 4294901760
    %10053 = vmatpush2.msra.mxu0 %v10052
    %10054 = vmatprep.subr.mxu0 0.0
    %v10055 = vand.u32 %v9200, 4294901760
    %10056 = vmatpush2.msra.mxu0 %v10055
    %10057 = vmatprep.subr.mxu0 0.0
    %v10058 = vand.u32 %v9199, 4294901760
    %10059 = vmatpush2.msra.mxu0 %v10058
    %10060 = vmatprep.subr.mxu0 0.0
    %v10061 = vand.u32 %v9198, 4294901760
    %10062 = vmatpush2.msra.mxu0 %v10061
    %10063 = vmatprep.subr.mxu0 0.0
    %v10064 = vand.u32 %v9197, 4294901760
    %10065 = vmatpush2.msra.mxu0 %v10064
    %10066 = vmatprep.subr.mxu0 0.0
    %v10067 = vand.u32 %v9196, 4294901760
    %10068 = vmatpush2.msra.mxu0 %v10067
    %10069 = vmatprep.subr.mxu0 0.0
    %v10070 = vand.u32 %v9195, 4294901760
    %10071 = vmatpush2.msra.mxu0 %v10070
    %10072 = vmatprep.subr.mxu0 0.0
    %v10073 = vand.u32 %v9194, 4294901760
    %10074 = vmatpush2.msra.mxu0 %v10073
    %10075 = vmatprep.subr.mxu0 0.0
    %v10076 = vand.u32 %v9193, 4294901760
    %10077 = vmatpush2.msra.mxu0 %v10076
    %10078 = vmatprep.subr.mxu0 0.0
    %v10079 = vand.u32 %v9192, 4294901760
    %10080 = vmatpush2.msra.mxu0 %v10079
    %10081 = vmatprep.subr.mxu0 0.0
    %v10082 = vand.u32 %v9191, 4294901760
    %10083 = vmatpush2.msra.mxu0 %v10082
    %v10084 = vand.u32 %v9173, 4294901760
    %10085 = vmatprep.mubr.f32.mxu0 %v10084
    %v10086 = vand.u32 %v9172, 4294901760
    %10087 = vmatmul.mubr.f32.gmra.mxu0 %v10086
    %v10088 = vpop.f32.mrf.mxu0
    %v10089 = vadd.f32 %v9985, %v10088
    %v10090 = vpop.f32.mrf.mxu0
    %10091 = vdwg.mxu0
    %10092 = vmatprep.subr.mxu0 0.0
    %v10093 = vand.u32 %v9222, 4294901760
    %10094 = vmatpush1.msra.mxu0 %v10093
    %10095 = vmatprep.subr.mxu0 0.0
    %v10096 = vand.u32 %v9221, 4294901760
    %10097 = vmatpush1.msra.mxu0 %v10096
    %10098 = vmatprep.subr.mxu0 0.0
    %v10099 = vand.u32 %v9220, 4294901760
    %10100 = vmatpush1.msra.mxu0 %v10099
    %10101 = vmatprep.subr.mxu0 0.0
    %v10102 = vand.u32 %v9219, 4294901760
    %10103 = vmatpush1.msra.mxu0 %v10102
    %10104 = vmatprep.subr.mxu0 0.0
    %v10105 = vand.u32 %v9218, 4294901760
    %10106 = vmatpush1.msra.mxu0 %v10105
    %10107 = vmatprep.subr.mxu0 0.0
    %v10108 = vand.u32 %v9217, 4294901760
    %10109 = vmatpush1.msra.mxu0 %v10108
    %10110 = vmatprep.subr.mxu0 0.0
    %v10111 = vand.u32 %v9216, 4294901760
    %10112 = vmatpush1.msra.mxu0 %v10111
    %10113 = vmatprep.subr.mxu0 0.0
    %v10114 = vand.u32 %v9215, 4294901760
    %10115 = vmatpush1.msra.mxu0 %v10114
    %10116 = vmatprep.subr.mxu0 0.0
    %v10117 = vand.u32 %v9214, 4294901760
    %10118 = vmatpush1.msra.mxu0 %v10117
    %10119 = vmatprep.subr.mxu0 0.0
    %v10120 = vand.u32 %v9213, 4294901760
    %10121 = vmatpush1.msra.mxu0 %v10120
    %10122 = vmatprep.subr.mxu0 0.0
    %v10123 = vand.u32 %v9212, 4294901760
    %10124 = vmatpush1.msra.mxu0 %v10123
    %10125 = vmatprep.subr.mxu0 0.0
    %v10126 = vand.u32 %v9211, 4294901760
    %10127 = vmatpush1.msra.mxu0 %v10126
    %10128 = vmatprep.subr.mxu0 0.0
    %v10129 = vand.u32 %v9210, 4294901760
    %10130 = vmatpush1.msra.mxu0 %v10129
    %10131 = vmatprep.subr.mxu0 0.0
    %v10132 = vand.u32 %v9209, 4294901760
    %10133 = vmatpush1.msra.mxu0 %v10132
    %10134 = vmatprep.subr.mxu0 0.0
    %v10135 = vand.u32 %v9208, 4294901760
    %10136 = vmatpush1.msra.mxu0 %v10135
    %10137 = vmatprep.subr.mxu0 0.0
    %v10138 = vand.u32 %v9207, 4294901760
    %10139 = vmatpush1.msra.mxu0 %v10138
    %10140 = vmatprep.subr.mxu0 0.0
    %10141 = vmatpush2.msra.mxu0 0.0
    %10142 = vmatprep.subr.mxu0 0.0
    %10143 = vmatpush2.msra.mxu0 0.0
    %10144 = vmatprep.subr.mxu0 0.0
    %10145 = vmatpush2.msra.mxu0 0.0
    %10146 = vmatprep.subr.mxu0 0.0
    %10147 = vmatpush2.msra.mxu0 0.0
    %10148 = vmatprep.subr.mxu0 0.0
    %10149 = vmatpush2.msra.mxu0 0.0
    %10150 = vmatprep.subr.mxu0 0.0
    %10151 = vmatpush2.msra.mxu0 0.0
    %10152 = vmatprep.subr.mxu0 0.0
    %10153 = vmatpush2.msra.mxu0 0.0
    %10154 = vmatprep.subr.mxu0 0.0
    %10155 = vmatpush2.msra.mxu0 0.0
    %10156 = vmatprep.subr.mxu0 0.0
    %10157 = vmatpush2.msra.mxu0 0.0
    %10158 = vmatprep.subr.mxu0 0.0
    %10159 = vmatpush2.msra.mxu0 0.0
    %10160 = vmatprep.subr.mxu0 0.0
    %10161 = vmatpush2.msra.mxu0 0.0
    %10162 = vmatprep.subr.mxu0 0.0
    %10163 = vmatpush2.msra.mxu0 0.0
    %10164 = vmatprep.subr.mxu0 0.0
    %10165 = vmatpush2.msra.mxu0 0.0
    %10166 = vmatprep.subr.mxu0 0.0
    %10167 = vmatpush2.msra.mxu0 0.0
    %10168 = vmatprep.subr.mxu0 0.0
    %10169 = vmatpush2.msra.mxu0 0.0
    %10170 = vmatprep.subr.mxu0 0.0
    %10171 = vmatpush2.msra.mxu0 0.0
    %10172 = vmatprep.mubr.f32.mxu0 0.0
    %v10173 = vand.u32 %v9174, 4294901760
    %v10174 = vsub.f32 %v9174, %v10173
    %v10175 = vand.u32 %v10174, 4294901760
    %v10176 = vsub.f32 %v10174, %v10175
    %v10177 = vand.u32 %v10176, 4294901760
    %10178 = vmatmul.mubr.f32.gmra.mxu0 %v10177
    %v10179 = vpop.f32.mrf.mxu0
    %v10180 = vadd.f32 %v10089, %v10179
    %v10181 = vpop.f32.mrf.mxu0
    %10182 = vdwg.mxu0
    %10183 = vmatprep.subr.mxu0 0.0
    %v10184 = vand.u32 %v9222, 4294901760
    %v10185 = vsub.f32 %v9222, %v10184
    %v10186 = vand.u32 %v10185, 4294901760
    %v10187 = vsub.f32 %v10185, %v10186
    %v10188 = vand.u32 %v10187, 4294901760
    %10189 = vmatpush1.msra.mxu0 %v10188
    %10190 = vmatprep.subr.mxu0 0.0
    %v10191 = vand.u32 %v9221, 4294901760
    %v10192 = vsub.f32 %v9221, %v10191
    %v10193 = vand.u32 %v10192, 4294901760
    %v10194 = vsub.f32 %v10192, %v10193
    %v10195 = vand.u32 %v10194, 4294901760
    %10196 = vmatpush1.msra.mxu0 %v10195
    %10197 = vmatprep.subr.mxu0 0.0
    %v10198 = vand.u32 %v9220, 4294901760
    %v10199 = vsub.f32 %v9220, %v10198
    %v10200 = vand.u32 %v10199, 4294901760
    %v10201 = vsub.f32 %v10199, %v10200
    %v10202 = vand.u32 %v10201, 4294901760
    %10203 = vmatpush1.msra.mxu0 %v10202
    %10204 = vmatprep.subr.mxu0 0.0
    %v10205 = vand.u32 %v9219, 4294901760
    %v10206 = vsub.f32 %v9219, %v10205
    %v10207 = vand.u32 %v10206, 4294901760
    %v10208 = vsub.f32 %v10206, %v10207
    %v10209 = vand.u32 %v10208, 4294901760
    %10210 = vmatpush1.msra.mxu0 %v10209
    %10211 = vmatprep.subr.mxu0 0.0
    %v10212 = vand.u32 %v9218, 4294901760
    %v10213 = vsub.f32 %v9218, %v10212
    %v10214 = vand.u32 %v10213, 4294901760
    %v10215 = vsub.f32 %v10213, %v10214
    %v10216 = vand.u32 %v10215, 4294901760
    %10217 = vmatpush1.msra.mxu0 %v10216
    %10218 = vmatprep.subr.mxu0 0.0
    %v10219 = vand.u32 %v9217, 4294901760
    %v10220 = vsub.f32 %v9217, %v10219
    %v10221 = vand.u32 %v10220, 4294901760
    %v10222 = vsub.f32 %v10220, %v10221
    %v10223 = vand.u32 %v10222, 4294901760
    %10224 = vmatpush1.msra.mxu0 %v10223
    %10225 = vmatprep.subr.mxu0 0.0
    %v10226 = vand.u32 %v9216, 4294901760
    %v10227 = vsub.f32 %v9216, %v10226
    %v10228 = vand.u32 %v10227, 4294901760
    %v10229 = vsub.f32 %v10227, %v10228
    %v10230 = vand.u32 %v10229, 4294901760
    %10231 = vmatpush1.msra.mxu0 %v10230
    %10232 = vmatprep.subr.mxu0 0.0
    %v10233 = vand.u32 %v9215, 4294901760
    %v10234 = vsub.f32 %v9215, %v10233
    %v10235 = vand.u32 %v10234, 4294901760
    %v10236 = vsub.f32 %v10234, %v10235
    %v10237 = vand.u32 %v10236, 4294901760
    %10238 = vmatpush1.msra.mxu0 %v10237
    %10239 = vmatprep.subr.mxu0 0.0
    %v10240 = vand.u32 %v9214, 4294901760
    %v10241 = vsub.f32 %v9214, %v10240
    %v10242 = vand.u32 %v10241, 4294901760
    %v10243 = vsub.f32 %v10241, %v10242
    %v10244 = vand.u32 %v10243, 4294901760
    %10245 = vmatpush1.msra.mxu0 %v10244
    %10246 = vmatprep.subr.mxu0 0.0
    %v10247 = vand.u32 %v9213, 4294901760
    %v10248 = vsub.f32 %v9213, %v10247
    %v10249 = vand.u32 %v10248, 4294901760
    %v10250 = vsub.f32 %v10248, %v10249
    %v10251 = vand.u32 %v10250, 4294901760
    %10252 = vmatpush1.msra.mxu0 %v10251
    %10253 = vmatprep.subr.mxu0 0.0
    %v10254 = vand.u32 %v9212, 4294901760
    %v10255 = vsub.f32 %v9212, %v10254
    %v10256 = vand.u32 %v10255, 4294901760
    %v10257 = vsub.f32 %v10255, %v10256
    %v10258 = vand.u32 %v10257, 4294901760
    %10259 = vmatpush1.msra.mxu0 %v10258
    %10260 = vmatprep.subr.mxu0 0.0
    %v10261 = vand.u32 %v9211, 4294901760
    %v10262 = vsub.f32 %v9211, %v10261
    %v10263 = vand.u32 %v10262, 4294901760
    %v10264 = vsub.f32 %v10262, %v10263
    %v10265 = vand.u32 %v10264, 4294901760
    %10266 = vmatpush1.msra.mxu0 %v10265
    %10267 = vmatprep.subr.mxu0 0.0
    %v10268 = vand.u32 %v9210, 4294901760
    %v10269 = vsub.f32 %v9210, %v10268
    %v10270 = vand.u32 %v10269, 4294901760
    %v10271 = vsub.f32 %v10269, %v10270
    %v10272 = vand.u32 %v10271, 4294901760
    %10273 = vmatpush1.msra.mxu0 %v10272
    %10274 = vmatprep.subr.mxu0 0.0
    %v10275 = vand.u32 %v9209, 4294901760
    %v10276 = vsub.f32 %v9209, %v10275
    %v10277 = vand.u32 %v10276, 4294901760
    %v10278 = vsub.f32 %v10276, %v10277
    %v10279 = vand.u32 %v10278, 4294901760
    %10280 = vmatpush1.msra.mxu0 %v10279
    %10281 = vmatprep.subr.mxu0 0.0
    %v10282 = vand.u32 %v9208, 4294901760
    %v10283 = vsub.f32 %v9208, %v10282
    %v10284 = vand.u32 %v10283, 4294901760
    %v10285 = vsub.f32 %v10283, %v10284
    %v10286 = vand.u32 %v10285, 4294901760
    %10287 = vmatpush1.msra.mxu0 %v10286
    %10288 = vmatprep.subr.mxu0 0.0
    %v10289 = vand.u32 %v9207, 4294901760
    %v10290 = vsub.f32 %v9207, %v10289
    %v10291 = vand.u32 %v10290, 4294901760
    %v10292 = vsub.f32 %v10290, %v10291
    %v10293 = vand.u32 %v10292, 4294901760
    %10294 = vmatpush1.msra.mxu0 %v10293
    %10295 = vmatprep.subr.mxu0 0.0
    %10296 = vmatpush2.msra.mxu0 0.0
    %10297 = vmatprep.subr.mxu0 0.0
    %10298 = vmatpush2.msra.mxu0 0.0
    %10299 = vmatprep.subr.mxu0 0.0
    %10300 = vmatpush2.msra.mxu0 0.0
    %10301 = vmatprep.subr.mxu0 0.0
    %10302 = vmatpush2.msra.mxu0 0.0
    %10303 = vmatprep.subr.mxu0 0.0
    %10304 = vmatpush2.msra.mxu0 0.0
    %10305 = vmatprep.subr.mxu0 0.0
    %10306 = vmatpush2.msra.mxu0 0.0
    %10307 = vmatprep.subr.mxu0 0.0
    %10308 = vmatpush2.msra.mxu0 0.0
    %10309 = vmatprep.subr.mxu0 0.0
    %10310 = vmatpush2.msra.mxu0 0.0
    %10311 = vmatprep.subr.mxu0 0.0
    %10312 = vmatpush2.msra.mxu0 0.0
    %10313 = vmatprep.subr.mxu0 0.0
    %10314 = vmatpush2.msra.mxu0 0.0
    %10315 = vmatprep.subr.mxu0 0.0
    %10316 = vmatpush2.msra.mxu0 0.0
    %10317 = vmatprep.subr.mxu0 0.0
    %10318 = vmatpush2.msra.mxu0 0.0
    %10319 = vmatprep.subr.mxu0 0.0
    %10320 = vmatpush2.msra.mxu0 0.0
    %10321 = vmatprep.subr.mxu0 0.0
    %10322 = vmatpush2.msra.mxu0 0.0
    %10323 = vmatprep.subr.mxu0 0.0
    %10324 = vmatpush2.msra.mxu0 0.0
    %10325 = vmatprep.subr.mxu0 0.0
    %10326 = vmatpush2.msra.mxu0 0.0
    %10327 = vmatprep.mubr.f32.mxu0 0.0
    %v10328 = vand.u32 %v9174, 4294901760
    %10329 = vmatmul.mubr.f32.gmra.mxu0 %v10328
    %v10330 = vpop.f32.mrf.mxu0
    %v10331 = vadd.f32 %v10180, %v10330
    %v10332 = vpop.f32.mrf.mxu0
    %10333 = vdwg.mxu0
    %10334 = vmatprep.subr.mxu0 0.0
    %v10335 = vand.u32 %v9222, 4294901760
    %v10336 = vsub.f32 %v9222, %v10335
    %10337 = vmatpush1.msra.mxu0 %v10336
    %10338 = vmatprep.subr.mxu0 0.0
    %v10339 = vand.u32 %v9221, 4294901760
    %v10340 = vsub.f32 %v9221, %v10339
    %10341 = vmatpush1.msra.mxu0 %v10340
    %10342 = vmatprep.subr.mxu0 0.0
    %v10343 = vand.u32 %v9220, 4294901760
    %v10344 = vsub.f32 %v9220, %v10343
    %10345 = vmatpush1.msra.mxu0 %v10344
    %10346 = vmatprep.subr.mxu0 0.0
    %v10347 = vand.u32 %v9219, 4294901760
    %v10348 = vsub.f32 %v9219, %v10347
    %10349 = vmatpush1.msra.mxu0 %v10348
    %10350 = vmatprep.subr.mxu0 0.0
    %v10351 = vand.u32 %v9218, 4294901760
    %v10352 = vsub.f32 %v9218, %v10351
    %10353 = vmatpush1.msra.mxu0 %v10352
    %10354 = vmatprep.subr.mxu0 0.0
    %v10355 = vand.u32 %v9217, 4294901760
    %v10356 = vsub.f32 %v9217, %v10355
    %10357 = vmatpush1.msra.mxu0 %v10356
    %10358 = vmatprep.subr.mxu0 0.0
    %v10359 = vand.u32 %v9216, 4294901760
    %v10360 = vsub.f32 %v9216, %v10359
    %10361 = vmatpush1.msra.mxu0 %v10360
    %10362 = vmatprep.subr.mxu0 0.0
    %v10363 = vand.u32 %v9215, 4294901760
    %v10364 = vsub.f32 %v9215, %v10363
    %10365 = vmatpush1.msra.mxu0 %v10364
    %10366 = vmatprep.subr.mxu0 0.0
    %v10367 = vand.u32 %v9214, 4294901760
    %v10368 = vsub.f32 %v9214, %v10367
    %10369 = vmatpush1.msra.mxu0 %v10368
    %10370 = vmatprep.subr.mxu0 0.0
    %v10371 = vand.u32 %v9213, 4294901760
    %v10372 = vsub.f32 %v9213, %v10371
    %10373 = vmatpush1.msra.mxu0 %v10372
    %10374 = vmatprep.subr.mxu0 0.0
    %v10375 = vand.u32 %v9212, 4294901760
    %v10376 = vsub.f32 %v9212, %v10375
    %10377 = vmatpush1.msra.mxu0 %v10376
    %10378 = vmatprep.subr.mxu0 0.0
    %v10379 = vand.u32 %v9211, 4294901760
    %v10380 = vsub.f32 %v9211, %v10379
    %10381 = vmatpush1.msra.mxu0 %v10380
    %10382 = vmatprep.subr.mxu0 0.0
    %v10383 = vand.u32 %v9210, 4294901760
    %v10384 = vsub.f32 %v9210, %v10383
    %10385 = vmatpush1.msra.mxu0 %v10384
    %10386 = vmatprep.subr.mxu0 0.0
    %v10387 = vand.u32 %v9209, 4294901760
    %v10388 = vsub.f32 %v9209, %v10387
    %10389 = vmatpush1.msra.mxu0 %v10388
    %10390 = vmatprep.subr.mxu0 0.0
    %v10391 = vand.u32 %v9208, 4294901760
    %v10392 = vsub.f32 %v9208, %v10391
    %10393 = vmatpush1.msra.mxu0 %v10392
    %10394 = vmatprep.subr.mxu0 0.0
    %v10395 = vand.u32 %v9207, 4294901760
    %v10396 = vsub.f32 %v9207, %v10395
    %10397 = vmatpush1.msra.mxu0 %v10396
    %10398 = vmatprep.subr.mxu0 0.0
    %10399 = vmatpush2.msra.mxu0 0.0
    %10400 = vmatprep.subr.mxu0 0.0
    %10401 = vmatpush2.msra.mxu0 0.0
    %10402 = vmatprep.subr.mxu0 0.0
    %10403 = vmatpush2.msra.mxu0 0.0
    %10404 = vmatprep.subr.mxu0 0.0
    %10405 = vmatpush2.msra.mxu0 0.0
    %10406 = vmatprep.subr.mxu0 0.0
    %10407 = vmatpush2.msra.mxu0 0.0
    %10408 = vmatprep.subr.mxu0 0.0
    %10409 = vmatpush2.msra.mxu0 0.0
    %10410 = vmatprep.subr.mxu0 0.0
    %10411 = vmatpush2.msra.mxu0 0.0
    %10412 = vmatprep.subr.mxu0 0.0
    %10413 = vmatpush2.msra.mxu0 0.0
    %10414 = vmatprep.subr.mxu0 0.0
    %10415 = vmatpush2.msra.mxu0 0.0
    %10416 = vmatprep.subr.mxu0 0.0
    %10417 = vmatpush2.msra.mxu0 0.0
    %10418 = vmatprep.subr.mxu0 0.0
    %10419 = vmatpush2.msra.mxu0 0.0
    %10420 = vmatprep.subr.mxu0 0.0
    %10421 = vmatpush2.msra.mxu0 0.0
    %10422 = vmatprep.subr.mxu0 0.0
    %10423 = vmatpush2.msra.mxu0 0.0
    %10424 = vmatprep.subr.mxu0 0.0
    %10425 = vmatpush2.msra.mxu0 0.0
    %10426 = vmatprep.subr.mxu0 0.0
    %10427 = vmatpush2.msra.mxu0 0.0
    %10428 = vmatprep.subr.mxu0 0.0
    %10429 = vmatpush2.msra.mxu0 0.0
    %10430 = vmatprep.mubr.f32.mxu0 0.0
    %v10431 = vand.u32 %v9174, 4294901760
    %v10432 = vsub.f32 %v9174, %v10431
    %10433 = vmatmul.mubr.f32.gmra.mxu0 %v10432
    %v10434 = vpop.f32.mrf.mxu0
    %v10435 = vadd.f32 %v10331, %v10434
    %v10436 = vpop.f32.mrf.mxu0
    %10437 = vdwg.mxu0
    %10438 = vmatprep.subr.mxu0 0.0
    %v10439 = vand.u32 %v9222, 4294901760
    %10440 = vmatpush1.msra.mxu0 %v10439
    %10441 = vmatprep.subr.mxu0 0.0
    %v10442 = vand.u32 %v9221, 4294901760
    %10443 = vmatpush1.msra.mxu0 %v10442
    %10444 = vmatprep.subr.mxu0 0.0
    %v10445 = vand.u32 %v9220, 4294901760
    %10446 = vmatpush1.msra.mxu0 %v10445
    %10447 = vmatprep.subr.mxu0 0.0
    %v10448 = vand.u32 %v9219, 4294901760
    %10449 = vmatpush1.msra.mxu0 %v10448
    %10450 = vmatprep.subr.mxu0 0.0
    %v10451 = vand.u32 %v9218, 4294901760
    %10452 = vmatpush1.msra.mxu0 %v10451
    %10453 = vmatprep.subr.mxu0 0.0
    %v10454 = vand.u32 %v9217, 4294901760
    %10455 = vmatpush1.msra.mxu0 %v10454
    %10456 = vmatprep.subr.mxu0 0.0
    %v10457 = vand.u32 %v9216, 4294901760
    %10458 = vmatpush1.msra.mxu0 %v10457
    %10459 = vmatprep.subr.mxu0 0.0
    %v10460 = vand.u32 %v9215, 4294901760
    %10461 = vmatpush1.msra.mxu0 %v10460
    %10462 = vmatprep.subr.mxu0 0.0
    %v10463 = vand.u32 %v9214, 4294901760
    %10464 = vmatpush1.msra.mxu0 %v10463
    %10465 = vmatprep.subr.mxu0 0.0
    %v10466 = vand.u32 %v9213, 4294901760
    %10467 = vmatpush1.msra.mxu0 %v10466
    %10468 = vmatprep.subr.mxu0 0.0
    %v10469 = vand.u32 %v9212, 4294901760
    %10470 = vmatpush1.msra.mxu0 %v10469
    %10471 = vmatprep.subr.mxu0 0.0
    %v10472 = vand.u32 %v9211, 4294901760
    %10473 = vmatpush1.msra.mxu0 %v10472
    %10474 = vmatprep.subr.mxu0 0.0
    %v10475 = vand.u32 %v9210, 4294901760
    %10476 = vmatpush1.msra.mxu0 %v10475
    %10477 = vmatprep.subr.mxu0 0.0
    %v10478 = vand.u32 %v9209, 4294901760
    %10479 = vmatpush1.msra.mxu0 %v10478
    %10480 = vmatprep.subr.mxu0 0.0
    %v10481 = vand.u32 %v9208, 4294901760
    %10482 = vmatpush1.msra.mxu0 %v10481
    %10483 = vmatprep.subr.mxu0 0.0
    %v10484 = vand.u32 %v9207, 4294901760
    %10485 = vmatpush1.msra.mxu0 %v10484
    %10486 = vmatprep.subr.mxu0 0.0
    %10487 = vmatpush2.msra.mxu0 0.0
    %10488 = vmatprep.subr.mxu0 0.0
    %10489 = vmatpush2.msra.mxu0 0.0
    %10490 = vmatprep.subr.mxu0 0.0
    %10491 = vmatpush2.msra.mxu0 0.0
    %10492 = vmatprep.subr.mxu0 0.0
    %10493 = vmatpush2.msra.mxu0 0.0
    %10494 = vmatprep.subr.mxu0 0.0
    %10495 = vmatpush2.msra.mxu0 0.0
    %10496 = vmatprep.subr.mxu0 0.0
    %10497 = vmatpush2.msra.mxu0 0.0
    %10498 = vmatprep.subr.mxu0 0.0
    %10499 = vmatpush2.msra.mxu0 0.0
    %10500 = vmatprep.subr.mxu0 0.0
    %10501 = vmatpush2.msra.mxu0 0.0
    %10502 = vmatprep.subr.mxu0 0.0
    %10503 = vmatpush2.msra.mxu0 0.0
    %10504 = vmatprep.subr.mxu0 0.0
    %10505 = vmatpush2.msra.mxu0 0.0
    %10506 = vmatprep.subr.mxu0 0.0
    %10507 = vmatpush2.msra.mxu0 0.0
    %10508 = vmatprep.subr.mxu0 0.0
    %10509 = vmatpush2.msra.mxu0 0.0
    %10510 = vmatprep.subr.mxu0 0.0
    %10511 = vmatpush2.msra.mxu0 0.0
    %10512 = vmatprep.subr.mxu0 0.0
    %10513 = vmatpush2.msra.mxu0 0.0
    %10514 = vmatprep.subr.mxu0 0.0
    %10515 = vmatpush2.msra.mxu0 0.0
    %10516 = vmatprep.subr.mxu0 0.0
    %10517 = vmatpush2.msra.mxu0 0.0
    %10518 = vmatprep.mubr.f32.mxu0 0.0
    %v10519 = vand.u32 %v9174, 4294901760
    %v10520 = vsub.f32 %v9174, %v10519
    %v10521 = vand.u32 %v10520, 4294901760
    %10522 = vmatmul.mubr.f32.gmra.mxu0 %v10521
    %v10523 = vpop.f32.mrf.mxu0
    %v10524 = vadd.f32 %v10435, %v10523
    %v10525 = vpop.f32.mrf.mxu0
    %10526 = vdwg.mxu0
    %10527 = vmatprep.subr.mxu0 0.0
    %v10528 = vand.u32 %v9222, 4294901760
    %v10529 = vsub.f32 %v9222, %v10528
    %v10530 = vand.u32 %v10529, 4294901760
    %10531 = vmatpush1.msra.mxu0 %v10530
    %10532 = vmatprep.subr.mxu0 0.0
    %v10533 = vand.u32 %v9221, 4294901760
    %v10534 = vsub.f32 %v9221, %v10533
    %v10535 = vand.u32 %v10534, 4294901760
    %10536 = vmatpush1.msra.mxu0 %v10535
    %10537 = vmatprep.subr.mxu0 0.0
    %v10538 = vand.u32 %v9220, 4294901760
    %v10539 = vsub.f32 %v9220, %v10538
    %v10540 = vand.u32 %v10539, 4294901760
    %10541 = vmatpush1.msra.mxu0 %v10540
    %10542 = vmatprep.subr.mxu0 0.0
    %v10543 = vand.u32 %v9219, 4294901760
    %v10544 = vsub.f32 %v9219, %v10543
    %v10545 = vand.u32 %v10544, 4294901760
    %10546 = vmatpush1.msra.mxu0 %v10545
    %10547 = vmatprep.subr.mxu0 0.0
    %v10548 = vand.u32 %v9218, 4294901760
    %v10549 = vsub.f32 %v9218, %v10548
    %v10550 = vand.u32 %v10549, 4294901760
    %10551 = vmatpush1.msra.mxu0 %v10550
    %10552 = vmatprep.subr.mxu0 0.0
    %v10553 = vand.u32 %v9217, 4294901760
    %v10554 = vsub.f32 %v9217, %v10553
    %v10555 = vand.u32 %v10554, 4294901760
    %10556 = vmatpush1.msra.mxu0 %v10555
    %10557 = vmatprep.subr.mxu0 0.0
    %v10558 = vand.u32 %v9216, 4294901760
    %v10559 = vsub.f32 %v9216, %v10558
    %v10560 = vand.u32 %v10559, 4294901760
    %10561 = vmatpush1.msra.mxu0 %v10560
    %10562 = vmatprep.subr.mxu0 0.0
    %v10563 = vand.u32 %v9215, 4294901760
    %v10564 = vsub.f32 %v9215, %v10563
    %v10565 = vand.u32 %v10564, 4294901760
    %10566 = vmatpush1.msra.mxu0 %v10565
    %10567 = vmatprep.subr.mxu0 0.0
    %v10568 = vand.u32 %v9214, 4294901760
    %v10569 = vsub.f32 %v9214, %v10568
    %v10570 = vand.u32 %v10569, 4294901760
    %10571 = vmatpush1.msra.mxu0 %v10570
    %10572 = vmatprep.subr.mxu0 0.0
    %v10573 = vand.u32 %v9213, 4294901760
    %v10574 = vsub.f32 %v9213, %v10573
    %v10575 = vand.u32 %v10574, 4294901760
    %10576 = vmatpush1.msra.mxu0 %v10575
    %10577 = vmatprep.subr.mxu0 0.0
    %v10578 = vand.u32 %v9212, 4294901760
    %v10579 = vsub.f32 %v9212, %v10578
    %v10580 = vand.u32 %v10579, 4294901760
    %10581 = vmatpush1.msra.mxu0 %v10580
    %10582 = vmatprep.subr.mxu0 0.0
    %v10583 = vand.u32 %v9211, 4294901760
    %v10584 = vsub.f32 %v9211, %v10583
    %v10585 = vand.u32 %v10584, 4294901760
    %10586 = vmatpush1.msra.mxu0 %v10585
    %10587 = vmatprep.subr.mxu0 0.0
    %v10588 = vand.u32 %v9210, 4294901760
    %v10589 = vsub.f32 %v9210, %v10588
    %v10590 = vand.u32 %v10589, 4294901760
    %10591 = vmatpush1.msra.mxu0 %v10590
    %10592 = vmatprep.subr.mxu0 0.0
    %v10593 = vand.u32 %v9209, 4294901760
    %v10594 = vsub.f32 %v9209, %v10593
    %v10595 = vand.u32 %v10594, 4294901760
    %10596 = vmatpush1.msra.mxu0 %v10595
    %10597 = vmatprep.subr.mxu0 0.0
    %v10598 = vand.u32 %v9208, 4294901760
    %v10599 = vsub.f32 %v9208, %v10598
    %v10600 = vand.u32 %v10599, 4294901760
    %10601 = vmatpush1.msra.mxu0 %v10600
    %10602 = vmatprep.subr.mxu0 0.0
    %v10603 = vand.u32 %v9207, 4294901760
    %v10604 = vsub.f32 %v9207, %v10603
    %v10605 = vand.u32 %v10604, 4294901760
    %10606 = vmatpush1.msra.mxu0 %v10605
    %10607 = vmatprep.subr.mxu0 0.0
    %10608 = vmatpush2.msra.mxu0 0.0
    %10609 = vmatprep.subr.mxu0 0.0
    %10610 = vmatpush2.msra.mxu0 0.0
    %10611 = vmatprep.subr.mxu0 0.0
    %10612 = vmatpush2.msra.mxu0 0.0
    %10613 = vmatprep.subr.mxu0 0.0
    %10614 = vmatpush2.msra.mxu0 0.0
    %10615 = vmatprep.subr.mxu0 0.0
    %10616 = vmatpush2.msra.mxu0 0.0
    %10617 = vmatprep.subr.mxu0 0.0
    %10618 = vmatpush2.msra.mxu0 0.0
    %10619 = vmatprep.subr.mxu0 0.0
    %10620 = vmatpush2.msra.mxu0 0.0
    %10621 = vmatprep.subr.mxu0 0.0
    %10622 = vmatpush2.msra.mxu0 0.0
    %10623 = vmatprep.subr.mxu0 0.0
    %10624 = vmatpush2.msra.mxu0 0.0
    %10625 = vmatprep.subr.mxu0 0.0
    %10626 = vmatpush2.msra.mxu0 0.0
    %10627 = vmatprep.subr.mxu0 0.0
    %10628 = vmatpush2.msra.mxu0 0.0
    %10629 = vmatprep.subr.mxu0 0.0
    %10630 = vmatpush2.msra.mxu0 0.0
    %10631 = vmatprep.subr.mxu0 0.0
    %10632 = vmatpush2.msra.mxu0 0.0
    %10633 = vmatprep.subr.mxu0 0.0
    %10634 = vmatpush2.msra.mxu0 0.0
    %10635 = vmatprep.subr.mxu0 0.0
    %10636 = vmatpush2.msra.mxu0 0.0
    %10637 = vmatprep.subr.mxu0 0.0
    %10638 = vmatpush2.msra.mxu0 0.0
    %10639 = vmatprep.mubr.f32.mxu0 0.0
    %v10640 = vand.u32 %v9174, 4294901760
    %10641 = vmatmul.mubr.f32.gmra.mxu0 %v10640
    %v10642 = vpop.f32.mrf.mxu0
    %v10643 = vadd.f32 %v10524, %v10642
    %v10644 = vpop.f32.mrf.mxu0
    %10645 = vdwg.mxu0
    %10646 = vmatprep.subr.mxu0 0.0
    %v10647 = vand.u32 %v9222, 4294901760
    %10648 = vmatpush1.msra.mxu0 %v10647
    %10649 = vmatprep.subr.mxu0 0.0
    %v10650 = vand.u32 %v9221, 4294901760
    %10651 = vmatpush1.msra.mxu0 %v10650
    %10652 = vmatprep.subr.mxu0 0.0
    %v10653 = vand.u32 %v9220, 4294901760
    %10654 = vmatpush1.msra.mxu0 %v10653
    %10655 = vmatprep.subr.mxu0 0.0
    %v10656 = vand.u32 %v9219, 4294901760
    %10657 = vmatpush1.msra.mxu0 %v10656
    %10658 = vmatprep.subr.mxu0 0.0
    %v10659 = vand.u32 %v9218, 4294901760
    %10660 = vmatpush1.msra.mxu0 %v10659
    %10661 = vmatprep.subr.mxu0 0.0
    %v10662 = vand.u32 %v9217, 4294901760
    %10663 = vmatpush1.msra.mxu0 %v10662
    %10664 = vmatprep.subr.mxu0 0.0
    %v10665 = vand.u32 %v9216, 4294901760
    %10666 = vmatpush1.msra.mxu0 %v10665
    %10667 = vmatprep.subr.mxu0 0.0
    %v10668 = vand.u32 %v9215, 4294901760
    %10669 = vmatpush1.msra.mxu0 %v10668
    %10670 = vmatprep.subr.mxu0 0.0
    %v10671 = vand.u32 %v9214, 4294901760
    %10672 = vmatpush1.msra.mxu0 %v10671
    %10673 = vmatprep.subr.mxu0 0.0
    %v10674 = vand.u32 %v9213, 4294901760
    %10675 = vmatpush1.msra.mxu0 %v10674
    %10676 = vmatprep.subr.mxu0 0.0
    %v10677 = vand.u32 %v9212, 4294901760
    %10678 = vmatpush1.msra.mxu0 %v10677
    %10679 = vmatprep.subr.mxu0 0.0
    %v10680 = vand.u32 %v9211, 4294901760
    %10681 = vmatpush1.msra.mxu0 %v10680
    %10682 = vmatprep.subr.mxu0 0.0
    %v10683 = vand.u32 %v9210, 4294901760
    %10684 = vmatpush1.msra.mxu0 %v10683
    %10685 = vmatprep.subr.mxu0 0.0
    %v10686 = vand.u32 %v9209, 4294901760
    %10687 = vmatpush1.msra.mxu0 %v10686
    %10688 = vmatprep.subr.mxu0 0.0
    %v10689 = vand.u32 %v9208, 4294901760
    %10690 = vmatpush1.msra.mxu0 %v10689
    %10691 = vmatprep.subr.mxu0 0.0
    %v10692 = vand.u32 %v9207, 4294901760
    %10693 = vmatpush1.msra.mxu0 %v10692
    %10694 = vmatprep.subr.mxu0 0.0
    %10695 = vmatpush2.msra.mxu0 0.0
    %10696 = vmatprep.subr.mxu0 0.0
    %10697 = vmatpush2.msra.mxu0 0.0
    %10698 = vmatprep.subr.mxu0 0.0
    %10699 = vmatpush2.msra.mxu0 0.0
    %10700 = vmatprep.subr.mxu0 0.0
    %10701 = vmatpush2.msra.mxu0 0.0
    %10702 = vmatprep.subr.mxu0 0.0
    %10703 = vmatpush2.msra.mxu0 0.0
    %10704 = vmatprep.subr.mxu0 0.0
    %10705 = vmatpush2.msra.mxu0 0.0
    %10706 = vmatprep.subr.mxu0 0.0
    %10707 = vmatpush2.msra.mxu0 0.0
    %10708 = vmatprep.subr.mxu0 0.0
    %10709 = vmatpush2.msra.mxu0 0.0
    %10710 = vmatprep.subr.mxu0 0.0
    %10711 = vmatpush2.msra.mxu0 0.0
    %10712 = vmatprep.subr.mxu0 0.0
    %10713 = vmatpush2.msra.mxu0 0.0
    %10714 = vmatprep.subr.mxu0 0.0
    %10715 = vmatpush2.msra.mxu0 0.0
    %10716 = vmatprep.subr.mxu0 0.0
    %10717 = vmatpush2.msra.mxu0 0.0
    %10718 = vmatprep.subr.mxu0 0.0
    %10719 = vmatpush2.msra.mxu0 0.0
    %10720 = vmatprep.subr.mxu0 0.0
    %10721 = vmatpush2.msra.mxu0 0.0
    %10722 = vmatprep.subr.mxu0 0.0
    %10723 = vmatpush2.msra.mxu0 0.0
    %10724 = vmatprep.subr.mxu0 0.0
    %10725 = vmatpush2.msra.mxu0 0.0
    %10726 = vmatprep.mubr.f32.mxu0 0.0
    %v10727 = vand.u32 %v9174, 4294901760
    %10728 = vmatmul.mubr.f32.gmra.mxu0 %v10727
    %v10729 = vpop.f32.mrf.mxu0
    %v10730 = vadd.f32 %v10643, %v10729
    %v10731 = vpop.f32.mrf.mxu0
    %10732 = vdwg.mxu0
    %vm10733 = vcmp.gt.f32.partialorder %v10730, 0.0
    %v10734 = vmul.f32 %v10730, 0.01
    %v10735 = vsel %vm10733, %v10730, %v10734
    %v10736 = vld [vmem:[#allocation11] sm:$0x1]
    %v10738 = vlaneseq
    %v10739 = vshrl.u32 %v10738, 7
    %v10740 = vsub.s32 0, %v10739
    %v10741 = vrot.slane %v10736, %v10740
    %v10743 = vmul.f32 %v10735, %v10741
    %vm10744 = vcmask 517120
    %v10745 = vsel %vm10744, %v10743, 0.0
    %10746 = vadd.xlane.f32.xlu0 %v10745
    %v10747 = vpop.xlane.xlu0 %10746
    %v10748 = vld [vmem:[#allocation2] sm:$0x1]
    %v10750 = vlaneseq
    %v10751 = vshrl.u32 %v10750, 7
    %v10752 = vsub.s32 0, %v10751
    %v10753 = vrot.slane %v10748, %v10752
    %v10755 = vadd.f32 %v10747, %v10753
    %v10756 = vtanh.pop %v10755
    %vm10757 = vcmask 1024
    %10758 = vst.msk [vmem:[%s9] sm:$0x3] %vm10757, %v10756
    // Predicated region
    $region62: #{architecture2_forward.1} parent=1 // pred_check
      _
    $region63: #{architecture2_forward.1} parent=1 // pred_check_branch
      %10760 = sbr.rel (0) target = $region65
    $region64: #{architecture2_forward.1} parent=1 // pred_region
      _
    $region65: #{architecture2_forward.1} parent=1 // pred_fallthru
      _
    // Predicated region
    $region66: #{architecture2_forward.1} parent=1 // pred_check
      _
    $region67: #{architecture2_forward.1} parent=1 // pred_check_branch
      %10762 = sbr.rel (0) target = $region69
    $region68: #{architecture2_forward.1} parent=1 // pred_region
      _
    $region69: #{architecture2_forward.1} parent=1 // pred_fallthru
      _
    %10763 = vsyncpa [#allocation4], 1
    %10764 = vsyncpa [#allocation6], 1
    %10765 = vsyncpa [#allocation9], 1
    %10766 = vsyncpa [#allocation12], 1

</llo_original>
